<compile_context>
chip_gen: v7x
topology: tpu7x:2x2x1
jax: 0.10.0
libtpu: 0.0.40
codegen_flags: <defaults>
</compile_context>

<pallas_src>
import functools

import jax
import jax.numpy as jnp
from jax.experimental import pallas as pl
from jax.experimental.pallas import tpu as pltpu

EPS = 1e-5            # nn.LayerNorm default
NEG_INF = -1e30       # additive causal-mask bias (avoids NaN on fully-masked rows)
VMEM_LIMIT = 64 * 1024 * 1024


def _pick_tile(dim, desired):
    """Largest power-of-two-ish tile <= desired that divides dim."""
    t = max(1, min(desired, dim))
    while dim % t:
        t //= 2
    return t


# ----------------------------------------------------------------------------
# Tiled projection matmul (qkv_net / r_net): bf16 operands, f32 VMEM accumulator
# ----------------------------------------------------------------------------
def _matmul_kernel(x_ref, w_ref, o_ref, acc_ref):
    @pl.when(pl.program_id(2) == 0)
    def _():
        acc_ref[...] = jnp.zeros_like(acc_ref)

    acc_ref[...] += jnp.dot(x_ref[...], w_ref[...], preferred_element_type=jnp.float32)

    @pl.when(pl.program_id(2) == pl.num_programs(2) - 1)
    def _():
        o_ref[...] = acc_ref[...].astype(o_ref.dtype)


def pallas_matmul(x, w, *, out_dtype=jnp.bfloat16, tm=256, tn=256, tk=512):
    """x:(M,K) bf16 @ w:(K,N) bf16 -> (M,N) out_dtype, tiled over (M,N,K)."""
    M, K = x.shape
    K2, N = w.shape
    assert K == K2
    tm, tn, tk = _pick_tile(M, tm), _pick_tile(N, tn), _pick_tile(K, tk)
    return pl.pallas_call(
        _matmul_kernel,
        out_shape=jax.ShapeDtypeStruct((M, N), out_dtype),
        grid_spec=pltpu.PrefetchScalarGridSpec(
            num_scalar_prefetch=0,
            grid=(M // tm, N // tn, K // tk),
            in_specs=[
                pl.BlockSpec((tm, tk), lambda i, j, k: (i, k)),
                pl.BlockSpec((tk, tn), lambda i, j, k: (k, j)),
            ],
            out_specs=pl.BlockSpec((tm, tn), lambda i, j, k: (i, j)),
            scratch_shapes=[pltpu.VMEM((tm, tn), jnp.float32)],
        ),
        compiler_params=pltpu.CompilerParams(
            dimension_semantics=("parallel", "parallel", "arbitrary"),
            vmem_limit_bytes=VMEM_LIMIT),
    )(x, w)


# ----------------------------------------------------------------------------
# Fused relative multi-head attention, grid = (bsz, n_head)
#   scores (AC + rel-shifted BD) + causal mask + softmax + P@V per head
# ----------------------------------------------------------------------------
def _rel_attn_kernel(q_ref, k_ref, v_ref, rk_ref, rwb_ref, rrb_ref, o_ref, *, scale):
    Q = q_ref.shape[1]
    K = k_ref.shape[1]

    # Causal additive bias (dec_attn_mask dim-3 branch), built in-register.
    row = jax.lax.broadcasted_iota(jnp.int32, (Q, K), 0)
    col = jax.lax.broadcasted_iota(jnp.int32, (Q, K), 1)
    causal = jnp.where(col > row, NEG_INF, 0.0).astype(jnp.float32)

    # Fold the 1/sqrt(d_head) scale into the (Q, Dh) query terms (not the (Q, K) scores).
    q = q_ref[0].astype(jnp.float32)                                  # (Q, Dh) bf16 -> f32
    rwq = ((q + rwb_ref[...]) * scale).astype(jnp.bfloat16)
    rrq = ((q + rrb_ref[...]) * scale).astype(jnp.bfloat16)

    dims_nt = (((1,), (1,)), ((), ()))  # contract last dims (A @ B^T on the MXU)
    ac = jax.lax.dot_general(rwq, k_ref[0], dims_nt,
                             preferred_element_type=jnp.float32)      # (Q, K)
    bd_raw = jax.lax.dot_general(rrq, rk_ref[...], dims_nt,
                                 preferred_element_type=jnp.float32)  # (Q, R)

    # Transformer-XL _rel_shift: bd[i, j] = bd_raw[i, (j - i - 1) mod R]
    # (equals the reference's shifted values on the causal region j <= i).
    # Per-row lane rotation on the XLU: row i rolled by (1 + i).
    bd = pltpu.roll(bd_raw, 1, 1, stride=1, stride_axis=0)

    s = ac + bd + causal
    s = s - jnp.max(s, axis=-1, keepdims=True)                        # softmax over klen
    p = jnp.exp(s)
    p = p * pl.reciprocal(jnp.sum(p, axis=-1, keepdims=True), approx=True)

    o_ref[0] = jnp.dot(p.astype(jnp.bfloat16), v_ref[0],
                       preferred_element_type=jnp.float32).astype(o_ref.dtype)


def pallas_rel_attention(qkv, rk, rwb_row, rrb_row, *, n_head, d_head):
    """qkv: (B, Q, 3*H*Dh) bf16 fused slab; rk: (R, H*Dh) bf16; biases: (1, H*Dh) f32."""
    B, Q, three_hd = qkv.shape
    R, HD = rk.shape
    assert three_hd == 3 * n_head * d_head and HD == n_head * d_head and R == Q
    # TODO(synk): pad d_head to a 128-lane multiple for configs with d_head < 128.
    assert d_head % 128 == 0, "d_head must be lane-aligned (128) for per-head BlockSpec slices"
    scale = 1.0 / (d_head ** 0.5)
    H = n_head
    kern = functools.partial(_rel_attn_kernel, scale=scale)
    # TODO(synk): flash-style Q/K tiling (running max/sum scratch) for long qlen / mems;
    #             currently each (b, h) grid step holds a full (Q, klen) score block.
    return pl.pallas_call(
        kern,
        out_shape=jax.ShapeDtypeStruct((B, Q, HD), jnp.bfloat16),
        grid=(B, H),
        in_specs=[
            # same fused-QKV slab passed three times with head-sliced, 128-lane-aligned blocks
            pl.BlockSpec((1, Q, d_head), lambda b, h: (b, 0, h)),            # q head slice
            pl.BlockSpec((1, Q, d_head), lambda b, h: (b, 0, H + h)),        # k head slice
            pl.BlockSpec((1, Q, d_head), lambda b, h: (b, 0, 2 * H + h)),    # v head slice
            pl.BlockSpec((R, d_head), lambda b, h: (0, h)),                  # r_head_k head slice
            pl.BlockSpec((1, d_head), lambda b, h: (0, h)),                  # r_w_bias head slice
            pl.BlockSpec((1, d_head), lambda b, h: (0, h)),                  # r_r_bias head slice
        ],
        out_specs=pl.BlockSpec((1, Q, d_head), lambda b, h: (b, 0, h)),
        compiler_params=pltpu.CompilerParams(
            dimension_semantics=("parallel", "parallel"),
            vmem_limit_bytes=VMEM_LIMIT),
    )(qkv, qkv, qkv, rk, rwb_row, rrb_row)


# ----------------------------------------------------------------------------
# Fused o_net + residual + LayerNorm + PositionwiseFF + residual + LayerNorm
# ----------------------------------------------------------------------------
def _out_ffn_kernel(av_ref, wo_ref, res_ref, g1_ref, b1_ref,
                    w1_ref, bb1_ref, w2_ref, bb2_ref, g2_ref, b2_ref, o_ref):
    attn_out = jnp.dot(av_ref[...], wo_ref[...], preferred_element_type=jnp.float32)
    x = res_ref[...] + attn_out                          # w + attn_out
    mean = jnp.mean(x, axis=-1, keepdims=True)
    xc = x - mean
    var = jnp.mean(xc * xc, axis=-1, keepdims=True)
    y1 = xc * jax.lax.rsqrt(var + EPS) * g1_ref[...] + b1_ref[...]    # attention LayerNorm

    h = jnp.dot(y1.astype(jnp.bfloat16), w1_ref[...],
                preferred_element_type=jnp.float32) + bb1_ref[...]
    h = jnp.maximum(h, 0.0)                              # ReLU
    core = jnp.dot(h.astype(jnp.bfloat16), w2_ref[...],
                   preferred_element_type=jnp.float32) + bb2_ref[...]
    y = y1 + core                                        # FF residual (post-norm)
    mean2 = jnp.mean(y, axis=-1, keepdims=True)
    yc = y - mean2
    var2 = jnp.mean(yc * yc, axis=-1, keepdims=True)
    o_ref[...] = (yc * jax.lax.rsqrt(var2 + EPS) * g2_ref[...] + b2_ref[...]).astype(o_ref.dtype)


def pallas_out_ffn(av2d, wo_t, res2d, ln1_g, ln1_b, w1_t, b1, w2_t, b2, ln2_g, ln2_b, *, tm=256):
    T, HD = av2d.shape
    Dm = wo_t.shape[1]
    Di = w1_t.shape[1]
    tm = _pick_tile(T, tm)

    def full(shape):
        # Constant block index -> the pipeliner does not re-fetch these weights per row tile.
        # TODO(synk): single-buffer these operands (pipeline_mode=pl.Buffered(1)) and add
        #             K/N tiling with a VMEM accumulator for large d_model/d_inner (v7x/v5e VMEM).
        return pl.BlockSpec(shape, lambda i: (0, 0))

    return pl.pallas_call(
        _out_ffn_kernel,
        out_shape=jax.ShapeDtypeStruct((T, Dm), jnp.float32),
        grid=(T // tm,),
        in_specs=[
            pl.BlockSpec((tm, HD), lambda i: (i, 0)),   # attention vectors (bf16 row tile)
            full((HD, Dm)),                              # o_net weight (bf16)
            pl.BlockSpec((tm, Dm), lambda i: (i, 0)),   # residual (original w, f32)
            full((1, Dm)), full((1, Dm)),                # LN1 gamma / beta
            full((Dm, Di)), full((1, Di)),               # FF W1 (bf16) / b1
            full((Di, Dm)), full((1, Dm)),               # FF W2 (bf16) / b2
            full((1, Dm)), full((1, Dm)),                # LN2 gamma / beta
        ],
        out_specs=pl.BlockSpec((tm, Dm), lambda i: (i, 0)),
        compiler_params=pltpu.CompilerParams(
            dimension_semantics=("parallel",),
            vmem_limit_bytes=VMEM_LIMIT),
    )(av2d, wo_t, res2d, ln1_g, ln1_b, w1_t, b1, w2_t, b2, ln2_g, ln2_b)


# ----------------------------------------------------------------------------
# One-time parameter preparation (outside the jitted forward)
# ----------------------------------------------------------------------------
def prepare_params(params):
    """Pre-transpose + pre-cast weights to bf16 (MXU-ready layout); biases as lane-dense rows."""
    bf = lambda a: jnp.asarray(a).T.astype(jnp.bfloat16)
    row = lambda a: jnp.asarray(a)[None, :].astype(jnp.float32)
    return {
        "qkv_wT": bf(params["qkv_w"]),    # (Dm, 3*H*Dh)
        "r_wT":   bf(params["r_w"]),      # (Dm, H*Dh)
        "o_wT":   bf(params["o_w"]),      # (H*Dh, Dm)
        "ff_w1T": bf(params["ff_w1"]),    # (Dm, Di)
        "ff_w2T": bf(params["ff_w2"]),    # (Di, Dm)
        "ff_b1":  row(params["ff_b1"]),
        "ff_b2":  row(params["ff_b2"]),
        "ln1_g":  row(params["ln1_g"]), "ln1_b": row(params["ln1_b"]),
        "ln2_g":  row(params["ln2_g"]), "ln2_b": row(params["ln2_b"]),
    }


# ----------------------------------------------------------------------------
# Full decoder layer forward (glue + pallas kernels)
# ----------------------------------------------------------------------------
def decoder_layer_forward(prep, w, r, r_w_bias, r_r_bias):
    Q, B, Dm = w.shape
    H, Dh = r_w_bias.shape
    HD = H * Dh

    # batch-major, lane-dense activation slab: row t = b*Q + q (f32 kept for the residual path)
    w_bm = jnp.transpose(w, (1, 0, 2)).reshape(B * Q, Dm)

    # qkv_net / r_net projections (bf16 MXU matmuls, f32 accumulation, bf16 slabs out)
    qkv = pallas_matmul(w_bm.astype(jnp.bfloat16), prep["qkv_wT"])   # (B*Q, 3*H*Dh) bf16
    rk = pallas_matmul(r.astype(jnp.bfloat16), prep["r_wT"])         # (R, H*Dh) bf16

    # fused relative attention: scores + rel_shift + causal mask + softmax + P@V per (b, h)
    attn = pallas_rel_attention(
        qkv.reshape(B, Q, 3 * HD), rk,
        r_w_bias.reshape(1, HD).astype(jnp.float32),
        r_r_bias.reshape(1, HD).astype(jnp.float32),
        n_head=H, d_head=Dh)                                         # (B, Q, H*Dh) bf16

    # fused o_net + residual + LN + PositionwiseFF + residual + LN
    out2d = pallas_out_ffn(
        attn.reshape(B * Q, HD), prep["o_wT"], w_bm,
        prep["ln1_g"], prep["ln1_b"],
        prep["ff_w1T"], prep["ff_b1"],
        prep["ff_w2T"], prep["ff_b2"],
        prep["ln2_g"], prep["ln2_b"])                                # (B*Q, Dm) f32

    return jnp.transpose(out2d.reshape(B, Q, Dm), (1, 0, 2))         # (qlen, bsz, d_model)


# ----------------------------------------------------------------------------
# Pure-JAX reference (mirrors the PyTorch forward exactly, eval mode, f32)
# ----------------------------------------------------------------------------
def _layernorm_ref(x, g, b):
    mean = jnp.mean(x, axis=-1, keepdims=True)
    var = jnp.mean((x - mean) ** 2, axis=-1, keepdims=True)
    return (x - mean) * jax.lax.rsqrt(var + EPS) * g + b


def reference_forward(params, w, r, r_w_bias, r_r_bias, attn_mask):
    Q, B, Dm = w.shape
    H, Dh = r_w_bias.shape
    R = r.shape[0]
    scale = 1.0 / (Dh ** 0.5)

    w_heads = w @ params["qkv_w"].T
    r_head_k = r @ params["r_w"].T
    q_, k_, v_ = jnp.split(w_heads, 3, axis=-1)
    q_ = q_.reshape(Q, B, H, Dh)
    k_ = k_.reshape(Q, B, H, Dh)
    v_ = v_.reshape(Q, B, H, Dh)
    rk = r_head_k.reshape(R, H, Dh)

    AC = jnp.einsum("ibnd,jbnd->ijbn", q_ + r_w_bias, k_)
    BD = jnp.einsum("ibnd,jnd->ijbn", q_ + r_r_bias, rk)
    one_pad = jnp.ones((Q, 1, B, H), BD.dtype)
    flat = jnp.concatenate([one_pad, BD], axis=1).reshape(Q * (R + 1), B, H)
    BD = flat[Q:].reshape(Q, R, B, H)

    score = (AC + BD) * scale
    score = jnp.where(attn_mask[:, :, :, None], -jnp.inf, score)
    prob = jax.nn.softmax(score, axis=1)
    attn_vec = jnp.einsum("ijbn,jbnd->ibnd", prob, v_).reshape(Q, B, H * Dh)
    attn_out = attn_vec @ params["o_w"].T
    out1 = _layernorm_ref(w + attn_out, params["ln1_g"], params["ln1_b"])

    core = jnp.maximum(out1 @ params["ff_w1"].T + params["ff_b1"], 0.0)
    core = core @ params["ff_w2"].T + params["ff_b2"]
    return _layernorm_ref(out1 + core, params["ln2_g"], params["ln2_b"])


# ----------------------------------------------------------------------------
if __name__ == "__main__":
    # hardware-aligned small config: n_head=2, d_model=256, d_head=128, d_inner=512,
    # qlen = rlen = 128, bsz = 2
    Q, B, Dm, H, Di = 128, 2, 256, 2, 512
    Dh = Dm // H
    R = Q

    key = jax.random.PRNGKey(0)
    ks = jax.random.split(key, 12)
    params = {
        "qkv_w": 0.05 * jax.random.normal(ks[0], (3 * H * Dh, Dm), jnp.float32),
        "r_w":   0.05 * jax.random.normal(ks[1], (H * Dh, Dm), jnp.float32),
        "o_w":   0.05 * jax.random.normal(ks[2], (Dm, H * Dh), jnp.float32),
        "ln1_g": jnp.ones((Dm,), jnp.float32),
        "ln1_b": jnp.zeros((Dm,), jnp.float32),
        "ff_w1": 0.05 * jax.random.normal(ks[3], (Di, Dm), jnp.float32),
        "ff_b1": 0.05 * jax.random.normal(ks[4], (Di,), jnp.float32),
        "ff_w2": 0.05 * jax.random.normal(ks[5], (Dm, Di), jnp.float32),
        "ff_b2": 0.05 * jax.random.normal(ks[6], (Dm,), jnp.float32),
        "ln2_g": jnp.ones((Dm,), jnp.float32),
        "ln2_b": jnp.zeros((Dm,), jnp.float32),
    }
    r_w_bias = 0.05 * jax.random.normal(ks[7], (H, Dh), jnp.float32)
    r_r_bias = 0.05 * jax.random.normal(ks[8], (H, Dh), jnp.float32)

    dec_inp = jax.random.normal(ks[9], (Q, B, Dm), jnp.float32)
    r_emb = jax.random.normal(ks[10], (R, Dm), jnp.float32)
    # causal mask (dim-3 branch of the PyTorch forward), used by the f32 reference only;
    # the Pallas kernel builds the same mask in-register from iota.
    dec_attn_mask = jnp.triu(jnp.ones((Q, Q), jnp.bool_), k=1)[:, :, None]

    # one-time weight prep (transpose + bf16 cast), outside the jitted forward
    prep = prepare_params(params)

    fwd = jax.jit(decoder_layer_forward)
    out = fwd(prep, dec_inp, r_emb, r_w_bias, r_r_bias)
    out = jax.block_until_ready(out)

    ref = reference_forward(params, dec_inp, r_emb, r_w_bias, r_r_bias, dec_attn_mask)
    assert out.shape == (Q, B, Dm)
    max_diff = float(jnp.max(jnp.abs(out - ref)))
    # kernel uses bf16 weights/activations on the MXU paths (f32 accumulation),
    # so allow a bf16-scale tolerance vs the f32 reference
    assert jnp.allclose(out, ref, atol=5e-2, rtol=5e-2), f"max|diff|={max_diff}"
    print("KERNEL_OK")
</pallas_src>

<mosaic_0001>
module attributes {stable_mosaic.version = 11 : i64} {
  func.func @_matmul_kernel(%arg0: i32, %arg1: i32, %arg2: i32, %arg3: memref<128x256xbf16, #tpu.memory_space<vmem>>, %arg4: memref<256x256xbf16, #tpu.memory_space<vmem>>, %arg5: memref<128x256xbf16, #tpu.memory_space<vmem>>, %arg6: memref<128x256xf32, #tpu.memory_space<vmem>>) attributes {dimension_semantics = [#tpu.dimension_semantics<parallel>, #tpu.dimension_semantics<parallel>, #tpu.dimension_semantics<arbitrary>], iteration_bounds = array<i64: 1, 1, 1>, scalar_prefetch = 0 : i64, scratch_operands = 1 : i64, tpu.core_type = #tpu.core_type<tc>, window_params = [{transform_indices = @transform_0, window_bounds = array<i64: 128, 256>}, {transform_indices = @transform_1, window_bounds = array<i64: 256, 256>}, {transform_indices = @transform_2, window_bounds = array<i64: 128, 256>}]} {
    %c0_i32 = arith.constant 0 : i32
    %0 = arith.cmpi eq, %arg2, %c0_i32 : i32
    %1 = arith.extui %0 : i1 to i32
    %c0_i32_0 = arith.constant 0 : i32
    %2 = arith.cmpi ne, %1, %c0_i32_0 : i32
    scf.if %2 {
      %cst_10 = arith.constant 0.000000e+00 : f32
      %12 = vector.broadcast %cst_10 : f32 to vector<128x256xf32>
      %c0_11 = arith.constant 0 : index
      %c0_12 = arith.constant 0 : index
      %13 = vector.load %arg6[%c0_11, %c0_12] : memref<128x256xf32, #tpu.memory_space<vmem>>, vector<128x256xf32>
      tpu.vector_store %arg6[%c0_11, %c0_12], %12 {strides = array<i32>} : memref<128x256xf32, #tpu.memory_space<vmem>>, vector<128x256xf32>,
    } else {
    }
    %c0 = arith.constant 0 : index
    %c0_1 = arith.constant 0 : index
    %3 = vector.load %arg6[%c0, %c0_1] : memref<128x256xf32, #tpu.memory_space<vmem>>, vector<128x256xf32>
    %c0_2 = arith.constant 0 : index
    %c0_3 = arith.constant 0 : index
    %4 = vector.load %arg3[%c0_2, %c0_3] : memref<128x256xbf16, #tpu.memory_space<vmem>>, vector<128x256xbf16>
    %c0_4 = arith.constant 0 : index
    %c0_5 = arith.constant 0 : index
    %5 = vector.load %arg4[%c0_4, %c0_5] : memref<256x256xbf16, #tpu.memory_space<vmem>>, vector<256x256xbf16>
    %cst = arith.constant dense<0.000000e+00> : vector<128x256xf32>
    %6 = tpu.matmul %4, %5, %cst {dimension_numbers = #tpu.dot_dimension_numbers<[1], [0], [0], [1], [0, 0, 1, 1], [], []>} : vector<128x256xbf16>, vector<256x256xbf16>, vector<128x256xf32> -> vector<128x256xf32>
    %7 = arith.addf %3, %6 : vector<128x256xf32>
    %c0_6 = arith.constant 0 : index
    %c0_7 = arith.constant 0 : index
    %8 = vector.load %arg6[%c0_6, %c0_7] : memref<128x256xf32, #tpu.memory_space<vmem>>, vector<128x256xf32>
    tpu.vector_store %arg6[%c0_6, %c0_7], %7 {strides = array<i32>} : memref<128x256xf32, #tpu.memory_space<vmem>>, vector<128x256xf32>,
    %c0_i32_8 = arith.constant 0 : i32
    %9 = arith.cmpi eq, %arg2, %c0_i32_8 : i32
    %10 = arith.extui %9 : i1 to i32
    %c0_i32_9 = arith.constant 0 : i32
    %11 = arith.cmpi ne, %10, %c0_i32_9 : i32
    scf.if %11 {
      %c0_10 = arith.constant 0 : index
      %c0_11 = arith.constant 0 : index
      %12 = vector.load %arg6[%c0_10, %c0_11] : memref<128x256xf32, #tpu.memory_space<vmem>>, vector<128x256xf32>
      %13 = arith.truncf %12 : vector<128x256xf32> to vector<128x256xbf16>
      %c0_12 = arith.constant 0 : index
      %c0_13 = arith.constant 0 : index
      %14 = vector.load %arg5[%c0_12, %c0_13] : memref<128x256xbf16, #tpu.memory_space<vmem>>, vector<128x256xbf16>
      tpu.vector_store %arg5[%c0_12, %c0_13], %13 {strides = array<i32>} : memref<128x256xbf16, #tpu.memory_space<vmem>>, vector<128x256xbf16>,
    } else {
    }
    return
  }
  func.func @transform_0(%arg0: i32, %arg1: i32, %arg2: i32) -> (i32, i32) {
    %c0_i32 = arith.constant 0 : i32
    return %arg0, %arg2 : i32, i32
  }
  func.func @transform_1(%arg0: i32, %arg1: i32, %arg2: i32) -> (i32, i32) {
    %c0_i32 = arith.constant 0 : i32
    return %arg2, %arg1 : i32, i32
  }
  func.func @transform_2(%arg0: i32, %arg1: i32, %arg2: i32) -> (i32, i32) {
    %c0_i32 = arith.constant 0 : i32
    return %arg0, %arg1 : i32, i32
  }
}

module attributes {stable_mosaic.version = 11 : i64} {
  func.func @_rel_attn_kernel(%arg0: i32, %arg1: i32, %arg2: memref<1x128x128xbf16, #tpu.memory_space<vmem>>, %arg3: memref<1x128x128xbf16, #tpu.memory_space<vmem>>, %arg4: memref<1x128x128xbf16, #tpu.memory_space<vmem>>, %arg5: memref<128x128xbf16, #tpu.memory_space<vmem>>, %arg6: memref<1x128xf32, #tpu.memory_space<vmem>>, %arg7: memref<1x128xf32, #tpu.memory_space<vmem>>, %arg8: memref<1x128x128xbf16, #tpu.memory_space<vmem>>) attributes {dimension_semantics = [#tpu.dimension_semantics<parallel>, #tpu.dimension_semantics<parallel>], iteration_bounds = array<i64: 2, 2>, scalar_prefetch = 0 : i64, scratch_operands = 0 : i64, tpu.core_type = #tpu.core_type<tc>, window_params = [{transform_indices = @transform_0, window_bounds = array<i64: 1, 128, 128>}, {transform_indices = @transform_1, window_bounds = array<i64: 1, 128, 128>}, {transform_indices = @transform_2, window_bounds = array<i64: 1, 128, 128>}, {transform_indices = @transform_3, window_bounds = array<i64: 128, 128>}, {transform_indices = @transform_4, window_bounds = array<i64: 1, 128>}, {transform_indices = @transform_5, window_bounds = array<i64: 1, 128>}, {transform_indices = @transform_6, window_bounds = array<i64: 1, 128, 128>}]} {
    %0 = tpu.iota {dimensions = array<i32: 0>} : vector<128x128xi32>
    %1 = tpu.iota {dimensions = array<i32: 1>} : vector<128x128xi32>
    %2 = arith.cmpi sgt, %1, %0 : vector<128x128xi32>
    %cst = arith.constant -1.000000e+30 : f32
    %cst_0 = arith.constant 0.000000e+00 : f32
    %3 = vector.broadcast %cst : f32 to vector<128x128xf32>
    %4 = vector.broadcast %cst_0 : f32 to vector<128x128xf32>
    %5 = arith.select %2, %3, %4 : vector<128x128xi1>, vector<128x128xf32>
    %c0 = arith.constant 0 : index
    %c0_1 = arith.constant 0 : index
    %c0_2 = arith.constant 0 : index
    %6 = vector.load %arg2[%c0, %c0_1, %c0_2] : memref<1x128x128xbf16, #tpu.memory_space<vmem>>, vector<1x128x128xbf16>
    %7 = vector.shape_cast %6 : vector<1x128x128xbf16> to vector<128x128xbf16>
    %8 = arith.extf %7 : vector<128x128xbf16> to vector<128x128xf32>
    %c0_3 = arith.constant 0 : index
    %c0_4 = arith.constant 0 : index
    %9 = vector.load %arg6[%c0_3, %c0_4] : memref<1x128xf32, #tpu.memory_space<vmem>>, vector<1x128xf32>
    %10 = vector.broadcast %9 : vector<1x128xf32> to vector<128x128xf32>
    %11 = arith.addf %8, %10 : vector<128x128xf32>
    %cst_5 = arith.constant 0.0883883461 : f32
    %12 = vector.broadcast %cst_5 : f32 to vector<128x128xf32>
    %13 = arith.mulf %11, %12 : vector<128x128xf32>
    %14 = arith.truncf %13 : vector<128x128xf32> to vector<128x128xbf16>
    %c0_6 = arith.constant 0 : index
    %c0_7 = arith.constant 0 : index
    %15 = vector.load %arg7[%c0_6, %c0_7] : memref<1x128xf32, #tpu.memory_space<vmem>>, vector<1x128xf32>
    %16 = vector.broadcast %15 : vector<1x128xf32> to vector<128x128xf32>
    %17 = arith.addf %8, %16 : vector<128x128xf32>
    %cst_8 = arith.constant 0.0883883461 : f32
    %18 = vector.broadcast %cst_8 : f32 to vector<128x128xf32>
    %19 = arith.mulf %17, %18 : vector<128x128xf32>
    %20 = arith.truncf %19 : vector<128x128xf32> to vector<128x128xbf16>
    %c0_9 = arith.constant 0 : index
    %c0_10 = arith.constant 0 : index
    %c0_11 = arith.constant 0 : index
    %21 = vector.load %arg3[%c0_9, %c0_10, %c0_11] : memref<1x128x128xbf16, #tpu.memory_space<vmem>>, vector<1x128x128xbf16>
    %22 = vector.shape_cast %21 : vector<1x128x128xbf16> to vector<128x128xbf16>
    %cst_12 = arith.constant dense<0.000000e+00> : vector<128x128xf32>
    %23 = tpu.matmul %14, %22, %cst_12 {dimension_numbers = #tpu.dot_dimension_numbers<[1], [1], [0], [0], [0, 0, 1, 0], [], []>} : vector<128x128xbf16>, vector<128x128xbf16>, vector<128x128xf32> -> vector<128x128xf32>
    %c0_13 = arith.constant 0 : index
    %c0_14 = arith.constant 0 : index
    %24 = vector.load %arg5[%c0_13, %c0_14] : memref<128x128xbf16, #tpu.memory_space<vmem>>, vector<128x128xbf16>
    %cst_15 = arith.constant dense<0.000000e+00> : vector<128x128xf32>
    %25 = tpu.matmul %20, %24, %cst_15 {dimension_numbers = #tpu.dot_dimension_numbers<[1], [1], [0], [0], [0, 0, 1, 0], [], []>} : vector<128x128xbf16>, vector<128x128xbf16>, vector<128x128xf32> -> vector<128x128xf32>
    %c1_i32 = arith.constant 1 : i32
    %26 = tpu.dynamic_rotate %25 by %c1_i32 dim 1 {stride = 1 : si32, stride_dimension = 0 : si32} : vector<128x128xf32>, i32 -> vector<128x128xf32>
    %27 = arith.addf %23, %26 : vector<128x128xf32>
    %28 = arith.addf %27, %5 : vector<128x128xf32>
    %cst_16 = arith.constant dense<0xFF800000> : vector<128xf32>
    %29 = vector.multi_reduction <maximumf>, %28, %cst_16 [1] : vector<128x128xf32> to vector<128xf32>
    %30 = vector.shape_cast %29 : vector<128xf32> to vector<128x1xf32>
    %31 = vector.broadcast %30 : vector<128x1xf32> to vector<128x128xf32>
    %32 = arith.subf %28, %31 : vector<128x128xf32>
    %33 = math.exp %32 : vector<128x128xf32>
    %cst_17 = arith.constant dense<0.000000e+00> : vector<128xf32>
    %34 = vector.multi_reduction <add>, %33, %cst_17 [1] : vector<128x128xf32> to vector<128xf32>
    %35 = vector.shape_cast %34 : vector<128xf32> to vector<128x1xf32>
    %36 = tpu.reciprocal %35 {approx = true} : vector<128x1xf32> -> vector<128x1xf32>
    %37 = vector.broadcast %36 : vector<128x1xf32> to vector<128x128xf32>
    %38 = arith.mulf %33, %37 : vector<128x128xf32>
    %39 = arith.truncf %38 : vector<128x128xf32> to vector<128x128xbf16>
    %c0_18 = arith.constant 0 : index
    %c0_19 = arith.constant 0 : index
    %c0_20 = arith.constant 0 : index
    %40 = vector.load %arg4[%c0_18, %c0_19, %c0_20] : memref<1x128x128xbf16, #tpu.memory_space<vmem>>, vector<1x128x128xbf16>
    %41 = vector.shape_cast %40 : vector<1x128x128xbf16> to vector<128x128xbf16>
    %cst_21 = arith.constant dense<0.000000e+00> : vector<128x128xf32>
    %42 = tpu.matmul %39, %41, %cst_21 {dimension_numbers = #tpu.dot_dimension_numbers<[1], [0], [0], [1], [0, 0, 1, 1], [], []>} : vector<128x128xbf16>, vector<128x128xbf16>, vector<128x128xf32> -> vector<128x128xf32>
    %43 = arith.truncf %42 : vector<128x128xf32> to vector<128x128xbf16>
    %c0_22 = arith.constant 0 : index
    %c0_23 = arith.constant 0 : index
    %c0_24 = arith.constant 0 : index
    %44 = vector.load %arg8[%c0_22, %c0_23, %c0_24] : memref<1x128x128xbf16, #tpu.memory_space<vmem>>, vector<1x128x128xbf16>
    %45 = vector.shape_cast %44 : vector<1x128x128xbf16> to vector<128x128xbf16>
    %46 = vector.shape_cast %43 : vector<128x128xbf16> to vector<1x128x128xbf16>
    tpu.vector_store %arg8[%c0_22, %c0_23, %c0_24], %46 {strides = array<i32>} : memref<1x128x128xbf16, #tpu.memory_space<vmem>>, vector<1x128x128xbf16>,
    return
  }
  func.func @transform_0(%arg0: i32, %arg1: i32) -> (i32, i32, i32) {
    %c0_i32 = arith.constant 0 : i32
    %c0_i32_0 = arith.constant 0 : i32
    return %arg0, %c0_i32, %arg1 : i32, i32, i32
  }
  func.func @transform_1(%arg0: i32, %arg1: i32) -> (i32, i32, i32) {
    %c2_i32 = arith.constant 2 : i32
    %0 = arith.addi %c2_i32, %arg1 : i32
    %c0_i32 = arith.constant 0 : i32
    %c0_i32_0 = arith.constant 0 : i32
    return %arg0, %c0_i32, %0 : i32, i32, i32
  }
  func.func @transform_2(%arg0: i32, %arg1: i32) -> (i32, i32, i32) {
    %c4_i32 = arith.constant 4 : i32
    %0 = arith.addi %c4_i32, %arg1 : i32
    %c0_i32 = arith.constant 0 : i32
    %c0_i32_0 = arith.constant 0 : i32
    return %arg0, %c0_i32, %0 : i32, i32, i32
  }
  func.func @transform_3(%arg0: i32, %arg1: i32) -> (i32, i32) {
    %c0_i32 = arith.constant 0 : i32
    %c0_i32_0 = arith.constant 0 : i32
    return %c0_i32, %arg1 : i32, i32
  }
  func.func @transform_4(%arg0: i32, %arg1: i32) -> (i32, i32) {
    %c0_i32 = arith.constant 0 : i32
    %c0_i32_0 = arith.constant 0 : i32
    return %c0_i32, %arg1 : i32, i32
  }
  func.func @transform_5(%arg0: i32, %arg1: i32) -> (i32, i32) {
    %c0_i32 = arith.constant 0 : i32
    %c0_i32_0 = arith.constant 0 : i32
    return %c0_i32, %arg1 : i32, i32
  }
  func.func @transform_6(%arg0: i32, %arg1: i32) -> (i32, i32, i32) {
    %c0_i32 = arith.constant 0 : i32
    %c0_i32_0 = arith.constant 0 : i32
    return %arg0, %c0_i32, %arg1 : i32, i32, i32
  }
}

module attributes {stable_mosaic.version = 11 : i64} {
  func.func @_matmul_kernel(%arg0: i32, %arg1: i32, %arg2: i32, %arg3: memref<256x256xbf16, #tpu.memory_space<vmem>>, %arg4: memref<256x256xbf16, #tpu.memory_space<vmem>>, %arg5: memref<256x256xbf16, #tpu.memory_space<vmem>>, %arg6: memref<256x256xf32, #tpu.memory_space<vmem>>) attributes {dimension_semantics = [#tpu.dimension_semantics<parallel>, #tpu.dimension_semantics<parallel>, #tpu.dimension_semantics<arbitrary>], iteration_bounds = array<i64: 1, 3, 1>, scalar_prefetch = 0 : i64, scratch_operands = 1 : i64, tpu.core_type = #tpu.core_type<tc>, window_params = [{transform_indices = @transform_0, window_bounds = array<i64: 256, 256>}, {transform_indices = @transform_1, window_bounds = array<i64: 256, 256>}, {transform_indices = @transform_2, window_bounds = array<i64: 256, 256>}]} {
    %c0_i32 = arith.constant 0 : i32
    %0 = arith.cmpi eq, %arg2, %c0_i32 : i32
    %1 = arith.extui %0 : i1 to i32
    %c0_i32_0 = arith.constant 0 : i32
    %2 = arith.cmpi ne, %1, %c0_i32_0 : i32
    scf.if %2 {
      %cst_10 = arith.constant 0.000000e+00 : f32
      %12 = vector.broadcast %cst_10 : f32 to vector<256x256xf32>
      %c0_11 = arith.constant 0 : index
      %c0_12 = arith.constant 0 : index
      %13 = vector.load %arg6[%c0_11, %c0_12] : memref<256x256xf32, #tpu.memory_space<vmem>>, vector<256x256xf32>
      tpu.vector_store %arg6[%c0_11, %c0_12], %12 {strides = array<i32>} : memref<256x256xf32, #tpu.memory_space<vmem>>, vector<256x256xf32>,
    } else {
    }
    %c0 = arith.constant 0 : index
    %c0_1 = arith.constant 0 : index
    %3 = vector.load %arg6[%c0, %c0_1] : memref<256x256xf32, #tpu.memory_space<vmem>>, vector<256x256xf32>
    %c0_2 = arith.constant 0 : index
    %c0_3 = arith.constant 0 : index
    %4 = vector.load %arg3[%c0_2, %c0_3] : memref<256x256xbf16, #tpu.memory_space<vmem>>, vector<256x256xbf16>
    %c0_4 = arith.constant 0 : index
    %c0_5 = arith.constant 0 : index
    %5 = vector.load %arg4[%c0_4, %c0_5] : memref<256x256xbf16, #tpu.memory_space<vmem>>, vector<256x256xbf16>
    %cst = arith.constant dense<0.000000e+00> : vector<256x256xf32>
    %6 = tpu.matmul %4, %5, %cst {dimension_numbers = #tpu.dot_dimension_numbers<[1], [0], [0], [1], [0, 0, 1, 1], [], []>} : vector<256x256xbf16>, vector<256x256xbf16>, vector<256x256xf32> -> vector<256x256xf32>
    %7 = arith.addf %3, %6 : vector<256x256xf32>
    %c0_6 = arith.constant 0 : index
    %c0_7 = arith.constant 0 : index
    %8 = vector.load %arg6[%c0_6, %c0_7] : memref<256x256xf32, #tpu.memory_space<vmem>>, vector<256x256xf32>
    tpu.vector_store %arg6[%c0_6, %c0_7], %7 {strides = array<i32>} : memref<256x256xf32, #tpu.memory_space<vmem>>, vector<256x256xf32>,
    %c0_i32_8 = arith.constant 0 : i32
    %9 = arith.cmpi eq, %arg2, %c0_i32_8 : i32
    %10 = arith.extui %9 : i1 to i32
    %c0_i32_9 = arith.constant 0 : i32
    %11 = arith.cmpi ne, %10, %c0_i32_9 : i32
    scf.if %11 {
      %c0_10 = arith.constant 0 : index
      %c0_11 = arith.constant 0 : index
      %12 = vector.load %arg6[%c0_10, %c0_11] : memref<256x256xf32, #tpu.memory_space<vmem>>, vector<256x256xf32>
      %13 = arith.truncf %12 : vector<256x256xf32> to vector<256x256xbf16>
      %c0_12 = arith.constant 0 : index
      %c0_13 = arith.constant 0 : index
      %14 = vector.load %arg5[%c0_12, %c0_13] : memref<256x256xbf16, #tpu.memory_space<vmem>>, vector<256x256xbf16>
      tpu.vector_store %arg5[%c0_12, %c0_13], %13 {strides = array<i32>} : memref<256x256xbf16, #tpu.memory_space<vmem>>, vector<256x256xbf16>,
    } else {
    }
    return
  }
  func.func @transform_0(%arg0: i32, %arg1: i32, %arg2: i32) -> (i32, i32) {
    %c0_i32 = arith.constant 0 : i32
    return %arg0, %arg2 : i32, i32
  }
  func.func @transform_1(%arg0: i32, %arg1: i32, %arg2: i32) -> (i32, i32) {
    %c0_i32 = arith.constant 0 : i32
    return %arg2, %arg1 : i32, i32
  }
  func.func @transform_2(%arg0: i32, %arg1: i32, %arg2: i32) -> (i32, i32) {
    %c0_i32 = arith.constant 0 : i32
    return %arg0, %arg1 : i32, i32
  }
}

module attributes {stable_mosaic.version = 11 : i64} {
  func.func @_out_ffn_kernel(%arg0: i32, %arg1: memref<256x256xbf16, #tpu.memory_space<vmem>>, %arg2: memref<256x256xbf16, #tpu.memory_space<vmem>>, %arg3: memref<256x256xf32, #tpu.memory_space<vmem>>, %arg4: memref<1x256xf32, #tpu.memory_space<vmem>>, %arg5: memref<1x256xf32, #tpu.memory_space<vmem>>, %arg6: memref<256x512xbf16, #tpu.memory_space<vmem>>, %arg7: memref<1x512xf32, #tpu.memory_space<vmem>>, %arg8: memref<512x256xbf16, #tpu.memory_space<vmem>>, %arg9: memref<1x256xf32, #tpu.memory_space<vmem>>, %arg10: memref<1x256xf32, #tpu.memory_space<vmem>>, %arg11: memref<1x256xf32, #tpu.memory_space<vmem>>, %arg12: memref<256x256xf32, #tpu.memory_space<vmem>>) attributes {dimension_semantics = [#tpu.dimension_semantics<parallel>], iteration_bounds = array<i64: 1>, scalar_prefetch = 0 : i64, scratch_operands = 0 : i64, tpu.core_type = #tpu.core_type<tc>, window_params = [{transform_indices = @transform_0, window_bounds = array<i64: 256, 256>}, {pipeline_mode = #tpu.pipeline_mode<synchronous>, transform_indices = @transform_1, window_bounds = array<i64: 256, 256>}, {transform_indices = @transform_2, window_bounds = array<i64: 256, 256>}, {pipeline_mode = #tpu.pipeline_mode<synchronous>, transform_indices = @transform_3, window_bounds = array<i64: 1, 256>}, {pipeline_mode = #tpu.pipeline_mode<synchronous>, transform_indices = @transform_4, window_bounds = array<i64: 1, 256>}, {pipeline_mode = #tpu.pipeline_mode<synchronous>, transform_indices = @transform_5, window_bounds = array<i64: 256, 512>}, {pipeline_mode = #tpu.pipeline_mode<synchronous>, transform_indices = @transform_6, window_bounds = array<i64: 1, 512>}, {pipeline_mode = #tpu.pipeline_mode<synchronous>, transform_indices = @transform_7, window_bounds = array<i64: 512, 256>}, {pipeline_mode = #tpu.pipeline_mode<synchronous>, transform_indices = @transform_8, window_bounds = array<i64: 1, 256>}, {pipeline_mode = #tpu.pipeline_mode<synchronous>, transform_indices = @transform_9, window_bounds = array<i64: 1, 256>}, {pipeline_mode = #tpu.pipeline_mode<synchronous>, transform_indices = @transform_10, window_bounds = array<i64: 1, 256>}, {transform_indices = @transform_11, window_bounds = array<i64: 256, 256>}]} {
    %c0 = arith.constant 0 : index
    %c0_0 = arith.constant 0 : index
    %0 = vector.load %arg1[%c0, %c0_0] : memref<256x256xbf16, #tpu.memory_space<vmem>>, vector<256x256xbf16>
    %c0_1 = arith.constant 0 : index
    %c0_2 = arith.constant 0 : index
    %1 = vector.load %arg2[%c0_1, %c0_2] : memref<256x256xbf16, #tpu.memory_space<vmem>>, vector<256x256xbf16>
    %cst = arith.constant dense<0.000000e+00> : vector<256x256xf32>
    %2 = tpu.matmul %0, %1, %cst {dimension_numbers = #tpu.dot_dimension_numbers<[1], [0], [0], [1], [0, 0, 1, 1], [], []>} : vector<256x256xbf16>, vector<256x256xbf16>, vector<256x256xf32> -> vector<256x256xf32>
    %c0_3 = arith.constant 0 : index
    %c0_4 = arith.constant 0 : index
    %3 = vector.load %arg3[%c0_3, %c0_4] : memref<256x256xf32, #tpu.memory_space<vmem>>, vector<256x256xf32>
    %4 = arith.addf %3, %2 : vector<256x256xf32>
    %cst_5 = arith.constant dense<0.000000e+00> : vector<256xf32>
    %5 = vector.multi_reduction <add>, %4, %cst_5 [1] : vector<256x256xf32> to vector<256xf32>
    %6 = vector.shape_cast %5 : vector<256xf32> to vector<256x1xf32>
    %cst_6 = arith.constant 2.560000e+02 : f32
    %7 = vector.broadcast %cst_6 : f32 to vector<256x1xf32>
    %8 = arith.divf %6, %7 : vector<256x1xf32>
    %9 = vector.broadcast %8 : vector<256x1xf32> to vector<256x256xf32>
    %10 = arith.subf %4, %9 : vector<256x256xf32>
    %11 = arith.mulf %10, %10 : vector<256x256xf32>
    %cst_7 = arith.constant dense<0.000000e+00> : vector<256xf32>
    %12 = vector.multi_reduction <add>, %11, %cst_7 [1] : vector<256x256xf32> to vector<256xf32>
    %13 = vector.shape_cast %12 : vector<256xf32> to vector<256x1xf32>
    %cst_8 = arith.constant 2.560000e+02 : f32
    %14 = vector.broadcast %cst_8 : f32 to vector<256x1xf32>
    %15 = arith.divf %13, %14 : vector<256x1xf32>
    %cst_9 = arith.constant 9.99999974E-6 : f32
    %16 = vector.broadcast %cst_9 : f32 to vector<256x1xf32>
    %17 = arith.addf %15, %16 : vector<256x1xf32>
    %18 = math.rsqrt %17 : vector<256x1xf32>
    %19 = vector.broadcast %18 : vector<256x1xf32> to vector<256x256xf32>
    %20 = arith.mulf %10, %19 : vector<256x256xf32>
    %c0_10 = arith.constant 0 : index
    %c0_11 = arith.constant 0 : index
    %21 = vector.load %arg4[%c0_10, %c0_11] : memref<1x256xf32, #tpu.memory_space<vmem>>, vector<1x256xf32>
    %22 = vector.broadcast %21 : vector<1x256xf32> to vector<256x256xf32>
    %23 = arith.mulf %20, %22 : vector<256x256xf32>
    %c0_12 = arith.constant 0 : index
    %c0_13 = arith.constant 0 : index
    %24 = vector.load %arg5[%c0_12, %c0_13] : memref<1x256xf32, #tpu.memory_space<vmem>>, vector<1x256xf32>
    %25 = vector.broadcast %24 : vector<1x256xf32> to vector<256x256xf32>
    %26 = arith.addf %23, %25 : vector<256x256xf32>
    %27 = arith.truncf %26 : vector<256x256xf32> to vector<256x256xbf16>
    %c0_14 = arith.constant 0 : index
    %c0_15 = arith.constant 0 : index
    %28 = vector.load %arg6[%c0_14, %c0_15] : memref<256x512xbf16, #tpu.memory_space<vmem>>, vector<256x512xbf16>
    %cst_16 = arith.constant dense<0.000000e+00> : vector<256x512xf32>
    %29 = tpu.matmul %27, %28, %cst_16 {dimension_numbers = #tpu.dot_dimension_numbers<[1], [0], [0], [1], [0, 0, 1, 1], [], []>} : vector<256x256xbf16>, vector<256x512xbf16>, vector<256x512xf32> -> vector<256x512xf32>
    %c0_17 = arith.constant 0 : index
    %c0_18 = arith.constant 0 : index
    %30 = vector.load %arg7[%c0_17, %c0_18] : memref<1x512xf32, #tpu.memory_space<vmem>>, vector<1x512xf32>
    %31 = vector.broadcast %30 : vector<1x512xf32> to vector<256x512xf32>
    %32 = arith.addf %29, %31 : vector<256x512xf32>
    %cst_19 = arith.constant 0.000000e+00 : f32
    %33 = vector.broadcast %cst_19 : f32 to vector<256x512xf32>
    %34 = arith.maximumf %32, %33 : vector<256x512xf32>
    %35 = arith.truncf %34 : vector<256x512xf32> to vector<256x512xbf16>
    %c0_20 = arith.constant 0 : index
    %c0_21 = arith.constant 0 : index
    %36 = vector.load %arg8[%c0_20, %c0_21] : memref<512x256xbf16, #tpu.memory_space<vmem>>, vector<512x256xbf16>
    %cst_22 = arith.constant dense<0.000000e+00> : vector<256x256xf32>
    %37 = tpu.matmul %35, %36, %cst_22 {dimension_numbers = #tpu.dot_dimension_numbers<[1], [0], [0], [1], [0, 0, 1, 1], [], []>} : vector<256x512xbf16>, vector<512x256xbf16>, vector<256x256xf32> -> vector<256x256xf32>
    %c0_23 = arith.constant 0 : index
    %c0_24 = arith.constant 0 : index
    %38 = vector.load %arg9[%c0_23, %c0_24] : memref<1x256xf32, #tpu.memory_space<vmem>>, vector<1x256xf32>
    %39 = vector.broadcast %38 : vector<1x256xf32> to vector<256x256xf32>
    %40 = arith.addf %37, %39 : vector<256x256xf32>
    %41 = arith.addf %26, %40 : vector<256x256xf32>
    %cst_25 = arith.constant dense<0.000000e+00> : vector<256xf32>
    %42 = vector.multi_reduction <add>, %41, %cst_25 [1] : vector<256x256xf32> to vector<256xf32>
    %43 = vector.shape_cast %42 : vector<256xf32> to vector<256x1xf32>
    %cst_26 = arith.constant 2.560000e+02 : f32
    %44 = vector.broadcast %cst_26 : f32 to vector<256x1xf32>
    %45 = arith.divf %43, %44 : vector<256x1xf32>
    %46 = vector.broadcast %45 : vector<256x1xf32> to vector<256x256xf32>
    %47 = arith.subf %41, %46 : vector<256x256xf32>
    %48 = arith.mulf %47, %47 : vector<256x256xf32>
    %cst_27 = arith.constant dense<0.000000e+00> : vector<256xf32>
    %49 = vector.multi_reduction <add>, %48, %cst_27 [1] : vector<256x256xf32> to vector<256xf32>
    %50 = vector.shape_cast %49 : vector<256xf32> to vector<256x1xf32>
    %cst_28 = arith.constant 2.560000e+02 : f32
    %51 = vector.broadcast %cst_28 : f32 to vector<256x1xf32>
    %52 = arith.divf %50, %51 : vector<256x1xf32>
    %cst_29 = arith.constant 9.99999974E-6 : f32
    %53 = vector.broadcast %cst_29 : f32 to vector<256x1xf32>
    %54 = arith.addf %52, %53 : vector<256x1xf32>
    %55 = math.rsqrt %54 : vector<256x1xf32>
    %56 = vector.broadcast %55 : vector<256x1xf32> to vector<256x256xf32>
    %57 = arith.mulf %47, %56 : vector<256x256xf32>
    %c0_30 = arith.constant 0 : index
    %c0_31 = arith.constant 0 : index
    %58 = vector.load %arg10[%c0_30, %c0_31] : memref<1x256xf32, #tpu.memory_space<vmem>>, vector<1x256xf32>
    %59 = vector.broadcast %58 : vector<1x256xf32> to vector<256x256xf32>
    %60 = arith.mulf %57, %59 : vector<256x256xf32>
    %c0_32 = arith.constant 0 : index
    %c0_33 = arith.constant 0 : index
    %61 = vector.load %arg11[%c0_32, %c0_33] : memref<1x256xf32, #tpu.memory_space<vmem>>, vector<1x256xf32>
    %62 = vector.broadcast %61 : vector<1x256xf32> to vector<256x256xf32>
    %63 = arith.addf %60, %62 : vector<256x256xf32>
    %c0_34 = arith.constant 0 : index
    %c0_35 = arith.constant 0 : index
    %64 = vector.load %arg12[%c0_34, %c0_35] : memref<256x256xf32, #tpu.memory_space<vmem>>, vector<256x256xf32>
    tpu.vector_store %arg12[%c0_34, %c0_35], %63 {strides = array<i32>} : memref<256x256xf32, #tpu.memory_space<vmem>>, vector<256x256xf32>,
    return
  }
  func.func @transform_0(%arg0: i32) -> (i32, i32) {
    %c0_i32 = arith.constant 0 : i32
    %c0_i32_0 = arith.constant 0 : i32
    return %arg0, %c0_i32 : i32, i32
  }
  func.func @transform_1(%arg0: i32) -> (i32, i32) {
    %c0_i32 = arith.constant 0 : i32
    %c0_i32_0 = arith.constant 0 : i32
    %c0_i32_1 = arith.constant 0 : i32
    return %c0_i32, %c0_i32_0 : i32, i32
  }
  func.func @transform_2(%arg0: i32) -> (i32, i32) {
    %c0_i32 = arith.constant 0 : i32
    %c0_i32_0 = arith.constant 0 : i32
    return %arg0, %c0_i32 : i32, i32
  }
  func.func @transform_3(%arg0: i32) -> (i32, i32) {
    %c0_i32 = arith.constant 0 : i32
    %c0_i32_0 = arith.constant 0 : i32
    %c0_i32_1 = arith.constant 0 : i32
    return %c0_i32, %c0_i32_0 : i32, i32
  }
  func.func @transform_4(%arg0: i32) -> (i32, i32) {
    %c0_i32 = arith.constant 0 : i32
    %c0_i32_0 = arith.constant 0 : i32
    %c0_i32_1 = arith.constant 0 : i32
    return %c0_i32, %c0_i32_0 : i32, i32
  }
  func.func @transform_5(%arg0: i32) -> (i32, i32) {
    %c0_i32 = arith.constant 0 : i32
    %c0_i32_0 = arith.constant 0 : i32
    %c0_i32_1 = arith.constant 0 : i32
    return %c0_i32, %c0_i32_0 : i32, i32
  }
  func.func @transform_6(%arg0: i32) -> (i32, i32) {
    %c0_i32 = arith.constant 0 : i32
    %c0_i32_0 = arith.constant 0 : i32
    %c0_i32_1 = arith.constant 0 : i32
    return %c0_i32, %c0_i32_0 : i32, i32
  }
  func.func @transform_7(%arg0: i32) -> (i32, i32) {
    %c0_i32 = arith.constant 0 : i32
    %c0_i32_0 = arith.constant 0 : i32
    %c0_i32_1 = arith.constant 0 : i32
    return %c0_i32, %c0_i32_0 : i32, i32
  }
  func.func @transform_8(%arg0: i32) -> (i32, i32) {
    %c0_i32 = arith.constant 0 : i32
    %c0_i32_0 = arith.constant 0 : i32
    %c0_i32_1 = arith.constant 0 : i32
    return %c0_i32, %c0_i32_0 : i32, i32
  }
  func.func @transform_9(%arg0: i32) -> (i32, i32) {
    %c0_i32 = arith.constant 0 : i32
    %c0_i32_0 = arith.constant 0 : i32
    %c0_i32_1 = arith.constant 0 : i32
    return %c0_i32, %c0_i32_0 : i32, i32
  }
  func.func @transform_10(%arg0: i32) -> (i32, i32) {
    %c0_i32 = arith.constant 0 : i32
    %c0_i32_0 = arith.constant 0 : i32
    %c0_i32_1 = arith.constant 0 : i32
    return %c0_i32, %c0_i32_0 : i32, i32
  }
  func.func @transform_11(%arg0: i32) -> (i32, i32) {
    %c0_i32 = arith.constant 0 : i32
    %c0_i32_0 = arith.constant 0 : i32
    return %arg0, %c0_i32 : i32, i32
  }
}

</mosaic_0001>

<llo_original>
// kernel: decoder_layer_forward.5
$region0: #{decoder_layer_forward.5}
  #allocation0 [shape = 'u32[]', space=smem, size = 0x4, offset = 0x4, fixed_abs, tag = 'smem constant byte address 0x4 - core index']
  #allocation1 [shape = 'u32[144,128]{1,0:T(1,128)}', space=vmem, size = 0x12000, scoped, tag = 'internal scratch']
  #allocation2 [shape = 'f32[128,256]{1,0:T(8,128)}', space=vmem, size = 0x20000, scoped, tag = 'scratch operand']
  %s0 = inlined_call_operand.hbm [shape: bf16[128,256], index: 0, kind: input, shape index: {}]
  %s1 = inlined_call_operand.hbm [shape: bf16[256,256], index: 1, kind: input, shape index: {}]
  %s2 = inlined_call_operand.hbm [shape: bf16[128,256], index: 2, kind: output, shape index: {}]
  %s3 = sld [smem:[#allocation0]]
  $region34: #{decoder_layer_forward.5} parent=0
    _
  %s5 = ssub.s32 1, %s3
  %s6 = scalar_select 0, %s5, %s3
  $region1: #{decoder_layer_forward.5} parent=0
    #allocation3 [shape = 'u8[65536]{0}', space=vmem, size = 0x10000, scoped, tag = 'input window, operand 0, single buffered']
    #allocation4 [shape = 's32[1]{0}', space=sflag, size = 0x4, scoped, tag = 'scoped memory for decoder_layer_forward.5']
    #allocation5 [shape = 's32[1]{0}', space=sflag, size = 0x4, scoped, tag = 'scoped memory for decoder_layer_forward.5']
    #allocation6 [shape = 'u8[131072]{0}', space=vmem, size = 0x20000, scoped, tag = 'input window, operand 1, single buffered']
    #allocation7 [shape = 's32[1]{0}', space=sflag, size = 0x4, scoped, tag = 'scoped memory for decoder_layer_forward.5']
    #allocation8 [shape = 'u8[65536]{0}', space=vmem, size = 0x10000, scoped, tag = 'output window, operand 0, single buffered']
    %7 = vsyncpa [#allocation4], 0
    %8 = vsyncpa [#allocation7], 0
    %9 = vsyncpa [#allocation5], 0
    // Predicated region
    $region2: #{decoder_layer_forward.5} parent=1 // pred_check
      _
    $region3: #{decoder_layer_forward.5} parent=1 // pred_check_branch
      %11 = sbr.rel (0) target = $region5
    $region4: #{decoder_layer_forward.5} parent=1 // pred_region
      %s13 = ssub.s32 2048, 2048
      %14 = vsyncadd [#allocation4], %s13
      %s15 = sshll.u32 [#allocation3], 4
      %s16 = int_to_ptr.vmem [resolvable:$true] %s15
      %21 = dma.hbm_to_vmem [thread:$0]  %s0, 2048, %s16, [#allocation4], 128, 128, 8
    $region5: #{decoder_layer_forward.5} parent=1 // pred_fallthru
      _
    // Predicated region
    $region6: #{decoder_layer_forward.5} parent=1 // pred_check
      _
    $region7: #{decoder_layer_forward.5} parent=1 // pred_check_branch
      %23 = sbr.rel (0) target = $region9
    $region8: #{decoder_layer_forward.5} parent=1 // pred_region
      %s25 = ssub.s32 4096, 4096
      %26 = vsyncadd [#allocation7], %s25
      %s27 = sshll.u32 [#allocation6], 4
      %s28 = int_to_ptr.vmem [resolvable:$true] %s27
      %33 = dma.hbm_to_vmem [thread:$0]  %s1, 4096, %s28, [#allocation7], 128, 128, 8
    $region9: #{decoder_layer_forward.5} parent=1 // pred_fallthru
      _
    // Predicated region
    $region10: #{decoder_layer_forward.5} parent=1 // pred_check
      _
    $region11: #{decoder_layer_forward.5} parent=1 // pred_check_branch
      %35 = sbr.rel (0) target = $region13
    $region12: #{decoder_layer_forward.5} parent=1 // pred_region
      %36 = dma.done [#allocation4], 2048
    $region13: #{decoder_layer_forward.5} parent=1 // pred_fallthru
      _
    // Predicated region
    $region14: #{decoder_layer_forward.5} parent=1 // pred_check
      _
    $region15: #{decoder_layer_forward.5} parent=1 // pred_check_branch
      %38 = sbr.rel (0) target = $region17
    $region16: #{decoder_layer_forward.5} parent=1 // pred_region
      %39 = dma.done [#allocation7], 4096
    $region17: #{decoder_layer_forward.5} parent=1 // pred_fallthru
      _
    %p40 = scmp.eq.s32.totalorder 0, 0
    // Predicated region
    $region18: #{decoder_layer_forward.5} parent=1 // pred_check
      %p41 = pneg %p40
    $region19: #{decoder_layer_forward.5} parent=1 // pred_check_branch
      %43 = sbr.rel (%p41) target = $region21
    $region20: #{decoder_layer_forward.5} parent=1 // pred_region
      %44 = vst [vmem:[#allocation2] sm:$0xff] 0.0
      %45 = vst [vmem:[#allocation2 + $0x8] sm:$0xff] 0.0
      %46 = vst [vmem:[#allocation2 + $0x10] sm:$0xff] 0.0
      %47 = vst [vmem:[#allocation2 + $0x18] sm:$0xff] 0.0
      %48 = vst [vmem:[#allocation2 + $0x20] sm:$0xff] 0.0
      %49 = vst [vmem:[#allocation2 + $0x28] sm:$0xff] 0.0
      %50 = vst [vmem:[#allocation2 + $0x30] sm:$0xff] 0.0
      %51 = vst [vmem:[#allocation2 + $0x38] sm:$0xff] 0.0
      %52 = vst [vmem:[#allocation2 + $0x40] sm:$0xff] 0.0
      %53 = vst [vmem:[#allocation2 + $0x48] sm:$0xff] 0.0
      %54 = vst [vmem:[#allocation2 + $0x50] sm:$0xff] 0.0
      %55 = vst [vmem:[#allocation2 + $0x58] sm:$0xff] 0.0
      %56 = vst [vmem:[#allocation2 + $0x60] sm:$0xff] 0.0
      %57 = vst [vmem:[#allocation2 + $0x68] sm:$0xff] 0.0
      %58 = vst [vmem:[#allocation2 + $0x70] sm:$0xff] 0.0
      %59 = vst [vmem:[#allocation2 + $0x78] sm:$0xff] 0.0
      %60 = vst [vmem:[#allocation2 + $0x80] sm:$0xff] 0.0
      %61 = vst [vmem:[#allocation2 + $0x88] sm:$0xff] 0.0
      %62 = vst [vmem:[#allocation2 + $0x90] sm:$0xff] 0.0
      %63 = vst [vmem:[#allocation2 + $0x98] sm:$0xff] 0.0
      %64 = vst [vmem:[#allocation2 + $0xa0] sm:$0xff] 0.0
      %65 = vst [vmem:[#allocation2 + $0xa8] sm:$0xff] 0.0
      %66 = vst [vmem:[#allocation2 + $0xb0] sm:$0xff] 0.0
      %67 = vst [vmem:[#allocation2 + $0xb8] sm:$0xff] 0.0
      %68 = vst [vmem:[#allocation2 + $0xc0] sm:$0xff] 0.0
      %69 = vst [vmem:[#allocation2 + $0xc8] sm:$0xff] 0.0
      %70 = vst [vmem:[#allocation2 + $0xd0] sm:$0xff] 0.0
      %71 = vst [vmem:[#allocation2 + $0xd8] sm:$0xff] 0.0
      %72 = vst [vmem:[#allocation2 + $0xe0] sm:$0xff] 0.0
      %73 = vst [vmem:[#allocation2 + $0xe8] sm:$0xff] 0.0
      %74 = vst [vmem:[#allocation2 + $0xf0] sm:$0xff] 0.0
      %75 = vst [vmem:[#allocation2 + $0xf8] sm:$0xff] 0.0
    $region21: #{decoder_layer_forward.5} parent=1 // pred_fallthru
      _
    %v76 = vld [vmem:[#allocation2] sm:$0xff]
    %v77 = vld [vmem:[#allocation2 + $0x8] sm:$0xff]
    %v78 = vld [vmem:[#allocation2 + $0x10] sm:$0xff]
    %v79 = vld [vmem:[#allocation2 + $0x18] sm:$0xff]
    %v80 = vld [vmem:[#allocation2 + $0x20] sm:$0xff]
    %v81 = vld [vmem:[#allocation2 + $0x28] sm:$0xff]
    %v82 = vld [vmem:[#allocation2 + $0x30] sm:$0xff]
    %v83 = vld [vmem:[#allocation2 + $0x38] sm:$0xff]
    %v84 = vld [vmem:[#allocation2 + $0x40] sm:$0xff]
    %v85 = vld [vmem:[#allocation2 + $0x48] sm:$0xff]
    %v86 = vld [vmem:[#allocation2 + $0x50] sm:$0xff]
    %v87 = vld [vmem:[#allocation2 + $0x58] sm:$0xff]
    %v88 = vld [vmem:[#allocation2 + $0x60] sm:$0xff]
    %v89 = vld [vmem:[#allocation2 + $0x68] sm:$0xff]
    %v90 = vld [vmem:[#allocation2 + $0x70] sm:$0xff]
    %v91 = vld [vmem:[#allocation2 + $0x78] sm:$0xff]
    %v92 = vld [vmem:[#allocation2 + $0x80] sm:$0xff]
    %v93 = vld [vmem:[#allocation2 + $0x88] sm:$0xff]
    %v94 = vld [vmem:[#allocation2 + $0x90] sm:$0xff]
    %v95 = vld [vmem:[#allocation2 + $0x98] sm:$0xff]
    %v96 = vld [vmem:[#allocation2 + $0xa0] sm:$0xff]
    %v97 = vld [vmem:[#allocation2 + $0xa8] sm:$0xff]
    %v98 = vld [vmem:[#allocation2 + $0xb0] sm:$0xff]
    %v99 = vld [vmem:[#allocation2 + $0xb8] sm:$0xff]
    %v100 = vld [vmem:[#allocation2 + $0xc0] sm:$0xff]
    %v101 = vld [vmem:[#allocation2 + $0xc8] sm:$0xff]
    %v102 = vld [vmem:[#allocation2 + $0xd0] sm:$0xff]
    %v103 = vld [vmem:[#allocation2 + $0xd8] sm:$0xff]
    %v104 = vld [vmem:[#allocation2 + $0xe0] sm:$0xff]
    %v105 = vld [vmem:[#allocation2 + $0xe8] sm:$0xff]
    %v106 = vld [vmem:[#allocation2 + $0xf0] sm:$0xff]
    %v107 = vld [vmem:[#allocation2 + $0xf8] sm:$0xff]
    %v108 = vld [vmem:[#allocation3] sm:$0xff]
    %v109 = vld [vmem:[#allocation3 + $0x8] sm:$0xff]
    %v110 = vld [vmem:[#allocation3 + $0x10] sm:$0xff]
    %v111 = vld [vmem:[#allocation3 + $0x18] sm:$0xff]
    %v112 = vld [vmem:[#allocation3 + $0x20] sm:$0xff]
    %v113 = vld [vmem:[#allocation3 + $0x28] sm:$0xff]
    %v114 = vld [vmem:[#allocation3 + $0x30] sm:$0xff]
    %v115 = vld [vmem:[#allocation3 + $0x38] sm:$0xff]
    %v116 = vld [vmem:[#allocation3 + $0x40] sm:$0xff]
    %v117 = vld [vmem:[#allocation3 + $0x48] sm:$0xff]
    %v118 = vld [vmem:[#allocation3 + $0x50] sm:$0xff]
    %v119 = vld [vmem:[#allocation3 + $0x58] sm:$0xff]
    %v120 = vld [vmem:[#allocation3 + $0x60] sm:$0xff]
    %v121 = vld [vmem:[#allocation3 + $0x68] sm:$0xff]
    %v122 = vld [vmem:[#allocation3 + $0x70] sm:$0xff]
    %v123 = vld [vmem:[#allocation3 + $0x78] sm:$0xff]
    %v124 = vld [vmem:[#allocation6] sm:$0xff]
    %v125 = vld [vmem:[#allocation6 + $0x8] sm:$0xff]
    %v126 = vld [vmem:[#allocation6 + $0x10] sm:$0xff]
    %v127 = vld [vmem:[#allocation6 + $0x18] sm:$0xff]
    %v128 = vld [vmem:[#allocation6 + $0x20] sm:$0xff]
    %v129 = vld [vmem:[#allocation6 + $0x28] sm:$0xff]
    %v130 = vld [vmem:[#allocation6 + $0x30] sm:$0xff]
    %v131 = vld [vmem:[#allocation6 + $0x38] sm:$0xff]
    %v132 = vld [vmem:[#allocation6 + $0x40] sm:$0xff]
    %v133 = vld [vmem:[#allocation6 + $0x48] sm:$0xff]
    %v134 = vld [vmem:[#allocation6 + $0x50] sm:$0xff]
    %v135 = vld [vmem:[#allocation6 + $0x58] sm:$0xff]
    %v136 = vld [vmem:[#allocation6 + $0x60] sm:$0xff]
    %v137 = vld [vmem:[#allocation6 + $0x68] sm:$0xff]
    %v138 = vld [vmem:[#allocation6 + $0x70] sm:$0xff]
    %v139 = vld [vmem:[#allocation6 + $0x78] sm:$0xff]
    %v140 = vld [vmem:[#allocation6 + $0x80] sm:$0xff]
    %v141 = vld [vmem:[#allocation6 + $0x88] sm:$0xff]
    %v142 = vld [vmem:[#allocation6 + $0x90] sm:$0xff]
    %v143 = vld [vmem:[#allocation6 + $0x98] sm:$0xff]
    %v144 = vld [vmem:[#allocation6 + $0xa0] sm:$0xff]
    %v145 = vld [vmem:[#allocation6 + $0xa8] sm:$0xff]
    %v146 = vld [vmem:[#allocation6 + $0xb0] sm:$0xff]
    %v147 = vld [vmem:[#allocation6 + $0xb8] sm:$0xff]
    %v148 = vld [vmem:[#allocation6 + $0xc0] sm:$0xff]
    %v149 = vld [vmem:[#allocation6 + $0xc8] sm:$0xff]
    %v150 = vld [vmem:[#allocation6 + $0xd0] sm:$0xff]
    %v151 = vld [vmem:[#allocation6 + $0xd8] sm:$0xff]
    %v152 = vld [vmem:[#allocation6 + $0xe0] sm:$0xff]
    %v153 = vld [vmem:[#allocation6 + $0xe8] sm:$0xff]
    %v154 = vld [vmem:[#allocation6 + $0xf0] sm:$0xff]
    %v155 = vld [vmem:[#allocation6 + $0xf8] sm:$0xff]
    %v172 = vunpack.c.l.b16 %v108
    %v173 = vunpack.c.h.b16 %v108
    %v174 = vunpack.c.l.b16 %v109
    %v175 = vunpack.c.h.b16 %v109
    %v176 = vunpack.c.l.b16 %v110
    %v177 = vunpack.c.h.b16 %v110
    %v178 = vunpack.c.l.b16 %v111
    %v179 = vunpack.c.h.b16 %v111
    %v180 = vunpack.c.l.b16 %v112
    %v181 = vunpack.c.h.b16 %v112
    %v182 = vunpack.c.l.b16 %v113
    %v183 = vunpack.c.h.b16 %v113
    %v184 = vunpack.c.l.b16 %v114
    %v185 = vunpack.c.h.b16 %v114
    %v186 = vunpack.c.l.b16 %v115
    %v187 = vunpack.c.h.b16 %v115
    %v188 = vunpack.c.l.b16 %v116
    %v189 = vunpack.c.h.b16 %v116
    %v190 = vunpack.c.l.b16 %v117
    %v191 = vunpack.c.h.b16 %v117
    %v192 = vunpack.c.l.b16 %v118
    %v193 = vunpack.c.h.b16 %v118
    %v194 = vunpack.c.l.b16 %v119
    %v195 = vunpack.c.h.b16 %v119
    %v196 = vunpack.c.l.b16 %v120
    %v197 = vunpack.c.h.b16 %v120
    %v198 = vunpack.c.l.b16 %v121
    %v199 = vunpack.c.h.b16 %v121
    %v200 = vunpack.c.l.b16 %v122
    %v201 = vunpack.c.h.b16 %v122
    %v202 = vunpack.c.l.b16 %v123
    %v203 = vunpack.c.h.b16 %v123
    %v204 = vpack.c.b16 %v174, %v172
    %v205 = vpack.c.b16 %v175, %v173
    %v206 = vpack.c.b16 %v178, %v176
    %v207 = vpack.c.b16 %v179, %v177
    %v208 = vpack.c.b16 %v182, %v180
    %v209 = vpack.c.b16 %v183, %v181
    %v210 = vpack.c.b16 %v186, %v184
    %v211 = vpack.c.b16 %v187, %v185
    %v212 = vpack.c.b16 %v190, %v188
    %v213 = vpack.c.b16 %v191, %v189
    %v214 = vpack.c.b16 %v194, %v192
    %v215 = vpack.c.b16 %v195, %v193
    %v216 = vpack.c.b16 %v198, %v196
    %v217 = vpack.c.b16 %v199, %v197
    %v218 = vpack.c.b16 %v202, %v200
    %v219 = vpack.c.b16 %v203, %v201
    %v268 = vunpack.c.l.b16 %v124
    %v269 = vunpack.c.h.b16 %v124
    %v270 = vunpack.c.l.b16 %v125
    %v271 = vunpack.c.h.b16 %v125
    %v272 = vunpack.c.l.b16 %v126
    %v273 = vunpack.c.h.b16 %v126
    %v274 = vunpack.c.l.b16 %v127
    %v275 = vunpack.c.h.b16 %v127
    %v276 = vunpack.c.l.b16 %v128
    %v277 = vunpack.c.h.b16 %v128
    %v278 = vunpack.c.l.b16 %v129
    %v279 = vunpack.c.h.b16 %v129
    %v280 = vunpack.c.l.b16 %v130
    %v281 = vunpack.c.h.b16 %v130
    %v282 = vunpack.c.l.b16 %v131
    %v283 = vunpack.c.h.b16 %v131
    %v284 = vunpack.c.l.b16 %v132
    %v285 = vunpack.c.h.b16 %v132
    %v286 = vunpack.c.l.b16 %v133
    %v287 = vunpack.c.h.b16 %v133
    %v288 = vunpack.c.l.b16 %v134
    %v289 = vunpack.c.h.b16 %v134
    %v290 = vunpack.c.l.b16 %v135
    %v291 = vunpack.c.h.b16 %v135
    %v292 = vunpack.c.l.b16 %v136
    %v293 = vunpack.c.h.b16 %v136
    %v294 = vunpack.c.l.b16 %v137
    %v295 = vunpack.c.h.b16 %v137
    %v296 = vunpack.c.l.b16 %v138
    %v297 = vunpack.c.h.b16 %v138
    %v298 = vunpack.c.l.b16 %v139
    %v299 = vunpack.c.h.b16 %v139
    %v300 = vunpack.c.l.b16 %v140
    %v301 = vunpack.c.h.b16 %v140
    %v302 = vunpack.c.l.b16 %v141
    %v303 = vunpack.c.h.b16 %v141
    %v304 = vunpack.c.l.b16 %v142
    %v305 = vunpack.c.h.b16 %v142
    %v306 = vunpack.c.l.b16 %v143
    %v307 = vunpack.c.h.b16 %v143
    %v308 = vunpack.c.l.b16 %v144
    %v309 = vunpack.c.h.b16 %v144
    %v310 = vunpack.c.l.b16 %v145
    %v311 = vunpack.c.h.b16 %v145
    %v312 = vunpack.c.l.b16 %v146
    %v313 = vunpack.c.h.b16 %v146
    %v314 = vunpack.c.l.b16 %v147
    %v315 = vunpack.c.h.b16 %v147
    %v316 = vunpack.c.l.b16 %v148
    %v317 = vunpack.c.h.b16 %v148
    %v318 = vunpack.c.l.b16 %v149
    %v319 = vunpack.c.h.b16 %v149
    %v320 = vunpack.c.l.b16 %v150
    %v321 = vunpack.c.h.b16 %v150
    %v322 = vunpack.c.l.b16 %v151
    %v323 = vunpack.c.h.b16 %v151
    %v324 = vunpack.c.l.b16 %v152
    %v325 = vunpack.c.h.b16 %v152
    %v326 = vunpack.c.l.b16 %v153
    %v327 = vunpack.c.h.b16 %v153
    %v328 = vunpack.c.l.b16 %v154
    %v329 = vunpack.c.h.b16 %v154
    %v330 = vunpack.c.l.b16 %v155
    %v331 = vunpack.c.h.b16 %v155
    %v332 = vpack.c.b16 %v270, %v268
    %v333 = vpack.c.b16 %v271, %v269
    %v334 = vpack.c.b16 %v274, %v272
    %v335 = vpack.c.b16 %v275, %v273
    %v336 = vpack.c.b16 %v278, %v276
    %v337 = vpack.c.b16 %v279, %v277
    %v338 = vpack.c.b16 %v282, %v280
    %v339 = vpack.c.b16 %v283, %v281
    %v340 = vpack.c.b16 %v286, %v284
    %v341 = vpack.c.b16 %v287, %v285
    %v342 = vpack.c.b16 %v290, %v288
    %v343 = vpack.c.b16 %v291, %v289
    %v344 = vpack.c.b16 %v294, %v292
    %v345 = vpack.c.b16 %v295, %v293
    %v346 = vpack.c.b16 %v298, %v296
    %v347 = vpack.c.b16 %v299, %v297
    %v348 = vpack.c.b16 %v302, %v300
    %v349 = vpack.c.b16 %v303, %v301
    %v350 = vpack.c.b16 %v306, %v304
    %v351 = vpack.c.b16 %v307, %v305
    %v352 = vpack.c.b16 %v310, %v308
    %v353 = vpack.c.b16 %v311, %v309
    %v354 = vpack.c.b16 %v314, %v312
    %v355 = vpack.c.b16 %v315, %v313
    %v356 = vpack.c.b16 %v318, %v316
    %v357 = vpack.c.b16 %v319, %v317
    %v358 = vpack.c.b16 %v322, %v320
    %v359 = vpack.c.b16 %v323, %v321
    %v360 = vpack.c.b16 %v326, %v324
    %v361 = vpack.c.b16 %v327, %v325
    %v362 = vpack.c.b16 %v330, %v328
    %v363 = vpack.c.b16 %v331, %v329
    %396 = vmatprep.subr.bf16.mxu0 %v333
    %397 = vmatpush1.bf16.msra.mxu0 %v332
    %398 = vmatprep.subr.bf16.mxu0 %v335
    %399 = vmatpush1.bf16.msra.mxu0 %v334
    %400 = vmatprep.subr.bf16.mxu0 %v337
    %401 = vmatpush1.bf16.msra.mxu0 %v336
    %402 = vmatprep.subr.bf16.mxu0 %v339
    %403 = vmatpush1.bf16.msra.mxu0 %v338
    %404 = vmatprep.subr.bf16.mxu0 %v341
    %405 = vmatpush1.bf16.msra.mxu0 %v340
    %406 = vmatprep.subr.bf16.mxu0 %v343
    %407 = vmatpush1.bf16.msra.mxu0 %v342
    %408 = vmatprep.subr.bf16.mxu0 %v345
    %409 = vmatpush1.bf16.msra.mxu0 %v344
    %410 = vmatprep.subr.bf16.mxu0 %v347
    %411 = vmatpush1.bf16.msra.mxu0 %v346
    %412 = vmatprep.subr.bf16.mxu0 %v349
    %413 = vmatpush1.bf16.msra.mxu0 %v348
    %414 = vmatprep.subr.bf16.mxu0 %v351
    %415 = vmatpush1.bf16.msra.mxu0 %v350
    %416 = vmatprep.subr.bf16.mxu0 %v353
    %417 = vmatpush1.bf16.msra.mxu0 %v352
    %418 = vmatprep.subr.bf16.mxu0 %v355
    %419 = vmatpush1.bf16.msra.mxu0 %v354
    %420 = vmatprep.subr.bf16.mxu0 %v357
    %421 = vmatpush1.bf16.msra.mxu0 %v356
    %422 = vmatprep.subr.bf16.mxu0 %v359
    %423 = vmatpush1.bf16.msra.mxu0 %v358
    %424 = vmatprep.subr.bf16.mxu0 %v361
    %425 = vmatpush1.bf16.msra.mxu0 %v360
    %426 = vmatprep.subr.bf16.mxu0 %v363
    %427 = vmatpush1.bf16.msra.mxu0 %v362
    %428 = vmatprep.mubr.bf16.mxu0 %v205
    %429 = vmatmul.mubr.bf16.gmra.mrb[0].mxu0 %v204
    %v430 = vpop.f32.mrb[0].mxu0
    %v431 = vadd.f32 0.0, %v430
    %v432 = vpop.f32.mrb[0].mxu0
    %v433 = vadd.f32 0.0, %v432
    %v434 = vpop.f32.mrb[0].mxu0
    %v435 = vadd.f32 0.0, %v434
    %v436 = vpop.f32.mrb[0].mxu0
    %v437 = vadd.f32 0.0, %v436
    %438 = vmatprep.mubr.bf16.mxu0 %v207
    %439 = vmatmul.mubr.bf16.gmra.mrb[0].mxu0 %v206
    %v440 = vpop.f32.mrb[0].mxu0
    %v441 = vadd.f32 0.0, %v440
    %v442 = vpop.f32.mrb[0].mxu0
    %v443 = vadd.f32 0.0, %v442
    %v444 = vpop.f32.mrb[0].mxu0
    %v445 = vadd.f32 0.0, %v444
    %v446 = vpop.f32.mrb[0].mxu0
    %v447 = vadd.f32 0.0, %v446
    %448 = vmatprep.mubr.bf16.mxu0 %v209
    %449 = vmatmul.mubr.bf16.gmra.mrb[0].mxu0 %v208
    %v450 = vpop.f32.mrb[0].mxu0
    %v451 = vadd.f32 0.0, %v450
    %v452 = vpop.f32.mrb[0].mxu0
    %v453 = vadd.f32 0.0, %v452
    %v454 = vpop.f32.mrb[0].mxu0
    %v455 = vadd.f32 0.0, %v454
    %v456 = vpop.f32.mrb[0].mxu0
    %v457 = vadd.f32 0.0, %v456
    %458 = vmatprep.mubr.bf16.mxu0 %v211
    %459 = vmatmul.mubr.bf16.gmra.mrb[0].mxu0 %v210
    %v460 = vpop.f32.mrb[0].mxu0
    %v461 = vadd.f32 0.0, %v460
    %v462 = vpop.f32.mrb[0].mxu0
    %v463 = vadd.f32 0.0, %v462
    %v464 = vpop.f32.mrb[0].mxu0
    %v465 = vadd.f32 0.0, %v464
    %v466 = vpop.f32.mrb[0].mxu0
    %v467 = vadd.f32 0.0, %v466
    %468 = vmatprep.mubr.bf16.mxu0 %v213
    %469 = vmatmul.mubr.bf16.gmra.mrb[0].mxu0 %v212
    %v470 = vpop.f32.mrb[0].mxu0
    %v471 = vadd.f32 0.0, %v470
    %v472 = vpop.f32.mrb[0].mxu0
    %v473 = vadd.f32 0.0, %v472
    %v474 = vpop.f32.mrb[0].mxu0
    %v475 = vadd.f32 0.0, %v474
    %v476 = vpop.f32.mrb[0].mxu0
    %v477 = vadd.f32 0.0, %v476
    %478 = vmatprep.mubr.bf16.mxu0 %v215
    %479 = vmatmul.mubr.bf16.gmra.mrb[0].mxu0 %v214
    %v480 = vpop.f32.mrb[0].mxu0
    %v481 = vadd.f32 0.0, %v480
    %v482 = vpop.f32.mrb[0].mxu0
    %v483 = vadd.f32 0.0, %v482
    %v484 = vpop.f32.mrb[0].mxu0
    %v485 = vadd.f32 0.0, %v484
    %v486 = vpop.f32.mrb[0].mxu0
    %v487 = vadd.f32 0.0, %v486
    %488 = vmatprep.mubr.bf16.mxu0 %v217
    %489 = vmatmul.mubr.bf16.gmra.mrb[0].mxu0 %v216
    %v490 = vpop.f32.mrb[0].mxu0
    %v491 = vadd.f32 0.0, %v490
    %v492 = vpop.f32.mrb[0].mxu0
    %v493 = vadd.f32 0.0, %v492
    %v494 = vpop.f32.mrb[0].mxu0
    %v495 = vadd.f32 0.0, %v494
    %v496 = vpop.f32.mrb[0].mxu0
    %v497 = vadd.f32 0.0, %v496
    %498 = vmatprep.mubr.bf16.mxu0 %v219
    %499 = vmatmul.mubr.bf16.gmra.mrb[0].mxu0 %v218
    %v500 = vpop.f32.mrb[0].mxu0
    %v501 = vadd.f32 0.0, %v500
    %v502 = vpop.f32.mrb[0].mxu0
    %v503 = vadd.f32 0.0, %v502
    %v504 = vpop.f32.mrb[0].mxu0
    %v505 = vadd.f32 0.0, %v504
    %v506 = vpop.f32.mrb[0].mxu0
    %v507 = vadd.f32 0.0, %v506
    %508 = vdwg.mxu0
    %v509 = vadd.f32 %v76, %v431
    %v510 = vadd.f32 %v77, %v433
    %v511 = vadd.f32 %v78, %v435
    %v512 = vadd.f32 %v79, %v437
    %v513 = vadd.f32 %v80, %v441
    %v514 = vadd.f32 %v81, %v443
    %v515 = vadd.f32 %v82, %v445
    %v516 = vadd.f32 %v83, %v447
    %v517 = vadd.f32 %v84, %v451
    %v518 = vadd.f32 %v85, %v453
    %v519 = vadd.f32 %v86, %v455
    %v520 = vadd.f32 %v87, %v457
    %v521 = vadd.f32 %v88, %v461
    %v522 = vadd.f32 %v89, %v463
    %v523 = vadd.f32 %v90, %v465
    %v524 = vadd.f32 %v91, %v467
    %v525 = vadd.f32 %v92, %v471
    %v526 = vadd.f32 %v93, %v473
    %v527 = vadd.f32 %v94, %v475
    %v528 = vadd.f32 %v95, %v477
    %v529 = vadd.f32 %v96, %v481
    %v530 = vadd.f32 %v97, %v483
    %v531 = vadd.f32 %v98, %v485
    %v532 = vadd.f32 %v99, %v487
    %v533 = vadd.f32 %v100, %v491
    %v534 = vadd.f32 %v101, %v493
    %v535 = vadd.f32 %v102, %v495
    %v536 = vadd.f32 %v103, %v497
    %v537 = vadd.f32 %v104, %v501
    %v538 = vadd.f32 %v105, %v503
    %v539 = vadd.f32 %v106, %v505
    %v540 = vadd.f32 %v107, %v507
    %541 = vst [vmem:[#allocation2] sm:$0xff] %v509
    %542 = vst [vmem:[#allocation2 + $0x8] sm:$0xff] %v510
    %543 = vst [vmem:[#allocation2 + $0x10] sm:$0xff] %v511
    %544 = vst [vmem:[#allocation2 + $0x18] sm:$0xff] %v512
    %545 = vst [vmem:[#allocation2 + $0x20] sm:$0xff] %v513
    %546 = vst [vmem:[#allocation2 + $0x28] sm:$0xff] %v514
    %547 = vst [vmem:[#allocation2 + $0x30] sm:$0xff] %v515
    %548 = vst [vmem:[#allocation2 + $0x38] sm:$0xff] %v516
    %549 = vst [vmem:[#allocation2 + $0x40] sm:$0xff] %v517
    %550 = vst [vmem:[#allocation2 + $0x48] sm:$0xff] %v518
    %551 = vst [vmem:[#allocation2 + $0x50] sm:$0xff] %v519
    %552 = vst [vmem:[#allocation2 + $0x58] sm:$0xff] %v520
    %553 = vst [vmem:[#allocation2 + $0x60] sm:$0xff] %v521
    %554 = vst [vmem:[#allocation2 + $0x68] sm:$0xff] %v522
    %555 = vst [vmem:[#allocation2 + $0x70] sm:$0xff] %v523
    %556 = vst [vmem:[#allocation2 + $0x78] sm:$0xff] %v524
    %557 = vst [vmem:[#allocation2 + $0x80] sm:$0xff] %v525
    %558 = vst [vmem:[#allocation2 + $0x88] sm:$0xff] %v526
    %559 = vst [vmem:[#allocation2 + $0x90] sm:$0xff] %v527
    %560 = vst [vmem:[#allocation2 + $0x98] sm:$0xff] %v528
    %561 = vst [vmem:[#allocation2 + $0xa0] sm:$0xff] %v529
    %562 = vst [vmem:[#allocation2 + $0xa8] sm:$0xff] %v530
    %563 = vst [vmem:[#allocation2 + $0xb0] sm:$0xff] %v531
    %564 = vst [vmem:[#allocation2 + $0xb8] sm:$0xff] %v532
    %565 = vst [vmem:[#allocation2 + $0xc0] sm:$0xff] %v533
    %566 = vst [vmem:[#allocation2 + $0xc8] sm:$0xff] %v534
    %567 = vst [vmem:[#allocation2 + $0xd0] sm:$0xff] %v535
    %568 = vst [vmem:[#allocation2 + $0xd8] sm:$0xff] %v536
    %569 = vst [vmem:[#allocation2 + $0xe0] sm:$0xff] %v537
    %570 = vst [vmem:[#allocation2 + $0xe8] sm:$0xff] %v538
    %571 = vst [vmem:[#allocation2 + $0xf0] sm:$0xff] %v539
    %572 = vst [vmem:[#allocation2 + $0xf8] sm:$0xff] %v540
    // Predicated region
    $region22: #{decoder_layer_forward.5} parent=1 // pred_check
      %p573 = pneg %p40
    $region23: #{decoder_layer_forward.5} parent=1 // pred_check_branch
      %575 = sbr.rel (%p573) target = $region25
    $region24: #{decoder_layer_forward.5} parent=1 // pred_region
      %v576 = vld [vmem:[#allocation2] sm:$0xff]
      %v577 = vld [vmem:[#allocation2 + $0x8] sm:$0xff]
      %v578 = vld [vmem:[#allocation2 + $0x10] sm:$0xff]
      %v579 = vld [vmem:[#allocation2 + $0x18] sm:$0xff]
      %v580 = vld [vmem:[#allocation2 + $0x20] sm:$0xff]
      %v581 = vld [vmem:[#allocation2 + $0x28] sm:$0xff]
      %v582 = vld [vmem:[#allocation2 + $0x30] sm:$0xff]
      %v583 = vld [vmem:[#allocation2 + $0x38] sm:$0xff]
      %v584 = vld [vmem:[#allocation2 + $0x40] sm:$0xff]
      %v585 = vld [vmem:[#allocation2 + $0x48] sm:$0xff]
      %v586 = vld [vmem:[#allocation2 + $0x50] sm:$0xff]
      %v587 = vld [vmem:[#allocation2 + $0x58] sm:$0xff]
      %v588 = vld [vmem:[#allocation2 + $0x60] sm:$0xff]
      %v589 = vld [vmem:[#allocation2 + $0x68] sm:$0xff]
      %v590 = vld [vmem:[#allocation2 + $0x70] sm:$0xff]
      %v591 = vld [vmem:[#allocation2 + $0x78] sm:$0xff]
      %v592 = vld [vmem:[#allocation2 + $0x80] sm:$0xff]
      %v593 = vld [vmem:[#allocation2 + $0x88] sm:$0xff]
      %v594 = vld [vmem:[#allocation2 + $0x90] sm:$0xff]
      %v595 = vld [vmem:[#allocation2 + $0x98] sm:$0xff]
      %v596 = vld [vmem:[#allocation2 + $0xa0] sm:$0xff]
      %v597 = vld [vmem:[#allocation2 + $0xa8] sm:$0xff]
      %v598 = vld [vmem:[#allocation2 + $0xb0] sm:$0xff]
      %v599 = vld [vmem:[#allocation2 + $0xb8] sm:$0xff]
      %v600 = vld [vmem:[#allocation2 + $0xc0] sm:$0xff]
      %v601 = vld [vmem:[#allocation2 + $0xc8] sm:$0xff]
      %v602 = vld [vmem:[#allocation2 + $0xd0] sm:$0xff]
      %v603 = vld [vmem:[#allocation2 + $0xd8] sm:$0xff]
      %v604 = vld [vmem:[#allocation2 + $0xe0] sm:$0xff]
      %v605 = vld [vmem:[#allocation2 + $0xe8] sm:$0xff]
      %v606 = vld [vmem:[#allocation2 + $0xf0] sm:$0xff]
      %v607 = vld [vmem:[#allocation2 + $0xf8] sm:$0xff]
      %v608 = vpack.c.bf16 %v578, %v576
      %v609 = vpack.c.bf16 %v579, %v577
      %v610 = vpack.c.bf16 %v582, %v580
      %v611 = vpack.c.bf16 %v583, %v581
      %v612 = vpack.c.bf16 %v586, %v584
      %v613 = vpack.c.bf16 %v587, %v585
      %v614 = vpack.c.bf16 %v590, %v588
      %v615 = vpack.c.bf16 %v591, %v589
      %v616 = vpack.c.bf16 %v594, %v592
      %v617 = vpack.c.bf16 %v595, %v593
      %v618 = vpack.c.bf16 %v598, %v596
      %v619 = vpack.c.bf16 %v599, %v597
      %v620 = vpack.c.bf16 %v602, %v600
      %v621 = vpack.c.bf16 %v603, %v601
      %v622 = vpack.c.bf16 %v606, %v604
      %v623 = vpack.c.bf16 %v607, %v605
      %v640 = vunpack.c.l.b16 %v608
      %v641 = vunpack.c.l.b16 %v609
      %v642 = vunpack.c.h.b16 %v608
      %v643 = vunpack.c.h.b16 %v609
      %v644 = vunpack.c.l.b16 %v610
      %v645 = vunpack.c.l.b16 %v611
      %v646 = vunpack.c.h.b16 %v610
      %v647 = vunpack.c.h.b16 %v611
      %v648 = vunpack.c.l.b16 %v612
      %v649 = vunpack.c.l.b16 %v613
      %v650 = vunpack.c.h.b16 %v612
      %v651 = vunpack.c.h.b16 %v613
      %v652 = vunpack.c.l.b16 %v614
      %v653 = vunpack.c.l.b16 %v615
      %v654 = vunpack.c.h.b16 %v614
      %v655 = vunpack.c.h.b16 %v615
      %v656 = vunpack.c.l.b16 %v616
      %v657 = vunpack.c.l.b16 %v617
      %v658 = vunpack.c.h.b16 %v616
      %v659 = vunpack.c.h.b16 %v617
      %v660 = vunpack.c.l.b16 %v618
      %v661 = vunpack.c.l.b16 %v619
      %v662 = vunpack.c.h.b16 %v618
      %v663 = vunpack.c.h.b16 %v619
      %v664 = vunpack.c.l.b16 %v620
      %v665 = vunpack.c.l.b16 %v621
      %v666 = vunpack.c.h.b16 %v620
      %v667 = vunpack.c.h.b16 %v621
      %v668 = vunpack.c.l.b16 %v622
      %v669 = vunpack.c.l.b16 %v623
      %v670 = vunpack.c.h.b16 %v622
      %v671 = vunpack.c.h.b16 %v623
      %v672 = vpack.c.b16 %v641, %v640
      %v673 = vpack.c.b16 %v643, %v642
      %v674 = vpack.c.b16 %v645, %v644
      %v675 = vpack.c.b16 %v647, %v646
      %v676 = vpack.c.b16 %v649, %v648
      %v677 = vpack.c.b16 %v651, %v650
      %v678 = vpack.c.b16 %v653, %v652
      %v679 = vpack.c.b16 %v655, %v654
      %v680 = vpack.c.b16 %v657, %v656
      %v681 = vpack.c.b16 %v659, %v658
      %v682 = vpack.c.b16 %v661, %v660
      %v683 = vpack.c.b16 %v663, %v662
      %v684 = vpack.c.b16 %v665, %v664
      %v685 = vpack.c.b16 %v667, %v666
      %v686 = vpack.c.b16 %v669, %v668
      %v687 = vpack.c.b16 %v671, %v670
      %704 = vst [vmem:[#allocation8] sm:$0xff] %v672
      %705 = vst [vmem:[#allocation8 + $0x8] sm:$0xff] %v673
      %706 = vst [vmem:[#allocation8 + $0x10] sm:$0xff] %v674
      %707 = vst [vmem:[#allocation8 + $0x18] sm:$0xff] %v675
      %708 = vst [vmem:[#allocation8 + $0x20] sm:$0xff] %v676
      %709 = vst [vmem:[#allocation8 + $0x28] sm:$0xff] %v677
      %710 = vst [vmem:[#allocation8 + $0x30] sm:$0xff] %v678
      %711 = vst [vmem:[#allocation8 + $0x38] sm:$0xff] %v679
      %712 = vst [vmem:[#allocation8 + $0x40] sm:$0xff] %v680
      %713 = vst [vmem:[#allocation8 + $0x48] sm:$0xff] %v681
      %714 = vst [vmem:[#allocation8 + $0x50] sm:$0xff] %v682
      %715 = vst [vmem:[#allocation8 + $0x58] sm:$0xff] %v683
      %716 = vst [vmem:[#allocation8 + $0x60] sm:$0xff] %v684
      %717 = vst [vmem:[#allocation8 + $0x68] sm:$0xff] %v685
      %718 = vst [vmem:[#allocation8 + $0x70] sm:$0xff] %v686
      %719 = vst [vmem:[#allocation8 + $0x78] sm:$0xff] %v687
    $region25: #{decoder_layer_forward.5} parent=1 // pred_fallthru
      _
    // Predicated region
    $region26: #{decoder_layer_forward.5} parent=1 // pred_check
      _
    $region27: #{decoder_layer_forward.5} parent=1 // pred_check_branch
      %721 = sbr.rel (0) target = $region29
    $region28: #{decoder_layer_forward.5} parent=1 // pred_region
      %s723 = ssub.s32 2048, 2048
      %724 = vsyncadd [#allocation5], %s723
      %s725 = sshll.u32 [#allocation8], 4
      %s726 = int_to_ptr.vmem [resolvable:$true] %s725
      %731 = dma.vmem_to_hbm [thread:$0]  %s726, 2048, %s2, [#allocation5], 128, 128, 8
    $region29: #{decoder_layer_forward.5} parent=1 // pred_fallthru
      _
    // Predicated region
    $region30: #{decoder_layer_forward.5} parent=1 // pred_check
      _
    $region31: #{decoder_layer_forward.5} parent=1 // pred_check_branch
      %733 = sbr.rel (0) target = $region33
    $region32: #{decoder_layer_forward.5} parent=1 // pred_region
      %734 = dma.done [#allocation5], 2048
    $region33: #{decoder_layer_forward.5} parent=1 // pred_fallthru
      _
    %735 = vsyncpa [#allocation4], 1
    %736 = vsyncpa [#allocation7], 1
    %737 = vsyncpa [#allocation5], 1

// kernel: decoder_layer_forward.6
$region0: #{decoder_layer_forward.6}
  #allocation0 [shape = 'u32[]', space=smem, size = 0x4, offset = 0x4, fixed_abs, tag = 'smem constant byte address 0x4 - core index']
  #allocation1 [shape = 'u32[144,128]{1,0:T(1,128)}', space=vmem, size = 0x12000, scoped, tag = 'internal scratch']
  %s0 = inlined_call_operand.hbm [shape: bf16[2,128,768], index: 0, kind: input, shape index: {}, may-alias: {0,1,2}]
  %s1 = inlined_call_operand.hbm [shape: bf16[2,128,768], index: 1, kind: input, shape index: {}, may-alias: {0,1,2}]
  %s2 = inlined_call_operand.hbm [shape: bf16[2,128,768], index: 2, kind: input, shape index: {}, may-alias: {0,1,2}]
  %s3 = inlined_call_operand.hbm [shape: bf16[128,256], index: 3, kind: input, shape index: {}]
  %s4 = inlined_call_operand.hbm [shape: f32[1,256], index: 4, kind: input, shape index: {}]
  %s5 = inlined_call_operand.hbm [shape: f32[1,256], index: 5, kind: input, shape index: {}]
  %s6 = inlined_call_operand.hbm [shape: bf16[2,128,256], index: 6, kind: output, shape index: {}]
  %s7 = sld [smem:[#allocation0]]
  $region81: #{decoder_layer_forward.6} parent=0
    _
  %s9 = ssub.s32 1, %s7
  %s10 = scalar_select 0, %s9, %s7
  $region1: #{decoder_layer_forward.6} parent=0
    #allocation2 [shape = 'u8[65536]{0}', space=vmem, size = 0x10000, scoped, tag = 'input window, operand 0']
    #allocation3 [shape = 's32[2]{0}', space=sflag, size = 0x8, scoped, tag = 'scoped memory for decoder_layer_forward.6']
    #allocation4 [shape = 's32[2]{0}', space=sflag, size = 0x8, scoped, tag = 'scoped memory for decoder_layer_forward.6']
    #allocation5 [shape = 'u8[65536]{0}', space=vmem, size = 0x10000, scoped, tag = 'input window, operand 1']
    #allocation6 [shape = 's32[2]{0}', space=sflag, size = 0x8, scoped, tag = 'scoped memory for decoder_layer_forward.6']
    #allocation7 [shape = 'u8[65536]{0}', space=vmem, size = 0x10000, scoped, tag = 'input window, operand 2']
    #allocation8 [shape = 'u8[65536]{0}', space=vmem, size = 0x10000, scoped, tag = 'input window, operand 3']
    #allocation9 [shape = 's32[2]{0}', space=sflag, size = 0x8, scoped, tag = 'scoped memory for decoder_layer_forward.6']
    #allocation10 [shape = 'u8[1024]{0}', space=vmem, size = 0x400, scoped, tag = 'input window, operand 4']
    #allocation11 [shape = 'u8[1024]{0}', space=vmem, size = 0x400, scoped, tag = 'input window, operand 5']
    #allocation12 [shape = 's32[2]{0}', space=sflag, size = 0x8, scoped, tag = 'scoped memory for decoder_layer_forward.6']
    #allocation13 [shape = 'u8[65536]{0}', space=vmem, size = 0x10000, scoped, tag = 'output window, operand 0']
    %11 = vsyncpa [#allocation3], 0
    %s12 = scalar_lea.sflag [#allocation3], 1
    %13 = vsyncpa %s12, 0
    %14 = vsyncpa [#allocation6], 0
    %s15 = scalar_lea.sflag [#allocation6], 1
    %16 = vsyncpa %s15, 0
    %17 = vsyncpa [#allocation9], 0
    %s18 = scalar_lea.sflag [#allocation9], 1
    %19 = vsyncpa %s18, 0
    %20 = vsyncpa [#allocation12], 0
    %s21 = scalar_lea.sflag [#allocation12], 1
    %22 = vsyncpa %s21, 0
    %23 = vsyncpa [#allocation4], 0
    %s24 = scalar_lea.sflag [#allocation4], 1
    %25 = vsyncpa %s24, 0
    loop: start=0, step=1, limit=6
    $region2: #{decoder_layer_forward.6} parent=1 // loop_pre_header
      _
    $region3: #{decoder_layer_forward.6} parent=1 // loop_header
      %s27 = sphi 0, %s31
      %p28 = scmp.ge.s32.totalorder %s27, 6
      %s34 = sphi 0, %s46
      %s35 = sphi 0, %s42
      %s36 = sphi 0, %s34
      %s37 = sphi 0, %s35
      %s38 = sphi 0, %s36
      %s39 = sphi 0, %s37
      %s51 = sphi 0, %s53
      %s54 = sphi 0, %s51
      %s55 = sphi 0, %s54
      %s71 = sphi 0, %s55
      %s81 = sphi 0, %s83
      %s84 = sphi 0, %s81
      %s85 = sphi 0, %s84
      %s101 = sphi 0, %s85
      %s111 = sphi 0, %s113
      %s114 = sphi 0, %s111
      %s115 = sphi 0, %s114
      %s131 = sphi 0, %s115
      %s137 = sphi 0, %s139
      %s140 = sphi 0, %s137
      %s141 = sphi 0, %s140
      %s157 = sphi 0, %s141
      %s163 = sphi 0, %s165
      %s166 = sphi 0, %s163
      %s167 = sphi 0, %s166
      %s183 = sphi 0, %s167
      %s189 = sphi 0, %s191
      %s192 = sphi 0, %s189
      %s193 = sphi 0, %s192
      %s209 = sphi 0, %s193
      %s217 = sphi 0, %s219
      %s220 = sphi 0, %s217
      %s221 = sphi 0, %s220
      %s237 = sphi 0, %s221
    $region4: #{decoder_layer_forward.6} parent=1 // loop_header_branch
      %30 = sbr.rel (%p28) target = $region8
    $region5: #{decoder_layer_forward.6} parent=1 // loop_body
      %s32 = ssub.s32 %s27, 1
      %s33 = ssub.s32 %s27, 2
      %s40 = sadd.s32 1, %s35
      %p41 = scmp.ge.s32.totalorder %s40, 2
      %s42 = scalar_select %p41, 0, %s40
      %s43 = sadd.s32 1, %s34
      %s44 = scalar_select %p41, %s43, %s34
      %p45 = scmp.ge.s32.totalorder %s44, 2
      %s46 = scalar_select %p45, 0, %s44
      %s47 = ssub.s32 %s34, %s46
      %s48 = ssub.s32 %s35, %s42
      %s49 = sor.u32 %s47, %s48
      %p50 = scmp.eq.s32.totalorder %s49, 0
      %s52 = sadd.s32 %s51, 1
      %s53 = scalar_select %p50, %s51, %s52
      %p56 = pneg %p50
      %p57 = scmp.eq.s32.totalorder %s27, 3
      %p58 = por %p56, %p57
      %p59 = scmp.ne.s32.totalorder %s51, %s54
      %p60 = scmp.eq.s32.totalorder %s27, 0
      %p61 = por %p59, %p60
      %p62 = scmp.ne.s32.totalorder %s51, %s54
      %p63 = scmp.eq.s32.totalorder %s32, 3
      %p64 = por %p62, %p63
      %p65 = scmp.ne.s32.totalorder %s54, %s55
      %p66 = scmp.eq.s32.totalorder %s32, 0
      %p67 = por %p65, %p66
      %p68 = scmp.ne.s32.totalorder %s54, %s55
      %p69 = scmp.eq.s32.totalorder %s33, 3
      %p70 = por %p68, %p69
      %p72 = scmp.ne.s32.totalorder %s55, %s71
      %p73 = scmp.eq.s32.totalorder %s33, 0
      %p74 = por %p72, %p73
      %s75 = sadd.s32 %s35, 2
      %s76 = sadd.s32 %s42, 2
      %s77 = ssub.s32 %s34, %s46
      %s78 = ssub.s32 %s75, %s76
      %s79 = sor.u32 %s77, %s78
      %p80 = scmp.eq.s32.totalorder %s79, 0
      %s82 = sadd.s32 %s81, 1
      %s83 = scalar_select %p80, %s81, %s82
      %p86 = pneg %p80
      %p87 = scmp.eq.s32.totalorder %s27, 3
      %p88 = por %p86, %p87
      %p89 = scmp.ne.s32.totalorder %s81, %s84
      %p90 = scmp.eq.s32.totalorder %s27, 0
      %p91 = por %p89, %p90
      %p92 = scmp.ne.s32.totalorder %s81, %s84
      %p93 = scmp.eq.s32.totalorder %s32, 3
      %p94 = por %p92, %p93
      %p95 = scmp.ne.s32.totalorder %s84, %s85
      %p96 = scmp.eq.s32.totalorder %s32, 0
      %p97 = por %p95, %p96
      %p98 = scmp.ne.s32.totalorder %s84, %s85
      %p99 = scmp.eq.s32.totalorder %s33, 3
      %p100 = por %p98, %p99
      %p102 = scmp.ne.s32.totalorder %s85, %s101
      %p103 = scmp.eq.s32.totalorder %s33, 0
      %p104 = por %p102, %p103
      %s105 = sadd.s32 %s35, 4
      %s106 = sadd.s32 %s42, 4
      %s107 = ssub.s32 %s34, %s46
      %s108 = ssub.s32 %s105, %s106
      %s109 = sor.u32 %s107, %s108
      %p110 = scmp.eq.s32.totalorder %s109, 0
      %s112 = sadd.s32 %s111, 1
      %s113 = scalar_select %p110, %s111, %s112
      %p116 = pneg %p110
      %p117 = scmp.eq.s32.totalorder %s27, 3
      %p118 = por %p116, %p117
      %p119 = scmp.ne.s32.totalorder %s111, %s114
      %p120 = scmp.eq.s32.totalorder %s27, 0
      %p121 = por %p119, %p120
      %p122 = scmp.ne.s32.totalorder %s111, %s114
      %p123 = scmp.eq.s32.totalorder %s32, 3
      %p124 = por %p122, %p123
      %p125 = scmp.ne.s32.totalorder %s114, %s115
      %p126 = scmp.eq.s32.totalorder %s32, 0
      %p127 = por %p125, %p126
      %p128 = scmp.ne.s32.totalorder %s114, %s115
      %p129 = scmp.eq.s32.totalorder %s33, 3
      %p130 = por %p128, %p129
      %p132 = scmp.ne.s32.totalorder %s115, %s131
      %p133 = scmp.eq.s32.totalorder %s33, 0
      %p134 = por %p132, %p133
      %s135 = ssub.s32 %s35, %s42
      %p136 = scmp.eq.s32.totalorder %s135, 0
      %s138 = sadd.s32 %s137, 1
      %s139 = scalar_select %p136, %s137, %s138
      %p142 = pneg %p136
      %p143 = scmp.eq.s32.totalorder %s27, 3
      %p144 = por %p142, %p143
      %p145 = scmp.ne.s32.totalorder %s137, %s140
      %p146 = scmp.eq.s32.totalorder %s27, 0
      %p147 = por %p145, %p146
      %p148 = scmp.ne.s32.totalorder %s137, %s140
      %p149 = scmp.eq.s32.totalorder %s32, 3
      %p150 = por %p148, %p149
      %p151 = scmp.ne.s32.totalorder %s140, %s141
      %p152 = scmp.eq.s32.totalorder %s32, 0
      %p153 = por %p151, %p152
      %p154 = scmp.ne.s32.totalorder %s140, %s141
      %p155 = scmp.eq.s32.totalorder %s33, 3
      %p156 = por %p154, %p155
      %p158 = scmp.ne.s32.totalorder %s141, %s157
      %p159 = scmp.eq.s32.totalorder %s33, 0
      %p160 = por %p158, %p159
      %s161 = ssub.s32 %s35, %s42
      %p162 = scmp.eq.s32.totalorder %s161, 0
      %s164 = sadd.s32 %s163, 1
      %s165 = scalar_select %p162, %s163, %s164
      %p168 = pneg %p162
      %p169 = scmp.eq.s32.totalorder %s27, 3
      %p170 = por %p168, %p169
      %p171 = scmp.ne.s32.totalorder %s163, %s166
      %p172 = scmp.eq.s32.totalorder %s27, 0
      %p173 = por %p171, %p172
      %p174 = scmp.ne.s32.totalorder %s163, %s166
      %p175 = scmp.eq.s32.totalorder %s32, 3
      %p176 = por %p174, %p175
      %p177 = scmp.ne.s32.totalorder %s166, %s167
      %p178 = scmp.eq.s32.totalorder %s32, 0
      %p179 = por %p177, %p178
      %p180 = scmp.ne.s32.totalorder %s166, %s167
      %p181 = scmp.eq.s32.totalorder %s33, 3
      %p182 = por %p180, %p181
      %p184 = scmp.ne.s32.totalorder %s167, %s183
      %p185 = scmp.eq.s32.totalorder %s33, 0
      %p186 = por %p184, %p185
      %s187 = ssub.s32 %s35, %s42
      %p188 = scmp.eq.s32.totalorder %s187, 0
      %s190 = sadd.s32 %s189, 1
      %s191 = scalar_select %p188, %s189, %s190
      %p194 = pneg %p188
      %p195 = scmp.eq.s32.totalorder %s27, 3
      %p196 = por %p194, %p195
      %p197 = scmp.ne.s32.totalorder %s189, %s192
      %p198 = scmp.eq.s32.totalorder %s27, 0
      %p199 = por %p197, %p198
      %p200 = scmp.ne.s32.totalorder %s189, %s192
      %p201 = scmp.eq.s32.totalorder %s32, 3
      %p202 = por %p200, %p201
      %p203 = scmp.ne.s32.totalorder %s192, %s193
      %p204 = scmp.eq.s32.totalorder %s32, 0
      %p205 = por %p203, %p204
      %p206 = scmp.ne.s32.totalorder %s192, %s193
      %p207 = scmp.eq.s32.totalorder %s33, 3
      %p208 = por %p206, %p207
      %p210 = scmp.ne.s32.totalorder %s193, %s209
      %p211 = scmp.eq.s32.totalorder %s33, 0
      %p212 = por %p210, %p211
      %s213 = ssub.s32 %s34, %s46
      %s214 = ssub.s32 %s35, %s42
      %s215 = sor.u32 %s213, %s214
      %p216 = scmp.eq.s32.totalorder %s215, 0
      %s218 = sadd.s32 %s217, 1
      %s219 = scalar_select %p216, %s217, %s218
      %p222 = pneg %p216
      %p223 = scmp.eq.s32.totalorder %s27, 3
      %p224 = por %p222, %p223
      %p225 = scmp.ne.s32.totalorder %s217, %s220
      %p226 = scmp.eq.s32.totalorder %s27, 0
      %p227 = por %p225, %p226
      %p228 = scmp.ne.s32.totalorder %s217, %s220
      %p229 = scmp.eq.s32.totalorder %s32, 3
      %p230 = por %p228, %p229
      %p231 = scmp.ne.s32.totalorder %s220, %s221
      %p232 = scmp.eq.s32.totalorder %s32, 0
      %p233 = por %p231, %p232
      %p234 = scmp.ne.s32.totalorder %s220, %s221
      %p235 = scmp.eq.s32.totalorder %s33, 3
      %p236 = por %p234, %p235
      %p238 = scmp.ne.s32.totalorder %s221, %s237
      %p239 = scmp.eq.s32.totalorder %s33, 0
      %p240 = por %p238, %p239
      %p241 = scmp.le.s32.totalorder 1, %s27
      %p242 = scmp.lt.s32.totalorder %s27, 5
      %p243 = pnand %p241, %p242
      %p244 = pneg %p243
      // Predicated region
      $region9: #{decoder_layer_forward.6} parent=5 // pred_check
        _
      $region10: #{decoder_layer_forward.6} parent=5 // pred_check_branch
        %246 = sbr.rel (%p243) target = $region12
      $region11: #{decoder_layer_forward.6} parent=5 // pred_region
        %s247 = ssub.s32 %s27, 1
      $region12: #{decoder_layer_forward.6} parent=5 // pred_fallthru
        _
      %p248 = scmp.lt.s32.totalorder %s27, 4
      // Predicated region
      $region13: #{decoder_layer_forward.6} parent=5 // pred_check
        %p249 = pneg %p248
      $region14: #{decoder_layer_forward.6} parent=5 // pred_check_branch
        %251 = sbr.rel (%p249) target = $region16
      $region15: #{decoder_layer_forward.6} parent=5 // pred_region
        // Predicated region
        $region17: #{decoder_layer_forward.6} parent=15 // pred_check
          %p252 = pneg %p61
        $region18: #{decoder_layer_forward.6} parent=15 // pred_check_branch
          %254 = sbr.rel (%p252) target = $region20
        $region19: #{decoder_layer_forward.6} parent=15 // pred_region
          %s255 = sand.u32 %s51, 1
          %s256 = scalar_lea.sflag [#allocation3], %s255
          %s257 = sand.u32 %s51, 1
          %s258 = smul.addr %s257, 64
          %s259 = scalar_lea.vmem [#allocation2], %s258
          %s261 = ssub.s32 1024, 1024
          %262 = vsyncadd %s256, %s261
          %s263 = smul.addr %s34, 96
          %s264 = sadd.s32 %s35, %s263
          %s265 = smul.addr %s264, 64
          %s266 = scalar_lea.hbm %s0, %s265
          %s267 = sshll.u32 %s259, 4
          %s268 = int_to_ptr.vmem [resolvable:$true] %s267
          %273 = dma.hbm_to_vmem [thread:$0]  %s266, 1024, %s268, %s256, 384, 64, 4
        $region20: #{decoder_layer_forward.6} parent=15 // pred_fallthru
          _
        // Predicated region
        $region21: #{decoder_layer_forward.6} parent=15 // pred_check
          %p274 = pneg %p91
        $region22: #{decoder_layer_forward.6} parent=15 // pred_check_branch
          %276 = sbr.rel (%p274) target = $region24
        $region23: #{decoder_layer_forward.6} parent=15 // pred_region
          %s277 = sand.u32 %s27, 1
          %s278 = scalar_lea.sflag [#allocation6], %s277
          %s279 = sand.u32 %s81, 1
          %s280 = smul.addr %s279, 64
          %s281 = scalar_lea.vmem [#allocation5], %s280
          %s282 = sadd.s32 %s35, 2
          %s284 = ssub.s32 1024, 1024
          %285 = vsyncadd %s278, %s284
          %s286 = smul.addr %s34, 96
          %s287 = sadd.s32 %s282, %s286
          %s288 = smul.addr %s287, 64
          %s289 = scalar_lea.hbm %s1, %s288
          %s290 = sshll.u32 %s281, 4
          %s291 = int_to_ptr.vmem [resolvable:$true] %s290
          %296 = dma.hbm_to_vmem [thread:$0]  %s289, 1024, %s291, %s278, 384, 64, 4
        $region24: #{decoder_layer_forward.6} parent=15 // pred_fallthru
          _
        // Predicated region
        $region25: #{decoder_layer_forward.6} parent=15 // pred_check
          %p297 = pneg %p121
        $region26: #{decoder_layer_forward.6} parent=15 // pred_check_branch
          %299 = sbr.rel (%p297) target = $region28
        $region27: #{decoder_layer_forward.6} parent=15 // pred_region
          %s300 = sand.u32 %s27, 1
          %s301 = scalar_lea.sflag [#allocation6], %s300
          %s302 = sand.u32 %s111, 1
          %s303 = smul.addr %s302, 64
          %s304 = scalar_lea.vmem [#allocation7], %s303
          %s305 = sadd.s32 %s35, 4
          %s307 = ssub.s32 1024, 1024
          %308 = vsyncadd %s301, %s307
          %s309 = smul.addr %s34, 96
          %s310 = sadd.s32 %s305, %s309
          %s311 = smul.addr %s310, 64
          %s312 = scalar_lea.hbm %s2, %s311
          %s313 = sshll.u32 %s304, 4
          %s314 = int_to_ptr.vmem [resolvable:$true] %s313
          %319 = dma.hbm_to_vmem [thread:$0]  %s312, 1024, %s314, %s301, 384, 64, 4
        $region28: #{decoder_layer_forward.6} parent=15 // pred_fallthru
          _
        // Predicated region
        $region29: #{decoder_layer_forward.6} parent=15 // pred_check
          %p320 = pneg %p147
        $region30: #{decoder_layer_forward.6} parent=15 // pred_check_branch
          %322 = sbr.rel (%p320) target = $region32
        $region31: #{decoder_layer_forward.6} parent=15 // pred_region
          %s323 = sand.u32 %s27, 1
          %s324 = scalar_lea.sflag [#allocation9], %s323
          %s325 = sand.u32 %s137, 1
          %s326 = smul.addr %s325, 64
          %s327 = scalar_lea.vmem [#allocation8], %s326
          %s329 = ssub.s32 1024, 1024
          %330 = vsyncadd %s324, %s329
          %s331 = smul.addr %s35, 64
          %s332 = scalar_lea.hbm %s3, %s331
          %s333 = sshll.u32 %s327, 4
          %s334 = int_to_ptr.vmem [resolvable:$true] %s333
          %339 = dma.hbm_to_vmem [thread:$0]  %s332, 1024, %s334, %s324, 128, 64, 4
        $region32: #{decoder_layer_forward.6} parent=15 // pred_fallthru
          _
        // Predicated region
        $region33: #{decoder_layer_forward.6} parent=15 // pred_check
          %p340 = pneg %p173
        $region34: #{decoder_layer_forward.6} parent=15 // pred_check_branch
          %342 = sbr.rel (%p340) target = $region36
        $region35: #{decoder_layer_forward.6} parent=15 // pred_region
          %s343 = sand.u32 %s27, 1
          %s344 = scalar_lea.sflag [#allocation9], %s343
          %s345 = sand.u32 %s163, 1
          %s346 = scalar_lea.vmem [#allocation10], %s345
          %s348 = ssub.s32 16, 16
          %349 = vsyncadd %s344, %s348
          %s350 = smul.addr %s35, 16
          %s351 = scalar_lea.hbm %s4, %s350
          %s353 = sshll.u32 %s346, 4
          %s354 = int_to_ptr.vmem [resolvable:$true] %s353
          %356 = dma.hbm_to_vmem [thread:$0]  %s351, 16, %s354, %s344
        $region36: #{decoder_layer_forward.6} parent=15 // pred_fallthru
          _
        // Predicated region
        $region37: #{decoder_layer_forward.6} parent=15 // pred_check
          %p357 = pneg %p199
        $region38: #{decoder_layer_forward.6} parent=15 // pred_check_branch
          %359 = sbr.rel (%p357) target = $region40
        $region39: #{decoder_layer_forward.6} parent=15 // pred_region
          %s360 = sand.u32 %s189, 1
          %s361 = scalar_lea.sflag [#allocation12], %s360
          %s362 = sand.u32 %s189, 1
          %s363 = scalar_lea.vmem [#allocation11], %s362
          %s365 = ssub.s32 16, 16
          %366 = vsyncadd %s361, %s365
          %s367 = smul.addr %s35, 16
          %s368 = scalar_lea.hbm %s5, %s367
          %s370 = sshll.u32 %s363, 4
          %s371 = int_to_ptr.vmem [resolvable:$true] %s370
          %373 = dma.hbm_to_vmem [thread:$0]  %s368, 16, %s371, %s361
        $region40: #{decoder_layer_forward.6} parent=15 // pred_fallthru
          _
      $region16: #{decoder_layer_forward.6} parent=5 // pred_fallthru
        _
      %p374 = scmp.le.s32.totalorder 1, %s27
      %p375 = scmp.lt.s32.totalorder %s27, 5
      %p376 = pnand %p374, %p375
      %p377 = pneg %p376
      // Predicated region
      $region41: #{decoder_layer_forward.6} parent=5 // pred_check
        _
      $region42: #{decoder_layer_forward.6} parent=5 // pred_check_branch
        %379 = sbr.rel (%p376) target = $region44
      $region43: #{decoder_layer_forward.6} parent=5 // pred_region
        %s380 = ssub.s32 %s27, 1
        %s381 = sand.u32 %s54, 1
        %s382 = scalar_lea.sflag [#allocation3], %s381
        %s383 = sand.u32 %s54, 1
        %s384 = smul.addr %s383, 64
        %s385 = scalar_lea.vmem [#allocation2], %s384
        // Predicated region
        $region45: #{decoder_layer_forward.6} parent=43 // pred_check
          %p386 = pneg %p67
        $region46: #{decoder_layer_forward.6} parent=43 // pred_check_branch
          %388 = sbr.rel (%p386) target = $region48
        $region47: #{decoder_layer_forward.6} parent=43 // pred_region
          %389 = dma.done %s382, 1024
        $region48: #{decoder_layer_forward.6} parent=43 // pred_fallthru
          _
        %s390 = sand.u32 %s32, 1
        %s391 = scalar_lea.sflag [#allocation6], %s390
        %s392 = sand.u32 %s84, 1
        %s393 = smul.addr %s392, 64
        %s394 = scalar_lea.vmem [#allocation5], %s393
        // Predicated region
        $region49: #{decoder_layer_forward.6} parent=43 // pred_check
          %p395 = pneg %p97
        $region50: #{decoder_layer_forward.6} parent=43 // pred_check_branch
          %397 = sbr.rel (%p395) target = $region52
        $region51: #{decoder_layer_forward.6} parent=43 // pred_region
          %398 = dma.done %s391, 1024
        $region52: #{decoder_layer_forward.6} parent=43 // pred_fallthru
          _
        %s399 = sand.u32 %s32, 1
        %s400 = scalar_lea.sflag [#allocation6], %s399
        %s401 = sand.u32 %s114, 1
        %s402 = smul.addr %s401, 64
        %s403 = scalar_lea.vmem [#allocation7], %s402
        // Predicated region
        $region53: #{decoder_layer_forward.6} parent=43 // pred_check
          %p404 = pneg %p127
        $region54: #{decoder_layer_forward.6} parent=43 // pred_check_branch
          %406 = sbr.rel (%p404) target = $region56
        $region55: #{decoder_layer_forward.6} parent=43 // pred_region
          %407 = dma.done %s400, 1024
        $region56: #{decoder_layer_forward.6} parent=43 // pred_fallthru
          _
        %s408 = sand.u32 %s32, 1
        %s409 = scalar_lea.sflag [#allocation9], %s408
        %s410 = sand.u32 %s140, 1
        %s411 = smul.addr %s410, 64
        %s412 = scalar_lea.vmem [#allocation8], %s411
        // Predicated region
        $region57: #{decoder_layer_forward.6} parent=43 // pred_check
          %p413 = pneg %p153
        $region58: #{decoder_layer_forward.6} parent=43 // pred_check_branch
          %415 = sbr.rel (%p413) target = $region60
        $region59: #{decoder_layer_forward.6} parent=43 // pred_region
          %416 = dma.done %s409, 1024
        $region60: #{decoder_layer_forward.6} parent=43 // pred_fallthru
          _
        %s417 = sand.u32 %s32, 1
        %s418 = scalar_lea.sflag [#allocation9], %s417
        %s419 = sand.u32 %s166, 1
        %s420 = scalar_lea.vmem [#allocation10], %s419
        // Predicated region
        $region61: #{decoder_layer_forward.6} parent=43 // pred_check
          %p421 = pneg %p179
        $region62: #{decoder_layer_forward.6} parent=43 // pred_check_branch
          %423 = sbr.rel (%p421) target = $region64
        $region63: #{decoder_layer_forward.6} parent=43 // pred_region
          %424 = dma.done %s418, 16
        $region64: #{decoder_layer_forward.6} parent=43 // pred_fallthru
          _
        %s425 = sand.u32 %s192, 1
        %s426 = scalar_lea.sflag [#allocation12], %s425
        %s427 = sand.u32 %s192, 1
        %s428 = scalar_lea.vmem [#allocation11], %s427
        // Predicated region
        $region65: #{decoder_layer_forward.6} parent=43 // pred_check
          %p429 = pneg %p205
        $region66: #{decoder_layer_forward.6} parent=43 // pred_check_branch
          %431 = sbr.rel (%p429) target = $region68
        $region67: #{decoder_layer_forward.6} parent=43 // pred_region
          %432 = dma.done %s426, 16
        $region68: #{decoder_layer_forward.6} parent=43 // pred_fallthru
          _
        %s433 = sand.u32 %s54, 1
        %s434 = scalar_lea.sflag [#allocation3], %s433
        %s435 = sand.u32 %s54, 1
        %s436 = smul.addr %s435, 64
        %s437 = scalar_lea.vmem [#allocation2], %s436
        %p438 = pneg %p67
        %p439 = pneg %p64
        %s440 = sand.u32 %s32, 1
        %s441 = scalar_lea.sflag [#allocation6], %s440
        %s442 = sand.u32 %s84, 1
        %s443 = smul.addr %s442, 64
        %s444 = scalar_lea.vmem [#allocation5], %s443
        %p445 = pneg %p97
        %p446 = pneg %p94
        %s447 = sand.u32 %s32, 1
        %s448 = scalar_lea.sflag [#allocation6], %s447
        %s449 = sand.u32 %s114, 1
        %s450 = smul.addr %s449, 64
        %s451 = scalar_lea.vmem [#allocation7], %s450
        %p452 = pneg %p127
        %p453 = pneg %p124
        %s454 = sand.u32 %s32, 1
        %s455 = scalar_lea.sflag [#allocation9], %s454
        %s456 = sand.u32 %s140, 1
        %s457 = smul.addr %s456, 64
        %s458 = scalar_lea.vmem [#allocation8], %s457
        %p459 = pneg %p153
        %p460 = pneg %p150
        %s461 = sand.u32 %s32, 1
        %s462 = scalar_lea.sflag [#allocation9], %s461
        %s463 = sand.u32 %s166, 1
        %s464 = scalar_lea.vmem [#allocation10], %s463
        %p465 = pneg %p179
        %p466 = pneg %p176
        %s467 = sand.u32 %s192, 1
        %s468 = scalar_lea.sflag [#allocation12], %s467
        %s469 = sand.u32 %s192, 1
        %s470 = scalar_lea.vmem [#allocation11], %s469
        %p471 = pneg %p205
        %p472 = pneg %p202
        %p473 = pneg %p233
        %p474 = pneg %p230
        %s475 = sand.u32 %s220, 1
        %s476 = scalar_lea.sflag [#allocation4], %s475
        %s477 = sand.u32 %s220, 1
        %s478 = smul.addr %s477, 64
        %s479 = scalar_lea.vmem [#allocation13], %s478
        %s480 = sadd.s32 %s37, 2
        %s481 = sadd.s32 %s37, 4
        %v483 = vlaneseq
        %v484 = vshrl.u32 %v483, 7
        %v485 = vadd.s32 %v484, 8
        %v486 = vadd.s32 %v484, 16
        %v487 = vadd.s32 %v484, 24
        %v488 = vadd.s32 %v484, 32
        %v489 = vadd.s32 %v484, 40
        %v490 = vadd.s32 %v484, 48
        %v491 = vadd.s32 %v484, 56
        %v492 = vadd.s32 %v484, 64
        %v493 = vadd.s32 %v484, 72
        %v494 = vadd.s32 %v484, 80
        %v495 = vadd.s32 %v484, 88
        %v496 = vadd.s32 %v484, 96
        %v497 = vadd.s32 %v484, 104
        %v498 = vadd.s32 %v484, 112
        %v499 = vadd.s32 %v484, 120
        %v500 = vlaneseq
        %v501 = vand.u32 %v500, 127
        %vm502 = vcmp.gt.s32.totalorder %v501, %v484
        %vm503 = vcmp.gt.s32.totalorder %v501, %v485
        %vm504 = vcmp.gt.s32.totalorder %v501, %v486
        %vm505 = vcmp.gt.s32.totalorder %v501, %v487
        %vm506 = vcmp.gt.s32.totalorder %v501, %v488
        %vm507 = vcmp.gt.s32.totalorder %v501, %v489
        %vm508 = vcmp.gt.s32.totalorder %v501, %v490
        %vm509 = vcmp.gt.s32.totalorder %v501, %v491
        %vm510 = vcmp.gt.s32.totalorder %v501, %v492
        %vm511 = vcmp.gt.s32.totalorder %v501, %v493
        %vm512 = vcmp.gt.s32.totalorder %v501, %v494
        %vm513 = vcmp.gt.s32.totalorder %v501, %v495
        %vm514 = vcmp.gt.s32.totalorder %v501, %v496
        %vm515 = vcmp.gt.s32.totalorder %v501, %v497
        %vm516 = vcmp.gt.s32.totalorder %v501, %v498
        %vm517 = vcmp.gt.s32.totalorder %v501, %v499
        %v518 = vsel %vm502, -1e+30, 0.0
        %v519 = vsel %vm503, -1e+30, 0.0
        %v520 = vsel %vm504, -1e+30, 0.0
        %v521 = vsel %vm505, -1e+30, 0.0
        %v522 = vsel %vm506, -1e+30, 0.0
        %v523 = vsel %vm507, -1e+30, 0.0
        %v524 = vsel %vm508, -1e+30, 0.0
        %v525 = vsel %vm509, -1e+30, 0.0
        %v526 = vsel %vm510, -1e+30, 0.0
        %v527 = vsel %vm511, -1e+30, 0.0
        %v528 = vsel %vm512, -1e+30, 0.0
        %v529 = vsel %vm513, -1e+30, 0.0
        %v530 = vsel %vm514, -1e+30, 0.0
        %v531 = vsel %vm515, -1e+30, 0.0
        %v532 = vsel %vm516, -1e+30, 0.0
        %v533 = vsel %vm517, -1e+30, 0.0
        %v534 = vld [vmem:[%s385] sm:$0xf]
        %v535 = vld [vmem:[%s385 + $0x4] sm:$0xf]
        %v536 = vld [vmem:[%s385 + $0x8] sm:$0xf]
        %v537 = vld [vmem:[%s385 + $0xc] sm:$0xf]
        %v538 = vld [vmem:[%s385 + $0x10] sm:$0xf]
        %v539 = vld [vmem:[%s385 + $0x14] sm:$0xf]
        %v540 = vld [vmem:[%s385 + $0x18] sm:$0xf]
        %v541 = vld [vmem:[%s385 + $0x1c] sm:$0xf]
        %v542 = vld [vmem:[%s385 + $0x20] sm:$0xf]
        %v543 = vld [vmem:[%s385 + $0x24] sm:$0xf]
        %v544 = vld [vmem:[%s385 + $0x28] sm:$0xf]
        %v545 = vld [vmem:[%s385 + $0x2c] sm:$0xf]
        %v546 = vld [vmem:[%s385 + $0x30] sm:$0xf]
        %v547 = vld [vmem:[%s385 + $0x34] sm:$0xf]
        %v548 = vld [vmem:[%s385 + $0x38] sm:$0xf]
        %v549 = vld [vmem:[%s385 + $0x3c] sm:$0xf]
        %v550 = vunpack.c.l.bf16 %v534
        %v551 = vunpack.c.l.bf16 %v535
        %v552 = vunpack.c.l.bf16 %v536
        %v553 = vunpack.c.l.bf16 %v537
        %v554 = vunpack.c.l.bf16 %v538
        %v555 = vunpack.c.l.bf16 %v539
        %v556 = vunpack.c.l.bf16 %v540
        %v557 = vunpack.c.l.bf16 %v541
        %v558 = vunpack.c.l.bf16 %v542
        %v559 = vunpack.c.l.bf16 %v543
        %v560 = vunpack.c.l.bf16 %v544
        %v561 = vunpack.c.l.bf16 %v545
        %v562 = vunpack.c.l.bf16 %v546
        %v563 = vunpack.c.l.bf16 %v547
        %v564 = vunpack.c.l.bf16 %v548
        %v565 = vunpack.c.l.bf16 %v549
        %v566 = vld [vmem:[%s420] sm:$0x1]
        %v568 = vlaneseq
        %v569 = vshrl.u32 %v568, 7
        %v570 = vsub.s32 0, %v569
        %v571 = vrot.slane %v566, %v570
        %v573 = vadd.f32 %v550, %v571
        %v574 = vadd.f32 %v551, %v571
        %v575 = vadd.f32 %v552, %v571
        %v576 = vadd.f32 %v553, %v571
        %v577 = vadd.f32 %v554, %v571
        %v578 = vadd.f32 %v555, %v571
        %v579 = vadd.f32 %v556, %v571
        %v580 = vadd.f32 %v557, %v571
        %v581 = vadd.f32 %v558, %v571
        %v582 = vadd.f32 %v559, %v571
        %v583 = vadd.f32 %v560, %v571
        %v584 = vadd.f32 %v561, %v571
        %v585 = vadd.f32 %v562, %v571
        %v586 = vadd.f32 %v563, %v571
        %v587 = vadd.f32 %v564, %v571
        %v588 = vadd.f32 %v565, %v571
        %v589 = vmul.f32 %v573, 0.088388346
        %v590 = vmul.f32 %v574, 0.088388346
        %v591 = vmul.f32 %v575, 0.088388346
        %v592 = vmul.f32 %v576, 0.088388346
        %v593 = vmul.f32 %v577, 0.088388346
        %v594 = vmul.f32 %v578, 0.088388346
        %v595 = vmul.f32 %v579, 0.088388346
        %v596 = vmul.f32 %v580, 0.088388346
        %v597 = vmul.f32 %v581, 0.088388346
        %v598 = vmul.f32 %v582, 0.088388346
        %v599 = vmul.f32 %v583, 0.088388346
        %v600 = vmul.f32 %v584, 0.088388346
        %v601 = vmul.f32 %v585, 0.088388346
        %v602 = vmul.f32 %v586, 0.088388346
        %v603 = vmul.f32 %v587, 0.088388346
        %v604 = vmul.f32 %v588, 0.088388346
        %v605 = vpack.c.bf16 %v590, %v589
        %v606 = vpack.c.bf16 %v592, %v591
        %v607 = vpack.c.bf16 %v594, %v593
        %v608 = vpack.c.bf16 %v596, %v595
        %v609 = vpack.c.bf16 %v598, %v597
        %v610 = vpack.c.bf16 %v600, %v599
        %v611 = vpack.c.bf16 %v602, %v601
        %v612 = vpack.c.bf16 %v604, %v603
        %v613 = vld [vmem:[%s428] sm:$0x1]
        %v615 = vlaneseq
        %v616 = vshrl.u32 %v615, 7
        %v617 = vsub.s32 0, %v616
        %v618 = vrot.slane %v613, %v617
        %v620 = vadd.f32 %v550, %v618
        %v621 = vadd.f32 %v551, %v618
        %v622 = vadd.f32 %v552, %v618
        %v623 = vadd.f32 %v553, %v618
        %v624 = vadd.f32 %v554, %v618
        %v625 = vadd.f32 %v555, %v618
        %v626 = vadd.f32 %v556, %v618
        %v627 = vadd.f32 %v557, %v618
        %v628 = vadd.f32 %v558, %v618
        %v629 = vadd.f32 %v559, %v618
        %v630 = vadd.f32 %v560, %v618
        %v631 = vadd.f32 %v561, %v618
        %v632 = vadd.f32 %v562, %v618
        %v633 = vadd.f32 %v563, %v618
        %v634 = vadd.f32 %v564, %v618
        %v635 = vadd.f32 %v565, %v618
        %v636 = vmul.f32 %v620, 0.088388346
        %v637 = vmul.f32 %v621, 0.088388346
        %v638 = vmul.f32 %v622, 0.088388346
        %v639 = vmul.f32 %v623, 0.088388346
        %v640 = vmul.f32 %v624, 0.088388346
        %v641 = vmul.f32 %v625, 0.088388346
        %v642 = vmul.f32 %v626, 0.088388346
        %v643 = vmul.f32 %v627, 0.088388346
        %v644 = vmul.f32 %v628, 0.088388346
        %v645 = vmul.f32 %v629, 0.088388346
        %v646 = vmul.f32 %v630, 0.088388346
        %v647 = vmul.f32 %v631, 0.088388346
        %v648 = vmul.f32 %v632, 0.088388346
        %v649 = vmul.f32 %v633, 0.088388346
        %v650 = vmul.f32 %v634, 0.088388346
        %v651 = vmul.f32 %v635, 0.088388346
        %v652 = vpack.c.bf16 %v637, %v636
        %v653 = vpack.c.bf16 %v639, %v638
        %v654 = vpack.c.bf16 %v641, %v640
        %v655 = vpack.c.bf16 %v643, %v642
        %v656 = vpack.c.bf16 %v645, %v644
        %v657 = vpack.c.bf16 %v647, %v646
        %v658 = vpack.c.bf16 %v649, %v648
        %v659 = vpack.c.bf16 %v651, %v650
        %v660 = vld [vmem:[%s394] sm:$0xf]
        %v661 = vld [vmem:[%s394 + $0x4] sm:$0xf]
        %v662 = vld [vmem:[%s394 + $0x8] sm:$0xf]
        %v663 = vld [vmem:[%s394 + $0xc] sm:$0xf]
        %v664 = vld [vmem:[%s394 + $0x10] sm:$0xf]
        %v665 = vld [vmem:[%s394 + $0x14] sm:$0xf]
        %v666 = vld [vmem:[%s394 + $0x18] sm:$0xf]
        %v667 = vld [vmem:[%s394 + $0x1c] sm:$0xf]
        %v668 = vld [vmem:[%s394 + $0x20] sm:$0xf]
        %v669 = vld [vmem:[%s394 + $0x24] sm:$0xf]
        %v670 = vld [vmem:[%s394 + $0x28] sm:$0xf]
        %v671 = vld [vmem:[%s394 + $0x2c] sm:$0xf]
        %v672 = vld [vmem:[%s394 + $0x30] sm:$0xf]
        %v673 = vld [vmem:[%s394 + $0x34] sm:$0xf]
        %v674 = vld [vmem:[%s394 + $0x38] sm:$0xf]
        %v675 = vld [vmem:[%s394 + $0x3c] sm:$0xf]
        %v676 = vld [vmem:[%s412] sm:$0xf]
        %v677 = vld [vmem:[%s412 + $0x4] sm:$0xf]
        %v678 = vld [vmem:[%s412 + $0x8] sm:$0xf]
        %v679 = vld [vmem:[%s412 + $0xc] sm:$0xf]
        %v680 = vld [vmem:[%s412 + $0x10] sm:$0xf]
        %v681 = vld [vmem:[%s412 + $0x14] sm:$0xf]
        %v682 = vld [vmem:[%s412 + $0x18] sm:$0xf]
        %v683 = vld [vmem:[%s412 + $0x1c] sm:$0xf]
        %v684 = vld [vmem:[%s412 + $0x20] sm:$0xf]
        %v685 = vld [vmem:[%s412 + $0x24] sm:$0xf]
        %v686 = vld [vmem:[%s412 + $0x28] sm:$0xf]
        %v687 = vld [vmem:[%s412 + $0x2c] sm:$0xf]
        %v688 = vld [vmem:[%s412 + $0x30] sm:$0xf]
        %v689 = vld [vmem:[%s412 + $0x34] sm:$0xf]
        %v690 = vld [vmem:[%s412 + $0x38] sm:$0xf]
        %v691 = vld [vmem:[%s412 + $0x3c] sm:$0xf]
        %v708 = vunpack.c.l.b16 %v676
        %v709 = vunpack.c.l.b16 %v677
        %v710 = vunpack.c.l.b16 %v678
        %v711 = vunpack.c.l.b16 %v679
        %v712 = vunpack.c.l.b16 %v680
        %v713 = vunpack.c.l.b16 %v681
        %v714 = vunpack.c.l.b16 %v682
        %v715 = vunpack.c.l.b16 %v683
        %v716 = vunpack.c.l.b16 %v684
        %v717 = vunpack.c.l.b16 %v685
        %v718 = vunpack.c.l.b16 %v686
        %v719 = vunpack.c.l.b16 %v687
        %v720 = vunpack.c.l.b16 %v688
        %v721 = vunpack.c.l.b16 %v689
        %v722 = vunpack.c.l.b16 %v690
        %v723 = vunpack.c.l.b16 %v691
        %v724 = vpack.c.b16 %v709, %v708
        %v725 = vpack.c.b16 %v711, %v710
        %v726 = vpack.c.b16 %v713, %v712
        %v727 = vpack.c.b16 %v715, %v714
        %v728 = vpack.c.b16 %v717, %v716
        %v729 = vpack.c.b16 %v719, %v718
        %v730 = vpack.c.b16 %v721, %v720
        %v731 = vpack.c.b16 %v723, %v722
        %740 = vmatprep.subr.bf16.mxu0 0
        %741 = vmatpush1.bf16.xpose.msra.mxu0 %v724
        %742 = vmatprep.subr.bf16.mxu0 0
        %743 = vmatpush1.bf16.xpose.msra.mxu0 %v725
        %744 = vmatprep.subr.bf16.mxu0 0
        %745 = vmatpush1.bf16.xpose.msra.mxu0 %v726
        %746 = vmatprep.subr.bf16.mxu0 0
        %747 = vmatpush1.bf16.xpose.msra.mxu0 %v727
        %748 = vmatprep.subr.bf16.mxu0 0
        %749 = vmatpush1.bf16.xpose.msra.mxu0 %v728
        %750 = vmatprep.subr.bf16.mxu0 0
        %751 = vmatpush1.bf16.xpose.msra.mxu0 %v729
        %752 = vmatprep.subr.bf16.mxu0 0
        %753 = vmatpush1.bf16.xpose.msra.mxu0 %v730
        %754 = vmatprep.subr.bf16.mxu0 0
        %755 = vmatpush1.bf16.xpose.msra.mxu0 %v731
        %756 = vmatprep.subr.bf16.mxu0 0
        %757 = vmatpush1.bf16.xpose.msra.mxu0 0
        %758 = vmatprep.subr.bf16.mxu0 0
        %759 = vmatpush1.bf16.xpose.msra.mxu0 0
        %760 = vmatprep.subr.bf16.mxu0 0
        %761 = vmatpush1.bf16.xpose.msra.mxu0 0
        %762 = vmatprep.subr.bf16.mxu0 0
        %763 = vmatpush1.bf16.xpose.msra.mxu0 0
        %764 = vmatprep.subr.bf16.mxu0 0
        %765 = vmatpush1.bf16.xpose.msra.mxu0 0
        %766 = vmatprep.subr.bf16.mxu0 0
        %767 = vmatpush1.bf16.xpose.msra.mxu0 0
        %768 = vmatprep.subr.bf16.mxu0 0
        %769 = vmatpush1.bf16.xpose.msra.mxu0 0
        %770 = vmatprep.subr.bf16.mxu0 0
        %771 = vmatpush1.bf16.xpose.msra.mxu0 0
        %772 = vmatprep.mubr.bf16.mxu0 0
        %773 = vmatmul.mubr.bf16.gmra.mrb[0].mxu0 %v652
        %v774 = vpop.f32.mrb[0].mxu0
        %v775 = vadd.f32 0.0, %v774
        %v776 = vpop.f32.mrb[0].mxu0
        %v777 = vpop.f32.mrb[0].mxu0
        %v778 = vadd.f32 0.0, %v777
        %v779 = vpop.f32.mrb[0].mxu0
        %780 = vmatprep.mubr.bf16.mxu0 0
        %781 = vmatmul.mubr.bf16.gmra.mrb[0].mxu0 %v653
        %v782 = vpop.f32.mrb[0].mxu0
        %v783 = vadd.f32 0.0, %v782
        %v784 = vpop.f32.mrb[0].mxu0
        %v785 = vpop.f32.mrb[0].mxu0
        %v786 = vadd.f32 0.0, %v785
        %v787 = vpop.f32.mrb[0].mxu0
        %788 = vmatprep.mubr.bf16.mxu0 0
        %789 = vmatmul.mubr.bf16.gmra.mrb[0].mxu0 %v654
        %v790 = vpop.f32.mrb[0].mxu0
        %v791 = vadd.f32 0.0, %v790
        %v792 = vpop.f32.mrb[0].mxu0
        %v793 = vpop.f32.mrb[0].mxu0
        %v794 = vadd.f32 0.0, %v793
        %v795 = vpop.f32.mrb[0].mxu0
        %796 = vmatprep.mubr.bf16.mxu0 0
        %797 = vmatmul.mubr.bf16.gmra.mrb[0].mxu0 %v655
        %v798 = vpop.f32.mrb[0].mxu0
        %v799 = vadd.f32 0.0, %v798
        %v800 = vpop.f32.mrb[0].mxu0
        %v801 = vpop.f32.mrb[0].mxu0
        %v802 = vadd.f32 0.0, %v801
        %v803 = vpop.f32.mrb[0].mxu0
        %804 = vmatprep.mubr.bf16.mxu0 0
        %805 = vmatmul.mubr.bf16.gmra.mrb[0].mxu0 %v656
        %v806 = vpop.f32.mrb[0].mxu0
        %v807 = vadd.f32 0.0, %v806
        %v808 = vpop.f32.mrb[0].mxu0
        %v809 = vpop.f32.mrb[0].mxu0
        %v810 = vadd.f32 0.0, %v809
        %v811 = vpop.f32.mrb[0].mxu0
        %812 = vmatprep.mubr.bf16.mxu0 0
        %813 = vmatmul.mubr.bf16.gmra.mrb[0].mxu0 %v657
        %v814 = vpop.f32.mrb[0].mxu0
        %v815 = vadd.f32 0.0, %v814
        %v816 = vpop.f32.mrb[0].mxu0
        %v817 = vpop.f32.mrb[0].mxu0
        %v818 = vadd.f32 0.0, %v817
        %v819 = vpop.f32.mrb[0].mxu0
        %820 = vmatprep.mubr.bf16.mxu0 0
        %821 = vmatmul.mubr.bf16.gmra.mrb[0].mxu0 %v658
        %v822 = vpop.f32.mrb[0].mxu0
        %v823 = vadd.f32 0.0, %v822
        %v824 = vpop.f32.mrb[0].mxu0
        %v825 = vpop.f32.mrb[0].mxu0
        %v826 = vadd.f32 0.0, %v825
        %v827 = vpop.f32.mrb[0].mxu0
        %828 = vmatprep.mubr.bf16.mxu0 0
        %829 = vmatmul.mubr.bf16.gmra.mrb[0].mxu0 %v659
        %v830 = vpop.f32.mrb[0].mxu0
        %v831 = vadd.f32 0.0, %v830
        %v832 = vpop.f32.mrb[0].mxu0
        %v833 = vpop.f32.mrb[0].mxu0
        %v834 = vadd.f32 0.0, %v833
        %v835 = vpop.f32.mrb[0].mxu0
        %836 = vdwg.mxu0
        %s838 = sor.u32 256, 1
        %839 = vrot.lane.b32.xlu0 %v775, %s838
        %v840 = vpop.permute.xlu0 %839
        %s842 = sor.u32 256, 9
        %843 = vrot.lane.b32.xlu0 %v778, %s842
        %v844 = vpop.permute.xlu0 %843
        %s846 = sor.u32 256, 17
        %847 = vrot.lane.b32.xlu0 %v783, %s846
        %v848 = vpop.permute.xlu0 %847
        %s850 = sor.u32 256, 25
        %851 = vrot.lane.b32.xlu0 %v786, %s850
        %v852 = vpop.permute.xlu0 %851
        %s854 = sor.u32 256, 33
        %855 = vrot.lane.b32.xlu0 %v791, %s854
        %v856 = vpop.permute.xlu0 %855
        %s858 = sor.u32 256, 41
        %859 = vrot.lane.b32.xlu0 %v794, %s858
        %v860 = vpop.permute.xlu0 %859
        %s862 = sor.u32 256, 49
        %863 = vrot.lane.b32.xlu0 %v799, %s862
        %v864 = vpop.permute.xlu0 %863
        %s866 = sor.u32 256, 57
        %867 = vrot.lane.b32.xlu0 %v802, %s866
        %v868 = vpop.permute.xlu0 %867
        %s870 = sor.u32 256, 65
        %871 = vrot.lane.b32.xlu0 %v807, %s870
        %v872 = vpop.permute.xlu0 %871
        %s874 = sor.u32 256, 73
        %875 = vrot.lane.b32.xlu0 %v810, %s874
        %v876 = vpop.permute.xlu0 %875
        %s878 = sor.u32 256, 81
        %879 = vrot.lane.b32.xlu0 %v815, %s878
        %v880 = vpop.permute.xlu0 %879
        %s882 = sor.u32 256, 89
        %883 = vrot.lane.b32.xlu0 %v818, %s882
        %v884 = vpop.permute.xlu0 %883
        %s886 = sor.u32 256, 97
        %887 = vrot.lane.b32.xlu0 %v823, %s886
        %v888 = vpop.permute.xlu0 %887
        %s890 = sor.u32 256, 105
        %891 = vrot.lane.b32.xlu0 %v826, %s890
        %v892 = vpop.permute.xlu0 %891
        %s894 = sor.u32 256, 113
        %895 = vrot.lane.b32.xlu0 %v831, %s894
        %v896 = vpop.permute.xlu0 %895
        %s898 = sor.u32 256, 121
        %899 = vrot.lane.b32.xlu0 %v834, %s898
        %v900 = vpop.permute.xlu0 %899
        %v917 = vunpack.c.l.b16 %v660
        %v918 = vunpack.c.l.b16 %v661
        %v919 = vunpack.c.l.b16 %v662
        %v920 = vunpack.c.l.b16 %v663
        %v921 = vunpack.c.l.b16 %v664
        %v922 = vunpack.c.l.b16 %v665
        %v923 = vunpack.c.l.b16 %v666
        %v924 = vunpack.c.l.b16 %v667
        %v925 = vunpack.c.l.b16 %v668
        %v926 = vunpack.c.l.b16 %v669
        %v927 = vunpack.c.l.b16 %v670
        %v928 = vunpack.c.l.b16 %v671
        %v929 = vunpack.c.l.b16 %v672
        %v930 = vunpack.c.l.b16 %v673
        %v931 = vunpack.c.l.b16 %v674
        %v932 = vunpack.c.l.b16 %v675
        %v933 = vpack.c.b16 %v918, %v917
        %v934 = vpack.c.b16 %v920, %v919
        %v935 = vpack.c.b16 %v922, %v921
        %v936 = vpack.c.b16 %v924, %v923
        %v937 = vpack.c.b16 %v926, %v925
        %v938 = vpack.c.b16 %v928, %v927
        %v939 = vpack.c.b16 %v930, %v929
        %v940 = vpack.c.b16 %v932, %v931
        %949 = vmatprep.subr.bf16.mxu0 0
        %950 = vmatpush1.bf16.xpose.msra.mxu0 %v933
        %951 = vmatprep.subr.bf16.mxu0 0
        %952 = vmatpush1.bf16.xpose.msra.mxu0 %v934
        %953 = vmatprep.subr.bf16.mxu0 0
        %954 = vmatpush1.bf16.xpose.msra.mxu0 %v935
        %955 = vmatprep.subr.bf16.mxu0 0
        %956 = vmatpush1.bf16.xpose.msra.mxu0 %v936
        %957 = vmatprep.subr.bf16.mxu0 0
        %958 = vmatpush1.bf16.xpose.msra.mxu0 %v937
        %959 = vmatprep.subr.bf16.mxu0 0
        %960 = vmatpush1.bf16.xpose.msra.mxu0 %v938
        %961 = vmatprep.subr.bf16.mxu0 0
        %962 = vmatpush1.bf16.xpose.msra.mxu0 %v939
        %963 = vmatprep.subr.bf16.mxu0 0
        %964 = vmatpush1.bf16.xpose.msra.mxu0 %v940
        %965 = vmatprep.subr.bf16.mxu0 0
        %966 = vmatpush1.bf16.xpose.msra.mxu0 0
        %967 = vmatprep.subr.bf16.mxu0 0
        %968 = vmatpush1.bf16.xpose.msra.mxu0 0
        %969 = vmatprep.subr.bf16.mxu0 0
        %970 = vmatpush1.bf16.xpose.msra.mxu0 0
        %971 = vmatprep.subr.bf16.mxu0 0
        %972 = vmatpush1.bf16.xpose.msra.mxu0 0
        %973 = vmatprep.subr.bf16.mxu0 0
        %974 = vmatpush1.bf16.xpose.msra.mxu0 0
        %975 = vmatprep.subr.bf16.mxu0 0
        %976 = vmatpush1.bf16.xpose.msra.mxu0 0
        %977 = vmatprep.subr.bf16.mxu0 0
        %978 = vmatpush1.bf16.xpose.msra.mxu0 0
        %979 = vmatprep.subr.bf16.mxu0 0
        %980 = vmatpush1.bf16.xpose.msra.mxu0 0
        %981 = vmatprep.mubr.bf16.mxu0 0
        %982 = vmatmul.mubr.bf16.gmra.mrb[0].mxu0 %v605
        %v983 = vpop.f32.mrb[0].mxu0
        %v984 = vadd.f32 %v840, %v983
        %v985 = vpop.f32.mrb[0].mxu0
        %v986 = vpop.f32.mrb[0].mxu0
        %v987 = vadd.f32 %v844, %v986
        %v988 = vpop.f32.mrb[0].mxu0
        %989 = vmatprep.mubr.bf16.mxu0 0
        %990 = vmatmul.mubr.bf16.gmra.mrb[0].mxu0 %v606
        %v991 = vpop.f32.mrb[0].mxu0
        %v992 = vadd.f32 %v848, %v991
        %v993 = vpop.f32.mrb[0].mxu0
        %v994 = vpop.f32.mrb[0].mxu0
        %v995 = vadd.f32 %v852, %v994
        %v996 = vpop.f32.mrb[0].mxu0
        %997 = vmatprep.mubr.bf16.mxu0 0
        %998 = vmatmul.mubr.bf16.gmra.mrb[0].mxu0 %v607
        %v999 = vpop.f32.mrb[0].mxu0
        %v1000 = vadd.f32 %v856, %v999
        %v1001 = vpop.f32.mrb[0].mxu0
        %v1002 = vpop.f32.mrb[0].mxu0
        %v1003 = vadd.f32 %v860, %v1002
        %v1004 = vpop.f32.mrb[0].mxu0
        %1005 = vmatprep.mubr.bf16.mxu0 0
        %1006 = vmatmul.mubr.bf16.gmra.mrb[0].mxu0 %v608
        %v1007 = vpop.f32.mrb[0].mxu0
        %v1008 = vadd.f32 %v864, %v1007
        %v1009 = vpop.f32.mrb[0].mxu0
        %v1010 = vpop.f32.mrb[0].mxu0
        %v1011 = vadd.f32 %v868, %v1010
        %v1012 = vpop.f32.mrb[0].mxu0
        %1013 = vmatprep.mubr.bf16.mxu0 0
        %1014 = vmatmul.mubr.bf16.gmra.mrb[0].mxu0 %v609
        %v1015 = vpop.f32.mrb[0].mxu0
        %v1016 = vadd.f32 %v872, %v1015
        %v1017 = vpop.f32.mrb[0].mxu0
        %v1018 = vpop.f32.mrb[0].mxu0
        %v1019 = vadd.f32 %v876, %v1018
        %v1020 = vpop.f32.mrb[0].mxu0
        %1021 = vmatprep.mubr.bf16.mxu0 0
        %1022 = vmatmul.mubr.bf16.gmra.mrb[0].mxu0 %v610
        %v1023 = vpop.f32.mrb[0].mxu0
        %v1024 = vadd.f32 %v880, %v1023
        %v1025 = vpop.f32.mrb[0].mxu0
        %v1026 = vpop.f32.mrb[0].mxu0
        %v1027 = vadd.f32 %v884, %v1026
        %v1028 = vpop.f32.mrb[0].mxu0
        %1029 = vmatprep.mubr.bf16.mxu0 0
        %1030 = vmatmul.mubr.bf16.gmra.mrb[0].mxu0 %v611
        %v1031 = vpop.f32.mrb[0].mxu0
        %v1032 = vadd.f32 %v888, %v1031
        %v1033 = vpop.f32.mrb[0].mxu0
        %v1034 = vpop.f32.mrb[0].mxu0
        %v1035 = vadd.f32 %v892, %v1034
        %v1036 = vpop.f32.mrb[0].mxu0
        %1037 = vmatprep.mubr.bf16.mxu0 0
        %1038 = vmatmul.mubr.bf16.gmra.mrb[0].mxu0 %v612
        %v1039 = vpop.f32.mrb[0].mxu0
        %v1040 = vadd.f32 %v896, %v1039
        %v1041 = vpop.f32.mrb[0].mxu0
        %v1042 = vpop.f32.mrb[0].mxu0
        %v1043 = vadd.f32 %v900, %v1042
        %v1044 = vpop.f32.mrb[0].mxu0
        %1045 = vdwg.mxu0
        %v1046 = vadd.f32 %v984, %v518
        %v1047 = vadd.f32 %v987, %v519
        %v1048 = vadd.f32 %v992, %v520
        %v1049 = vadd.f32 %v995, %v521
        %v1050 = vadd.f32 %v1000, %v522
        %v1051 = vadd.f32 %v1003, %v523
        %v1052 = vadd.f32 %v1008, %v524
        %v1053 = vadd.f32 %v1011, %v525
        %v1054 = vadd.f32 %v1016, %v526
        %v1055 = vadd.f32 %v1019, %v527
        %v1056 = vadd.f32 %v1024, %v528
        %v1057 = vadd.f32 %v1027, %v529
        %v1058 = vadd.f32 %v1032, %v530
        %v1059 = vadd.f32 %v1035, %v531
        %v1060 = vadd.f32 %v1040, %v532
        %v1061 = vadd.f32 %v1043, %v533
        %1062 = vmax.xlane.f32.xlu0 %v1046
        %v1063 = vpop.xlane.xlu0 %1062
        %1064 = vmax.xlane.f32.xlu0 %v1047
        %v1065 = vpop.xlane.xlu0 %1064
        %1066 = vmax.xlane.f32.xlu0 %v1048
        %v1067 = vpop.xlane.xlu0 %1066
        %1068 = vmax.xlane.f32.xlu0 %v1049
        %v1069 = vpop.xlane.xlu0 %1068
        %1070 = vmax.xlane.f32.xlu0 %v1050
        %v1071 = vpop.xlane.xlu0 %1070
        %1072 = vmax.xlane.f32.xlu0 %v1051
        %v1073 = vpop.xlane.xlu0 %1072
        %1074 = vmax.xlane.f32.xlu0 %v1052
        %v1075 = vpop.xlane.xlu0 %1074
        %1076 = vmax.xlane.f32.xlu0 %v1053
        %v1077 = vpop.xlane.xlu0 %1076
        %1078 = vmax.xlane.f32.xlu0 %v1054
        %v1079 = vpop.xlane.xlu0 %1078
        %1080 = vmax.xlane.f32.xlu0 %v1055
        %v1081 = vpop.xlane.xlu0 %1080
        %1082 = vmax.xlane.f32.xlu0 %v1056
        %v1083 = vpop.xlane.xlu0 %1082
        %1084 = vmax.xlane.f32.xlu0 %v1057
        %v1085 = vpop.xlane.xlu0 %1084
        %1086 = vmax.xlane.f32.xlu0 %v1058
        %v1087 = vpop.xlane.xlu0 %1086
        %1088 = vmax.xlane.f32.xlu0 %v1059
        %v1089 = vpop.xlane.xlu0 %1088
        %1090 = vmax.xlane.f32.xlu0 %v1060
        %v1091 = vpop.xlane.xlu0 %1090
        %1092 = vmax.xlane.f32.xlu0 %v1061
        %v1093 = vpop.xlane.xlu0 %1092
        %v1094 = vsub.f32 %v1046, %v1063
        %v1095 = vsub.f32 %v1047, %v1065
        %v1096 = vsub.f32 %v1048, %v1067
        %v1097 = vsub.f32 %v1049, %v1069
        %v1098 = vsub.f32 %v1050, %v1071
        %v1099 = vsub.f32 %v1051, %v1073
        %v1100 = vsub.f32 %v1052, %v1075
        %v1101 = vsub.f32 %v1053, %v1077
        %v1102 = vsub.f32 %v1054, %v1079
        %v1103 = vsub.f32 %v1055, %v1081
        %v1104 = vsub.f32 %v1056, %v1083
        %v1105 = vsub.f32 %v1057, %v1085
        %v1106 = vsub.f32 %v1058, %v1087
        %v1107 = vsub.f32 %v1059, %v1089
        %v1108 = vsub.f32 %v1060, %v1091
        %v1109 = vsub.f32 %v1061, %v1093
        %v1110 = vmul.f32 %v1094, 1.442695
        %v1111 = vpow.pop %v1110
        %v1112 = vmul.f32 %v1095, 1.442695
        %v1113 = vpow.pop %v1112
        %v1114 = vmul.f32 %v1096, 1.442695
        %v1115 = vpow.pop %v1114
        %v1116 = vmul.f32 %v1097, 1.442695
        %v1117 = vpow.pop %v1116
        %v1118 = vmul.f32 %v1098, 1.442695
        %v1119 = vpow.pop %v1118
        %v1120 = vmul.f32 %v1099, 1.442695
        %v1121 = vpow.pop %v1120
        %v1122 = vmul.f32 %v1100, 1.442695
        %v1123 = vpow.pop %v1122
        %v1124 = vmul.f32 %v1101, 1.442695
        %v1125 = vpow.pop %v1124
        %v1126 = vmul.f32 %v1102, 1.442695
        %v1127 = vpow.pop %v1126
        %v1128 = vmul.f32 %v1103, 1.442695
        %v1129 = vpow.pop %v1128
        %v1130 = vmul.f32 %v1104, 1.442695
        %v1131 = vpow.pop %v1130
        %v1132 = vmul.f32 %v1105, 1.442695
        %v1133 = vpow.pop %v1132
        %v1134 = vmul.f32 %v1106, 1.442695
        %v1135 = vpow.pop %v1134
        %v1136 = vmul.f32 %v1107, 1.442695
        %v1137 = vpow.pop %v1136
        %v1138 = vmul.f32 %v1108, 1.442695
        %v1139 = vpow.pop %v1138
        %v1140 = vmul.f32 %v1109, 1.442695
        %v1141 = vpow.pop %v1140
        %1142 = vadd.xlane.f32.xlu0 %v1111
        %v1143 = vpop.xlane.xlu0 %1142
        %1144 = vadd.xlane.f32.xlu0 %v1113
        %v1145 = vpop.xlane.xlu0 %1144
        %1146 = vadd.xlane.f32.xlu0 %v1115
        %v1147 = vpop.xlane.xlu0 %1146
        %1148 = vadd.xlane.f32.xlu0 %v1117
        %v1149 = vpop.xlane.xlu0 %1148
        %1150 = vadd.xlane.f32.xlu0 %v1119
        %v1151 = vpop.xlane.xlu0 %1150
        %1152 = vadd.xlane.f32.xlu0 %v1121
        %v1153 = vpop.xlane.xlu0 %1152
        %1154 = vadd.xlane.f32.xlu0 %v1123
        %v1155 = vpop.xlane.xlu0 %1154
        %1156 = vadd.xlane.f32.xlu0 %v1125
        %v1157 = vpop.xlane.xlu0 %1156
        %1158 = vadd.xlane.f32.xlu0 %v1127
        %v1159 = vpop.xlane.xlu0 %1158
        %1160 = vadd.xlane.f32.xlu0 %v1129
        %v1161 = vpop.xlane.xlu0 %1160
        %1162 = vadd.xlane.f32.xlu0 %v1131
        %v1163 = vpop.xlane.xlu0 %1162
        %1164 = vadd.xlane.f32.xlu0 %v1133
        %v1165 = vpop.xlane.xlu0 %1164
        %1166 = vadd.xlane.f32.xlu0 %v1135
        %v1167 = vpop.xlane.xlu0 %1166
        %1168 = vadd.xlane.f32.xlu0 %v1137
        %v1169 = vpop.xlane.xlu0 %1168
        %1170 = vadd.xlane.f32.xlu0 %v1139
        %v1171 = vpop.xlane.xlu0 %1170
        %1172 = vadd.xlane.f32.xlu0 %v1141
        %v1173 = vpop.xlane.xlu0 %1172
        %v1174 = vrcp.pop %v1143
        %v1175 = vrcp.pop %v1145
        %v1176 = vrcp.pop %v1147
        %v1177 = vrcp.pop %v1149
        %v1178 = vrcp.pop %v1151
        %v1179 = vrcp.pop %v1153
        %v1180 = vrcp.pop %v1155
        %v1181 = vrcp.pop %v1157
        %v1182 = vrcp.pop %v1159
        %v1183 = vrcp.pop %v1161
        %v1184 = vrcp.pop %v1163
        %v1185 = vrcp.pop %v1165
        %v1186 = vrcp.pop %v1167
        %v1187 = vrcp.pop %v1169
        %v1188 = vrcp.pop %v1171
        %v1189 = vrcp.pop %v1173
        %v1190 = vmul.f32 %v1111, %v1174
        %v1191 = vmul.f32 %v1113, %v1175
        %v1192 = vmul.f32 %v1115, %v1176
        %v1193 = vmul.f32 %v1117, %v1177
        %v1194 = vmul.f32 %v1119, %v1178
        %v1195 = vmul.f32 %v1121, %v1179
        %v1196 = vmul.f32 %v1123, %v1180
        %v1197 = vmul.f32 %v1125, %v1181
        %v1198 = vmul.f32 %v1127, %v1182
        %v1199 = vmul.f32 %v1129, %v1183
        %v1200 = vmul.f32 %v1131, %v1184
        %v1201 = vmul.f32 %v1133, %v1185
        %v1202 = vmul.f32 %v1135, %v1186
        %v1203 = vmul.f32 %v1137, %v1187
        %v1204 = vmul.f32 %v1139, %v1188
        %v1205 = vmul.f32 %v1141, %v1189
        %v1206 = vpack.c.bf16 %v1191, %v1190
        %v1207 = vpack.c.bf16 %v1193, %v1192
        %v1208 = vpack.c.bf16 %v1195, %v1194
        %v1209 = vpack.c.bf16 %v1197, %v1196
        %v1210 = vpack.c.bf16 %v1199, %v1198
        %v1211 = vpack.c.bf16 %v1201, %v1200
        %v1212 = vpack.c.bf16 %v1203, %v1202
        %v1213 = vpack.c.bf16 %v1205, %v1204
        %v1214 = vld [vmem:[%s403] sm:$0xf]
        %v1215 = vld [vmem:[%s403 + $0x4] sm:$0xf]
        %v1216 = vld [vmem:[%s403 + $0x8] sm:$0xf]
        %v1217 = vld [vmem:[%s403 + $0xc] sm:$0xf]
        %v1218 = vld [vmem:[%s403 + $0x10] sm:$0xf]
        %v1219 = vld [vmem:[%s403 + $0x14] sm:$0xf]
        %v1220 = vld [vmem:[%s403 + $0x18] sm:$0xf]
        %v1221 = vld [vmem:[%s403 + $0x1c] sm:$0xf]
        %v1222 = vld [vmem:[%s403 + $0x20] sm:$0xf]
        %v1223 = vld [vmem:[%s403 + $0x24] sm:$0xf]
        %v1224 = vld [vmem:[%s403 + $0x28] sm:$0xf]
        %v1225 = vld [vmem:[%s403 + $0x2c] sm:$0xf]
        %v1226 = vld [vmem:[%s403 + $0x30] sm:$0xf]
        %v1227 = vld [vmem:[%s403 + $0x34] sm:$0xf]
        %v1228 = vld [vmem:[%s403 + $0x38] sm:$0xf]
        %v1229 = vld [vmem:[%s403 + $0x3c] sm:$0xf]
        %v1246 = vunpack.c.l.b16 %v1214
        %v1247 = vunpack.c.l.b16 %v1215
        %v1248 = vunpack.c.l.b16 %v1216
        %v1249 = vunpack.c.l.b16 %v1217
        %v1250 = vunpack.c.l.b16 %v1218
        %v1251 = vunpack.c.l.b16 %v1219
        %v1252 = vunpack.c.l.b16 %v1220
        %v1253 = vunpack.c.l.b16 %v1221
        %v1254 = vunpack.c.l.b16 %v1222
        %v1255 = vunpack.c.l.b16 %v1223
        %v1256 = vunpack.c.l.b16 %v1224
        %v1257 = vunpack.c.l.b16 %v1225
        %v1258 = vunpack.c.l.b16 %v1226
        %v1259 = vunpack.c.l.b16 %v1227
        %v1260 = vunpack.c.l.b16 %v1228
        %v1261 = vunpack.c.l.b16 %v1229
        %v1262 = vpack.c.b16 %v1247, %v1246
        %v1263 = vpack.c.b16 %v1249, %v1248
        %v1264 = vpack.c.b16 %v1251, %v1250
        %v1265 = vpack.c.b16 %v1253, %v1252
        %v1266 = vpack.c.b16 %v1255, %v1254
        %v1267 = vpack.c.b16 %v1257, %v1256
        %v1268 = vpack.c.b16 %v1259, %v1258
        %v1269 = vpack.c.b16 %v1261, %v1260
        %1278 = vmatprep.subr.bf16.mxu0 0
        %1279 = vmatpush1.bf16.msra.mxu0 %v1262
        %1280 = vmatprep.subr.bf16.mxu0 0
        %1281 = vmatpush1.bf16.msra.mxu0 %v1263
        %1282 = vmatprep.subr.bf16.mxu0 0
        %1283 = vmatpush1.bf16.msra.mxu0 %v1264
        %1284 = vmatprep.subr.bf16.mxu0 0
        %1285 = vmatpush1.bf16.msra.mxu0 %v1265
        %1286 = vmatprep.subr.bf16.mxu0 0
        %1287 = vmatpush1.bf16.msra.mxu0 %v1266
        %1288 = vmatprep.subr.bf16.mxu0 0
        %1289 = vmatpush1.bf16.msra.mxu0 %v1267
        %1290 = vmatprep.subr.bf16.mxu0 0
        %1291 = vmatpush1.bf16.msra.mxu0 %v1268
        %1292 = vmatprep.subr.bf16.mxu0 0
        %1293 = vmatpush1.bf16.msra.mxu0 %v1269
        %1294 = vmatprep.subr.bf16.mxu0 0
        %1295 = vmatpush1.bf16.msra.mxu0 0
        %1296 = vmatprep.subr.bf16.mxu0 0
        %1297 = vmatpush1.bf16.msra.mxu0 0
        %1298 = vmatprep.subr.bf16.mxu0 0
        %1299 = vmatpush1.bf16.msra.mxu0 0
        %1300 = vmatprep.subr.bf16.mxu0 0
        %1301 = vmatpush1.bf16.msra.mxu0 0
        %1302 = vmatprep.subr.bf16.mxu0 0
        %1303 = vmatpush1.bf16.msra.mxu0 0
        %1304 = vmatprep.subr.bf16.mxu0 0
        %1305 = vmatpush1.bf16.msra.mxu0 0
        %1306 = vmatprep.subr.bf16.mxu0 0
        %1307 = vmatpush1.bf16.msra.mxu0 0
        %1308 = vmatprep.subr.bf16.mxu0 0
        %1309 = vmatpush1.bf16.msra.mxu0 0
        %1310 = vmatprep.mubr.bf16.mxu0 0
        %1311 = vmatmul.mubr.bf16.gmra.mrb[0].mxu0 %v1206
        %v1312 = vpop.f32.mrb[0].mxu0
        %v1313 = vadd.f32 0.0, %v1312
        %v1314 = vpop.f32.mrb[0].mxu0
        %v1315 = vpop.f32.mrb[0].mxu0
        %v1316 = vadd.f32 0.0, %v1315
        %v1317 = vpop.f32.mrb[0].mxu0
        %1318 = vmatprep.mubr.bf16.mxu0 0
        %1319 = vmatmul.mubr.bf16.gmra.mrb[0].mxu0 %v1207
        %v1320 = vpop.f32.mrb[0].mxu0
        %v1321 = vadd.f32 0.0, %v1320
        %v1322 = vpop.f32.mrb[0].mxu0
        %v1323 = vpop.f32.mrb[0].mxu0
        %v1324 = vadd.f32 0.0, %v1323
        %v1325 = vpop.f32.mrb[0].mxu0
        %1326 = vmatprep.mubr.bf16.mxu0 0
        %1327 = vmatmul.mubr.bf16.gmra.mrb[0].mxu0 %v1208
        %v1328 = vpop.f32.mrb[0].mxu0
        %v1329 = vadd.f32 0.0, %v1328
        %v1330 = vpop.f32.mrb[0].mxu0
        %v1331 = vpop.f32.mrb[0].mxu0
        %v1332 = vadd.f32 0.0, %v1331
        %v1333 = vpop.f32.mrb[0].mxu0
        %1334 = vmatprep.mubr.bf16.mxu0 0
        %1335 = vmatmul.mubr.bf16.gmra.mrb[0].mxu0 %v1209
        %v1336 = vpop.f32.mrb[0].mxu0
        %v1337 = vadd.f32 0.0, %v1336
        %v1338 = vpop.f32.mrb[0].mxu0
        %v1339 = vpop.f32.mrb[0].mxu0
        %v1340 = vadd.f32 0.0, %v1339
        %v1341 = vpop.f32.mrb[0].mxu0
        %1342 = vmatprep.mubr.bf16.mxu0 0
        %1343 = vmatmul.mubr.bf16.gmra.mrb[0].mxu0 %v1210
        %v1344 = vpop.f32.mrb[0].mxu0
        %v1345 = vadd.f32 0.0, %v1344
        %v1346 = vpop.f32.mrb[0].mxu0
        %v1347 = vpop.f32.mrb[0].mxu0
        %v1348 = vadd.f32 0.0, %v1347
        %v1349 = vpop.f32.mrb[0].mxu0
        %1350 = vmatprep.mubr.bf16.mxu0 0
        %1351 = vmatmul.mubr.bf16.gmra.mrb[0].mxu0 %v1211
        %v1352 = vpop.f32.mrb[0].mxu0
        %v1353 = vadd.f32 0.0, %v1352
        %v1354 = vpop.f32.mrb[0].mxu0
        %v1355 = vpop.f32.mrb[0].mxu0
        %v1356 = vadd.f32 0.0, %v1355
        %v1357 = vpop.f32.mrb[0].mxu0
        %1358 = vmatprep.mubr.bf16.mxu0 0
        %1359 = vmatmul.mubr.bf16.gmra.mrb[0].mxu0 %v1212
        %v1360 = vpop.f32.mrb[0].mxu0
        %v1361 = vadd.f32 0.0, %v1360
        %v1362 = vpop.f32.mrb[0].mxu0
        %v1363 = vpop.f32.mrb[0].mxu0
        %v1364 = vadd.f32 0.0, %v1363
        %v1365 = vpop.f32.mrb[0].mxu0
        %1366 = vmatprep.mubr.bf16.mxu0 0
        %1367 = vmatmul.mubr.bf16.gmra.mrb[0].mxu0 %v1213
        %v1368 = vpop.f32.mrb[0].mxu0
        %v1369 = vadd.f32 0.0, %v1368
        %v1370 = vpop.f32.mrb[0].mxu0
        %v1371 = vpop.f32.mrb[0].mxu0
        %v1372 = vadd.f32 0.0, %v1371
        %v1373 = vpop.f32.mrb[0].mxu0
        %1374 = vdwg.mxu0
        %v1375 = vpack.c.bf16 %v1316, %v1313
        %v1376 = vpack.c.bf16 %v1324, %v1321
        %v1377 = vpack.c.bf16 %v1332, %v1329
        %v1378 = vpack.c.bf16 %v1340, %v1337
        %v1379 = vpack.c.bf16 %v1348, %v1345
        %v1380 = vpack.c.bf16 %v1356, %v1353
        %v1381 = vpack.c.bf16 %v1364, %v1361
        %v1382 = vpack.c.bf16 %v1372, %v1369
        %v1391 = vunpack.c.l.b16 %v1375
        %v1392 = vunpack.c.h.b16 %v1375
        %v1393 = vunpack.c.l.b16 %v1376
        %v1394 = vunpack.c.h.b16 %v1376
        %v1395 = vunpack.c.l.b16 %v1377
        %v1396 = vunpack.c.h.b16 %v1377
        %v1397 = vunpack.c.l.b16 %v1378
        %v1398 = vunpack.c.h.b16 %v1378
        %v1399 = vunpack.c.l.b16 %v1379
        %v1400 = vunpack.c.h.b16 %v1379
        %v1401 = vunpack.c.l.b16 %v1380
        %v1402 = vunpack.c.h.b16 %v1380
        %v1403 = vunpack.c.l.b16 %v1381
        %v1404 = vunpack.c.h.b16 %v1381
        %v1405 = vunpack.c.l.b16 %v1382
        %v1406 = vunpack.c.h.b16 %v1382
        %v1407 = vpack.c.b16 %v1391, %v1391
        %v1408 = vpack.c.b16 %v1392, %v1392
        %v1409 = vpack.c.b16 %v1393, %v1393
        %v1410 = vpack.c.b16 %v1394, %v1394
        %v1411 = vpack.c.b16 %v1395, %v1395
        %v1412 = vpack.c.b16 %v1396, %v1396
        %v1413 = vpack.c.b16 %v1397, %v1397
        %v1414 = vpack.c.b16 %v1398, %v1398
        %v1415 = vpack.c.b16 %v1399, %v1399
        %v1416 = vpack.c.b16 %v1400, %v1400
        %v1417 = vpack.c.b16 %v1401, %v1401
        %v1418 = vpack.c.b16 %v1402, %v1402
        %v1419 = vpack.c.b16 %v1403, %v1403
        %v1420 = vpack.c.b16 %v1404, %v1404
        %v1421 = vpack.c.b16 %v1405, %v1405
        %v1422 = vpack.c.b16 %v1406, %v1406
        %1439 = vst [vmem:[%s479] sm:$0xf] %v1407
        %1440 = vst [vmem:[%s479 + $0x4] sm:$0xf] %v1408
        %1441 = vst [vmem:[%s479 + $0x8] sm:$0xf] %v1409
        %1442 = vst [vmem:[%s479 + $0xc] sm:$0xf] %v1410
        %1443 = vst [vmem:[%s479 + $0x10] sm:$0xf] %v1411
        %1444 = vst [vmem:[%s479 + $0x14] sm:$0xf] %v1412
        %1445 = vst [vmem:[%s479 + $0x18] sm:$0xf] %v1413
        %1446 = vst [vmem:[%s479 + $0x1c] sm:$0xf] %v1414
        %1447 = vst [vmem:[%s479 + $0x20] sm:$0xf] %v1415
        %1448 = vst [vmem:[%s479 + $0x24] sm:$0xf] %v1416
        %1449 = vst [vmem:[%s479 + $0x28] sm:$0xf] %v1417
        %1450 = vst [vmem:[%s479 + $0x2c] sm:$0xf] %v1418
        %1451 = vst [vmem:[%s479 + $0x30] sm:$0xf] %v1419
        %1452 = vst [vmem:[%s479 + $0x34] sm:$0xf] %v1420
        %1453 = vst [vmem:[%s479 + $0x38] sm:$0xf] %v1421
        %1454 = vst [vmem:[%s479 + $0x3c] sm:$0xf] %v1422
        %s1455 = sand.u32 %s220, 1
        %s1456 = scalar_lea.sflag [#allocation4], %s1455
        %s1457 = sand.u32 %s220, 1
        %s1458 = smul.addr %s1457, 64
        %s1459 = scalar_lea.vmem [#allocation13], %s1458
        // Predicated region
        $region69: #{decoder_layer_forward.6} parent=43 // pred_check
          %p1460 = pneg %p230
        $region70: #{decoder_layer_forward.6} parent=43 // pred_check_branch
          %1462 = sbr.rel (%p1460) target = $region72
        $region71: #{decoder_layer_forward.6} parent=43 // pred_region
          %s1464 = ssub.s32 1024, 1024
          %1465 = vsyncadd %s1456, %s1464
          %s1466 = smul.addr %s36, 32
          %s1467 = sadd.s32 %s37, %s1466
          %s1468 = smul.addr %s1467, 64
          %s1469 = scalar_lea.hbm %s6, %s1468
          %s1470 = sshll.u32 %s1459, 4
          %s1471 = int_to_ptr.vmem [resolvable:$true] %s1470
          %1476 = dma.vmem_to_hbm [thread:$0]  %s1471, 1024, %s1469, %s1456, 64, 128, 4
        $region72: #{decoder_layer_forward.6} parent=43 // pred_fallthru
          _
      $region44: #{decoder_layer_forward.6} parent=5 // pred_fallthru
        _
      %p1477 = scmp.le.s32.totalorder 2, %s27
      // Predicated region
      $region73: #{decoder_layer_forward.6} parent=5 // pred_check
        %p1478 = pneg %p1477
      $region74: #{decoder_layer_forward.6} parent=5 // pred_check_branch
        %1480 = sbr.rel (%p1478) target = $region76
      $region75: #{decoder_layer_forward.6} parent=5 // pred_region
        %s1481 = ssub.s32 %s27, 2
        // Predicated region
        $region77: #{decoder_layer_forward.6} parent=75 // pred_check
          %p1482 = pneg %p236
        $region78: #{decoder_layer_forward.6} parent=75 // pred_check_branch
          %1484 = sbr.rel (%p1482) target = $region80
        $region79: #{decoder_layer_forward.6} parent=75 // pred_region
          %s1485 = sand.u32 %s221, 1
          %s1486 = scalar_lea.sflag [#allocation4], %s1485
          %s1487 = sand.u32 %s221, 1
          %s1488 = smul.addr %s1487, 64
          %s1489 = scalar_lea.vmem [#allocation13], %s1488
          %1490 = dma.done %s1486, 1024
        $region80: #{decoder_layer_forward.6} parent=75 // pred_fallthru
          _
      $region76: #{decoder_layer_forward.6} parent=5 // pred_fallthru
        _
    $region6: #{decoder_layer_forward.6} parent=1 // loop_footer
      %s31 = sadd.s32 1, %s27
    $region7: #{decoder_layer_forward.6} parent=1 // loop_footer_branch
      %26 = sbr.rel target = $region3
    $region8: #{decoder_layer_forward.6} parent=1 // loop_exit
      _
    %1491 = vsyncpa [#allocation3], 1
    %s1492 = scalar_lea.sflag [#allocation3], 1
    %1493 = vsyncpa %s1492, 1
    %1494 = vsyncpa [#allocation6], 1
    %s1495 = scalar_lea.sflag [#allocation6], 1
    %1496 = vsyncpa %s1495, 1
    %1497 = vsyncpa [#allocation9], 1
    %s1498 = scalar_lea.sflag [#allocation9], 1
    %1499 = vsyncpa %s1498, 1
    %1500 = vsyncpa [#allocation12], 1
    %s1501 = scalar_lea.sflag [#allocation12], 1
    %1502 = vsyncpa %s1501, 1
    %1503 = vsyncpa [#allocation4], 1
    %s1504 = scalar_lea.sflag [#allocation4], 1
    %1505 = vsyncpa %s1504, 1

// kernel: decoder_layer_forward.4
$region0: #{decoder_layer_forward.4}
  #allocation0 [shape = 'u32[]', space=smem, size = 0x4, offset = 0x4, fixed_abs, tag = 'smem constant byte address 0x4 - core index']
  #allocation1 [shape = 'u32[144,128]{1,0:T(1,128)}', space=vmem, size = 0x12000, scoped, tag = 'internal scratch']
  #allocation2 [shape = 'f32[256,256]{1,0:T(8,128)}', space=vmem, size = 0x40000, scoped, tag = 'scratch operand']
  %s0 = inlined_call_operand.hbm [shape: bf16[256,256], index: 0, kind: input, shape index: {}]
  %s1 = inlined_call_operand.hbm [shape: bf16[256,768], index: 1, kind: input, shape index: {}]
  %s2 = inlined_call_operand.hbm [shape: bf16[256,768], index: 2, kind: output, shape index: {}]
  %s3 = sld [smem:[#allocation0]]
  $region57: #{decoder_layer_forward.4} parent=0
    _
  %s5 = ssub.s32 1, %s3
  %s6 = scalar_select 0, %s5, %s3
  $region1: #{decoder_layer_forward.4} parent=0
    #allocation3 [shape = 'u8[131072]{0}', space=vmem, size = 0x20000, scoped, tag = 'input window, operand 0, single buffered']
    #allocation4 [shape = 's32[2]{0}', space=sflag, size = 0x8, scoped, tag = 'scoped memory for decoder_layer_forward.4']
    #allocation5 [shape = 's32[2]{0}', space=sflag, size = 0x8, scoped, tag = 'scoped memory for decoder_layer_forward.4']
    #allocation6 [shape = 'u8[262144]{0}', space=vmem, size = 0x40000, scoped, tag = 'input window, operand 1']
    #allocation7 [shape = 's32[2]{0}', space=sflag, size = 0x8, scoped, tag = 'scoped memory for decoder_layer_forward.4']
    #allocation8 [shape = 'u8[262144]{0}', space=vmem, size = 0x40000, scoped, tag = 'output window, operand 0']
    %7 = vsyncpa [#allocation4], 0
    %8 = vsyncpa [#allocation7], 0
    %s9 = scalar_lea.sflag [#allocation7], 1
    %10 = vsyncpa %s9, 0
    %11 = vsyncpa [#allocation5], 0
    %s12 = scalar_lea.sflag [#allocation5], 1
    %13 = vsyncpa %s12, 0
    loop: start=0, step=1, limit=5
    $region2: #{decoder_layer_forward.4} parent=1 // loop_pre_header
      _
    $region3: #{decoder_layer_forward.4} parent=1 // loop_header
      %s15 = sphi 0, %s19
      %p16 = scmp.ge.s32.totalorder %s15, 5
      %s22 = sphi 0, %s41
      %s23 = sphi 0, %s37
      %s24 = sphi 0, %s33
      %s25 = sphi 0, %s22
      %s26 = sphi 0, %s23
      %s27 = sphi 0, %s24
      %s28 = sphi 0, %s25
      %s29 = sphi 0, %s26
      %s30 = sphi 0, %s27
      %s46 = sphi 0, %s48
      %s49 = sphi 0, %s46
      %s50 = sphi 0, %s49
      %s66 = sphi 0, %s50
      %s74 = sphi 0, %s76
      %s77 = sphi 0, %s74
      %s78 = sphi 0, %s77
      %s94 = sphi 0, %s78
      %s102 = sphi 0, %s104
      %s105 = sphi 0, %s102
      %s106 = sphi 0, %s105
      %s122 = sphi 0, %s106
    $region4: #{decoder_layer_forward.4} parent=1 // loop_header_branch
      %18 = sbr.rel (%p16) target = $region8
    $region5: #{decoder_layer_forward.4} parent=1 // loop_body
      %s20 = ssub.s32 %s15, 1
      %s21 = ssub.s32 %s15, 2
      %s31 = sadd.s32 1, %s24
      %p32 = scmp.ge.s32.totalorder %s31, 1
      %s33 = scalar_select %p32, 0, %s31
      %s34 = sadd.s32 1, %s23
      %s35 = scalar_select %p32, %s34, %s23
      %p36 = scmp.ge.s32.totalorder %s35, 3
      %s37 = scalar_select %p36, 0, %s35
      %s38 = sadd.s32 1, %s22
      %s39 = scalar_select %p36, %s38, %s22
      %p40 = scmp.ge.s32.totalorder %s39, 1
      %s41 = scalar_select %p40, 0, %s39
      %s42 = ssub.s32 %s22, %s41
      %s43 = ssub.s32 %s24, %s33
      %s44 = sor.u32 %s42, %s43
      %p45 = scmp.eq.s32.totalorder %s44, 0
      %s47 = sadd.s32 %s46, 1
      %s48 = scalar_select %p45, %s46, %s47
      %p51 = pneg %p45
      %p52 = scmp.eq.s32.totalorder %s15, 2
      %p53 = por %p51, %p52
      %p54 = scmp.ne.s32.totalorder %s46, %s49
      %p55 = scmp.eq.s32.totalorder %s15, 0
      %p56 = por %p54, %p55
      %p57 = scmp.ne.s32.totalorder %s46, %s49
      %p58 = scmp.eq.s32.totalorder %s20, 2
      %p59 = por %p57, %p58
      %p60 = scmp.ne.s32.totalorder %s49, %s50
      %p61 = scmp.eq.s32.totalorder %s20, 0
      %p62 = por %p60, %p61
      %p63 = scmp.ne.s32.totalorder %s49, %s50
      %p64 = scmp.eq.s32.totalorder %s21, 2
      %p65 = por %p63, %p64
      %p67 = scmp.ne.s32.totalorder %s50, %s66
      %p68 = scmp.eq.s32.totalorder %s21, 0
      %p69 = por %p67, %p68
      %s70 = ssub.s32 %s24, %s33
      %s71 = ssub.s32 %s23, %s37
      %s72 = sor.u32 %s70, %s71
      %p73 = scmp.eq.s32.totalorder %s72, 0
      %s75 = sadd.s32 %s74, 1
      %s76 = scalar_select %p73, %s74, %s75
      %p79 = pneg %p73
      %p80 = scmp.eq.s32.totalorder %s15, 2
      %p81 = por %p79, %p80
      %p82 = scmp.ne.s32.totalorder %s74, %s77
      %p83 = scmp.eq.s32.totalorder %s15, 0
      %p84 = por %p82, %p83
      %p85 = scmp.ne.s32.totalorder %s74, %s77
      %p86 = scmp.eq.s32.totalorder %s20, 2
      %p87 = por %p85, %p86
      %p88 = scmp.ne.s32.totalorder %s77, %s78
      %p89 = scmp.eq.s32.totalorder %s20, 0
      %p90 = por %p88, %p89
      %p91 = scmp.ne.s32.totalorder %s77, %s78
      %p92 = scmp.eq.s32.totalorder %s21, 2
      %p93 = por %p91, %p92
      %p95 = scmp.ne.s32.totalorder %s78, %s94
      %p96 = scmp.eq.s32.totalorder %s21, 0
      %p97 = por %p95, %p96
      %s98 = ssub.s32 %s22, %s41
      %s99 = ssub.s32 %s23, %s37
      %s100 = sor.u32 %s98, %s99
      %p101 = scmp.eq.s32.totalorder %s100, 0
      %s103 = sadd.s32 %s102, 1
      %s104 = scalar_select %p101, %s102, %s103
      %p107 = pneg %p101
      %p108 = scmp.eq.s32.totalorder %s15, 2
      %p109 = por %p107, %p108
      %p110 = scmp.ne.s32.totalorder %s102, %s105
      %p111 = scmp.eq.s32.totalorder %s15, 0
      %p112 = por %p110, %p111
      %p113 = scmp.ne.s32.totalorder %s102, %s105
      %p114 = scmp.eq.s32.totalorder %s20, 2
      %p115 = por %p113, %p114
      %p116 = scmp.ne.s32.totalorder %s105, %s106
      %p117 = scmp.eq.s32.totalorder %s20, 0
      %p118 = por %p116, %p117
      %p119 = scmp.ne.s32.totalorder %s105, %s106
      %p120 = scmp.eq.s32.totalorder %s21, 2
      %p121 = por %p119, %p120
      %p123 = scmp.ne.s32.totalorder %s106, %s122
      %p124 = scmp.eq.s32.totalorder %s21, 0
      %p125 = por %p123, %p124
      %p126 = scmp.le.s32.totalorder 1, %s15
      %p127 = scmp.lt.s32.totalorder %s15, 4
      %p128 = pnand %p126, %p127
      %p129 = pneg %p128
      // Predicated region
      $region9: #{decoder_layer_forward.4} parent=5 // pred_check
        _
      $region10: #{decoder_layer_forward.4} parent=5 // pred_check_branch
        %131 = sbr.rel (%p128) target = $region12
      $region11: #{decoder_layer_forward.4} parent=5 // pred_region
        %s132 = ssub.s32 %s15, 1
        // Predicated region
        $region13: #{decoder_layer_forward.4} parent=11 // pred_check
          %p133 = pneg %p62
        $region14: #{decoder_layer_forward.4} parent=11 // pred_check_branch
          %135 = sbr.rel (%p133) target = $region16
        $region15: #{decoder_layer_forward.4} parent=11 // pred_region
          %s136 = smul.u32 32, %s25
          %s137 = smul.u32 2, %s27
          %s139 = ssub.s32 4096, 4096
          %140 = vsyncadd [#allocation4], %s139
          %s141 = smul.addr %s136, 2
          %s142 = sadd.s32 %s137, %s141
          %s143 = smul.addr %s142, 64
          %s144 = scalar_lea.hbm %s0, %s143
          %s145 = sshll.u32 [#allocation3], 4
          %s146 = int_to_ptr.vmem [resolvable:$true] %s145
          %151 = dma.hbm_to_vmem [thread:$0]  %s144, 4096, %s146, [#allocation4], 128, 128, 8
        $region16: #{decoder_layer_forward.4} parent=11 // pred_fallthru
          _
      $region12: #{decoder_layer_forward.4} parent=5 // pred_fallthru
        _
      %p152 = scmp.lt.s32.totalorder %s15, 3
      // Predicated region
      $region17: #{decoder_layer_forward.4} parent=5 // pred_check
        %p153 = pneg %p152
      $region18: #{decoder_layer_forward.4} parent=5 // pred_check_branch
        %155 = sbr.rel (%p153) target = $region20
      $region19: #{decoder_layer_forward.4} parent=5 // pred_region
        // Predicated region
        $region21: #{decoder_layer_forward.4} parent=19 // pred_check
          %p156 = pneg %p84
        $region22: #{decoder_layer_forward.4} parent=19 // pred_check_branch
          %158 = sbr.rel (%p156) target = $region24
        $region23: #{decoder_layer_forward.4} parent=19 // pred_region
          %s159 = sand.u32 %s74, 1
          %s160 = scalar_lea.sflag [#allocation7], %s159
          %s161 = sand.u32 %s74, 1
          %s162 = smul.addr %s161, 256
          %s163 = scalar_lea.vmem [#allocation6], %s162
          %s164 = smul.u32 32, %s24
          %s165 = smul.u32 2, %s23
          %s167 = ssub.s32 4096, 4096
          %168 = vsyncadd %s160, %s167
          %s169 = smul.addr %s164, 6
          %s170 = sadd.s32 %s165, %s169
          %s171 = smul.addr %s170, 64
          %s172 = scalar_lea.hbm %s1, %s171
          %s173 = sshll.u32 %s163, 4
          %s174 = int_to_ptr.vmem [resolvable:$true] %s173
          %179 = dma.hbm_to_vmem [thread:$0]  %s172, 4096, %s174, %s160, 384, 128, 8
        $region24: #{decoder_layer_forward.4} parent=19 // pred_fallthru
          _
      $region20: #{decoder_layer_forward.4} parent=5 // pred_fallthru
        _
      %p180 = scmp.le.s32.totalorder 1, %s15
      %p181 = scmp.lt.s32.totalorder %s15, 4
      %p182 = pnand %p180, %p181
      %p183 = pneg %p182
      // Predicated region
      $region25: #{decoder_layer_forward.4} parent=5 // pred_check
        _
      $region26: #{decoder_layer_forward.4} parent=5 // pred_check_branch
        %185 = sbr.rel (%p182) target = $region28
      $region27: #{decoder_layer_forward.4} parent=5 // pred_region
        %s186 = ssub.s32 %s15, 1
        // Predicated region
        $region29: #{decoder_layer_forward.4} parent=27 // pred_check
          %p187 = pneg %p62
        $region30: #{decoder_layer_forward.4} parent=27 // pred_check_branch
          %189 = sbr.rel (%p187) target = $region32
        $region31: #{decoder_layer_forward.4} parent=27 // pred_region
          %190 = dma.done [#allocation4], 4096
        $region32: #{decoder_layer_forward.4} parent=27 // pred_fallthru
          _
        %s191 = sand.u32 %s77, 1
        %s192 = scalar_lea.sflag [#allocation7], %s191
        %s193 = sand.u32 %s77, 1
        %s194 = smul.addr %s193, 256
        %s195 = scalar_lea.vmem [#allocation6], %s194
        // Predicated region
        $region33: #{decoder_layer_forward.4} parent=27 // pred_check
          %p196 = pneg %p90
        $region34: #{decoder_layer_forward.4} parent=27 // pred_check_branch
          %198 = sbr.rel (%p196) target = $region36
        $region35: #{decoder_layer_forward.4} parent=27 // pred_region
          %199 = dma.done %s192, 4096
        $region36: #{decoder_layer_forward.4} parent=27 // pred_fallthru
          _
        %p200 = pneg %p62
        %p201 = pneg %p59
        %s202 = sand.u32 %s77, 1
        %s203 = scalar_lea.sflag [#allocation7], %s202
        %s204 = sand.u32 %s77, 1
        %s205 = smul.addr %s204, 256
        %s206 = scalar_lea.vmem [#allocation6], %s205
        %p207 = pneg %p90
        %p208 = pneg %p87
        %p209 = pneg %p118
        %p210 = pneg %p115
        %s211 = sand.u32 %s105, 1
        %s212 = scalar_lea.sflag [#allocation5], %s211
        %s213 = sand.u32 %s105, 1
        %s214 = smul.addr %s213, 256
        %s215 = scalar_lea.vmem [#allocation8], %s214
        %s216 = smul.u32 32, %s25
        %s217 = smul.u32 2, %s27
        %s218 = smul.u32 32, %s27
        %s219 = smul.u32 2, %s26
        %s220 = smul.u32 32, %s25
        %s221 = smul.u32 2, %s26
        %p222 = scmp.eq.s32.totalorder %s27, 0
        // Predicated region
        $region37: #{decoder_layer_forward.4} parent=27 // pred_check
          %p223 = pneg %p222
        $region38: #{decoder_layer_forward.4} parent=27 // pred_check_branch
          %225 = sbr.rel (%p223) target = $region40
        $region39: #{decoder_layer_forward.4} parent=27 // pred_region
          %226 = vst [vmem:[#allocation2] sm:$0xff] 0.0
          %227 = vst [vmem:[#allocation2 + $0x8] sm:$0xff] 0.0
          %228 = vst [vmem:[#allocation2 + $0x10] sm:$0xff] 0.0
          %229 = vst [vmem:[#allocation2 + $0x18] sm:$0xff] 0.0
          %230 = vst [vmem:[#allocation2 + $0x20] sm:$0xff] 0.0
          %231 = vst [vmem:[#allocation2 + $0x28] sm:$0xff] 0.0
          %232 = vst [vmem:[#allocation2 + $0x30] sm:$0xff] 0.0
          %233 = vst [vmem:[#allocation2 + $0x38] sm:$0xff] 0.0
          %234 = vst [vmem:[#allocation2 + $0x40] sm:$0xff] 0.0
          %235 = vst [vmem:[#allocation2 + $0x48] sm:$0xff] 0.0
          %236 = vst [vmem:[#allocation2 + $0x50] sm:$0xff] 0.0
          %237 = vst [vmem:[#allocation2 + $0x58] sm:$0xff] 0.0
          %238 = vst [vmem:[#allocation2 + $0x60] sm:$0xff] 0.0
          %239 = vst [vmem:[#allocation2 + $0x68] sm:$0xff] 0.0
          %240 = vst [vmem:[#allocation2 + $0x70] sm:$0xff] 0.0
          %241 = vst [vmem:[#allocation2 + $0x78] sm:$0xff] 0.0
          %242 = vst [vmem:[#allocation2 + $0x80] sm:$0xff] 0.0
          %243 = vst [vmem:[#allocation2 + $0x88] sm:$0xff] 0.0
          %244 = vst [vmem:[#allocation2 + $0x90] sm:$0xff] 0.0
          %245 = vst [vmem:[#allocation2 + $0x98] sm:$0xff] 0.0
          %246 = vst [vmem:[#allocation2 + $0xa0] sm:$0xff] 0.0
          %247 = vst [vmem:[#allocation2 + $0xa8] sm:$0xff] 0.0
          %248 = vst [vmem:[#allocation2 + $0xb0] sm:$0xff] 0.0
          %249 = vst [vmem:[#allocation2 + $0xb8] sm:$0xff] 0.0
          %250 = vst [vmem:[#allocation2 + $0xc0] sm:$0xff] 0.0
          %251 = vst [vmem:[#allocation2 + $0xc8] sm:$0xff] 0.0
          %252 = vst [vmem:[#allocation2 + $0xd0] sm:$0xff] 0.0
          %253 = vst [vmem:[#allocation2 + $0xd8] sm:$0xff] 0.0
          %254 = vst [vmem:[#allocation2 + $0xe0] sm:$0xff] 0.0
          %255 = vst [vmem:[#allocation2 + $0xe8] sm:$0xff] 0.0
          %256 = vst [vmem:[#allocation2 + $0xf0] sm:$0xff] 0.0
          %257 = vst [vmem:[#allocation2 + $0xf8] sm:$0xff] 0.0
          %258 = vst [vmem:[#allocation2 + $0x100] sm:$0xff] 0.0
          %259 = vst [vmem:[#allocation2 + $0x108] sm:$0xff] 0.0
          %260 = vst [vmem:[#allocation2 + $0x110] sm:$0xff] 0.0
          %261 = vst [vmem:[#allocation2 + $0x118] sm:$0xff] 0.0
          %262 = vst [vmem:[#allocation2 + $0x120] sm:$0xff] 0.0
          %263 = vst [vmem:[#allocation2 + $0x128] sm:$0xff] 0.0
          %264 = vst [vmem:[#allocation2 + $0x130] sm:$0xff] 0.0
          %265 = vst [vmem:[#allocation2 + $0x138] sm:$0xff] 0.0
          %266 = vst [vmem:[#allocation2 + $0x140] sm:$0xff] 0.0
          %267 = vst [vmem:[#allocation2 + $0x148] sm:$0xff] 0.0
          %268 = vst [vmem:[#allocation2 + $0x150] sm:$0xff] 0.0
          %269 = vst [vmem:[#allocation2 + $0x158] sm:$0xff] 0.0
          %270 = vst [vmem:[#allocation2 + $0x160] sm:$0xff] 0.0
          %271 = vst [vmem:[#allocation2 + $0x168] sm:$0xff] 0.0
          %272 = vst [vmem:[#allocation2 + $0x170] sm:$0xff] 0.0
          %273 = vst [vmem:[#allocation2 + $0x178] sm:$0xff] 0.0
          %274 = vst [vmem:[#allocation2 + $0x180] sm:$0xff] 0.0
          %275 = vst [vmem:[#allocation2 + $0x188] sm:$0xff] 0.0
          %276 = vst [vmem:[#allocation2 + $0x190] sm:$0xff] 0.0
          %277 = vst [vmem:[#allocation2 + $0x198] sm:$0xff] 0.0
          %278 = vst [vmem:[#allocation2 + $0x1a0] sm:$0xff] 0.0
          %279 = vst [vmem:[#allocation2 + $0x1a8] sm:$0xff] 0.0
          %280 = vst [vmem:[#allocation2 + $0x1b0] sm:$0xff] 0.0
          %281 = vst [vmem:[#allocation2 + $0x1b8] sm:$0xff] 0.0
          %282 = vst [vmem:[#allocation2 + $0x1c0] sm:$0xff] 0.0
          %283 = vst [vmem:[#allocation2 + $0x1c8] sm:$0xff] 0.0
          %284 = vst [vmem:[#allocation2 + $0x1d0] sm:$0xff] 0.0
          %285 = vst [vmem:[#allocation2 + $0x1d8] sm:$0xff] 0.0
          %286 = vst [vmem:[#allocation2 + $0x1e0] sm:$0xff] 0.0
          %287 = vst [vmem:[#allocation2 + $0x1e8] sm:$0xff] 0.0
          %288 = vst [vmem:[#allocation2 + $0x1f0] sm:$0xff] 0.0
          %289 = vst [vmem:[#allocation2 + $0x1f8] sm:$0xff] 0.0
        $region40: #{decoder_layer_forward.4} parent=27 // pred_fallthru
          _
        %v290 = vld [vmem:[#allocation2] sm:$0xff]
        %v291 = vld [vmem:[#allocation2 + $0x8] sm:$0xff]
        %v292 = vld [vmem:[#allocation2 + $0x10] sm:$0xff]
        %v293 = vld [vmem:[#allocation2 + $0x18] sm:$0xff]
        %v294 = vld [vmem:[#allocation2 + $0x20] sm:$0xff]
        %v295 = vld [vmem:[#allocation2 + $0x28] sm:$0xff]
        %v296 = vld [vmem:[#allocation2 + $0x30] sm:$0xff]
        %v297 = vld [vmem:[#allocation2 + $0x38] sm:$0xff]
        %v298 = vld [vmem:[#allocation2 + $0x40] sm:$0xff]
        %v299 = vld [vmem:[#allocation2 + $0x48] sm:$0xff]
        %v300 = vld [vmem:[#allocation2 + $0x50] sm:$0xff]
        %v301 = vld [vmem:[#allocation2 + $0x58] sm:$0xff]
        %v302 = vld [vmem:[#allocation2 + $0x60] sm:$0xff]
        %v303 = vld [vmem:[#allocation2 + $0x68] sm:$0xff]
        %v304 = vld [vmem:[#allocation2 + $0x70] sm:$0xff]
        %v305 = vld [vmem:[#allocation2 + $0x78] sm:$0xff]
        %v306 = vld [vmem:[#allocation2 + $0x80] sm:$0xff]
        %v307 = vld [vmem:[#allocation2 + $0x88] sm:$0xff]
        %v308 = vld [vmem:[#allocation2 + $0x90] sm:$0xff]
        %v309 = vld [vmem:[#allocation2 + $0x98] sm:$0xff]
        %v310 = vld [vmem:[#allocation2 + $0xa0] sm:$0xff]
        %v311 = vld [vmem:[#allocation2 + $0xa8] sm:$0xff]
        %v312 = vld [vmem:[#allocation2 + $0xb0] sm:$0xff]
        %v313 = vld [vmem:[#allocation2 + $0xb8] sm:$0xff]
        %v314 = vld [vmem:[#allocation2 + $0xc0] sm:$0xff]
        %v315 = vld [vmem:[#allocation2 + $0xc8] sm:$0xff]
        %v316 = vld [vmem:[#allocation2 + $0xd0] sm:$0xff]
        %v317 = vld [vmem:[#allocation2 + $0xd8] sm:$0xff]
        %v318 = vld [vmem:[#allocation2 + $0xe0] sm:$0xff]
        %v319 = vld [vmem:[#allocation2 + $0xe8] sm:$0xff]
        %v320 = vld [vmem:[#allocation2 + $0xf0] sm:$0xff]
        %v321 = vld [vmem:[#allocation2 + $0xf8] sm:$0xff]
        %v322 = vld [vmem:[#allocation2 + $0x100] sm:$0xff]
        %v323 = vld [vmem:[#allocation2 + $0x108] sm:$0xff]
        %v324 = vld [vmem:[#allocation2 + $0x110] sm:$0xff]
        %v325 = vld [vmem:[#allocation2 + $0x118] sm:$0xff]
        %v326 = vld [vmem:[#allocation2 + $0x120] sm:$0xff]
        %v327 = vld [vmem:[#allocation2 + $0x128] sm:$0xff]
        %v328 = vld [vmem:[#allocation2 + $0x130] sm:$0xff]
        %v329 = vld [vmem:[#allocation2 + $0x138] sm:$0xff]
        %v330 = vld [vmem:[#allocation2 + $0x140] sm:$0xff]
        %v331 = vld [vmem:[#allocation2 + $0x148] sm:$0xff]
        %v332 = vld [vmem:[#allocation2 + $0x150] sm:$0xff]
        %v333 = vld [vmem:[#allocation2 + $0x158] sm:$0xff]
        %v334 = vld [vmem:[#allocation2 + $0x160] sm:$0xff]
        %v335 = vld [vmem:[#allocation2 + $0x168] sm:$0xff]
        %v336 = vld [vmem:[#allocation2 + $0x170] sm:$0xff]
        %v337 = vld [vmem:[#allocation2 + $0x178] sm:$0xff]
        %v338 = vld [vmem:[#allocation2 + $0x180] sm:$0xff]
        %v339 = vld [vmem:[#allocation2 + $0x188] sm:$0xff]
        %v340 = vld [vmem:[#allocation2 + $0x190] sm:$0xff]
        %v341 = vld [vmem:[#allocation2 + $0x198] sm:$0xff]
        %v342 = vld [vmem:[#allocation2 + $0x1a0] sm:$0xff]
        %v343 = vld [vmem:[#allocation2 + $0x1a8] sm:$0xff]
        %v344 = vld [vmem:[#allocation2 + $0x1b0] sm:$0xff]
        %v345 = vld [vmem:[#allocation2 + $0x1b8] sm:$0xff]
        %v346 = vld [vmem:[#allocation2 + $0x1c0] sm:$0xff]
        %v347 = vld [vmem:[#allocation2 + $0x1c8] sm:$0xff]
        %v348 = vld [vmem:[#allocation2 + $0x1d0] sm:$0xff]
        %v349 = vld [vmem:[#allocation2 + $0x1d8] sm:$0xff]
        %v350 = vld [vmem:[#allocation2 + $0x1e0] sm:$0xff]
        %v351 = vld [vmem:[#allocation2 + $0x1e8] sm:$0xff]
        %v352 = vld [vmem:[#allocation2 + $0x1f0] sm:$0xff]
        %v353 = vld [vmem:[#allocation2 + $0x1f8] sm:$0xff]
        %v354 = vld [vmem:[#allocation3] sm:$0xff]
        %v355 = vld [vmem:[#allocation3 + $0x8] sm:$0xff]
        %v356 = vld [vmem:[#allocation3 + $0x10] sm:$0xff]
        %v357 = vld [vmem:[#allocation3 + $0x18] sm:$0xff]
        %v358 = vld [vmem:[#allocation3 + $0x20] sm:$0xff]
        %v359 = vld [vmem:[#allocation3 + $0x28] sm:$0xff]
        %v360 = vld [vmem:[#allocation3 + $0x30] sm:$0xff]
        %v361 = vld [vmem:[#allocation3 + $0x38] sm:$0xff]
        %v362 = vld [vmem:[#allocation3 + $0x40] sm:$0xff]
        %v363 = vld [vmem:[#allocation3 + $0x48] sm:$0xff]
        %v364 = vld [vmem:[#allocation3 + $0x50] sm:$0xff]
        %v365 = vld [vmem:[#allocation3 + $0x58] sm:$0xff]
        %v366 = vld [vmem:[#allocation3 + $0x60] sm:$0xff]
        %v367 = vld [vmem:[#allocation3 + $0x68] sm:$0xff]
        %v368 = vld [vmem:[#allocation3 + $0x70] sm:$0xff]
        %v369 = vld [vmem:[#allocation3 + $0x78] sm:$0xff]
        %v370 = vld [vmem:[#allocation3 + $0x80] sm:$0xff]
        %v371 = vld [vmem:[#allocation3 + $0x88] sm:$0xff]
        %v372 = vld [vmem:[#allocation3 + $0x90] sm:$0xff]
        %v373 = vld [vmem:[#allocation3 + $0x98] sm:$0xff]
        %v374 = vld [vmem:[#allocation3 + $0xa0] sm:$0xff]
        %v375 = vld [vmem:[#allocation3 + $0xa8] sm:$0xff]
        %v376 = vld [vmem:[#allocation3 + $0xb0] sm:$0xff]
        %v377 = vld [vmem:[#allocation3 + $0xb8] sm:$0xff]
        %v378 = vld [vmem:[#allocation3 + $0xc0] sm:$0xff]
        %v379 = vld [vmem:[#allocation3 + $0xc8] sm:$0xff]
        %v380 = vld [vmem:[#allocation3 + $0xd0] sm:$0xff]
        %v381 = vld [vmem:[#allocation3 + $0xd8] sm:$0xff]
        %v382 = vld [vmem:[#allocation3 + $0xe0] sm:$0xff]
        %v383 = vld [vmem:[#allocation3 + $0xe8] sm:$0xff]
        %v384 = vld [vmem:[#allocation3 + $0xf0] sm:$0xff]
        %v385 = vld [vmem:[#allocation3 + $0xf8] sm:$0xff]
        %v386 = vld [vmem:[%s195] sm:$0xff]
        %v387 = vld [vmem:[%s195 + $0x8] sm:$0xff]
        %v388 = vld [vmem:[%s195 + $0x10] sm:$0xff]
        %v389 = vld [vmem:[%s195 + $0x18] sm:$0xff]
        %v390 = vld [vmem:[%s195 + $0x20] sm:$0xff]
        %v391 = vld [vmem:[%s195 + $0x28] sm:$0xff]
        %v392 = vld [vmem:[%s195 + $0x30] sm:$0xff]
        %v393 = vld [vmem:[%s195 + $0x38] sm:$0xff]
        %v394 = vld [vmem:[%s195 + $0x40] sm:$0xff]
        %v395 = vld [vmem:[%s195 + $0x48] sm:$0xff]
        %v396 = vld [vmem:[%s195 + $0x50] sm:$0xff]
        %v397 = vld [vmem:[%s195 + $0x58] sm:$0xff]
        %v398 = vld [vmem:[%s195 + $0x60] sm:$0xff]
        %v399 = vld [vmem:[%s195 + $0x68] sm:$0xff]
        %v400 = vld [vmem:[%s195 + $0x70] sm:$0xff]
        %v401 = vld [vmem:[%s195 + $0x78] sm:$0xff]
        %v402 = vld [vmem:[%s195 + $0x80] sm:$0xff]
        %v403 = vld [vmem:[%s195 + $0x88] sm:$0xff]
        %v404 = vld [vmem:[%s195 + $0x90] sm:$0xff]
        %v405 = vld [vmem:[%s195 + $0x98] sm:$0xff]
        %v406 = vld [vmem:[%s195 + $0xa0] sm:$0xff]
        %v407 = vld [vmem:[%s195 + $0xa8] sm:$0xff]
        %v408 = vld [vmem:[%s195 + $0xb0] sm:$0xff]
        %v409 = vld [vmem:[%s195 + $0xb8] sm:$0xff]
        %v410 = vld [vmem:[%s195 + $0xc0] sm:$0xff]
        %v411 = vld [vmem:[%s195 + $0xc8] sm:$0xff]
        %v412 = vld [vmem:[%s195 + $0xd0] sm:$0xff]
        %v413 = vld [vmem:[%s195 + $0xd8] sm:$0xff]
        %v414 = vld [vmem:[%s195 + $0xe0] sm:$0xff]
        %v415 = vld [vmem:[%s195 + $0xe8] sm:$0xff]
        %v416 = vld [vmem:[%s195 + $0xf0] sm:$0xff]
        %v417 = vld [vmem:[%s195 + $0xf8] sm:$0xff]
        %v450 = vunpack.c.l.b16 %v354
        %v451 = vunpack.c.h.b16 %v354
        %v452 = vunpack.c.l.b16 %v355
        %v453 = vunpack.c.h.b16 %v355
        %v454 = vunpack.c.l.b16 %v356
        %v455 = vunpack.c.h.b16 %v356
        %v456 = vunpack.c.l.b16 %v357
        %v457 = vunpack.c.h.b16 %v357
        %v458 = vunpack.c.l.b16 %v358
        %v459 = vunpack.c.h.b16 %v358
        %v460 = vunpack.c.l.b16 %v359
        %v461 = vunpack.c.h.b16 %v359
        %v462 = vunpack.c.l.b16 %v360
        %v463 = vunpack.c.h.b16 %v360
        %v464 = vunpack.c.l.b16 %v361
        %v465 = vunpack.c.h.b16 %v361
        %v466 = vunpack.c.l.b16 %v362
        %v467 = vunpack.c.h.b16 %v362
        %v468 = vunpack.c.l.b16 %v363
        %v469 = vunpack.c.h.b16 %v363
        %v470 = vunpack.c.l.b16 %v364
        %v471 = vunpack.c.h.b16 %v364
        %v472 = vunpack.c.l.b16 %v365
        %v473 = vunpack.c.h.b16 %v365
        %v474 = vunpack.c.l.b16 %v366
        %v475 = vunpack.c.h.b16 %v366
        %v476 = vunpack.c.l.b16 %v367
        %v477 = vunpack.c.h.b16 %v367
        %v478 = vunpack.c.l.b16 %v368
        %v479 = vunpack.c.h.b16 %v368
        %v480 = vunpack.c.l.b16 %v369
        %v481 = vunpack.c.h.b16 %v369
        %v482 = vunpack.c.l.b16 %v370
        %v483 = vunpack.c.h.b16 %v370
        %v484 = vunpack.c.l.b16 %v371
        %v485 = vunpack.c.h.b16 %v371
        %v486 = vunpack.c.l.b16 %v372
        %v487 = vunpack.c.h.b16 %v372
        %v488 = vunpack.c.l.b16 %v373
        %v489 = vunpack.c.h.b16 %v373
        %v490 = vunpack.c.l.b16 %v374
        %v491 = vunpack.c.h.b16 %v374
        %v492 = vunpack.c.l.b16 %v375
        %v493 = vunpack.c.h.b16 %v375
        %v494 = vunpack.c.l.b16 %v376
        %v495 = vunpack.c.h.b16 %v376
        %v496 = vunpack.c.l.b16 %v377
        %v497 = vunpack.c.h.b16 %v377
        %v498 = vunpack.c.l.b16 %v378
        %v499 = vunpack.c.h.b16 %v378
        %v500 = vunpack.c.l.b16 %v379
        %v501 = vunpack.c.h.b16 %v379
        %v502 = vunpack.c.l.b16 %v380
        %v503 = vunpack.c.h.b16 %v380
        %v504 = vunpack.c.l.b16 %v381
        %v505 = vunpack.c.h.b16 %v381
        %v506 = vunpack.c.l.b16 %v382
        %v507 = vunpack.c.h.b16 %v382
        %v508 = vunpack.c.l.b16 %v383
        %v509 = vunpack.c.h.b16 %v383
        %v510 = vunpack.c.l.b16 %v384
        %v511 = vunpack.c.h.b16 %v384
        %v512 = vunpack.c.l.b16 %v385
        %v513 = vunpack.c.h.b16 %v385
        %v514 = vpack.c.b16 %v452, %v450
        %v515 = vpack.c.b16 %v453, %v451
        %v516 = vpack.c.b16 %v456, %v454
        %v517 = vpack.c.b16 %v457, %v455
        %v518 = vpack.c.b16 %v460, %v458
        %v519 = vpack.c.b16 %v461, %v459
        %v520 = vpack.c.b16 %v464, %v462
        %v521 = vpack.c.b16 %v465, %v463
        %v522 = vpack.c.b16 %v468, %v466
        %v523 = vpack.c.b16 %v469, %v467
        %v524 = vpack.c.b16 %v472, %v470
        %v525 = vpack.c.b16 %v473, %v471
        %v526 = vpack.c.b16 %v476, %v474
        %v527 = vpack.c.b16 %v477, %v475
        %v528 = vpack.c.b16 %v480, %v478
        %v529 = vpack.c.b16 %v481, %v479
        %v530 = vpack.c.b16 %v484, %v482
        %v531 = vpack.c.b16 %v485, %v483
        %v532 = vpack.c.b16 %v488, %v486
        %v533 = vpack.c.b16 %v489, %v487
        %v534 = vpack.c.b16 %v492, %v490
        %v535 = vpack.c.b16 %v493, %v491
        %v536 = vpack.c.b16 %v496, %v494
        %v537 = vpack.c.b16 %v497, %v495
        %v538 = vpack.c.b16 %v500, %v498
        %v539 = vpack.c.b16 %v501, %v499
        %v540 = vpack.c.b16 %v504, %v502
        %v541 = vpack.c.b16 %v505, %v503
        %v542 = vpack.c.b16 %v508, %v506
        %v543 = vpack.c.b16 %v509, %v507
        %v544 = vpack.c.b16 %v512, %v510
        %v545 = vpack.c.b16 %v513, %v511
        %v610 = vunpack.c.l.b16 %v386
        %v611 = vunpack.c.h.b16 %v386
        %v612 = vunpack.c.l.b16 %v387
        %v613 = vunpack.c.h.b16 %v387
        %v614 = vunpack.c.l.b16 %v388
        %v615 = vunpack.c.h.b16 %v388
        %v616 = vunpack.c.l.b16 %v389
        %v617 = vunpack.c.h.b16 %v389
        %v618 = vunpack.c.l.b16 %v390
        %v619 = vunpack.c.h.b16 %v390
        %v620 = vunpack.c.l.b16 %v391
        %v621 = vunpack.c.h.b16 %v391
        %v622 = vunpack.c.l.b16 %v392
        %v623 = vunpack.c.h.b16 %v392
        %v624 = vunpack.c.l.b16 %v393
        %v625 = vunpack.c.h.b16 %v393
        %v626 = vunpack.c.l.b16 %v394
        %v627 = vunpack.c.h.b16 %v394
        %v628 = vunpack.c.l.b16 %v395
        %v629 = vunpack.c.h.b16 %v395
        %v630 = vunpack.c.l.b16 %v396
        %v631 = vunpack.c.h.b16 %v396
        %v632 = vunpack.c.l.b16 %v397
        %v633 = vunpack.c.h.b16 %v397
        %v634 = vunpack.c.l.b16 %v398
        %v635 = vunpack.c.h.b16 %v398
        %v636 = vunpack.c.l.b16 %v399
        %v637 = vunpack.c.h.b16 %v399
        %v638 = vunpack.c.l.b16 %v400
        %v639 = vunpack.c.h.b16 %v400
        %v640 = vunpack.c.l.b16 %v401
        %v641 = vunpack.c.h.b16 %v401
        %v642 = vunpack.c.l.b16 %v402
        %v643 = vunpack.c.h.b16 %v402
        %v644 = vunpack.c.l.b16 %v403
        %v645 = vunpack.c.h.b16 %v403
        %v646 = vunpack.c.l.b16 %v404
        %v647 = vunpack.c.h.b16 %v404
        %v648 = vunpack.c.l.b16 %v405
        %v649 = vunpack.c.h.b16 %v405
        %v650 = vunpack.c.l.b16 %v406
        %v651 = vunpack.c.h.b16 %v406
        %v652 = vunpack.c.l.b16 %v407
        %v653 = vunpack.c.h.b16 %v407
        %v654 = vunpack.c.l.b16 %v408
        %v655 = vunpack.c.h.b16 %v408
        %v656 = vunpack.c.l.b16 %v409
        %v657 = vunpack.c.h.b16 %v409
        %v658 = vunpack.c.l.b16 %v410
        %v659 = vunpack.c.h.b16 %v410
        %v660 = vunpack.c.l.b16 %v411
        %v661 = vunpack.c.h.b16 %v411
        %v662 = vunpack.c.l.b16 %v412
        %v663 = vunpack.c.h.b16 %v412
        %v664 = vunpack.c.l.b16 %v413
        %v665 = vunpack.c.h.b16 %v413
        %v666 = vunpack.c.l.b16 %v414
        %v667 = vunpack.c.h.b16 %v414
        %v668 = vunpack.c.l.b16 %v415
        %v669 = vunpack.c.h.b16 %v415
        %v670 = vunpack.c.l.b16 %v416
        %v671 = vunpack.c.h.b16 %v416
        %v672 = vunpack.c.l.b16 %v417
        %v673 = vunpack.c.h.b16 %v417
        %v674 = vpack.c.b16 %v612, %v610
        %v675 = vpack.c.b16 %v613, %v611
        %v676 = vpack.c.b16 %v616, %v614
        %v677 = vpack.c.b16 %v617, %v615
        %v678 = vpack.c.b16 %v620, %v618
        %v679 = vpack.c.b16 %v621, %v619
        %v680 = vpack.c.b16 %v624, %v622
        %v681 = vpack.c.b16 %v625, %v623
        %v682 = vpack.c.b16 %v628, %v626
        %v683 = vpack.c.b16 %v629, %v627
        %v684 = vpack.c.b16 %v632, %v630
        %v685 = vpack.c.b16 %v633, %v631
        %v686 = vpack.c.b16 %v636, %v634
        %v687 = vpack.c.b16 %v637, %v635
        %v688 = vpack.c.b16 %v640, %v638
        %v689 = vpack.c.b16 %v641, %v639
        %v690 = vpack.c.b16 %v644, %v642
        %v691 = vpack.c.b16 %v645, %v643
        %v692 = vpack.c.b16 %v648, %v646
        %v693 = vpack.c.b16 %v649, %v647
        %v694 = vpack.c.b16 %v652, %v650
        %v695 = vpack.c.b16 %v653, %v651
        %v696 = vpack.c.b16 %v656, %v654
        %v697 = vpack.c.b16 %v657, %v655
        %v698 = vpack.c.b16 %v660, %v658
        %v699 = vpack.c.b16 %v661, %v659
        %v700 = vpack.c.b16 %v664, %v662
        %v701 = vpack.c.b16 %v665, %v663
        %v702 = vpack.c.b16 %v668, %v666
        %v703 = vpack.c.b16 %v669, %v667
        %v704 = vpack.c.b16 %v672, %v670
        %v705 = vpack.c.b16 %v673, %v671
        %738 = vmatprep.subr.bf16.mxu0 %v675
        %739 = vmatpush1.bf16.msra.mxu0 %v674
        %740 = vmatprep.subr.bf16.mxu0 %v677
        %741 = vmatpush1.bf16.msra.mxu0 %v676
        %742 = vmatprep.subr.bf16.mxu0 %v679
        %743 = vmatpush1.bf16.msra.mxu0 %v678
        %744 = vmatprep.subr.bf16.mxu0 %v681
        %745 = vmatpush1.bf16.msra.mxu0 %v680
        %746 = vmatprep.subr.bf16.mxu0 %v683
        %747 = vmatpush1.bf16.msra.mxu0 %v682
        %748 = vmatprep.subr.bf16.mxu0 %v685
        %749 = vmatpush1.bf16.msra.mxu0 %v684
        %750 = vmatprep.subr.bf16.mxu0 %v687
        %751 = vmatpush1.bf16.msra.mxu0 %v686
        %752 = vmatprep.subr.bf16.mxu0 %v689
        %753 = vmatpush1.bf16.msra.mxu0 %v688
        %754 = vmatprep.subr.bf16.mxu0 %v691
        %755 = vmatpush1.bf16.msra.mxu0 %v690
        %756 = vmatprep.subr.bf16.mxu0 %v693
        %757 = vmatpush1.bf16.msra.mxu0 %v692
        %758 = vmatprep.subr.bf16.mxu0 %v695
        %759 = vmatpush1.bf16.msra.mxu0 %v694
        %760 = vmatprep.subr.bf16.mxu0 %v697
        %761 = vmatpush1.bf16.msra.mxu0 %v696
        %762 = vmatprep.subr.bf16.mxu0 %v699
        %763 = vmatpush1.bf16.msra.mxu0 %v698
        %764 = vmatprep.subr.bf16.mxu0 %v701
        %765 = vmatpush1.bf16.msra.mxu0 %v700
        %766 = vmatprep.subr.bf16.mxu0 %v703
        %767 = vmatpush1.bf16.msra.mxu0 %v702
        %768 = vmatprep.subr.bf16.mxu0 %v705
        %769 = vmatpush1.bf16.msra.mxu0 %v704
        %770 = vmatprep.mubr.bf16.mxu0 %v515
        %771 = vmatmul.mubr.bf16.gmra.mrb[0].mxu0 %v514
        %v772 = vpop.f32.mrb[0].mxu0
        %v773 = vadd.f32 0.0, %v772
        %v774 = vpop.f32.mrb[0].mxu0
        %v775 = vadd.f32 0.0, %v774
        %v776 = vpop.f32.mrb[0].mxu0
        %v777 = vadd.f32 0.0, %v776
        %v778 = vpop.f32.mrb[0].mxu0
        %v779 = vadd.f32 0.0, %v778
        %780 = vmatprep.mubr.bf16.mxu0 %v517
        %781 = vmatmul.mubr.bf16.gmra.mrb[0].mxu0 %v516
        %v782 = vpop.f32.mrb[0].mxu0
        %v783 = vadd.f32 0.0, %v782
        %v784 = vpop.f32.mrb[0].mxu0
        %v785 = vadd.f32 0.0, %v784
        %v786 = vpop.f32.mrb[0].mxu0
        %v787 = vadd.f32 0.0, %v786
        %v788 = vpop.f32.mrb[0].mxu0
        %v789 = vadd.f32 0.0, %v788
        %790 = vmatprep.mubr.bf16.mxu0 %v519
        %791 = vmatmul.mubr.bf16.gmra.mrb[0].mxu0 %v518
        %v792 = vpop.f32.mrb[0].mxu0
        %v793 = vadd.f32 0.0, %v792
        %v794 = vpop.f32.mrb[0].mxu0
        %v795 = vadd.f32 0.0, %v794
        %v796 = vpop.f32.mrb[0].mxu0
        %v797 = vadd.f32 0.0, %v796
        %v798 = vpop.f32.mrb[0].mxu0
        %v799 = vadd.f32 0.0, %v798
        %800 = vmatprep.mubr.bf16.mxu0 %v521
        %801 = vmatmul.mubr.bf16.gmra.mrb[0].mxu0 %v520
        %v802 = vpop.f32.mrb[0].mxu0
        %v803 = vadd.f32 0.0, %v802
        %v804 = vpop.f32.mrb[0].mxu0
        %v805 = vadd.f32 0.0, %v804
        %v806 = vpop.f32.mrb[0].mxu0
        %v807 = vadd.f32 0.0, %v806
        %v808 = vpop.f32.mrb[0].mxu0
        %v809 = vadd.f32 0.0, %v808
        %810 = vmatprep.mubr.bf16.mxu0 %v523
        %811 = vmatmul.mubr.bf16.gmra.mrb[0].mxu0 %v522
        %v812 = vpop.f32.mrb[0].mxu0
        %v813 = vadd.f32 0.0, %v812
        %v814 = vpop.f32.mrb[0].mxu0
        %v815 = vadd.f32 0.0, %v814
        %v816 = vpop.f32.mrb[0].mxu0
        %v817 = vadd.f32 0.0, %v816
        %v818 = vpop.f32.mrb[0].mxu0
        %v819 = vadd.f32 0.0, %v818
        %820 = vmatprep.mubr.bf16.mxu0 %v525
        %821 = vmatmul.mubr.bf16.gmra.mrb[0].mxu0 %v524
        %v822 = vpop.f32.mrb[0].mxu0
        %v823 = vadd.f32 0.0, %v822
        %v824 = vpop.f32.mrb[0].mxu0
        %v825 = vadd.f32 0.0, %v824
        %v826 = vpop.f32.mrb[0].mxu0
        %v827 = vadd.f32 0.0, %v826
        %v828 = vpop.f32.mrb[0].mxu0
        %v829 = vadd.f32 0.0, %v828
        %830 = vmatprep.mubr.bf16.mxu0 %v527
        %831 = vmatmul.mubr.bf16.gmra.mrb[0].mxu0 %v526
        %v832 = vpop.f32.mrb[0].mxu0
        %v833 = vadd.f32 0.0, %v832
        %v834 = vpop.f32.mrb[0].mxu0
        %v835 = vadd.f32 0.0, %v834
        %v836 = vpop.f32.mrb[0].mxu0
        %v837 = vadd.f32 0.0, %v836
        %v838 = vpop.f32.mrb[0].mxu0
        %v839 = vadd.f32 0.0, %v838
        %840 = vmatprep.mubr.bf16.mxu0 %v529
        %841 = vmatmul.mubr.bf16.gmra.mrb[0].mxu0 %v528
        %v842 = vpop.f32.mrb[0].mxu0
        %v843 = vadd.f32 0.0, %v842
        %v844 = vpop.f32.mrb[0].mxu0
        %v845 = vadd.f32 0.0, %v844
        %v846 = vpop.f32.mrb[0].mxu0
        %v847 = vadd.f32 0.0, %v846
        %v848 = vpop.f32.mrb[0].mxu0
        %v849 = vadd.f32 0.0, %v848
        %850 = vmatprep.mubr.bf16.mxu0 %v531
        %851 = vmatmul.mubr.bf16.gmra.mrb[0].mxu0 %v530
        %v852 = vpop.f32.mrb[0].mxu0
        %v853 = vadd.f32 0.0, %v852
        %v854 = vpop.f32.mrb[0].mxu0
        %v855 = vadd.f32 0.0, %v854
        %v856 = vpop.f32.mrb[0].mxu0
        %v857 = vadd.f32 0.0, %v856
        %v858 = vpop.f32.mrb[0].mxu0
        %v859 = vadd.f32 0.0, %v858
        %860 = vmatprep.mubr.bf16.mxu0 %v533
        %861 = vmatmul.mubr.bf16.gmra.mrb[0].mxu0 %v532
        %v862 = vpop.f32.mrb[0].mxu0
        %v863 = vadd.f32 0.0, %v862
        %v864 = vpop.f32.mrb[0].mxu0
        %v865 = vadd.f32 0.0, %v864
        %v866 = vpop.f32.mrb[0].mxu0
        %v867 = vadd.f32 0.0, %v866
        %v868 = vpop.f32.mrb[0].mxu0
        %v869 = vadd.f32 0.0, %v868
        %870 = vmatprep.mubr.bf16.mxu0 %v535
        %871 = vmatmul.mubr.bf16.gmra.mrb[0].mxu0 %v534
        %v872 = vpop.f32.mrb[0].mxu0
        %v873 = vadd.f32 0.0, %v872
        %v874 = vpop.f32.mrb[0].mxu0
        %v875 = vadd.f32 0.0, %v874
        %v876 = vpop.f32.mrb[0].mxu0
        %v877 = vadd.f32 0.0, %v876
        %v878 = vpop.f32.mrb[0].mxu0
        %v879 = vadd.f32 0.0, %v878
        %880 = vmatprep.mubr.bf16.mxu0 %v537
        %881 = vmatmul.mubr.bf16.gmra.mrb[0].mxu0 %v536
        %v882 = vpop.f32.mrb[0].mxu0
        %v883 = vadd.f32 0.0, %v882
        %v884 = vpop.f32.mrb[0].mxu0
        %v885 = vadd.f32 0.0, %v884
        %v886 = vpop.f32.mrb[0].mxu0
        %v887 = vadd.f32 0.0, %v886
        %v888 = vpop.f32.mrb[0].mxu0
        %v889 = vadd.f32 0.0, %v888
        %890 = vmatprep.mubr.bf16.mxu0 %v539
        %891 = vmatmul.mubr.bf16.gmra.mrb[0].mxu0 %v538
        %v892 = vpop.f32.mrb[0].mxu0
        %v893 = vadd.f32 0.0, %v892
        %v894 = vpop.f32.mrb[0].mxu0
        %v895 = vadd.f32 0.0, %v894
        %v896 = vpop.f32.mrb[0].mxu0
        %v897 = vadd.f32 0.0, %v896
        %v898 = vpop.f32.mrb[0].mxu0
        %v899 = vadd.f32 0.0, %v898
        %900 = vmatprep.mubr.bf16.mxu0 %v541
        %901 = vmatmul.mubr.bf16.gmra.mrb[0].mxu0 %v540
        %v902 = vpop.f32.mrb[0].mxu0
        %v903 = vadd.f32 0.0, %v902
        %v904 = vpop.f32.mrb[0].mxu0
        %v905 = vadd.f32 0.0, %v904
        %v906 = vpop.f32.mrb[0].mxu0
        %v907 = vadd.f32 0.0, %v906
        %v908 = vpop.f32.mrb[0].mxu0
        %v909 = vadd.f32 0.0, %v908
        %910 = vmatprep.mubr.bf16.mxu0 %v543
        %911 = vmatmul.mubr.bf16.gmra.mrb[0].mxu0 %v542
        %v912 = vpop.f32.mrb[0].mxu0
        %v913 = vadd.f32 0.0, %v912
        %v914 = vpop.f32.mrb[0].mxu0
        %v915 = vadd.f32 0.0, %v914
        %v916 = vpop.f32.mrb[0].mxu0
        %v917 = vadd.f32 0.0, %v916
        %v918 = vpop.f32.mrb[0].mxu0
        %v919 = vadd.f32 0.0, %v918
        %920 = vmatprep.mubr.bf16.mxu0 %v545
        %921 = vmatmul.mubr.bf16.gmra.mrb[0].mxu0 %v544
        %v922 = vpop.f32.mrb[0].mxu0
        %v923 = vadd.f32 0.0, %v922
        %v924 = vpop.f32.mrb[0].mxu0
        %v925 = vadd.f32 0.0, %v924
        %v926 = vpop.f32.mrb[0].mxu0
        %v927 = vadd.f32 0.0, %v926
        %v928 = vpop.f32.mrb[0].mxu0
        %v929 = vadd.f32 0.0, %v928
        %930 = vdwg.mxu0
        %v931 = vadd.f32 %v290, %v773
        %v932 = vadd.f32 %v291, %v775
        %v933 = vadd.f32 %v292, %v777
        %v934 = vadd.f32 %v293, %v779
        %v935 = vadd.f32 %v294, %v783
        %v936 = vadd.f32 %v295, %v785
        %v937 = vadd.f32 %v296, %v787
        %v938 = vadd.f32 %v297, %v789
        %v939 = vadd.f32 %v298, %v793
        %v940 = vadd.f32 %v299, %v795
        %v941 = vadd.f32 %v300, %v797
        %v942 = vadd.f32 %v301, %v799
        %v943 = vadd.f32 %v302, %v803
        %v944 = vadd.f32 %v303, %v805
        %v945 = vadd.f32 %v304, %v807
        %v946 = vadd.f32 %v305, %v809
        %v947 = vadd.f32 %v306, %v813
        %v948 = vadd.f32 %v307, %v815
        %v949 = vadd.f32 %v308, %v817
        %v950 = vadd.f32 %v309, %v819
        %v951 = vadd.f32 %v310, %v823
        %v952 = vadd.f32 %v311, %v825
        %v953 = vadd.f32 %v312, %v827
        %v954 = vadd.f32 %v313, %v829
        %v955 = vadd.f32 %v314, %v833
        %v956 = vadd.f32 %v315, %v835
        %v957 = vadd.f32 %v316, %v837
        %v958 = vadd.f32 %v317, %v839
        %v959 = vadd.f32 %v318, %v843
        %v960 = vadd.f32 %v319, %v845
        %v961 = vadd.f32 %v320, %v847
        %v962 = vadd.f32 %v321, %v849
        %v963 = vadd.f32 %v322, %v853
        %v964 = vadd.f32 %v323, %v855
        %v965 = vadd.f32 %v324, %v857
        %v966 = vadd.f32 %v325, %v859
        %v967 = vadd.f32 %v326, %v863
        %v968 = vadd.f32 %v327, %v865
        %v969 = vadd.f32 %v328, %v867
        %v970 = vadd.f32 %v329, %v869
        %v971 = vadd.f32 %v330, %v873
        %v972 = vadd.f32 %v331, %v875
        %v973 = vadd.f32 %v332, %v877
        %v974 = vadd.f32 %v333, %v879
        %v975 = vadd.f32 %v334, %v883
        %v976 = vadd.f32 %v335, %v885
        %v977 = vadd.f32 %v336, %v887
        %v978 = vadd.f32 %v337, %v889
        %v979 = vadd.f32 %v338, %v893
        %v980 = vadd.f32 %v339, %v895
        %v981 = vadd.f32 %v340, %v897
        %v982 = vadd.f32 %v341, %v899
        %v983 = vadd.f32 %v342, %v903
        %v984 = vadd.f32 %v343, %v905
        %v985 = vadd.f32 %v344, %v907
        %v986 = vadd.f32 %v345, %v909
        %v987 = vadd.f32 %v346, %v913
        %v988 = vadd.f32 %v347, %v915
        %v989 = vadd.f32 %v348, %v917
        %v990 = vadd.f32 %v349, %v919
        %v991 = vadd.f32 %v350, %v923
        %v992 = vadd.f32 %v351, %v925
        %v993 = vadd.f32 %v352, %v927
        %v994 = vadd.f32 %v353, %v929
        %995 = vst [vmem:[#allocation2] sm:$0xff] %v931
        %996 = vst [vmem:[#allocation2 + $0x8] sm:$0xff] %v932
        %997 = vst [vmem:[#allocation2 + $0x10] sm:$0xff] %v933
        %998 = vst [vmem:[#allocation2 + $0x18] sm:$0xff] %v934
        %999 = vst [vmem:[#allocation2 + $0x20] sm:$0xff] %v935
        %1000 = vst [vmem:[#allocation2 + $0x28] sm:$0xff] %v936
        %1001 = vst [vmem:[#allocation2 + $0x30] sm:$0xff] %v937
        %1002 = vst [vmem:[#allocation2 + $0x38] sm:$0xff] %v938
        %1003 = vst [vmem:[#allocation2 + $0x40] sm:$0xff] %v939
        %1004 = vst [vmem:[#allocation2 + $0x48] sm:$0xff] %v940
        %1005 = vst [vmem:[#allocation2 + $0x50] sm:$0xff] %v941
        %1006 = vst [vmem:[#allocation2 + $0x58] sm:$0xff] %v942
        %1007 = vst [vmem:[#allocation2 + $0x60] sm:$0xff] %v943
        %1008 = vst [vmem:[#allocation2 + $0x68] sm:$0xff] %v944
        %1009 = vst [vmem:[#allocation2 + $0x70] sm:$0xff] %v945
        %1010 = vst [vmem:[#allocation2 + $0x78] sm:$0xff] %v946
        %1011 = vst [vmem:[#allocation2 + $0x80] sm:$0xff] %v947
        %1012 = vst [vmem:[#allocation2 + $0x88] sm:$0xff] %v948
        %1013 = vst [vmem:[#allocation2 + $0x90] sm:$0xff] %v949
        %1014 = vst [vmem:[#allocation2 + $0x98] sm:$0xff] %v950
        %1015 = vst [vmem:[#allocation2 + $0xa0] sm:$0xff] %v951
        %1016 = vst [vmem:[#allocation2 + $0xa8] sm:$0xff] %v952
        %1017 = vst [vmem:[#allocation2 + $0xb0] sm:$0xff] %v953
        %1018 = vst [vmem:[#allocation2 + $0xb8] sm:$0xff] %v954
        %1019 = vst [vmem:[#allocation2 + $0xc0] sm:$0xff] %v955
        %1020 = vst [vmem:[#allocation2 + $0xc8] sm:$0xff] %v956
        %1021 = vst [vmem:[#allocation2 + $0xd0] sm:$0xff] %v957
        %1022 = vst [vmem:[#allocation2 + $0xd8] sm:$0xff] %v958
        %1023 = vst [vmem:[#allocation2 + $0xe0] sm:$0xff] %v959
        %1024 = vst [vmem:[#allocation2 + $0xe8] sm:$0xff] %v960
        %1025 = vst [vmem:[#allocation2 + $0xf0] sm:$0xff] %v961
        %1026 = vst [vmem:[#allocation2 + $0xf8] sm:$0xff] %v962
        %1027 = vst [vmem:[#allocation2 + $0x100] sm:$0xff] %v963
        %1028 = vst [vmem:[#allocation2 + $0x108] sm:$0xff] %v964
        %1029 = vst [vmem:[#allocation2 + $0x110] sm:$0xff] %v965
        %1030 = vst [vmem:[#allocation2 + $0x118] sm:$0xff] %v966
        %1031 = vst [vmem:[#allocation2 + $0x120] sm:$0xff] %v967
        %1032 = vst [vmem:[#allocation2 + $0x128] sm:$0xff] %v968
        %1033 = vst [vmem:[#allocation2 + $0x130] sm:$0xff] %v969
        %1034 = vst [vmem:[#allocation2 + $0x138] sm:$0xff] %v970
        %1035 = vst [vmem:[#allocation2 + $0x140] sm:$0xff] %v971
        %1036 = vst [vmem:[#allocation2 + $0x148] sm:$0xff] %v972
        %1037 = vst [vmem:[#allocation2 + $0x150] sm:$0xff] %v973
        %1038 = vst [vmem:[#allocation2 + $0x158] sm:$0xff] %v974
        %1039 = vst [vmem:[#allocation2 + $0x160] sm:$0xff] %v975
        %1040 = vst [vmem:[#allocation2 + $0x168] sm:$0xff] %v976
        %1041 = vst [vmem:[#allocation2 + $0x170] sm:$0xff] %v977
        %1042 = vst [vmem:[#allocation2 + $0x178] sm:$0xff] %v978
        %1043 = vst [vmem:[#allocation2 + $0x180] sm:$0xff] %v979
        %1044 = vst [vmem:[#allocation2 + $0x188] sm:$0xff] %v980
        %1045 = vst [vmem:[#allocation2 + $0x190] sm:$0xff] %v981
        %1046 = vst [vmem:[#allocation2 + $0x198] sm:$0xff] %v982
        %1047 = vst [vmem:[#allocation2 + $0x1a0] sm:$0xff] %v983
        %1048 = vst [vmem:[#allocation2 + $0x1a8] sm:$0xff] %v984
        %1049 = vst [vmem:[#allocation2 + $0x1b0] sm:$0xff] %v985
        %1050 = vst [vmem:[#allocation2 + $0x1b8] sm:$0xff] %v986
        %1051 = vst [vmem:[#allocation2 + $0x1c0] sm:$0xff] %v987
        %1052 = vst [vmem:[#allocation2 + $0x1c8] sm:$0xff] %v988
        %1053 = vst [vmem:[#allocation2 + $0x1d0] sm:$0xff] %v989
        %1054 = vst [vmem:[#allocation2 + $0x1d8] sm:$0xff] %v990
        %1055 = vst [vmem:[#allocation2 + $0x1e0] sm:$0xff] %v991
        %1056 = vst [vmem:[#allocation2 + $0x1e8] sm:$0xff] %v992
        %1057 = vst [vmem:[#allocation2 + $0x1f0] sm:$0xff] %v993
        %1058 = vst [vmem:[#allocation2 + $0x1f8] sm:$0xff] %v994
        // Predicated region
        $region41: #{decoder_layer_forward.4} parent=27 // pred_check
          %p1059 = pneg %p222
        $region42: #{decoder_layer_forward.4} parent=27 // pred_check_branch
          %1061 = sbr.rel (%p1059) target = $region44
        $region43: #{decoder_layer_forward.4} parent=27 // pred_region
          %v1062 = vld [vmem:[#allocation2] sm:$0xff]
          %v1063 = vld [vmem:[#allocation2 + $0x8] sm:$0xff]
          %v1064 = vld [vmem:[#allocation2 + $0x10] sm:$0xff]
          %v1065 = vld [vmem:[#allocation2 + $0x18] sm:$0xff]
          %v1066 = vld [vmem:[#allocation2 + $0x20] sm:$0xff]
          %v1067 = vld [vmem:[#allocation2 + $0x28] sm:$0xff]
          %v1068 = vld [vmem:[#allocation2 + $0x30] sm:$0xff]
          %v1069 = vld [vmem:[#allocation2 + $0x38] sm:$0xff]
          %v1070 = vld [vmem:[#allocation2 + $0x40] sm:$0xff]
          %v1071 = vld [vmem:[#allocation2 + $0x48] sm:$0xff]
          %v1072 = vld [vmem:[#allocation2 + $0x50] sm:$0xff]
          %v1073 = vld [vmem:[#allocation2 + $0x58] sm:$0xff]
          %v1074 = vld [vmem:[#allocation2 + $0x60] sm:$0xff]
          %v1075 = vld [vmem:[#allocation2 + $0x68] sm:$0xff]
          %v1076 = vld [vmem:[#allocation2 + $0x70] sm:$0xff]
          %v1077 = vld [vmem:[#allocation2 + $0x78] sm:$0xff]
          %v1078 = vld [vmem:[#allocation2 + $0x80] sm:$0xff]
          %v1079 = vld [vmem:[#allocation2 + $0x88] sm:$0xff]
          %v1080 = vld [vmem:[#allocation2 + $0x90] sm:$0xff]
          %v1081 = vld [vmem:[#allocation2 + $0x98] sm:$0xff]
          %v1082 = vld [vmem:[#allocation2 + $0xa0] sm:$0xff]
          %v1083 = vld [vmem:[#allocation2 + $0xa8] sm:$0xff]
          %v1084 = vld [vmem:[#allocation2 + $0xb0] sm:$0xff]
          %v1085 = vld [vmem:[#allocation2 + $0xb8] sm:$0xff]
          %v1086 = vld [vmem:[#allocation2 + $0xc0] sm:$0xff]
          %v1087 = vld [vmem:[#allocation2 + $0xc8] sm:$0xff]
          %v1088 = vld [vmem:[#allocation2 + $0xd0] sm:$0xff]
          %v1089 = vld [vmem:[#allocation2 + $0xd8] sm:$0xff]
          %v1090 = vld [vmem:[#allocation2 + $0xe0] sm:$0xff]
          %v1091 = vld [vmem:[#allocation2 + $0xe8] sm:$0xff]
          %v1092 = vld [vmem:[#allocation2 + $0xf0] sm:$0xff]
          %v1093 = vld [vmem:[#allocation2 + $0xf8] sm:$0xff]
          %v1094 = vld [vmem:[#allocation2 + $0x100] sm:$0xff]
          %v1095 = vld [vmem:[#allocation2 + $0x108] sm:$0xff]
          %v1096 = vld [vmem:[#allocation2 + $0x110] sm:$0xff]
          %v1097 = vld [vmem:[#allocation2 + $0x118] sm:$0xff]
          %v1098 = vld [vmem:[#allocation2 + $0x120] sm:$0xff]
          %v1099 = vld [vmem:[#allocation2 + $0x128] sm:$0xff]
          %v1100 = vld [vmem:[#allocation2 + $0x130] sm:$0xff]
          %v1101 = vld [vmem:[#allocation2 + $0x138] sm:$0xff]
          %v1102 = vld [vmem:[#allocation2 + $0x140] sm:$0xff]
          %v1103 = vld [vmem:[#allocation2 + $0x148] sm:$0xff]
          %v1104 = vld [vmem:[#allocation2 + $0x150] sm:$0xff]
          %v1105 = vld [vmem:[#allocation2 + $0x158] sm:$0xff]
          %v1106 = vld [vmem:[#allocation2 + $0x160] sm:$0xff]
          %v1107 = vld [vmem:[#allocation2 + $0x168] sm:$0xff]
          %v1108 = vld [vmem:[#allocation2 + $0x170] sm:$0xff]
          %v1109 = vld [vmem:[#allocation2 + $0x178] sm:$0xff]
          %v1110 = vld [vmem:[#allocation2 + $0x180] sm:$0xff]
          %v1111 = vld [vmem:[#allocation2 + $0x188] sm:$0xff]
          %v1112 = vld [vmem:[#allocation2 + $0x190] sm:$0xff]
          %v1113 = vld [vmem:[#allocation2 + $0x198] sm:$0xff]
          %v1114 = vld [vmem:[#allocation2 + $0x1a0] sm:$0xff]
          %v1115 = vld [vmem:[#allocation2 + $0x1a8] sm:$0xff]
          %v1116 = vld [vmem:[#allocation2 + $0x1b0] sm:$0xff]
          %v1117 = vld [vmem:[#allocation2 + $0x1b8] sm:$0xff]
          %v1118 = vld [vmem:[#allocation2 + $0x1c0] sm:$0xff]
          %v1119 = vld [vmem:[#allocation2 + $0x1c8] sm:$0xff]
          %v1120 = vld [vmem:[#allocation2 + $0x1d0] sm:$0xff]
          %v1121 = vld [vmem:[#allocation2 + $0x1d8] sm:$0xff]
          %v1122 = vld [vmem:[#allocation2 + $0x1e0] sm:$0xff]
          %v1123 = vld [vmem:[#allocation2 + $0x1e8] sm:$0xff]
          %v1124 = vld [vmem:[#allocation2 + $0x1f0] sm:$0xff]
          %v1125 = vld [vmem:[#allocation2 + $0x1f8] sm:$0xff]
          %v1126 = vpack.c.bf16 %v1064, %v1062
          %v1127 = vpack.c.bf16 %v1065, %v1063
          %v1128 = vpack.c.bf16 %v1068, %v1066
          %v1129 = vpack.c.bf16 %v1069, %v1067
          %v1130 = vpack.c.bf16 %v1072, %v1070
          %v1131 = vpack.c.bf16 %v1073, %v1071
          %v1132 = vpack.c.bf16 %v1076, %v1074
          %v1133 = vpack.c.bf16 %v1077, %v1075
          %v1134 = vpack.c.bf16 %v1080, %v1078
          %v1135 = vpack.c.bf16 %v1081, %v1079
          %v1136 = vpack.c.bf16 %v1084, %v1082
          %v1137 = vpack.c.bf16 %v1085, %v1083
          %v1138 = vpack.c.bf16 %v1088, %v1086
          %v1139 = vpack.c.bf16 %v1089, %v1087
          %v1140 = vpack.c.bf16 %v1092, %v1090
          %v1141 = vpack.c.bf16 %v1093, %v1091
          %v1142 = vpack.c.bf16 %v1096, %v1094
          %v1143 = vpack.c.bf16 %v1097, %v1095
          %v1144 = vpack.c.bf16 %v1100, %v1098
          %v1145 = vpack.c.bf16 %v1101, %v1099
          %v1146 = vpack.c.bf16 %v1104, %v1102
          %v1147 = vpack.c.bf16 %v1105, %v1103
          %v1148 = vpack.c.bf16 %v1108, %v1106
          %v1149 = vpack.c.bf16 %v1109, %v1107
          %v1150 = vpack.c.bf16 %v1112, %v1110
          %v1151 = vpack.c.bf16 %v1113, %v1111
          %v1152 = vpack.c.bf16 %v1116, %v1114
          %v1153 = vpack.c.bf16 %v1117, %v1115
          %v1154 = vpack.c.bf16 %v1120, %v1118
          %v1155 = vpack.c.bf16 %v1121, %v1119
          %v1156 = vpack.c.bf16 %v1124, %v1122
          %v1157 = vpack.c.bf16 %v1125, %v1123
          %v1190 = vunpack.c.l.b16 %v1126
          %v1191 = vunpack.c.l.b16 %v1127
          %v1192 = vunpack.c.h.b16 %v1126
          %v1193 = vunpack.c.h.b16 %v1127
          %v1194 = vunpack.c.l.b16 %v1128
          %v1195 = vunpack.c.l.b16 %v1129
          %v1196 = vunpack.c.h.b16 %v1128
          %v1197 = vunpack.c.h.b16 %v1129
          %v1198 = vunpack.c.l.b16 %v1130
          %v1199 = vunpack.c.l.b16 %v1131
          %v1200 = vunpack.c.h.b16 %v1130
          %v1201 = vunpack.c.h.b16 %v1131
          %v1202 = vunpack.c.l.b16 %v1132
          %v1203 = vunpack.c.l.b16 %v1133
          %v1204 = vunpack.c.h.b16 %v1132
          %v1205 = vunpack.c.h.b16 %v1133
          %v1206 = vunpack.c.l.b16 %v1134
          %v1207 = vunpack.c.l.b16 %v1135
          %v1208 = vunpack.c.h.b16 %v1134
          %v1209 = vunpack.c.h.b16 %v1135
          %v1210 = vunpack.c.l.b16 %v1136
          %v1211 = vunpack.c.l.b16 %v1137
          %v1212 = vunpack.c.h.b16 %v1136
          %v1213 = vunpack.c.h.b16 %v1137
          %v1214 = vunpack.c.l.b16 %v1138
          %v1215 = vunpack.c.l.b16 %v1139
          %v1216 = vunpack.c.h.b16 %v1138
          %v1217 = vunpack.c.h.b16 %v1139
          %v1218 = vunpack.c.l.b16 %v1140
          %v1219 = vunpack.c.l.b16 %v1141
          %v1220 = vunpack.c.h.b16 %v1140
          %v1221 = vunpack.c.h.b16 %v1141
          %v1222 = vunpack.c.l.b16 %v1142
          %v1223 = vunpack.c.l.b16 %v1143
          %v1224 = vunpack.c.h.b16 %v1142
          %v1225 = vunpack.c.h.b16 %v1143
          %v1226 = vunpack.c.l.b16 %v1144
          %v1227 = vunpack.c.l.b16 %v1145
          %v1228 = vunpack.c.h.b16 %v1144
          %v1229 = vunpack.c.h.b16 %v1145
          %v1230 = vunpack.c.l.b16 %v1146
          %v1231 = vunpack.c.l.b16 %v1147
          %v1232 = vunpack.c.h.b16 %v1146
          %v1233 = vunpack.c.h.b16 %v1147
          %v1234 = vunpack.c.l.b16 %v1148
          %v1235 = vunpack.c.l.b16 %v1149
          %v1236 = vunpack.c.h.b16 %v1148
          %v1237 = vunpack.c.h.b16 %v1149
          %v1238 = vunpack.c.l.b16 %v1150
          %v1239 = vunpack.c.l.b16 %v1151
          %v1240 = vunpack.c.h.b16 %v1150
          %v1241 = vunpack.c.h.b16 %v1151
          %v1242 = vunpack.c.l.b16 %v1152
          %v1243 = vunpack.c.l.b16 %v1153
          %v1244 = vunpack.c.h.b16 %v1152
          %v1245 = vunpack.c.h.b16 %v1153
          %v1246 = vunpack.c.l.b16 %v1154
          %v1247 = vunpack.c.l.b16 %v1155
          %v1248 = vunpack.c.h.b16 %v1154
          %v1249 = vunpack.c.h.b16 %v1155
          %v1250 = vunpack.c.l.b16 %v1156
          %v1251 = vunpack.c.l.b16 %v1157
          %v1252 = vunpack.c.h.b16 %v1156
          %v1253 = vunpack.c.h.b16 %v1157
          %v1254 = vpack.c.b16 %v1191, %v1190
          %v1255 = vpack.c.b16 %v1193, %v1192
          %v1256 = vpack.c.b16 %v1195, %v1194
          %v1257 = vpack.c.b16 %v1197, %v1196
          %v1258 = vpack.c.b16 %v1199, %v1198
          %v1259 = vpack.c.b16 %v1201, %v1200
          %v1260 = vpack.c.b16 %v1203, %v1202
          %v1261 = vpack.c.b16 %v1205, %v1204
          %v1262 = vpack.c.b16 %v1207, %v1206
          %v1263 = vpack.c.b16 %v1209, %v1208
          %v1264 = vpack.c.b16 %v1211, %v1210
          %v1265 = vpack.c.b16 %v1213, %v1212
          %v1266 = vpack.c.b16 %v1215, %v1214
          %v1267 = vpack.c.b16 %v1217, %v1216
          %v1268 = vpack.c.b16 %v1219, %v1218
          %v1269 = vpack.c.b16 %v1221, %v1220
          %v1270 = vpack.c.b16 %v1223, %v1222
          %v1271 = vpack.c.b16 %v1225, %v1224
          %v1272 = vpack.c.b16 %v1227, %v1226
          %v1273 = vpack.c.b16 %v1229, %v1228
          %v1274 = vpack.c.b16 %v1231, %v1230
          %v1275 = vpack.c.b16 %v1233, %v1232
          %v1276 = vpack.c.b16 %v1235, %v1234
          %v1277 = vpack.c.b16 %v1237, %v1236
          %v1278 = vpack.c.b16 %v1239, %v1238
          %v1279 = vpack.c.b16 %v1241, %v1240
          %v1280 = vpack.c.b16 %v1243, %v1242
          %v1281 = vpack.c.b16 %v1245, %v1244
          %v1282 = vpack.c.b16 %v1247, %v1246
          %v1283 = vpack.c.b16 %v1249, %v1248
          %v1284 = vpack.c.b16 %v1251, %v1250
          %v1285 = vpack.c.b16 %v1253, %v1252
          %1318 = vst [vmem:[%s215] sm:$0xff] %v1254
          %1319 = vst [vmem:[%s215 + $0x8] sm:$0xff] %v1255
          %1320 = vst [vmem:[%s215 + $0x10] sm:$0xff] %v1256
          %1321 = vst [vmem:[%s215 + $0x18] sm:$0xff] %v1257
          %1322 = vst [vmem:[%s215 + $0x20] sm:$0xff] %v1258
          %1323 = vst [vmem:[%s215 + $0x28] sm:$0xff] %v1259
          %1324 = vst [vmem:[%s215 + $0x30] sm:$0xff] %v1260
          %1325 = vst [vmem:[%s215 + $0x38] sm:$0xff] %v1261
          %1326 = vst [vmem:[%s215 + $0x40] sm:$0xff] %v1262
          %1327 = vst [vmem:[%s215 + $0x48] sm:$0xff] %v1263
          %1328 = vst [vmem:[%s215 + $0x50] sm:$0xff] %v1264
          %1329 = vst [vmem:[%s215 + $0x58] sm:$0xff] %v1265
          %1330 = vst [vmem:[%s215 + $0x60] sm:$0xff] %v1266
          %1331 = vst [vmem:[%s215 + $0x68] sm:$0xff] %v1267
          %1332 = vst [vmem:[%s215 + $0x70] sm:$0xff] %v1268
          %1333 = vst [vmem:[%s215 + $0x78] sm:$0xff] %v1269
          %1334 = vst [vmem:[%s215 + $0x80] sm:$0xff] %v1270
          %1335 = vst [vmem:[%s215 + $0x88] sm:$0xff] %v1271
          %1336 = vst [vmem:[%s215 + $0x90] sm:$0xff] %v1272
          %1337 = vst [vmem:[%s215 + $0x98] sm:$0xff] %v1273
          %1338 = vst [vmem:[%s215 + $0xa0] sm:$0xff] %v1274
          %1339 = vst [vmem:[%s215 + $0xa8] sm:$0xff] %v1275
          %1340 = vst [vmem:[%s215 + $0xb0] sm:$0xff] %v1276
          %1341 = vst [vmem:[%s215 + $0xb8] sm:$0xff] %v1277
          %1342 = vst [vmem:[%s215 + $0xc0] sm:$0xff] %v1278
          %1343 = vst [vmem:[%s215 + $0xc8] sm:$0xff] %v1279
          %1344 = vst [vmem:[%s215 + $0xd0] sm:$0xff] %v1280
          %1345 = vst [vmem:[%s215 + $0xd8] sm:$0xff] %v1281
          %1346 = vst [vmem:[%s215 + $0xe0] sm:$0xff] %v1282
          %1347 = vst [vmem:[%s215 + $0xe8] sm:$0xff] %v1283
          %1348 = vst [vmem:[%s215 + $0xf0] sm:$0xff] %v1284
          %1349 = vst [vmem:[%s215 + $0xf8] sm:$0xff] %v1285
        $region44: #{decoder_layer_forward.4} parent=27 // pred_fallthru
          _
        %s1350 = sand.u32 %s105, 1
        %s1351 = scalar_lea.sflag [#allocation5], %s1350
        %s1352 = sand.u32 %s105, 1
        %s1353 = smul.addr %s1352, 256
        %s1354 = scalar_lea.vmem [#allocation8], %s1353
        // Predicated region
        $region45: #{decoder_layer_forward.4} parent=27 // pred_check
          %p1355 = pneg %p115
        $region46: #{decoder_layer_forward.4} parent=27 // pred_check_branch
          %1357 = sbr.rel (%p1355) target = $region48
        $region47: #{decoder_layer_forward.4} parent=27 // pred_region
          %s1358 = smul.u32 32, %s25
          %s1359 = smul.u32 2, %s26
          %s1361 = ssub.s32 4096, 4096
          %1362 = vsyncadd %s1351, %s1361
          %s1363 = smul.addr %s1358, 6
          %s1364 = sadd.s32 %s1359, %s1363
          %s1365 = smul.addr %s1364, 64
          %s1366 = scalar_lea.hbm %s2, %s1365
          %s1367 = sshll.u32 %s1354, 4
          %s1368 = int_to_ptr.vmem [resolvable:$true] %s1367
          %1373 = dma.vmem_to_hbm [thread:$0]  %s1368, 4096, %s1366, %s1351, 128, 384, 8
        $region48: #{decoder_layer_forward.4} parent=27 // pred_fallthru
          _
      $region28: #{decoder_layer_forward.4} parent=5 // pred_fallthru
        _
      %p1374 = scmp.le.s32.totalorder 2, %s15
      // Predicated region
      $region49: #{decoder_layer_forward.4} parent=5 // pred_check
        %p1375 = pneg %p1374
      $region50: #{decoder_layer_forward.4} parent=5 // pred_check_branch
        %1377 = sbr.rel (%p1375) target = $region52
      $region51: #{decoder_layer_forward.4} parent=5 // pred_region
        %s1378 = ssub.s32 %s15, 2
        // Predicated region
        $region53: #{decoder_layer_forward.4} parent=51 // pred_check
          %p1379 = pneg %p121
        $region54: #{decoder_layer_forward.4} parent=51 // pred_check_branch
          %1381 = sbr.rel (%p1379) target = $region56
        $region55: #{decoder_layer_forward.4} parent=51 // pred_region
          %s1382 = sand.u32 %s106, 1
          %s1383 = scalar_lea.sflag [#allocation5], %s1382
          %s1384 = sand.u32 %s106, 1
          %s1385 = smul.addr %s1384, 256
          %s1386 = scalar_lea.vmem [#allocation8], %s1385
          %1387 = dma.done %s1383, 4096
        $region56: #{decoder_layer_forward.4} parent=51 // pred_fallthru
          _
      $region52: #{decoder_layer_forward.4} parent=5 // pred_fallthru
        _
    $region6: #{decoder_layer_forward.4} parent=1 // loop_footer
      %s19 = sadd.s32 1, %s15
    $region7: #{decoder_layer_forward.4} parent=1 // loop_footer_branch
      %14 = sbr.rel target = $region3
    $region8: #{decoder_layer_forward.4} parent=1 // loop_exit
      _
    %1388 = vsyncpa [#allocation4], 1
    %s1389 = scalar_lea.sflag [#allocation4], 1
    %1390 = vsyncpa %s1389, 1
    %1391 = vsyncpa [#allocation7], 1
    %s1392 = scalar_lea.sflag [#allocation7], 1
    %1393 = vsyncpa %s1392, 1
    %1394 = vsyncpa [#allocation5], 1
    %s1395 = scalar_lea.sflag [#allocation5], 1
    %1396 = vsyncpa %s1395, 1

// kernel: decoder_layer_forward.7
$region0: #{decoder_layer_forward.7}
  #allocation0 [shape = 'u32[]', space=smem, size = 0x4, offset = 0x4, fixed_abs, tag = 'smem constant byte address 0x4 - core index']
  #allocation1 [shape = 'u32[144,128]{1,0:T(1,128)}', space=vmem, size = 0x12000, scoped, tag = 'internal scratch']
  %s0 = inlined_call_operand.hbm [shape: bf16[256,256], index: 0, kind: input, shape index: {}]
  %s1 = inlined_call_operand.hbm [shape: bf16[256,256], index: 1, kind: input, shape index: {}]
  %s2 = inlined_call_operand.hbm [shape: f32[256,256], index: 2, kind: input, shape index: {}]
  %s3 = inlined_call_operand.hbm [shape: f32[1,256], index: 3, kind: input, shape index: {}]
  %s4 = inlined_call_operand.hbm [shape: f32[1,256], index: 4, kind: input, shape index: {}]
  %s5 = inlined_call_operand.hbm [shape: bf16[256,512], index: 5, kind: input, shape index: {}]
  %s6 = inlined_call_operand.hbm [shape: f32[1,512], index: 6, kind: input, shape index: {}]
  %s7 = inlined_call_operand.hbm [shape: bf16[512,256], index: 7, kind: input, shape index: {}]
  %s8 = inlined_call_operand.hbm [shape: f32[1,256], index: 8, kind: input, shape index: {}]
  %s9 = inlined_call_operand.hbm [shape: f32[1,256], index: 9, kind: input, shape index: {}]
  %s10 = inlined_call_operand.hbm [shape: f32[1,256], index: 10, kind: input, shape index: {}]
  %s11 = inlined_call_operand.hbm [shape: f32[256,256], index: 11, kind: output, shape index: {}]
  %s12 = sld [smem:[#allocation0]]
  $region98: #{decoder_layer_forward.7} parent=0
    _
  %s14 = ssub.s32 1, %s12
  %s15 = scalar_select 0, %s14, %s12
  $region1: #{decoder_layer_forward.7} parent=0
    #allocation2 [shape = 'u8[131072]{0}', space=vmem, size = 0x20000, scoped, tag = 'input window, operand 0, single buffered']
    #allocation3 [shape = 's32[1]{0}', space=sflag, size = 0x4, scoped, tag = 'scoped memory for decoder_layer_forward.7']
    #allocation4 [shape = 's32[1]{0}', space=sflag, size = 0x4, scoped, tag = 'scoped memory for decoder_layer_forward.7']
    #allocation5 [shape = 'u8[131072]{0}', space=vmem, size = 0x20000, scoped, tag = 'input window, operand 1, single buffered']
    #allocation6 [shape = 's32[1]{0}', space=sflag, size = 0x4, scoped, tag = 'scoped memory for decoder_layer_forward.7']
    #allocation7 [shape = 'u8[262144]{0}', space=vmem, size = 0x40000, scoped, tag = 'input window, operand 2, single buffered']
    #allocation8 [shape = 'u8[1024]{0}', space=vmem, size = 0x400, scoped, tag = 'input window, operand 3, single buffered']
    #allocation9 [shape = 's32[1]{0}', space=sflag, size = 0x4, scoped, tag = 'scoped memory for decoder_layer_forward.7']
    #allocation10 [shape = 'u8[1024]{0}', space=vmem, size = 0x400, scoped, tag = 'input window, operand 4, single buffered']
    #allocation11 [shape = 'u8[262144]{0}', space=vmem, size = 0x40000, scoped, tag = 'input window, operand 5, single buffered']
    #allocation12 [shape = 's32[1]{0}', space=sflag, size = 0x4, scoped, tag = 'scoped memory for decoder_layer_forward.7']
    #allocation13 [shape = 'u8[2048]{0}', space=vmem, size = 0x800, scoped, tag = 'input window, operand 6, single buffered']
    #allocation14 [shape = 'u8[262144]{0}', space=vmem, size = 0x40000, scoped, tag = 'input window, operand 7, single buffered']
    #allocation15 [shape = 's32[1]{0}', space=sflag, size = 0x4, scoped, tag = 'scoped memory for decoder_layer_forward.7']
    #allocation16 [shape = 'u8[1024]{0}', space=vmem, size = 0x400, scoped, tag = 'input window, operand 8, single buffered']
    #allocation17 [shape = 'u8[1024]{0}', space=vmem, size = 0x400, scoped, tag = 'input window, operand 9, single buffered']
    #allocation18 [shape = 's32[1]{0}', space=sflag, size = 0x4, scoped, tag = 'scoped memory for decoder_layer_forward.7']
    #allocation19 [shape = 'u8[1024]{0}', space=vmem, size = 0x400, scoped, tag = 'input window, operand 10, single buffered']
    #allocation20 [shape = 'u8[262144]{0}', space=vmem, size = 0x40000, scoped, tag = 'output window, operand 0, single buffered']
    %16 = vsyncpa [#allocation3], 0
    %17 = vsyncpa [#allocation6], 0
    %18 = vsyncpa [#allocation9], 0
    %19 = vsyncpa [#allocation12], 0
    %20 = vsyncpa [#allocation15], 0
    %21 = vsyncpa [#allocation18], 0
    %22 = vsyncpa [#allocation4], 0
    // Predicated region
    $region2: #{decoder_layer_forward.7} parent=1 // pred_check
      _
    $region3: #{decoder_layer_forward.7} parent=1 // pred_check_branch
      %24 = sbr.rel (0) target = $region5
    $region4: #{decoder_layer_forward.7} parent=1 // pred_region
      %s26 = ssub.s32 4096, 4096
      %27 = vsyncadd [#allocation3], %s26
      %s28 = sshll.u32 [#allocation2], 4
      %s29 = int_to_ptr.vmem [resolvable:$true] %s28
      %34 = dma.hbm_to_vmem [thread:$0]  %s0, 4096, %s29, [#allocation3], 128, 128, 8
    $region5: #{decoder_layer_forward.7} parent=1 // pred_fallthru
      _
    // Predicated region
    $region6: #{decoder_layer_forward.7} parent=1 // pred_check
      _
    $region7: #{decoder_layer_forward.7} parent=1 // pred_check_branch
      %36 = sbr.rel (0) target = $region9
    $region8: #{decoder_layer_forward.7} parent=1 // pred_region
      %s38 = ssub.s32 4096, 4096
      %39 = vsyncadd [#allocation6], %s38
      %s40 = sshll.u32 [#allocation5], 4
      %s41 = int_to_ptr.vmem [resolvable:$true] %s40
      %46 = dma.hbm_to_vmem [thread:$0]  %s1, 4096, %s41, [#allocation6], 128, 128, 8
    $region9: #{decoder_layer_forward.7} parent=1 // pred_fallthru
      _
    // Predicated region
    $region10: #{decoder_layer_forward.7} parent=1 // pred_check
      _
    $region11: #{decoder_layer_forward.7} parent=1 // pred_check_branch
      %48 = sbr.rel (0) target = $region13
    $region12: #{decoder_layer_forward.7} parent=1 // pred_region
      %s50 = ssub.s32 8192, 8192
      %51 = vsyncadd [#allocation6], %s50
      %s52 = sshll.u32 [#allocation7], 4
      %s53 = int_to_ptr.vmem [resolvable:$true] %s52
      %58 = dma.hbm_to_vmem [thread:$0]  %s2, 8192, %s53, [#allocation6], 256, 256, 16
    $region13: #{decoder_layer_forward.7} parent=1 // pred_fallthru
      _
    // Predicated region
    $region14: #{decoder_layer_forward.7} parent=1 // pred_check
      _
    $region15: #{decoder_layer_forward.7} parent=1 // pred_check_branch
      %60 = sbr.rel (0) target = $region17
    $region16: #{decoder_layer_forward.7} parent=1 // pred_region
      %s62 = ssub.s32 32, 32
      %63 = vsyncadd [#allocation9], %s62
      %s65 = sshll.u32 [#allocation8], 4
      %s66 = int_to_ptr.vmem [resolvable:$true] %s65
      %68 = dma.hbm_to_vmem [thread:$0]  %s3, 32, %s66, [#allocation9]
    $region17: #{decoder_layer_forward.7} parent=1 // pred_fallthru
      _
    // Predicated region
    $region18: #{decoder_layer_forward.7} parent=1 // pred_check
      _
    $region19: #{decoder_layer_forward.7} parent=1 // pred_check_branch
      %70 = sbr.rel (0) target = $region21
    $region20: #{decoder_layer_forward.7} parent=1 // pred_region
      %s72 = ssub.s32 32, 32
      %73 = vsyncadd [#allocation9], %s72
      %s75 = sshll.u32 [#allocation10], 4
      %s76 = int_to_ptr.vmem [resolvable:$true] %s75
      %78 = dma.hbm_to_vmem [thread:$0]  %s4, 32, %s76, [#allocation9]
    $region21: #{decoder_layer_forward.7} parent=1 // pred_fallthru
      _
    // Predicated region
    $region22: #{decoder_layer_forward.7} parent=1 // pred_check
      _
    $region23: #{decoder_layer_forward.7} parent=1 // pred_check_branch
      %80 = sbr.rel (0) target = $region25
    $region24: #{decoder_layer_forward.7} parent=1 // pred_region
      %s82 = ssub.s32 8192, 8192
      %83 = vsyncadd [#allocation12], %s82
      %s84 = sshll.u32 [#allocation11], 4
      %s85 = int_to_ptr.vmem [resolvable:$true] %s84
      %90 = dma.hbm_to_vmem [thread:$0]  %s5, 8192, %s85, [#allocation12], 256, 256, 16
    $region25: #{decoder_layer_forward.7} parent=1 // pred_fallthru
      _
    // Predicated region
    $region26: #{decoder_layer_forward.7} parent=1 // pred_check
      _
    $region27: #{decoder_layer_forward.7} parent=1 // pred_check_branch
      %92 = sbr.rel (0) target = $region29
    $region28: #{decoder_layer_forward.7} parent=1 // pred_region
      %s94 = ssub.s32 64, 64
      %95 = vsyncadd [#allocation12], %s94
      %s97 = sshll.u32 [#allocation13], 4
      %s98 = int_to_ptr.vmem [resolvable:$true] %s97
      %100 = dma.hbm_to_vmem [thread:$0]  %s6, 64, %s98, [#allocation12]
    $region29: #{decoder_layer_forward.7} parent=1 // pred_fallthru
      _
    // Predicated region
    $region30: #{decoder_layer_forward.7} parent=1 // pred_check
      _
    $region31: #{decoder_layer_forward.7} parent=1 // pred_check_branch
      %102 = sbr.rel (0) target = $region33
    $region32: #{decoder_layer_forward.7} parent=1 // pred_region
      %s104 = ssub.s32 8192, 8192
      %105 = vsyncadd [#allocation15], %s104
      %s106 = sshll.u32 [#allocation14], 4
      %s107 = int_to_ptr.vmem [resolvable:$true] %s106
      %112 = dma.hbm_to_vmem [thread:$0]  %s7, 8192, %s107, [#allocation15], 128, 128, 8
    $region33: #{decoder_layer_forward.7} parent=1 // pred_fallthru
      _
    // Predicated region
    $region34: #{decoder_layer_forward.7} parent=1 // pred_check
      _
    $region35: #{decoder_layer_forward.7} parent=1 // pred_check_branch
      %114 = sbr.rel (0) target = $region37
    $region36: #{decoder_layer_forward.7} parent=1 // pred_region
      %s116 = ssub.s32 32, 32
      %117 = vsyncadd [#allocation15], %s116
      %s119 = sshll.u32 [#allocation16], 4
      %s120 = int_to_ptr.vmem [resolvable:$true] %s119
      %122 = dma.hbm_to_vmem [thread:$0]  %s8, 32, %s120, [#allocation15]
    $region37: #{decoder_layer_forward.7} parent=1 // pred_fallthru
      _
    // Predicated region
    $region38: #{decoder_layer_forward.7} parent=1 // pred_check
      _
    $region39: #{decoder_layer_forward.7} parent=1 // pred_check_branch
      %124 = sbr.rel (0) target = $region41
    $region40: #{decoder_layer_forward.7} parent=1 // pred_region
      %s126 = ssub.s32 32, 32
      %127 = vsyncadd [#allocation18], %s126
      %s129 = sshll.u32 [#allocation17], 4
      %s130 = int_to_ptr.vmem [resolvable:$true] %s129
      %132 = dma.hbm_to_vmem [thread:$0]  %s9, 32, %s130, [#allocation18]
    $region41: #{decoder_layer_forward.7} parent=1 // pred_fallthru
      _
    // Predicated region
    $region42: #{decoder_layer_forward.7} parent=1 // pred_check
      _
    $region43: #{decoder_layer_forward.7} parent=1 // pred_check_branch
      %134 = sbr.rel (0) target = $region45
    $region44: #{decoder_layer_forward.7} parent=1 // pred_region
      %s136 = ssub.s32 32, 32
      %137 = vsyncadd [#allocation18], %s136
      %s139 = sshll.u32 [#allocation19], 4
      %s140 = int_to_ptr.vmem [resolvable:$true] %s139
      %142 = dma.hbm_to_vmem [thread:$0]  %s10, 32, %s140, [#allocation18]
    $region45: #{decoder_layer_forward.7} parent=1 // pred_fallthru
      _
    // Predicated region
    $region46: #{decoder_layer_forward.7} parent=1 // pred_check
      _
    $region47: #{decoder_layer_forward.7} parent=1 // pred_check_branch
      %144 = sbr.rel (0) target = $region49
    $region48: #{decoder_layer_forward.7} parent=1 // pred_region
      %145 = dma.done [#allocation3], 4096
    $region49: #{decoder_layer_forward.7} parent=1 // pred_fallthru
      _
    // Predicated region
    $region50: #{decoder_layer_forward.7} parent=1 // pred_check
      _
    $region51: #{decoder_layer_forward.7} parent=1 // pred_check_branch
      %147 = sbr.rel (0) target = $region53
    $region52: #{decoder_layer_forward.7} parent=1 // pred_region
      %148 = dma.done [#allocation6], 4096
    $region53: #{decoder_layer_forward.7} parent=1 // pred_fallthru
      _
    // Predicated region
    $region54: #{decoder_layer_forward.7} parent=1 // pred_check
      _
    $region55: #{decoder_layer_forward.7} parent=1 // pred_check_branch
      %150 = sbr.rel (0) target = $region57
    $region56: #{decoder_layer_forward.7} parent=1 // pred_region
      %151 = dma.done [#allocation6], 8192
    $region57: #{decoder_layer_forward.7} parent=1 // pred_fallthru
      _
    // Predicated region
    $region58: #{decoder_layer_forward.7} parent=1 // pred_check
      _
    $region59: #{decoder_layer_forward.7} parent=1 // pred_check_branch
      %153 = sbr.rel (0) target = $region61
    $region60: #{decoder_layer_forward.7} parent=1 // pred_region
      %154 = dma.done [#allocation9], 32
    $region61: #{decoder_layer_forward.7} parent=1 // pred_fallthru
      _
    // Predicated region
    $region62: #{decoder_layer_forward.7} parent=1 // pred_check
      _
    $region63: #{decoder_layer_forward.7} parent=1 // pred_check_branch
      %156 = sbr.rel (0) target = $region65
    $region64: #{decoder_layer_forward.7} parent=1 // pred_region
      %157 = dma.done [#allocation9], 32
    $region65: #{decoder_layer_forward.7} parent=1 // pred_fallthru
      _
    // Predicated region
    $region66: #{decoder_layer_forward.7} parent=1 // pred_check
      _
    $region67: #{decoder_layer_forward.7} parent=1 // pred_check_branch
      %159 = sbr.rel (0) target = $region69
    $region68: #{decoder_layer_forward.7} parent=1 // pred_region
      %160 = dma.done [#allocation12], 8192
    $region69: #{decoder_layer_forward.7} parent=1 // pred_fallthru
      _
    // Predicated region
    $region70: #{decoder_layer_forward.7} parent=1 // pred_check
      _
    $region71: #{decoder_layer_forward.7} parent=1 // pred_check_branch
      %162 = sbr.rel (0) target = $region73
    $region72: #{decoder_layer_forward.7} parent=1 // pred_region
      %163 = dma.done [#allocation12], 64
    $region73: #{decoder_layer_forward.7} parent=1 // pred_fallthru
      _
    // Predicated region
    $region74: #{decoder_layer_forward.7} parent=1 // pred_check
      _
    $region75: #{decoder_layer_forward.7} parent=1 // pred_check_branch
      %165 = sbr.rel (0) target = $region77
    $region76: #{decoder_layer_forward.7} parent=1 // pred_region
      %166 = dma.done [#allocation15], 8192
    $region77: #{decoder_layer_forward.7} parent=1 // pred_fallthru
      _
    // Predicated region
    $region78: #{decoder_layer_forward.7} parent=1 // pred_check
      _
    $region79: #{decoder_layer_forward.7} parent=1 // pred_check_branch
      %168 = sbr.rel (0) target = $region81
    $region80: #{decoder_layer_forward.7} parent=1 // pred_region
      %169 = dma.done [#allocation15], 32
    $region81: #{decoder_layer_forward.7} parent=1 // pred_fallthru
      _
    // Predicated region
    $region82: #{decoder_layer_forward.7} parent=1 // pred_check
      _
    $region83: #{decoder_layer_forward.7} parent=1 // pred_check_branch
      %171 = sbr.rel (0) target = $region85
    $region84: #{decoder_layer_forward.7} parent=1 // pred_region
      %172 = dma.done [#allocation18], 32
    $region85: #{decoder_layer_forward.7} parent=1 // pred_fallthru
      _
    // Predicated region
    $region86: #{decoder_layer_forward.7} parent=1 // pred_check
      _
    $region87: #{decoder_layer_forward.7} parent=1 // pred_check_branch
      %174 = sbr.rel (0) target = $region89
    $region88: #{decoder_layer_forward.7} parent=1 // pred_region
      %175 = dma.done [#allocation18], 32
    $region89: #{decoder_layer_forward.7} parent=1 // pred_fallthru
      _
    %v176 = vld [vmem:[#allocation2] sm:$0xff]
    %v177 = vld [vmem:[#allocation2 + $0x8] sm:$0xff]
    %v178 = vld [vmem:[#allocation2 + $0x10] sm:$0xff]
    %v179 = vld [vmem:[#allocation2 + $0x18] sm:$0xff]
    %v180 = vld [vmem:[#allocation2 + $0x20] sm:$0xff]
    %v181 = vld [vmem:[#allocation2 + $0x28] sm:$0xff]
    %v182 = vld [vmem:[#allocation2 + $0x30] sm:$0xff]
    %v183 = vld [vmem:[#allocation2 + $0x38] sm:$0xff]
    %v184 = vld [vmem:[#allocation2 + $0x40] sm:$0xff]
    %v185 = vld [vmem:[#allocation2 + $0x48] sm:$0xff]
    %v186 = vld [vmem:[#allocation2 + $0x50] sm:$0xff]
    %v187 = vld [vmem:[#allocation2 + $0x58] sm:$0xff]
    %v188 = vld [vmem:[#allocation2 + $0x60] sm:$0xff]
    %v189 = vld [vmem:[#allocation2 + $0x68] sm:$0xff]
    %v190 = vld [vmem:[#allocation2 + $0x70] sm:$0xff]
    %v191 = vld [vmem:[#allocation2 + $0x78] sm:$0xff]
    %v192 = vld [vmem:[#allocation2 + $0x80] sm:$0xff]
    %v193 = vld [vmem:[#allocation2 + $0x88] sm:$0xff]
    %v194 = vld [vmem:[#allocation2 + $0x90] sm:$0xff]
    %v195 = vld [vmem:[#allocation2 + $0x98] sm:$0xff]
    %v196 = vld [vmem:[#allocation2 + $0xa0] sm:$0xff]
    %v197 = vld [vmem:[#allocation2 + $0xa8] sm:$0xff]
    %v198 = vld [vmem:[#allocation2 + $0xb0] sm:$0xff]
    %v199 = vld [vmem:[#allocation2 + $0xb8] sm:$0xff]
    %v200 = vld [vmem:[#allocation2 + $0xc0] sm:$0xff]
    %v201 = vld [vmem:[#allocation2 + $0xc8] sm:$0xff]
    %v202 = vld [vmem:[#allocation2 + $0xd0] sm:$0xff]
    %v203 = vld [vmem:[#allocation2 + $0xd8] sm:$0xff]
    %v204 = vld [vmem:[#allocation2 + $0xe0] sm:$0xff]
    %v205 = vld [vmem:[#allocation2 + $0xe8] sm:$0xff]
    %v206 = vld [vmem:[#allocation2 + $0xf0] sm:$0xff]
    %v207 = vld [vmem:[#allocation2 + $0xf8] sm:$0xff]
    %v208 = vld [vmem:[#allocation5] sm:$0xff]
    %v209 = vld [vmem:[#allocation5 + $0x8] sm:$0xff]
    %v210 = vld [vmem:[#allocation5 + $0x10] sm:$0xff]
    %v211 = vld [vmem:[#allocation5 + $0x18] sm:$0xff]
    %v212 = vld [vmem:[#allocation5 + $0x20] sm:$0xff]
    %v213 = vld [vmem:[#allocation5 + $0x28] sm:$0xff]
    %v214 = vld [vmem:[#allocation5 + $0x30] sm:$0xff]
    %v215 = vld [vmem:[#allocation5 + $0x38] sm:$0xff]
    %v216 = vld [vmem:[#allocation5 + $0x40] sm:$0xff]
    %v217 = vld [vmem:[#allocation5 + $0x48] sm:$0xff]
    %v218 = vld [vmem:[#allocation5 + $0x50] sm:$0xff]
    %v219 = vld [vmem:[#allocation5 + $0x58] sm:$0xff]
    %v220 = vld [vmem:[#allocation5 + $0x60] sm:$0xff]
    %v221 = vld [vmem:[#allocation5 + $0x68] sm:$0xff]
    %v222 = vld [vmem:[#allocation5 + $0x70] sm:$0xff]
    %v223 = vld [vmem:[#allocation5 + $0x78] sm:$0xff]
    %v224 = vld [vmem:[#allocation5 + $0x80] sm:$0xff]
    %v225 = vld [vmem:[#allocation5 + $0x88] sm:$0xff]
    %v226 = vld [vmem:[#allocation5 + $0x90] sm:$0xff]
    %v227 = vld [vmem:[#allocation5 + $0x98] sm:$0xff]
    %v228 = vld [vmem:[#allocation5 + $0xa0] sm:$0xff]
    %v229 = vld [vmem:[#allocation5 + $0xa8] sm:$0xff]
    %v230 = vld [vmem:[#allocation5 + $0xb0] sm:$0xff]
    %v231 = vld [vmem:[#allocation5 + $0xb8] sm:$0xff]
    %v232 = vld [vmem:[#allocation5 + $0xc0] sm:$0xff]
    %v233 = vld [vmem:[#allocation5 + $0xc8] sm:$0xff]
    %v234 = vld [vmem:[#allocation5 + $0xd0] sm:$0xff]
    %v235 = vld [vmem:[#allocation5 + $0xd8] sm:$0xff]
    %v236 = vld [vmem:[#allocation5 + $0xe0] sm:$0xff]
    %v237 = vld [vmem:[#allocation5 + $0xe8] sm:$0xff]
    %v238 = vld [vmem:[#allocation5 + $0xf0] sm:$0xff]
    %v239 = vld [vmem:[#allocation5 + $0xf8] sm:$0xff]
    %v272 = vunpack.c.l.b16 %v176
    %v273 = vunpack.c.h.b16 %v176
    %v274 = vunpack.c.l.b16 %v177
    %v275 = vunpack.c.h.b16 %v177
    %v276 = vunpack.c.l.b16 %v178
    %v277 = vunpack.c.h.b16 %v178
    %v278 = vunpack.c.l.b16 %v179
    %v279 = vunpack.c.h.b16 %v179
    %v280 = vunpack.c.l.b16 %v180
    %v281 = vunpack.c.h.b16 %v180
    %v282 = vunpack.c.l.b16 %v181
    %v283 = vunpack.c.h.b16 %v181
    %v284 = vunpack.c.l.b16 %v182
    %v285 = vunpack.c.h.b16 %v182
    %v286 = vunpack.c.l.b16 %v183
    %v287 = vunpack.c.h.b16 %v183
    %v288 = vunpack.c.l.b16 %v184
    %v289 = vunpack.c.h.b16 %v184
    %v290 = vunpack.c.l.b16 %v185
    %v291 = vunpack.c.h.b16 %v185
    %v292 = vunpack.c.l.b16 %v186
    %v293 = vunpack.c.h.b16 %v186
    %v294 = vunpack.c.l.b16 %v187
    %v295 = vunpack.c.h.b16 %v187
    %v296 = vunpack.c.l.b16 %v188
    %v297 = vunpack.c.h.b16 %v188
    %v298 = vunpack.c.l.b16 %v189
    %v299 = vunpack.c.h.b16 %v189
    %v300 = vunpack.c.l.b16 %v190
    %v301 = vunpack.c.h.b16 %v190
    %v302 = vunpack.c.l.b16 %v191
    %v303 = vunpack.c.h.b16 %v191
    %v304 = vunpack.c.l.b16 %v192
    %v305 = vunpack.c.h.b16 %v192
    %v306 = vunpack.c.l.b16 %v193
    %v307 = vunpack.c.h.b16 %v193
    %v308 = vunpack.c.l.b16 %v194
    %v309 = vunpack.c.h.b16 %v194
    %v310 = vunpack.c.l.b16 %v195
    %v311 = vunpack.c.h.b16 %v195
    %v312 = vunpack.c.l.b16 %v196
    %v313 = vunpack.c.h.b16 %v196
    %v314 = vunpack.c.l.b16 %v197
    %v315 = vunpack.c.h.b16 %v197
    %v316 = vunpack.c.l.b16 %v198
    %v317 = vunpack.c.h.b16 %v198
    %v318 = vunpack.c.l.b16 %v199
    %v319 = vunpack.c.h.b16 %v199
    %v320 = vunpack.c.l.b16 %v200
    %v321 = vunpack.c.h.b16 %v200
    %v322 = vunpack.c.l.b16 %v201
    %v323 = vunpack.c.h.b16 %v201
    %v324 = vunpack.c.l.b16 %v202
    %v325 = vunpack.c.h.b16 %v202
    %v326 = vunpack.c.l.b16 %v203
    %v327 = vunpack.c.h.b16 %v203
    %v328 = vunpack.c.l.b16 %v204
    %v329 = vunpack.c.h.b16 %v204
    %v330 = vunpack.c.l.b16 %v205
    %v331 = vunpack.c.h.b16 %v205
    %v332 = vunpack.c.l.b16 %v206
    %v333 = vunpack.c.h.b16 %v206
    %v334 = vunpack.c.l.b16 %v207
    %v335 = vunpack.c.h.b16 %v207
    %v336 = vpack.c.b16 %v274, %v272
    %v337 = vpack.c.b16 %v275, %v273
    %v338 = vpack.c.b16 %v278, %v276
    %v339 = vpack.c.b16 %v279, %v277
    %v340 = vpack.c.b16 %v282, %v280
    %v341 = vpack.c.b16 %v283, %v281
    %v342 = vpack.c.b16 %v286, %v284
    %v343 = vpack.c.b16 %v287, %v285
    %v344 = vpack.c.b16 %v290, %v288
    %v345 = vpack.c.b16 %v291, %v289
    %v346 = vpack.c.b16 %v294, %v292
    %v347 = vpack.c.b16 %v295, %v293
    %v348 = vpack.c.b16 %v298, %v296
    %v349 = vpack.c.b16 %v299, %v297
    %v350 = vpack.c.b16 %v302, %v300
    %v351 = vpack.c.b16 %v303, %v301
    %v352 = vpack.c.b16 %v306, %v304
    %v353 = vpack.c.b16 %v307, %v305
    %v354 = vpack.c.b16 %v310, %v308
    %v355 = vpack.c.b16 %v311, %v309
    %v356 = vpack.c.b16 %v314, %v312
    %v357 = vpack.c.b16 %v315, %v313
    %v358 = vpack.c.b16 %v318, %v316
    %v359 = vpack.c.b16 %v319, %v317
    %v360 = vpack.c.b16 %v322, %v320
    %v361 = vpack.c.b16 %v323, %v321
    %v362 = vpack.c.b16 %v326, %v324
    %v363 = vpack.c.b16 %v327, %v325
    %v364 = vpack.c.b16 %v330, %v328
    %v365 = vpack.c.b16 %v331, %v329
    %v366 = vpack.c.b16 %v334, %v332
    %v367 = vpack.c.b16 %v335, %v333
    %v432 = vunpack.c.l.b16 %v208
    %v433 = vunpack.c.h.b16 %v208
    %v434 = vunpack.c.l.b16 %v209
    %v435 = vunpack.c.h.b16 %v209
    %v436 = vunpack.c.l.b16 %v210
    %v437 = vunpack.c.h.b16 %v210
    %v438 = vunpack.c.l.b16 %v211
    %v439 = vunpack.c.h.b16 %v211
    %v440 = vunpack.c.l.b16 %v212
    %v441 = vunpack.c.h.b16 %v212
    %v442 = vunpack.c.l.b16 %v213
    %v443 = vunpack.c.h.b16 %v213
    %v444 = vunpack.c.l.b16 %v214
    %v445 = vunpack.c.h.b16 %v214
    %v446 = vunpack.c.l.b16 %v215
    %v447 = vunpack.c.h.b16 %v215
    %v448 = vunpack.c.l.b16 %v216
    %v449 = vunpack.c.h.b16 %v216
    %v450 = vunpack.c.l.b16 %v217
    %v451 = vunpack.c.h.b16 %v217
    %v452 = vunpack.c.l.b16 %v218
    %v453 = vunpack.c.h.b16 %v218
    %v454 = vunpack.c.l.b16 %v219
    %v455 = vunpack.c.h.b16 %v219
    %v456 = vunpack.c.l.b16 %v220
    %v457 = vunpack.c.h.b16 %v220
    %v458 = vunpack.c.l.b16 %v221
    %v459 = vunpack.c.h.b16 %v221
    %v460 = vunpack.c.l.b16 %v222
    %v461 = vunpack.c.h.b16 %v222
    %v462 = vunpack.c.l.b16 %v223
    %v463 = vunpack.c.h.b16 %v223
    %v464 = vunpack.c.l.b16 %v224
    %v465 = vunpack.c.h.b16 %v224
    %v466 = vunpack.c.l.b16 %v225
    %v467 = vunpack.c.h.b16 %v225
    %v468 = vunpack.c.l.b16 %v226
    %v469 = vunpack.c.h.b16 %v226
    %v470 = vunpack.c.l.b16 %v227
    %v471 = vunpack.c.h.b16 %v227
    %v472 = vunpack.c.l.b16 %v228
    %v473 = vunpack.c.h.b16 %v228
    %v474 = vunpack.c.l.b16 %v229
    %v475 = vunpack.c.h.b16 %v229
    %v476 = vunpack.c.l.b16 %v230
    %v477 = vunpack.c.h.b16 %v230
    %v478 = vunpack.c.l.b16 %v231
    %v479 = vunpack.c.h.b16 %v231
    %v480 = vunpack.c.l.b16 %v232
    %v481 = vunpack.c.h.b16 %v232
    %v482 = vunpack.c.l.b16 %v233
    %v483 = vunpack.c.h.b16 %v233
    %v484 = vunpack.c.l.b16 %v234
    %v485 = vunpack.c.h.b16 %v234
    %v486 = vunpack.c.l.b16 %v235
    %v487 = vunpack.c.h.b16 %v235
    %v488 = vunpack.c.l.b16 %v236
    %v489 = vunpack.c.h.b16 %v236
    %v490 = vunpack.c.l.b16 %v237
    %v491 = vunpack.c.h.b16 %v237
    %v492 = vunpack.c.l.b16 %v238
    %v493 = vunpack.c.h.b16 %v238
    %v494 = vunpack.c.l.b16 %v239
    %v495 = vunpack.c.h.b16 %v239
    %v496 = vpack.c.b16 %v434, %v432
    %v497 = vpack.c.b16 %v435, %v433
    %v498 = vpack.c.b16 %v438, %v436
    %v499 = vpack.c.b16 %v439, %v437
    %v500 = vpack.c.b16 %v442, %v440
    %v501 = vpack.c.b16 %v443, %v441
    %v502 = vpack.c.b16 %v446, %v444
    %v503 = vpack.c.b16 %v447, %v445
    %v504 = vpack.c.b16 %v450, %v448
    %v505 = vpack.c.b16 %v451, %v449
    %v506 = vpack.c.b16 %v454, %v452
    %v507 = vpack.c.b16 %v455, %v453
    %v508 = vpack.c.b16 %v458, %v456
    %v509 = vpack.c.b16 %v459, %v457
    %v510 = vpack.c.b16 %v462, %v460
    %v511 = vpack.c.b16 %v463, %v461
    %v512 = vpack.c.b16 %v466, %v464
    %v513 = vpack.c.b16 %v467, %v465
    %v514 = vpack.c.b16 %v470, %v468
    %v515 = vpack.c.b16 %v471, %v469
    %v516 = vpack.c.b16 %v474, %v472
    %v517 = vpack.c.b16 %v475, %v473
    %v518 = vpack.c.b16 %v478, %v476
    %v519 = vpack.c.b16 %v479, %v477
    %v520 = vpack.c.b16 %v482, %v480
    %v521 = vpack.c.b16 %v483, %v481
    %v522 = vpack.c.b16 %v486, %v484
    %v523 = vpack.c.b16 %v487, %v485
    %v524 = vpack.c.b16 %v490, %v488
    %v525 = vpack.c.b16 %v491, %v489
    %v526 = vpack.c.b16 %v494, %v492
    %v527 = vpack.c.b16 %v495, %v493
    %560 = vmatprep.subr.bf16.mxu0 %v497
    %561 = vmatpush1.bf16.msra.mxu0 %v496
    %562 = vmatprep.subr.bf16.mxu0 %v499
    %563 = vmatpush1.bf16.msra.mxu0 %v498
    %564 = vmatprep.subr.bf16.mxu0 %v501
    %565 = vmatpush1.bf16.msra.mxu0 %v500
    %566 = vmatprep.subr.bf16.mxu0 %v503
    %567 = vmatpush1.bf16.msra.mxu0 %v502
    %568 = vmatprep.subr.bf16.mxu0 %v505
    %569 = vmatpush1.bf16.msra.mxu0 %v504
    %570 = vmatprep.subr.bf16.mxu0 %v507
    %571 = vmatpush1.bf16.msra.mxu0 %v506
    %572 = vmatprep.subr.bf16.mxu0 %v509
    %573 = vmatpush1.bf16.msra.mxu0 %v508
    %574 = vmatprep.subr.bf16.mxu0 %v511
    %575 = vmatpush1.bf16.msra.mxu0 %v510
    %576 = vmatprep.subr.bf16.mxu0 %v513
    %577 = vmatpush1.bf16.msra.mxu0 %v512
    %578 = vmatprep.subr.bf16.mxu0 %v515
    %579 = vmatpush1.bf16.msra.mxu0 %v514
    %580 = vmatprep.subr.bf16.mxu0 %v517
    %581 = vmatpush1.bf16.msra.mxu0 %v516
    %582 = vmatprep.subr.bf16.mxu0 %v519
    %583 = vmatpush1.bf16.msra.mxu0 %v518
    %584 = vmatprep.subr.bf16.mxu0 %v521
    %585 = vmatpush1.bf16.msra.mxu0 %v520
    %586 = vmatprep.subr.bf16.mxu0 %v523
    %587 = vmatpush1.bf16.msra.mxu0 %v522
    %588 = vmatprep.subr.bf16.mxu0 %v525
    %589 = vmatpush1.bf16.msra.mxu0 %v524
    %590 = vmatprep.subr.bf16.mxu0 %v527
    %591 = vmatpush1.bf16.msra.mxu0 %v526
    %592 = vmatprep.mubr.bf16.mxu0 %v337
    %593 = vmatmul.mubr.bf16.gmra.mrb[0].mxu0 %v336
    %v594 = vpop.f32.mrb[0].mxu0
    %v595 = vadd.f32 0.0, %v594
    %v596 = vpop.f32.mrb[0].mxu0
    %v597 = vadd.f32 0.0, %v596
    %v598 = vpop.f32.mrb[0].mxu0
    %v599 = vadd.f32 0.0, %v598
    %v600 = vpop.f32.mrb[0].mxu0
    %v601 = vadd.f32 0.0, %v600
    %602 = vmatprep.mubr.bf16.mxu0 %v339
    %603 = vmatmul.mubr.bf16.gmra.mrb[0].mxu0 %v338
    %v604 = vpop.f32.mrb[0].mxu0
    %v605 = vadd.f32 0.0, %v604
    %v606 = vpop.f32.mrb[0].mxu0
    %v607 = vadd.f32 0.0, %v606
    %v608 = vpop.f32.mrb[0].mxu0
    %v609 = vadd.f32 0.0, %v608
    %v610 = vpop.f32.mrb[0].mxu0
    %v611 = vadd.f32 0.0, %v610
    %612 = vmatprep.mubr.bf16.mxu0 %v341
    %613 = vmatmul.mubr.bf16.gmra.mrb[0].mxu0 %v340
    %v614 = vpop.f32.mrb[0].mxu0
    %v615 = vadd.f32 0.0, %v614
    %v616 = vpop.f32.mrb[0].mxu0
    %v617 = vadd.f32 0.0, %v616
    %v618 = vpop.f32.mrb[0].mxu0
    %v619 = vadd.f32 0.0, %v618
    %v620 = vpop.f32.mrb[0].mxu0
    %v621 = vadd.f32 0.0, %v620
    %622 = vmatprep.mubr.bf16.mxu0 %v343
    %623 = vmatmul.mubr.bf16.gmra.mrb[0].mxu0 %v342
    %v624 = vpop.f32.mrb[0].mxu0
    %v625 = vadd.f32 0.0, %v624
    %v626 = vpop.f32.mrb[0].mxu0
    %v627 = vadd.f32 0.0, %v626
    %v628 = vpop.f32.mrb[0].mxu0
    %v629 = vadd.f32 0.0, %v628
    %v630 = vpop.f32.mrb[0].mxu0
    %v631 = vadd.f32 0.0, %v630
    %632 = vmatprep.mubr.bf16.mxu0 %v345
    %633 = vmatmul.mubr.bf16.gmra.mrb[0].mxu0 %v344
    %v634 = vpop.f32.mrb[0].mxu0
    %v635 = vadd.f32 0.0, %v634
    %v636 = vpop.f32.mrb[0].mxu0
    %v637 = vadd.f32 0.0, %v636
    %v638 = vpop.f32.mrb[0].mxu0
    %v639 = vadd.f32 0.0, %v638
    %v640 = vpop.f32.mrb[0].mxu0
    %v641 = vadd.f32 0.0, %v640
    %642 = vmatprep.mubr.bf16.mxu0 %v347
    %643 = vmatmul.mubr.bf16.gmra.mrb[0].mxu0 %v346
    %v644 = vpop.f32.mrb[0].mxu0
    %v645 = vadd.f32 0.0, %v644
    %v646 = vpop.f32.mrb[0].mxu0
    %v647 = vadd.f32 0.0, %v646
    %v648 = vpop.f32.mrb[0].mxu0
    %v649 = vadd.f32 0.0, %v648
    %v650 = vpop.f32.mrb[0].mxu0
    %v651 = vadd.f32 0.0, %v650
    %652 = vmatprep.mubr.bf16.mxu0 %v349
    %653 = vmatmul.mubr.bf16.gmra.mrb[0].mxu0 %v348
    %v654 = vpop.f32.mrb[0].mxu0
    %v655 = vadd.f32 0.0, %v654
    %v656 = vpop.f32.mrb[0].mxu0
    %v657 = vadd.f32 0.0, %v656
    %v658 = vpop.f32.mrb[0].mxu0
    %v659 = vadd.f32 0.0, %v658
    %v660 = vpop.f32.mrb[0].mxu0
    %v661 = vadd.f32 0.0, %v660
    %662 = vmatprep.mubr.bf16.mxu0 %v351
    %663 = vmatmul.mubr.bf16.gmra.mrb[0].mxu0 %v350
    %v664 = vpop.f32.mrb[0].mxu0
    %v665 = vadd.f32 0.0, %v664
    %v666 = vpop.f32.mrb[0].mxu0
    %v667 = vadd.f32 0.0, %v666
    %v668 = vpop.f32.mrb[0].mxu0
    %v669 = vadd.f32 0.0, %v668
    %v670 = vpop.f32.mrb[0].mxu0
    %v671 = vadd.f32 0.0, %v670
    %672 = vmatprep.mubr.bf16.mxu0 %v353
    %673 = vmatmul.mubr.bf16.gmra.mrb[0].mxu0 %v352
    %v674 = vpop.f32.mrb[0].mxu0
    %v675 = vadd.f32 0.0, %v674
    %v676 = vpop.f32.mrb[0].mxu0
    %v677 = vadd.f32 0.0, %v676
    %v678 = vpop.f32.mrb[0].mxu0
    %v679 = vadd.f32 0.0, %v678
    %v680 = vpop.f32.mrb[0].mxu0
    %v681 = vadd.f32 0.0, %v680
    %682 = vmatprep.mubr.bf16.mxu0 %v355
    %683 = vmatmul.mubr.bf16.gmra.mrb[0].mxu0 %v354
    %v684 = vpop.f32.mrb[0].mxu0
    %v685 = vadd.f32 0.0, %v684
    %v686 = vpop.f32.mrb[0].mxu0
    %v687 = vadd.f32 0.0, %v686
    %v688 = vpop.f32.mrb[0].mxu0
    %v689 = vadd.f32 0.0, %v688
    %v690 = vpop.f32.mrb[0].mxu0
    %v691 = vadd.f32 0.0, %v690
    %692 = vmatprep.mubr.bf16.mxu0 %v357
    %693 = vmatmul.mubr.bf16.gmra.mrb[0].mxu0 %v356
    %v694 = vpop.f32.mrb[0].mxu0
    %v695 = vadd.f32 0.0, %v694
    %v696 = vpop.f32.mrb[0].mxu0
    %v697 = vadd.f32 0.0, %v696
    %v698 = vpop.f32.mrb[0].mxu0
    %v699 = vadd.f32 0.0, %v698
    %v700 = vpop.f32.mrb[0].mxu0
    %v701 = vadd.f32 0.0, %v700
    %702 = vmatprep.mubr.bf16.mxu0 %v359
    %703 = vmatmul.mubr.bf16.gmra.mrb[0].mxu0 %v358
    %v704 = vpop.f32.mrb[0].mxu0
    %v705 = vadd.f32 0.0, %v704
    %v706 = vpop.f32.mrb[0].mxu0
    %v707 = vadd.f32 0.0, %v706
    %v708 = vpop.f32.mrb[0].mxu0
    %v709 = vadd.f32 0.0, %v708
    %v710 = vpop.f32.mrb[0].mxu0
    %v711 = vadd.f32 0.0, %v710
    %712 = vmatprep.mubr.bf16.mxu0 %v361
    %713 = vmatmul.mubr.bf16.gmra.mrb[0].mxu0 %v360
    %v714 = vpop.f32.mrb[0].mxu0
    %v715 = vadd.f32 0.0, %v714
    %v716 = vpop.f32.mrb[0].mxu0
    %v717 = vadd.f32 0.0, %v716
    %v718 = vpop.f32.mrb[0].mxu0
    %v719 = vadd.f32 0.0, %v718
    %v720 = vpop.f32.mrb[0].mxu0
    %v721 = vadd.f32 0.0, %v720
    %722 = vmatprep.mubr.bf16.mxu0 %v363
    %723 = vmatmul.mubr.bf16.gmra.mrb[0].mxu0 %v362
    %v724 = vpop.f32.mrb[0].mxu0
    %v725 = vadd.f32 0.0, %v724
    %v726 = vpop.f32.mrb[0].mxu0
    %v727 = vadd.f32 0.0, %v726
    %v728 = vpop.f32.mrb[0].mxu0
    %v729 = vadd.f32 0.0, %v728
    %v730 = vpop.f32.mrb[0].mxu0
    %v731 = vadd.f32 0.0, %v730
    %732 = vmatprep.mubr.bf16.mxu0 %v365
    %733 = vmatmul.mubr.bf16.gmra.mrb[0].mxu0 %v364
    %v734 = vpop.f32.mrb[0].mxu0
    %v735 = vadd.f32 0.0, %v734
    %v736 = vpop.f32.mrb[0].mxu0
    %v737 = vadd.f32 0.0, %v736
    %v738 = vpop.f32.mrb[0].mxu0
    %v739 = vadd.f32 0.0, %v738
    %v740 = vpop.f32.mrb[0].mxu0
    %v741 = vadd.f32 0.0, %v740
    %742 = vmatprep.mubr.bf16.mxu0 %v367
    %743 = vmatmul.mubr.bf16.gmra.mrb[0].mxu0 %v366
    %v744 = vpop.f32.mrb[0].mxu0
    %v745 = vadd.f32 0.0, %v744
    %v746 = vpop.f32.mrb[0].mxu0
    %v747 = vadd.f32 0.0, %v746
    %v748 = vpop.f32.mrb[0].mxu0
    %v749 = vadd.f32 0.0, %v748
    %v750 = vpop.f32.mrb[0].mxu0
    %v751 = vadd.f32 0.0, %v750
    %752 = vdwg.mxu0
    %v753 = vld [vmem:[#allocation7] sm:$0xff]
    %v754 = vld [vmem:[#allocation7 + $0x8] sm:$0xff]
    %v755 = vld [vmem:[#allocation7 + $0x10] sm:$0xff]
    %v756 = vld [vmem:[#allocation7 + $0x18] sm:$0xff]
    %v757 = vld [vmem:[#allocation7 + $0x20] sm:$0xff]
    %v758 = vld [vmem:[#allocation7 + $0x28] sm:$0xff]
    %v759 = vld [vmem:[#allocation7 + $0x30] sm:$0xff]
    %v760 = vld [vmem:[#allocation7 + $0x38] sm:$0xff]
    %v761 = vld [vmem:[#allocation7 + $0x40] sm:$0xff]
    %v762 = vld [vmem:[#allocation7 + $0x48] sm:$0xff]
    %v763 = vld [vmem:[#allocation7 + $0x50] sm:$0xff]
    %v764 = vld [vmem:[#allocation7 + $0x58] sm:$0xff]
    %v765 = vld [vmem:[#allocation7 + $0x60] sm:$0xff]
    %v766 = vld [vmem:[#allocation7 + $0x68] sm:$0xff]
    %v767 = vld [vmem:[#allocation7 + $0x70] sm:$0xff]
    %v768 = vld [vmem:[#allocation7 + $0x78] sm:$0xff]
    %v769 = vld [vmem:[#allocation7 + $0x80] sm:$0xff]
    %v770 = vld [vmem:[#allocation7 + $0x88] sm:$0xff]
    %v771 = vld [vmem:[#allocation7 + $0x90] sm:$0xff]
    %v772 = vld [vmem:[#allocation7 + $0x98] sm:$0xff]
    %v773 = vld [vmem:[#allocation7 + $0xa0] sm:$0xff]
    %v774 = vld [vmem:[#allocation7 + $0xa8] sm:$0xff]
    %v775 = vld [vmem:[#allocation7 + $0xb0] sm:$0xff]
    %v776 = vld [vmem:[#allocation7 + $0xb8] sm:$0xff]
    %v777 = vld [vmem:[#allocation7 + $0xc0] sm:$0xff]
    %v778 = vld [vmem:[#allocation7 + $0xc8] sm:$0xff]
    %v779 = vld [vmem:[#allocation7 + $0xd0] sm:$0xff]
    %v780 = vld [vmem:[#allocation7 + $0xd8] sm:$0xff]
    %v781 = vld [vmem:[#allocation7 + $0xe0] sm:$0xff]
    %v782 = vld [vmem:[#allocation7 + $0xe8] sm:$0xff]
    %v783 = vld [vmem:[#allocation7 + $0xf0] sm:$0xff]
    %v784 = vld [vmem:[#allocation7 + $0xf8] sm:$0xff]
    %v785 = vld [vmem:[#allocation7 + $0x100] sm:$0xff]
    %v786 = vld [vmem:[#allocation7 + $0x108] sm:$0xff]
    %v787 = vld [vmem:[#allocation7 + $0x110] sm:$0xff]
    %v788 = vld [vmem:[#allocation7 + $0x118] sm:$0xff]
    %v789 = vld [vmem:[#allocation7 + $0x120] sm:$0xff]
    %v790 = vld [vmem:[#allocation7 + $0x128] sm:$0xff]
    %v791 = vld [vmem:[#allocation7 + $0x130] sm:$0xff]
    %v792 = vld [vmem:[#allocation7 + $0x138] sm:$0xff]
    %v793 = vld [vmem:[#allocation7 + $0x140] sm:$0xff]
    %v794 = vld [vmem:[#allocation7 + $0x148] sm:$0xff]
    %v795 = vld [vmem:[#allocation7 + $0x150] sm:$0xff]
    %v796 = vld [vmem:[#allocation7 + $0x158] sm:$0xff]
    %v797 = vld [vmem:[#allocation7 + $0x160] sm:$0xff]
    %v798 = vld [vmem:[#allocation7 + $0x168] sm:$0xff]
    %v799 = vld [vmem:[#allocation7 + $0x170] sm:$0xff]
    %v800 = vld [vmem:[#allocation7 + $0x178] sm:$0xff]
    %v801 = vld [vmem:[#allocation7 + $0x180] sm:$0xff]
    %v802 = vld [vmem:[#allocation7 + $0x188] sm:$0xff]
    %v803 = vld [vmem:[#allocation7 + $0x190] sm:$0xff]
    %v804 = vld [vmem:[#allocation7 + $0x198] sm:$0xff]
    %v805 = vld [vmem:[#allocation7 + $0x1a0] sm:$0xff]
    %v806 = vld [vmem:[#allocation7 + $0x1a8] sm:$0xff]
    %v807 = vld [vmem:[#allocation7 + $0x1b0] sm:$0xff]
    %v808 = vld [vmem:[#allocation7 + $0x1b8] sm:$0xff]
    %v809 = vld [vmem:[#allocation7 + $0x1c0] sm:$0xff]
    %v810 = vld [vmem:[#allocation7 + $0x1c8] sm:$0xff]
    %v811 = vld [vmem:[#allocation7 + $0x1d0] sm:$0xff]
    %v812 = vld [vmem:[#allocation7 + $0x1d8] sm:$0xff]
    %v813 = vld [vmem:[#allocation7 + $0x1e0] sm:$0xff]
    %v814 = vld [vmem:[#allocation7 + $0x1e8] sm:$0xff]
    %v815 = vld [vmem:[#allocation7 + $0x1f0] sm:$0xff]
    %v816 = vld [vmem:[#allocation7 + $0x1f8] sm:$0xff]
    %v817 = vadd.f32 %v753, %v595
    %v818 = vadd.f32 %v754, %v597
    %v819 = vadd.f32 %v755, %v599
    %v820 = vadd.f32 %v756, %v601
    %v821 = vadd.f32 %v757, %v605
    %v822 = vadd.f32 %v758, %v607
    %v823 = vadd.f32 %v759, %v609
    %v824 = vadd.f32 %v760, %v611
    %v825 = vadd.f32 %v761, %v615
    %v826 = vadd.f32 %v762, %v617
    %v827 = vadd.f32 %v763, %v619
    %v828 = vadd.f32 %v764, %v621
    %v829 = vadd.f32 %v765, %v625
    %v830 = vadd.f32 %v766, %v627
    %v831 = vadd.f32 %v767, %v629
    %v832 = vadd.f32 %v768, %v631
    %v833 = vadd.f32 %v769, %v635
    %v834 = vadd.f32 %v770, %v637
    %v835 = vadd.f32 %v771, %v639
    %v836 = vadd.f32 %v772, %v641
    %v837 = vadd.f32 %v773, %v645
    %v838 = vadd.f32 %v774, %v647
    %v839 = vadd.f32 %v775, %v649
    %v840 = vadd.f32 %v776, %v651
    %v841 = vadd.f32 %v777, %v655
    %v842 = vadd.f32 %v778, %v657
    %v843 = vadd.f32 %v779, %v659
    %v844 = vadd.f32 %v780, %v661
    %v845 = vadd.f32 %v781, %v665
    %v846 = vadd.f32 %v782, %v667
    %v847 = vadd.f32 %v783, %v669
    %v848 = vadd.f32 %v784, %v671
    %v849 = vadd.f32 %v785, %v675
    %v850 = vadd.f32 %v786, %v677
    %v851 = vadd.f32 %v787, %v679
    %v852 = vadd.f32 %v788, %v681
    %v853 = vadd.f32 %v789, %v685
    %v854 = vadd.f32 %v790, %v687
    %v855 = vadd.f32 %v791, %v689
    %v856 = vadd.f32 %v792, %v691
    %v857 = vadd.f32 %v793, %v695
    %v858 = vadd.f32 %v794, %v697
    %v859 = vadd.f32 %v795, %v699
    %v860 = vadd.f32 %v796, %v701
    %v861 = vadd.f32 %v797, %v705
    %v862 = vadd.f32 %v798, %v707
    %v863 = vadd.f32 %v799, %v709
    %v864 = vadd.f32 %v800, %v711
    %v865 = vadd.f32 %v801, %v715
    %v866 = vadd.f32 %v802, %v717
    %v867 = vadd.f32 %v803, %v719
    %v868 = vadd.f32 %v804, %v721
    %v869 = vadd.f32 %v805, %v725
    %v870 = vadd.f32 %v806, %v727
    %v871 = vadd.f32 %v807, %v729
    %v872 = vadd.f32 %v808, %v731
    %v873 = vadd.f32 %v809, %v735
    %v874 = vadd.f32 %v810, %v737
    %v875 = vadd.f32 %v811, %v739
    %v876 = vadd.f32 %v812, %v741
    %v877 = vadd.f32 %v813, %v745
    %v878 = vadd.f32 %v814, %v747
    %v879 = vadd.f32 %v815, %v749
    %v880 = vadd.f32 %v816, %v751
    %v881 = vadd.f32 %v817, %v818
    %882 = vadd.xlane.f32.xlu0 %v881
    %v883 = vpop.xlane.xlu0 %882
    %v884 = vadd.f32 %v819, %v820
    %885 = vadd.xlane.f32.xlu0 %v884
    %v886 = vpop.xlane.xlu0 %885
    %v887 = vadd.f32 %v821, %v822
    %888 = vadd.xlane.f32.xlu0 %v887
    %v889 = vpop.xlane.xlu0 %888
    %v890 = vadd.f32 %v823, %v824
    %891 = vadd.xlane.f32.xlu0 %v890
    %v892 = vpop.xlane.xlu0 %891
    %v893 = vadd.f32 %v825, %v826
    %894 = vadd.xlane.f32.xlu0 %v893
    %v895 = vpop.xlane.xlu0 %894
    %v896 = vadd.f32 %v827, %v828
    %897 = vadd.xlane.f32.xlu0 %v896
    %v898 = vpop.xlane.xlu0 %897
    %v899 = vadd.f32 %v829, %v830
    %900 = vadd.xlane.f32.xlu0 %v899
    %v901 = vpop.xlane.xlu0 %900
    %v902 = vadd.f32 %v831, %v832
    %903 = vadd.xlane.f32.xlu0 %v902
    %v904 = vpop.xlane.xlu0 %903
    %v905 = vadd.f32 %v833, %v834
    %906 = vadd.xlane.f32.xlu0 %v905
    %v907 = vpop.xlane.xlu0 %906
    %v908 = vadd.f32 %v835, %v836
    %909 = vadd.xlane.f32.xlu0 %v908
    %v910 = vpop.xlane.xlu0 %909
    %v911 = vadd.f32 %v837, %v838
    %912 = vadd.xlane.f32.xlu0 %v911
    %v913 = vpop.xlane.xlu0 %912
    %v914 = vadd.f32 %v839, %v840
    %915 = vadd.xlane.f32.xlu0 %v914
    %v916 = vpop.xlane.xlu0 %915
    %v917 = vadd.f32 %v841, %v842
    %918 = vadd.xlane.f32.xlu0 %v917
    %v919 = vpop.xlane.xlu0 %918
    %v920 = vadd.f32 %v843, %v844
    %921 = vadd.xlane.f32.xlu0 %v920
    %v922 = vpop.xlane.xlu0 %921
    %v923 = vadd.f32 %v845, %v846
    %924 = vadd.xlane.f32.xlu0 %v923
    %v925 = vpop.xlane.xlu0 %924
    %v926 = vadd.f32 %v847, %v848
    %927 = vadd.xlane.f32.xlu0 %v926
    %v928 = vpop.xlane.xlu0 %927
    %v929 = vadd.f32 %v849, %v850
    %930 = vadd.xlane.f32.xlu0 %v929
    %v931 = vpop.xlane.xlu0 %930
    %v932 = vadd.f32 %v851, %v852
    %933 = vadd.xlane.f32.xlu0 %v932
    %v934 = vpop.xlane.xlu0 %933
    %v935 = vadd.f32 %v853, %v854
    %936 = vadd.xlane.f32.xlu0 %v935
    %v937 = vpop.xlane.xlu0 %936
    %v938 = vadd.f32 %v855, %v856
    %939 = vadd.xlane.f32.xlu0 %v938
    %v940 = vpop.xlane.xlu0 %939
    %v941 = vadd.f32 %v857, %v858
    %942 = vadd.xlane.f32.xlu0 %v941
    %v943 = vpop.xlane.xlu0 %942
    %v944 = vadd.f32 %v859, %v860
    %945 = vadd.xlane.f32.xlu0 %v944
    %v946 = vpop.xlane.xlu0 %945
    %v947 = vadd.f32 %v861, %v862
    %948 = vadd.xlane.f32.xlu0 %v947
    %v949 = vpop.xlane.xlu0 %948
    %v950 = vadd.f32 %v863, %v864
    %951 = vadd.xlane.f32.xlu0 %v950
    %v952 = vpop.xlane.xlu0 %951
    %v953 = vadd.f32 %v865, %v866
    %954 = vadd.xlane.f32.xlu0 %v953
    %v955 = vpop.xlane.xlu0 %954
    %v956 = vadd.f32 %v867, %v868
    %957 = vadd.xlane.f32.xlu0 %v956
    %v958 = vpop.xlane.xlu0 %957
    %v959 = vadd.f32 %v869, %v870
    %960 = vadd.xlane.f32.xlu0 %v959
    %v961 = vpop.xlane.xlu0 %960
    %v962 = vadd.f32 %v871, %v872
    %963 = vadd.xlane.f32.xlu0 %v962
    %v964 = vpop.xlane.xlu0 %963
    %v965 = vadd.f32 %v873, %v874
    %966 = vadd.xlane.f32.xlu0 %v965
    %v967 = vpop.xlane.xlu0 %966
    %v968 = vadd.f32 %v875, %v876
    %969 = vadd.xlane.f32.xlu0 %v968
    %v970 = vpop.xlane.xlu0 %969
    %v971 = vadd.f32 %v877, %v878
    %972 = vadd.xlane.f32.xlu0 %v971
    %v973 = vpop.xlane.xlu0 %972
    %v974 = vadd.f32 %v879, %v880
    %975 = vadd.xlane.f32.xlu0 %v974
    %v976 = vpop.xlane.xlu0 %975
    %v977 = vrcp.pop 256.0
    %v978 = vmul.f32 %v883, %v977
    %v979 = vmul.f32 %v886, %v977
    %v980 = vmul.f32 %v889, %v977
    %v981 = vmul.f32 %v892, %v977
    %v982 = vmul.f32 %v895, %v977
    %v983 = vmul.f32 %v898, %v977
    %v984 = vmul.f32 %v901, %v977
    %v985 = vmul.f32 %v904, %v977
    %v986 = vmul.f32 %v907, %v977
    %v987 = vmul.f32 %v910, %v977
    %v988 = vmul.f32 %v913, %v977
    %v989 = vmul.f32 %v916, %v977
    %v990 = vmul.f32 %v919, %v977
    %v991 = vmul.f32 %v922, %v977
    %v992 = vmul.f32 %v925, %v977
    %v993 = vmul.f32 %v928, %v977
    %v994 = vmul.f32 %v931, %v977
    %v995 = vmul.f32 %v934, %v977
    %v996 = vmul.f32 %v937, %v977
    %v997 = vmul.f32 %v940, %v977
    %v998 = vmul.f32 %v943, %v977
    %v999 = vmul.f32 %v946, %v977
    %v1000 = vmul.f32 %v949, %v977
    %v1001 = vmul.f32 %v952, %v977
    %v1002 = vmul.f32 %v955, %v977
    %v1003 = vmul.f32 %v958, %v977
    %v1004 = vmul.f32 %v961, %v977
    %v1005 = vmul.f32 %v964, %v977
    %v1006 = vmul.f32 %v967, %v977
    %v1007 = vmul.f32 %v970, %v977
    %v1008 = vmul.f32 %v973, %v977
    %v1009 = vmul.f32 %v976, %v977
    %v1010 = vsub.f32 %v817, %v978
    %v1011 = vsub.f32 %v818, %v978
    %v1012 = vsub.f32 %v819, %v979
    %v1013 = vsub.f32 %v820, %v979
    %v1014 = vsub.f32 %v821, %v980
    %v1015 = vsub.f32 %v822, %v980
    %v1016 = vsub.f32 %v823, %v981
    %v1017 = vsub.f32 %v824, %v981
    %v1018 = vsub.f32 %v825, %v982
    %v1019 = vsub.f32 %v826, %v982
    %v1020 = vsub.f32 %v827, %v983
    %v1021 = vsub.f32 %v828, %v983
    %v1022 = vsub.f32 %v829, %v984
    %v1023 = vsub.f32 %v830, %v984
    %v1024 = vsub.f32 %v831, %v985
    %v1025 = vsub.f32 %v832, %v985
    %v1026 = vsub.f32 %v833, %v986
    %v1027 = vsub.f32 %v834, %v986
    %v1028 = vsub.f32 %v835, %v987
    %v1029 = vsub.f32 %v836, %v987
    %v1030 = vsub.f32 %v837, %v988
    %v1031 = vsub.f32 %v838, %v988
    %v1032 = vsub.f32 %v839, %v989
    %v1033 = vsub.f32 %v840, %v989
    %v1034 = vsub.f32 %v841, %v990
    %v1035 = vsub.f32 %v842, %v990
    %v1036 = vsub.f32 %v843, %v991
    %v1037 = vsub.f32 %v844, %v991
    %v1038 = vsub.f32 %v845, %v992
    %v1039 = vsub.f32 %v846, %v992
    %v1040 = vsub.f32 %v847, %v993
    %v1041 = vsub.f32 %v848, %v993
    %v1042 = vsub.f32 %v849, %v994
    %v1043 = vsub.f32 %v850, %v994
    %v1044 = vsub.f32 %v851, %v995
    %v1045 = vsub.f32 %v852, %v995
    %v1046 = vsub.f32 %v853, %v996
    %v1047 = vsub.f32 %v854, %v996
    %v1048 = vsub.f32 %v855, %v997
    %v1049 = vsub.f32 %v856, %v997
    %v1050 = vsub.f32 %v857, %v998
    %v1051 = vsub.f32 %v858, %v998
    %v1052 = vsub.f32 %v859, %v999
    %v1053 = vsub.f32 %v860, %v999
    %v1054 = vsub.f32 %v861, %v1000
    %v1055 = vsub.f32 %v862, %v1000
    %v1056 = vsub.f32 %v863, %v1001
    %v1057 = vsub.f32 %v864, %v1001
    %v1058 = vsub.f32 %v865, %v1002
    %v1059 = vsub.f32 %v866, %v1002
    %v1060 = vsub.f32 %v867, %v1003
    %v1061 = vsub.f32 %v868, %v1003
    %v1062 = vsub.f32 %v869, %v1004
    %v1063 = vsub.f32 %v870, %v1004
    %v1064 = vsub.f32 %v871, %v1005
    %v1065 = vsub.f32 %v872, %v1005
    %v1066 = vsub.f32 %v873, %v1006
    %v1067 = vsub.f32 %v874, %v1006
    %v1068 = vsub.f32 %v875, %v1007
    %v1069 = vsub.f32 %v876, %v1007
    %v1070 = vsub.f32 %v877, %v1008
    %v1071 = vsub.f32 %v878, %v1008
    %v1072 = vsub.f32 %v879, %v1009
    %v1073 = vsub.f32 %v880, %v1009
    %v1074 = vmul.f32 %v1010, %v1010
    %v1075 = vmul.f32 %v1011, %v1011
    %v1076 = vmul.f32 %v1012, %v1012
    %v1077 = vmul.f32 %v1013, %v1013
    %v1078 = vmul.f32 %v1014, %v1014
    %v1079 = vmul.f32 %v1015, %v1015
    %v1080 = vmul.f32 %v1016, %v1016
    %v1081 = vmul.f32 %v1017, %v1017
    %v1082 = vmul.f32 %v1018, %v1018
    %v1083 = vmul.f32 %v1019, %v1019
    %v1084 = vmul.f32 %v1020, %v1020
    %v1085 = vmul.f32 %v1021, %v1021
    %v1086 = vmul.f32 %v1022, %v1022
    %v1087 = vmul.f32 %v1023, %v1023
    %v1088 = vmul.f32 %v1024, %v1024
    %v1089 = vmul.f32 %v1025, %v1025
    %v1090 = vmul.f32 %v1026, %v1026
    %v1091 = vmul.f32 %v1027, %v1027
    %v1092 = vmul.f32 %v1028, %v1028
    %v1093 = vmul.f32 %v1029, %v1029
    %v1094 = vmul.f32 %v1030, %v1030
    %v1095 = vmul.f32 %v1031, %v1031
    %v1096 = vmul.f32 %v1032, %v1032
    %v1097 = vmul.f32 %v1033, %v1033
    %v1098 = vmul.f32 %v1034, %v1034
    %v1099 = vmul.f32 %v1035, %v1035
    %v1100 = vmul.f32 %v1036, %v1036
    %v1101 = vmul.f32 %v1037, %v1037
    %v1102 = vmul.f32 %v1038, %v1038
    %v1103 = vmul.f32 %v1039, %v1039
    %v1104 = vmul.f32 %v1040, %v1040
    %v1105 = vmul.f32 %v1041, %v1041
    %v1106 = vmul.f32 %v1042, %v1042
    %v1107 = vmul.f32 %v1043, %v1043
    %v1108 = vmul.f32 %v1044, %v1044
    %v1109 = vmul.f32 %v1045, %v1045
    %v1110 = vmul.f32 %v1046, %v1046
    %v1111 = vmul.f32 %v1047, %v1047
    %v1112 = vmul.f32 %v1048, %v1048
    %v1113 = vmul.f32 %v1049, %v1049
    %v1114 = vmul.f32 %v1050, %v1050
    %v1115 = vmul.f32 %v1051, %v1051
    %v1116 = vmul.f32 %v1052, %v1052
    %v1117 = vmul.f32 %v1053, %v1053
    %v1118 = vmul.f32 %v1054, %v1054
    %v1119 = vmul.f32 %v1055, %v1055
    %v1120 = vmul.f32 %v1056, %v1056
    %v1121 = vmul.f32 %v1057, %v1057
    %v1122 = vmul.f32 %v1058, %v1058
    %v1123 = vmul.f32 %v1059, %v1059
    %v1124 = vmul.f32 %v1060, %v1060
    %v1125 = vmul.f32 %v1061, %v1061
    %v1126 = vmul.f32 %v1062, %v1062
    %v1127 = vmul.f32 %v1063, %v1063
    %v1128 = vmul.f32 %v1064, %v1064
    %v1129 = vmul.f32 %v1065, %v1065
    %v1130 = vmul.f32 %v1066, %v1066
    %v1131 = vmul.f32 %v1067, %v1067
    %v1132 = vmul.f32 %v1068, %v1068
    %v1133 = vmul.f32 %v1069, %v1069
    %v1134 = vmul.f32 %v1070, %v1070
    %v1135 = vmul.f32 %v1071, %v1071
    %v1136 = vmul.f32 %v1072, %v1072
    %v1137 = vmul.f32 %v1073, %v1073
    %v1138 = vadd.f32 %v1074, %v1075
    %1139 = vadd.xlane.f32.xlu0 %v1138
    %v1140 = vpop.xlane.xlu0 %1139
    %v1141 = vadd.f32 %v1076, %v1077
    %1142 = vadd.xlane.f32.xlu0 %v1141
    %v1143 = vpop.xlane.xlu0 %1142
    %v1144 = vadd.f32 %v1078, %v1079
    %1145 = vadd.xlane.f32.xlu0 %v1144
    %v1146 = vpop.xlane.xlu0 %1145
    %v1147 = vadd.f32 %v1080, %v1081
    %1148 = vadd.xlane.f32.xlu0 %v1147
    %v1149 = vpop.xlane.xlu0 %1148
    %v1150 = vadd.f32 %v1082, %v1083
    %1151 = vadd.xlane.f32.xlu0 %v1150
    %v1152 = vpop.xlane.xlu0 %1151
    %v1153 = vadd.f32 %v1084, %v1085
    %1154 = vadd.xlane.f32.xlu0 %v1153
    %v1155 = vpop.xlane.xlu0 %1154
    %v1156 = vadd.f32 %v1086, %v1087
    %1157 = vadd.xlane.f32.xlu0 %v1156
    %v1158 = vpop.xlane.xlu0 %1157
    %v1159 = vadd.f32 %v1088, %v1089
    %1160 = vadd.xlane.f32.xlu0 %v1159
    %v1161 = vpop.xlane.xlu0 %1160
    %v1162 = vadd.f32 %v1090, %v1091
    %1163 = vadd.xlane.f32.xlu0 %v1162
    %v1164 = vpop.xlane.xlu0 %1163
    %v1165 = vadd.f32 %v1092, %v1093
    %1166 = vadd.xlane.f32.xlu0 %v1165
    %v1167 = vpop.xlane.xlu0 %1166
    %v1168 = vadd.f32 %v1094, %v1095
    %1169 = vadd.xlane.f32.xlu0 %v1168
    %v1170 = vpop.xlane.xlu0 %1169
    %v1171 = vadd.f32 %v1096, %v1097
    %1172 = vadd.xlane.f32.xlu0 %v1171
    %v1173 = vpop.xlane.xlu0 %1172
    %v1174 = vadd.f32 %v1098, %v1099
    %1175 = vadd.xlane.f32.xlu0 %v1174
    %v1176 = vpop.xlane.xlu0 %1175
    %v1177 = vadd.f32 %v1100, %v1101
    %1178 = vadd.xlane.f32.xlu0 %v1177
    %v1179 = vpop.xlane.xlu0 %1178
    %v1180 = vadd.f32 %v1102, %v1103
    %1181 = vadd.xlane.f32.xlu0 %v1180
    %v1182 = vpop.xlane.xlu0 %1181
    %v1183 = vadd.f32 %v1104, %v1105
    %1184 = vadd.xlane.f32.xlu0 %v1183
    %v1185 = vpop.xlane.xlu0 %1184
    %v1186 = vadd.f32 %v1106, %v1107
    %1187 = vadd.xlane.f32.xlu0 %v1186
    %v1188 = vpop.xlane.xlu0 %1187
    %v1189 = vadd.f32 %v1108, %v1109
    %1190 = vadd.xlane.f32.xlu0 %v1189
    %v1191 = vpop.xlane.xlu0 %1190
    %v1192 = vadd.f32 %v1110, %v1111
    %1193 = vadd.xlane.f32.xlu0 %v1192
    %v1194 = vpop.xlane.xlu0 %1193
    %v1195 = vadd.f32 %v1112, %v1113
    %1196 = vadd.xlane.f32.xlu0 %v1195
    %v1197 = vpop.xlane.xlu0 %1196
    %v1198 = vadd.f32 %v1114, %v1115
    %1199 = vadd.xlane.f32.xlu0 %v1198
    %v1200 = vpop.xlane.xlu0 %1199
    %v1201 = vadd.f32 %v1116, %v1117
    %1202 = vadd.xlane.f32.xlu0 %v1201
    %v1203 = vpop.xlane.xlu0 %1202
    %v1204 = vadd.f32 %v1118, %v1119
    %1205 = vadd.xlane.f32.xlu0 %v1204
    %v1206 = vpop.xlane.xlu0 %1205
    %v1207 = vadd.f32 %v1120, %v1121
    %1208 = vadd.xlane.f32.xlu0 %v1207
    %v1209 = vpop.xlane.xlu0 %1208
    %v1210 = vadd.f32 %v1122, %v1123
    %1211 = vadd.xlane.f32.xlu0 %v1210
    %v1212 = vpop.xlane.xlu0 %1211
    %v1213 = vadd.f32 %v1124, %v1125
    %1214 = vadd.xlane.f32.xlu0 %v1213
    %v1215 = vpop.xlane.xlu0 %1214
    %v1216 = vadd.f32 %v1126, %v1127
    %1217 = vadd.xlane.f32.xlu0 %v1216
    %v1218 = vpop.xlane.xlu0 %1217
    %v1219 = vadd.f32 %v1128, %v1129
    %1220 = vadd.xlane.f32.xlu0 %v1219
    %v1221 = vpop.xlane.xlu0 %1220
    %v1222 = vadd.f32 %v1130, %v1131
    %1223 = vadd.xlane.f32.xlu0 %v1222
    %v1224 = vpop.xlane.xlu0 %1223
    %v1225 = vadd.f32 %v1132, %v1133
    %1226 = vadd.xlane.f32.xlu0 %v1225
    %v1227 = vpop.xlane.xlu0 %1226
    %v1228 = vadd.f32 %v1134, %v1135
    %1229 = vadd.xlane.f32.xlu0 %v1228
    %v1230 = vpop.xlane.xlu0 %1229
    %v1231 = vadd.f32 %v1136, %v1137
    %1232 = vadd.xlane.f32.xlu0 %v1231
    %v1233 = vpop.xlane.xlu0 %1232
    %v1234 = vmul.f32 %v1140, %v977
    %v1235 = vmul.f32 %v1143, %v977
    %v1236 = vmul.f32 %v1146, %v977
    %v1237 = vmul.f32 %v1149, %v977
    %v1238 = vmul.f32 %v1152, %v977
    %v1239 = vmul.f32 %v1155, %v977
    %v1240 = vmul.f32 %v1158, %v977
    %v1241 = vmul.f32 %v1161, %v977
    %v1242 = vmul.f32 %v1164, %v977
    %v1243 = vmul.f32 %v1167, %v977
    %v1244 = vmul.f32 %v1170, %v977
    %v1245 = vmul.f32 %v1173, %v977
    %v1246 = vmul.f32 %v1176, %v977
    %v1247 = vmul.f32 %v1179, %v977
    %v1248 = vmul.f32 %v1182, %v977
    %v1249 = vmul.f32 %v1185, %v977
    %v1250 = vmul.f32 %v1188, %v977
    %v1251 = vmul.f32 %v1191, %v977
    %v1252 = vmul.f32 %v1194, %v977
    %v1253 = vmul.f32 %v1197, %v977
    %v1254 = vmul.f32 %v1200, %v977
    %v1255 = vmul.f32 %v1203, %v977
    %v1256 = vmul.f32 %v1206, %v977
    %v1257 = vmul.f32 %v1209, %v977
    %v1258 = vmul.f32 %v1212, %v977
    %v1259 = vmul.f32 %v1215, %v977
    %v1260 = vmul.f32 %v1218, %v977
    %v1261 = vmul.f32 %v1221, %v977
    %v1262 = vmul.f32 %v1224, %v977
    %v1263 = vmul.f32 %v1227, %v977
    %v1264 = vmul.f32 %v1230, %v977
    %v1265 = vmul.f32 %v1233, %v977
    %v1266 = vadd.f32 %v1234, 1e-05
    %v1267 = vadd.f32 %v1235, 1e-05
    %v1268 = vadd.f32 %v1236, 1e-05
    %v1269 = vadd.f32 %v1237, 1e-05
    %v1270 = vadd.f32 %v1238, 1e-05
    %v1271 = vadd.f32 %v1239, 1e-05
    %v1272 = vadd.f32 %v1240, 1e-05
    %v1273 = vadd.f32 %v1241, 1e-05
    %v1274 = vadd.f32 %v1242, 1e-05
    %v1275 = vadd.f32 %v1243, 1e-05
    %v1276 = vadd.f32 %v1244, 1e-05
    %v1277 = vadd.f32 %v1245, 1e-05
    %v1278 = vadd.f32 %v1246, 1e-05
    %v1279 = vadd.f32 %v1247, 1e-05
    %v1280 = vadd.f32 %v1248, 1e-05
    %v1281 = vadd.f32 %v1249, 1e-05
    %v1282 = vadd.f32 %v1250, 1e-05
    %v1283 = vadd.f32 %v1251, 1e-05
    %v1284 = vadd.f32 %v1252, 1e-05
    %v1285 = vadd.f32 %v1253, 1e-05
    %v1286 = vadd.f32 %v1254, 1e-05
    %v1287 = vadd.f32 %v1255, 1e-05
    %v1288 = vadd.f32 %v1256, 1e-05
    %v1289 = vadd.f32 %v1257, 1e-05
    %v1290 = vadd.f32 %v1258, 1e-05
    %v1291 = vadd.f32 %v1259, 1e-05
    %v1292 = vadd.f32 %v1260, 1e-05
    %v1293 = vadd.f32 %v1261, 1e-05
    %v1294 = vadd.f32 %v1262, 1e-05
    %v1295 = vadd.f32 %v1263, 1e-05
    %v1296 = vadd.f32 %v1264, 1e-05
    %v1297 = vadd.f32 %v1265, 1e-05
    %v1298 = vrsqrt.pop %v1266
    %v1299 = vrsqrt.pop %v1267
    %v1300 = vrsqrt.pop %v1268
    %v1301 = vrsqrt.pop %v1269
    %v1302 = vrsqrt.pop %v1270
    %v1303 = vrsqrt.pop %v1271
    %v1304 = vrsqrt.pop %v1272
    %v1305 = vrsqrt.pop %v1273
    %v1306 = vrsqrt.pop %v1274
    %v1307 = vrsqrt.pop %v1275
    %v1308 = vrsqrt.pop %v1276
    %v1309 = vrsqrt.pop %v1277
    %v1310 = vrsqrt.pop %v1278
    %v1311 = vrsqrt.pop %v1279
    %v1312 = vrsqrt.pop %v1280
    %v1313 = vrsqrt.pop %v1281
    %v1314 = vrsqrt.pop %v1282
    %v1315 = vrsqrt.pop %v1283
    %v1316 = vrsqrt.pop %v1284
    %v1317 = vrsqrt.pop %v1285
    %v1318 = vrsqrt.pop %v1286
    %v1319 = vrsqrt.pop %v1287
    %v1320 = vrsqrt.pop %v1288
    %v1321 = vrsqrt.pop %v1289
    %v1322 = vrsqrt.pop %v1290
    %v1323 = vrsqrt.pop %v1291
    %v1324 = vrsqrt.pop %v1292
    %v1325 = vrsqrt.pop %v1293
    %v1326 = vrsqrt.pop %v1294
    %v1327 = vrsqrt.pop %v1295
    %v1328 = vrsqrt.pop %v1296
    %v1329 = vrsqrt.pop %v1297
    %v1330 = vmul.f32 %v1010, %v1298
    %v1331 = vmul.f32 %v1011, %v1298
    %v1332 = vmul.f32 %v1012, %v1299
    %v1333 = vmul.f32 %v1013, %v1299
    %v1334 = vmul.f32 %v1014, %v1300
    %v1335 = vmul.f32 %v1015, %v1300
    %v1336 = vmul.f32 %v1016, %v1301
    %v1337 = vmul.f32 %v1017, %v1301
    %v1338 = vmul.f32 %v1018, %v1302
    %v1339 = vmul.f32 %v1019, %v1302
    %v1340 = vmul.f32 %v1020, %v1303
    %v1341 = vmul.f32 %v1021, %v1303
    %v1342 = vmul.f32 %v1022, %v1304
    %v1343 = vmul.f32 %v1023, %v1304
    %v1344 = vmul.f32 %v1024, %v1305
    %v1345 = vmul.f32 %v1025, %v1305
    %v1346 = vmul.f32 %v1026, %v1306
    %v1347 = vmul.f32 %v1027, %v1306
    %v1348 = vmul.f32 %v1028, %v1307
    %v1349 = vmul.f32 %v1029, %v1307
    %v1350 = vmul.f32 %v1030, %v1308
    %v1351 = vmul.f32 %v1031, %v1308
    %v1352 = vmul.f32 %v1032, %v1309
    %v1353 = vmul.f32 %v1033, %v1309
    %v1354 = vmul.f32 %v1034, %v1310
    %v1355 = vmul.f32 %v1035, %v1310
    %v1356 = vmul.f32 %v1036, %v1311
    %v1357 = vmul.f32 %v1037, %v1311
    %v1358 = vmul.f32 %v1038, %v1312
    %v1359 = vmul.f32 %v1039, %v1312
    %v1360 = vmul.f32 %v1040, %v1313
    %v1361 = vmul.f32 %v1041, %v1313
    %v1362 = vmul.f32 %v1042, %v1314
    %v1363 = vmul.f32 %v1043, %v1314
    %v1364 = vmul.f32 %v1044, %v1315
    %v1365 = vmul.f32 %v1045, %v1315
    %v1366 = vmul.f32 %v1046, %v1316
    %v1367 = vmul.f32 %v1047, %v1316
    %v1368 = vmul.f32 %v1048, %v1317
    %v1369 = vmul.f32 %v1049, %v1317
    %v1370 = vmul.f32 %v1050, %v1318
    %v1371 = vmul.f32 %v1051, %v1318
    %v1372 = vmul.f32 %v1052, %v1319
    %v1373 = vmul.f32 %v1053, %v1319
    %v1374 = vmul.f32 %v1054, %v1320
    %v1375 = vmul.f32 %v1055, %v1320
    %v1376 = vmul.f32 %v1056, %v1321
    %v1377 = vmul.f32 %v1057, %v1321
    %v1378 = vmul.f32 %v1058, %v1322
    %v1379 = vmul.f32 %v1059, %v1322
    %v1380 = vmul.f32 %v1060, %v1323
    %v1381 = vmul.f32 %v1061, %v1323
    %v1382 = vmul.f32 %v1062, %v1324
    %v1383 = vmul.f32 %v1063, %v1324
    %v1384 = vmul.f32 %v1064, %v1325
    %v1385 = vmul.f32 %v1065, %v1325
    %v1386 = vmul.f32 %v1066, %v1326
    %v1387 = vmul.f32 %v1067, %v1326
    %v1388 = vmul.f32 %v1068, %v1327
    %v1389 = vmul.f32 %v1069, %v1327
    %v1390 = vmul.f32 %v1070, %v1328
    %v1391 = vmul.f32 %v1071, %v1328
    %v1392 = vmul.f32 %v1072, %v1329
    %v1393 = vmul.f32 %v1073, %v1329
    %v1394 = vld [vmem:[#allocation8] sm:$0x3]
    %v1396 = vlaneseq
    %v1397 = vshrl.u32 %v1396, 7
    %v1398 = vsub.s32 0, %v1397
    %v1399 = vrot.slane %v1394, %v1398
    %v1400 = vlaneseq
    %v1401 = vshrl.u32 %v1400, 7
    %v1402 = vsub.s32 1, %v1401
    %v1403 = vrot.slane %v1394, %v1402
    %v1406 = vmul.f32 %v1330, %v1399
    %v1407 = vmul.f32 %v1331, %v1403
    %v1408 = vmul.f32 %v1332, %v1399
    %v1409 = vmul.f32 %v1333, %v1403
    %v1410 = vmul.f32 %v1334, %v1399
    %v1411 = vmul.f32 %v1335, %v1403
    %v1412 = vmul.f32 %v1336, %v1399
    %v1413 = vmul.f32 %v1337, %v1403
    %v1414 = vmul.f32 %v1338, %v1399
    %v1415 = vmul.f32 %v1339, %v1403
    %v1416 = vmul.f32 %v1340, %v1399
    %v1417 = vmul.f32 %v1341, %v1403
    %v1418 = vmul.f32 %v1342, %v1399
    %v1419 = vmul.f32 %v1343, %v1403
    %v1420 = vmul.f32 %v1344, %v1399
    %v1421 = vmul.f32 %v1345, %v1403
    %v1422 = vmul.f32 %v1346, %v1399
    %v1423 = vmul.f32 %v1347, %v1403
    %v1424 = vmul.f32 %v1348, %v1399
    %v1425 = vmul.f32 %v1349, %v1403
    %v1426 = vmul.f32 %v1350, %v1399
    %v1427 = vmul.f32 %v1351, %v1403
    %v1428 = vmul.f32 %v1352, %v1399
    %v1429 = vmul.f32 %v1353, %v1403
    %v1430 = vmul.f32 %v1354, %v1399
    %v1431 = vmul.f32 %v1355, %v1403
    %v1432 = vmul.f32 %v1356, %v1399
    %v1433 = vmul.f32 %v1357, %v1403
    %v1434 = vmul.f32 %v1358, %v1399
    %v1435 = vmul.f32 %v1359, %v1403
    %v1436 = vmul.f32 %v1360, %v1399
    %v1437 = vmul.f32 %v1361, %v1403
    %v1438 = vmul.f32 %v1362, %v1399
    %v1439 = vmul.f32 %v1363, %v1403
    %v1440 = vmul.f32 %v1364, %v1399
    %v1441 = vmul.f32 %v1365, %v1403
    %v1442 = vmul.f32 %v1366, %v1399
    %v1443 = vmul.f32 %v1367, %v1403
    %v1444 = vmul.f32 %v1368, %v1399
    %v1445 = vmul.f32 %v1369, %v1403
    %v1446 = vmul.f32 %v1370, %v1399
    %v1447 = vmul.f32 %v1371, %v1403
    %v1448 = vmul.f32 %v1372, %v1399
    %v1449 = vmul.f32 %v1373, %v1403
    %v1450 = vmul.f32 %v1374, %v1399
    %v1451 = vmul.f32 %v1375, %v1403
    %v1452 = vmul.f32 %v1376, %v1399
    %v1453 = vmul.f32 %v1377, %v1403
    %v1454 = vmul.f32 %v1378, %v1399
    %v1455 = vmul.f32 %v1379, %v1403
    %v1456 = vmul.f32 %v1380, %v1399
    %v1457 = vmul.f32 %v1381, %v1403
    %v1458 = vmul.f32 %v1382, %v1399
    %v1459 = vmul.f32 %v1383, %v1403
    %v1460 = vmul.f32 %v1384, %v1399
    %v1461 = vmul.f32 %v1385, %v1403
    %v1462 = vmul.f32 %v1386, %v1399
    %v1463 = vmul.f32 %v1387, %v1403
    %v1464 = vmul.f32 %v1388, %v1399
    %v1465 = vmul.f32 %v1389, %v1403
    %v1466 = vmul.f32 %v1390, %v1399
    %v1467 = vmul.f32 %v1391, %v1403
    %v1468 = vmul.f32 %v1392, %v1399
    %v1469 = vmul.f32 %v1393, %v1403
    %v1470 = vld [vmem:[#allocation10] sm:$0x3]
    %v1472 = vlaneseq
    %v1473 = vshrl.u32 %v1472, 7
    %v1474 = vsub.s32 0, %v1473
    %v1475 = vrot.slane %v1470, %v1474
    %v1476 = vlaneseq
    %v1477 = vshrl.u32 %v1476, 7
    %v1478 = vsub.s32 1, %v1477
    %v1479 = vrot.slane %v1470, %v1478
    %v1482 = vadd.f32 %v1406, %v1475
    %v1483 = vadd.f32 %v1407, %v1479
    %v1484 = vadd.f32 %v1408, %v1475
    %v1485 = vadd.f32 %v1409, %v1479
    %v1486 = vadd.f32 %v1410, %v1475
    %v1487 = vadd.f32 %v1411, %v1479
    %v1488 = vadd.f32 %v1412, %v1475
    %v1489 = vadd.f32 %v1413, %v1479
    %v1490 = vadd.f32 %v1414, %v1475
    %v1491 = vadd.f32 %v1415, %v1479
    %v1492 = vadd.f32 %v1416, %v1475
    %v1493 = vadd.f32 %v1417, %v1479
    %v1494 = vadd.f32 %v1418, %v1475
    %v1495 = vadd.f32 %v1419, %v1479
    %v1496 = vadd.f32 %v1420, %v1475
    %v1497 = vadd.f32 %v1421, %v1479
    %v1498 = vadd.f32 %v1422, %v1475
    %v1499 = vadd.f32 %v1423, %v1479
    %v1500 = vadd.f32 %v1424, %v1475
    %v1501 = vadd.f32 %v1425, %v1479
    %v1502 = vadd.f32 %v1426, %v1475
    %v1503 = vadd.f32 %v1427, %v1479
    %v1504 = vadd.f32 %v1428, %v1475
    %v1505 = vadd.f32 %v1429, %v1479
    %v1506 = vadd.f32 %v1430, %v1475
    %v1507 = vadd.f32 %v1431, %v1479
    %v1508 = vadd.f32 %v1432, %v1475
    %v1509 = vadd.f32 %v1433, %v1479
    %v1510 = vadd.f32 %v1434, %v1475
    %v1511 = vadd.f32 %v1435, %v1479
    %v1512 = vadd.f32 %v1436, %v1475
    %v1513 = vadd.f32 %v1437, %v1479
    %v1514 = vadd.f32 %v1438, %v1475
    %v1515 = vadd.f32 %v1439, %v1479
    %v1516 = vadd.f32 %v1440, %v1475
    %v1517 = vadd.f32 %v1441, %v1479
    %v1518 = vadd.f32 %v1442, %v1475
    %v1519 = vadd.f32 %v1443, %v1479
    %v1520 = vadd.f32 %v1444, %v1475
    %v1521 = vadd.f32 %v1445, %v1479
    %v1522 = vadd.f32 %v1446, %v1475
    %v1523 = vadd.f32 %v1447, %v1479
    %v1524 = vadd.f32 %v1448, %v1475
    %v1525 = vadd.f32 %v1449, %v1479
    %v1526 = vadd.f32 %v1450, %v1475
    %v1527 = vadd.f32 %v1451, %v1479
    %v1528 = vadd.f32 %v1452, %v1475
    %v1529 = vadd.f32 %v1453, %v1479
    %v1530 = vadd.f32 %v1454, %v1475
    %v1531 = vadd.f32 %v1455, %v1479
    %v1532 = vadd.f32 %v1456, %v1475
    %v1533 = vadd.f32 %v1457, %v1479
    %v1534 = vadd.f32 %v1458, %v1475
    %v1535 = vadd.f32 %v1459, %v1479
    %v1536 = vadd.f32 %v1460, %v1475
    %v1537 = vadd.f32 %v1461, %v1479
    %v1538 = vadd.f32 %v1462, %v1475
    %v1539 = vadd.f32 %v1463, %v1479
    %v1540 = vadd.f32 %v1464, %v1475
    %v1541 = vadd.f32 %v1465, %v1479
    %v1542 = vadd.f32 %v1466, %v1475
    %v1543 = vadd.f32 %v1467, %v1479
    %v1544 = vadd.f32 %v1468, %v1475
    %v1545 = vadd.f32 %v1469, %v1479
    %v1546 = vpack.c.bf16 %v1484, %v1482
    %v1547 = vpack.c.bf16 %v1485, %v1483
    %v1548 = vpack.c.bf16 %v1488, %v1486
    %v1549 = vpack.c.bf16 %v1489, %v1487
    %v1550 = vpack.c.bf16 %v1492, %v1490
    %v1551 = vpack.c.bf16 %v1493, %v1491
    %v1552 = vpack.c.bf16 %v1496, %v1494
    %v1553 = vpack.c.bf16 %v1497, %v1495
    %v1554 = vpack.c.bf16 %v1500, %v1498
    %v1555 = vpack.c.bf16 %v1501, %v1499
    %v1556 = vpack.c.bf16 %v1504, %v1502
    %v1557 = vpack.c.bf16 %v1505, %v1503
    %v1558 = vpack.c.bf16 %v1508, %v1506
    %v1559 = vpack.c.bf16 %v1509, %v1507
    %v1560 = vpack.c.bf16 %v1512, %v1510
    %v1561 = vpack.c.bf16 %v1513, %v1511
    %v1562 = vpack.c.bf16 %v1516, %v1514
    %v1563 = vpack.c.bf16 %v1517, %v1515
    %v1564 = vpack.c.bf16 %v1520, %v1518
    %v1565 = vpack.c.bf16 %v1521, %v1519
    %v1566 = vpack.c.bf16 %v1524, %v1522
    %v1567 = vpack.c.bf16 %v1525, %v1523
    %v1568 = vpack.c.bf16 %v1528, %v1526
    %v1569 = vpack.c.bf16 %v1529, %v1527
    %v1570 = vpack.c.bf16 %v1532, %v1530
    %v1571 = vpack.c.bf16 %v1533, %v1531
    %v1572 = vpack.c.bf16 %v1536, %v1534
    %v1573 = vpack.c.bf16 %v1537, %v1535
    %v1574 = vpack.c.bf16 %v1540, %v1538
    %v1575 = vpack.c.bf16 %v1541, %v1539
    %v1576 = vpack.c.bf16 %v1544, %v1542
    %v1577 = vpack.c.bf16 %v1545, %v1543
    %v1578 = vld [vmem:[#allocation11] sm:$0xff]
    %v1579 = vld [vmem:[#allocation11 + $0x8] sm:$0xff]
    %v1580 = vld [vmem:[#allocation11 + $0x10] sm:$0xff]
    %v1581 = vld [vmem:[#allocation11 + $0x18] sm:$0xff]
    %v1582 = vld [vmem:[#allocation11 + $0x20] sm:$0xff]
    %v1583 = vld [vmem:[#allocation11 + $0x28] sm:$0xff]
    %v1584 = vld [vmem:[#allocation11 + $0x30] sm:$0xff]
    %v1585 = vld [vmem:[#allocation11 + $0x38] sm:$0xff]
    %v1586 = vld [vmem:[#allocation11 + $0x40] sm:$0xff]
    %v1587 = vld [vmem:[#allocation11 + $0x48] sm:$0xff]
    %v1588 = vld [vmem:[#allocation11 + $0x50] sm:$0xff]
    %v1589 = vld [vmem:[#allocation11 + $0x58] sm:$0xff]
    %v1590 = vld [vmem:[#allocation11 + $0x60] sm:$0xff]
    %v1591 = vld [vmem:[#allocation11 + $0x68] sm:$0xff]
    %v1592 = vld [vmem:[#allocation11 + $0x70] sm:$0xff]
    %v1593 = vld [vmem:[#allocation11 + $0x78] sm:$0xff]
    %v1594 = vld [vmem:[#allocation11 + $0x80] sm:$0xff]
    %v1595 = vld [vmem:[#allocation11 + $0x88] sm:$0xff]
    %v1596 = vld [vmem:[#allocation11 + $0x90] sm:$0xff]
    %v1597 = vld [vmem:[#allocation11 + $0x98] sm:$0xff]
    %v1598 = vld [vmem:[#allocation11 + $0xa0] sm:$0xff]
    %v1599 = vld [vmem:[#allocation11 + $0xa8] sm:$0xff]
    %v1600 = vld [vmem:[#allocation11 + $0xb0] sm:$0xff]
    %v1601 = vld [vmem:[#allocation11 + $0xb8] sm:$0xff]
    %v1602 = vld [vmem:[#allocation11 + $0xc0] sm:$0xff]
    %v1603 = vld [vmem:[#allocation11 + $0xc8] sm:$0xff]
    %v1604 = vld [vmem:[#allocation11 + $0xd0] sm:$0xff]
    %v1605 = vld [vmem:[#allocation11 + $0xd8] sm:$0xff]
    %v1606 = vld [vmem:[#allocation11 + $0xe0] sm:$0xff]
    %v1607 = vld [vmem:[#allocation11 + $0xe8] sm:$0xff]
    %v1608 = vld [vmem:[#allocation11 + $0xf0] sm:$0xff]
    %v1609 = vld [vmem:[#allocation11 + $0xf8] sm:$0xff]
    %v1610 = vld [vmem:[#allocation11 + $0x100] sm:$0xff]
    %v1611 = vld [vmem:[#allocation11 + $0x108] sm:$0xff]
    %v1612 = vld [vmem:[#allocation11 + $0x110] sm:$0xff]
    %v1613 = vld [vmem:[#allocation11 + $0x118] sm:$0xff]
    %v1614 = vld [vmem:[#allocation11 + $0x120] sm:$0xff]
    %v1615 = vld [vmem:[#allocation11 + $0x128] sm:$0xff]
    %v1616 = vld [vmem:[#allocation11 + $0x130] sm:$0xff]
    %v1617 = vld [vmem:[#allocation11 + $0x138] sm:$0xff]
    %v1618 = vld [vmem:[#allocation11 + $0x140] sm:$0xff]
    %v1619 = vld [vmem:[#allocation11 + $0x148] sm:$0xff]
    %v1620 = vld [vmem:[#allocation11 + $0x150] sm:$0xff]
    %v1621 = vld [vmem:[#allocation11 + $0x158] sm:$0xff]
    %v1622 = vld [vmem:[#allocation11 + $0x160] sm:$0xff]
    %v1623 = vld [vmem:[#allocation11 + $0x168] sm:$0xff]
    %v1624 = vld [vmem:[#allocation11 + $0x170] sm:$0xff]
    %v1625 = vld [vmem:[#allocation11 + $0x178] sm:$0xff]
    %v1626 = vld [vmem:[#allocation11 + $0x180] sm:$0xff]
    %v1627 = vld [vmem:[#allocation11 + $0x188] sm:$0xff]
    %v1628 = vld [vmem:[#allocation11 + $0x190] sm:$0xff]
    %v1629 = vld [vmem:[#allocation11 + $0x198] sm:$0xff]
    %v1630 = vld [vmem:[#allocation11 + $0x1a0] sm:$0xff]
    %v1631 = vld [vmem:[#allocation11 + $0x1a8] sm:$0xff]
    %v1632 = vld [vmem:[#allocation11 + $0x1b0] sm:$0xff]
    %v1633 = vld [vmem:[#allocation11 + $0x1b8] sm:$0xff]
    %v1634 = vld [vmem:[#allocation11 + $0x1c0] sm:$0xff]
    %v1635 = vld [vmem:[#allocation11 + $0x1c8] sm:$0xff]
    %v1636 = vld [vmem:[#allocation11 + $0x1d0] sm:$0xff]
    %v1637 = vld [vmem:[#allocation11 + $0x1d8] sm:$0xff]
    %v1638 = vld [vmem:[#allocation11 + $0x1e0] sm:$0xff]
    %v1639 = vld [vmem:[#allocation11 + $0x1e8] sm:$0xff]
    %v1640 = vld [vmem:[#allocation11 + $0x1f0] sm:$0xff]
    %v1641 = vld [vmem:[#allocation11 + $0x1f8] sm:$0xff]
    %v1642 = vld [vmem:[#allocation13] sm:$0xf]
    %v1644 = vlaneseq
    %v1645 = vshrl.u32 %v1644, 7
    %v1646 = vsub.s32 0, %v1645
    %v1647 = vrot.slane %v1642, %v1646
    %v1648 = vlaneseq
    %v1649 = vshrl.u32 %v1648, 7
    %v1650 = vsub.s32 1, %v1649
    %v1651 = vrot.slane %v1642, %v1650
    %v1652 = vlaneseq
    %v1653 = vshrl.u32 %v1652, 7
    %v1654 = vsub.s32 2, %v1653
    %v1655 = vrot.slane %v1642, %v1654
    %v1656 = vlaneseq
    %v1657 = vshrl.u32 %v1656, 7
    %v1658 = vsub.s32 3, %v1657
    %v1659 = vrot.slane %v1642, %v1658
    %v1728 = vunpack.c.l.b16 %v1578
    %v1729 = vunpack.c.h.b16 %v1578
    %v1730 = vunpack.c.l.b16 %v1579
    %v1731 = vunpack.c.h.b16 %v1579
    %v1732 = vunpack.c.l.b16 %v1580
    %v1733 = vunpack.c.h.b16 %v1580
    %v1734 = vunpack.c.l.b16 %v1581
    %v1735 = vunpack.c.h.b16 %v1581
    %v1736 = vunpack.c.l.b16 %v1582
    %v1737 = vunpack.c.h.b16 %v1582
    %v1738 = vunpack.c.l.b16 %v1583
    %v1739 = vunpack.c.h.b16 %v1583
    %v1740 = vunpack.c.l.b16 %v1584
    %v1741 = vunpack.c.h.b16 %v1584
    %v1742 = vunpack.c.l.b16 %v1585
    %v1743 = vunpack.c.h.b16 %v1585
    %v1744 = vunpack.c.l.b16 %v1586
    %v1745 = vunpack.c.h.b16 %v1586
    %v1746 = vunpack.c.l.b16 %v1587
    %v1747 = vunpack.c.h.b16 %v1587
    %v1748 = vunpack.c.l.b16 %v1588
    %v1749 = vunpack.c.h.b16 %v1588
    %v1750 = vunpack.c.l.b16 %v1589
    %v1751 = vunpack.c.h.b16 %v1589
    %v1752 = vunpack.c.l.b16 %v1590
    %v1753 = vunpack.c.h.b16 %v1590
    %v1754 = vunpack.c.l.b16 %v1591
    %v1755 = vunpack.c.h.b16 %v1591
    %v1756 = vunpack.c.l.b16 %v1592
    %v1757 = vunpack.c.h.b16 %v1592
    %v1758 = vunpack.c.l.b16 %v1593
    %v1759 = vunpack.c.h.b16 %v1593
    %v1760 = vunpack.c.l.b16 %v1594
    %v1761 = vunpack.c.h.b16 %v1594
    %v1762 = vunpack.c.l.b16 %v1595
    %v1763 = vunpack.c.h.b16 %v1595
    %v1764 = vunpack.c.l.b16 %v1596
    %v1765 = vunpack.c.h.b16 %v1596
    %v1766 = vunpack.c.l.b16 %v1597
    %v1767 = vunpack.c.h.b16 %v1597
    %v1768 = vunpack.c.l.b16 %v1598
    %v1769 = vunpack.c.h.b16 %v1598
    %v1770 = vunpack.c.l.b16 %v1599
    %v1771 = vunpack.c.h.b16 %v1599
    %v1772 = vunpack.c.l.b16 %v1600
    %v1773 = vunpack.c.h.b16 %v1600
    %v1774 = vunpack.c.l.b16 %v1601
    %v1775 = vunpack.c.h.b16 %v1601
    %v1776 = vunpack.c.l.b16 %v1602
    %v1777 = vunpack.c.h.b16 %v1602
    %v1778 = vunpack.c.l.b16 %v1603
    %v1779 = vunpack.c.h.b16 %v1603
    %v1780 = vunpack.c.l.b16 %v1604
    %v1781 = vunpack.c.h.b16 %v1604
    %v1782 = vunpack.c.l.b16 %v1605
    %v1783 = vunpack.c.h.b16 %v1605
    %v1784 = vunpack.c.l.b16 %v1606
    %v1785 = vunpack.c.h.b16 %v1606
    %v1786 = vunpack.c.l.b16 %v1607
    %v1787 = vunpack.c.h.b16 %v1607
    %v1788 = vunpack.c.l.b16 %v1608
    %v1789 = vunpack.c.h.b16 %v1608
    %v1790 = vunpack.c.l.b16 %v1609
    %v1791 = vunpack.c.h.b16 %v1609
    %v1792 = vunpack.c.l.b16 %v1610
    %v1793 = vunpack.c.h.b16 %v1610
    %v1794 = vunpack.c.l.b16 %v1611
    %v1795 = vunpack.c.h.b16 %v1611
    %v1796 = vunpack.c.l.b16 %v1612
    %v1797 = vunpack.c.h.b16 %v1612
    %v1798 = vunpack.c.l.b16 %v1613
    %v1799 = vunpack.c.h.b16 %v1613
    %v1800 = vunpack.c.l.b16 %v1614
    %v1801 = vunpack.c.h.b16 %v1614
    %v1802 = vunpack.c.l.b16 %v1615
    %v1803 = vunpack.c.h.b16 %v1615
    %v1804 = vunpack.c.l.b16 %v1616
    %v1805 = vunpack.c.h.b16 %v1616
    %v1806 = vunpack.c.l.b16 %v1617
    %v1807 = vunpack.c.h.b16 %v1617
    %v1808 = vunpack.c.l.b16 %v1618
    %v1809 = vunpack.c.h.b16 %v1618
    %v1810 = vunpack.c.l.b16 %v1619
    %v1811 = vunpack.c.h.b16 %v1619
    %v1812 = vunpack.c.l.b16 %v1620
    %v1813 = vunpack.c.h.b16 %v1620
    %v1814 = vunpack.c.l.b16 %v1621
    %v1815 = vunpack.c.h.b16 %v1621
    %v1816 = vunpack.c.l.b16 %v1622
    %v1817 = vunpack.c.h.b16 %v1622
    %v1818 = vunpack.c.l.b16 %v1623
    %v1819 = vunpack.c.h.b16 %v1623
    %v1820 = vunpack.c.l.b16 %v1624
    %v1821 = vunpack.c.h.b16 %v1624
    %v1822 = vunpack.c.l.b16 %v1625
    %v1823 = vunpack.c.h.b16 %v1625
    %v1824 = vunpack.c.l.b16 %v1626
    %v1825 = vunpack.c.h.b16 %v1626
    %v1826 = vunpack.c.l.b16 %v1627
    %v1827 = vunpack.c.h.b16 %v1627
    %v1828 = vunpack.c.l.b16 %v1628
    %v1829 = vunpack.c.h.b16 %v1628
    %v1830 = vunpack.c.l.b16 %v1629
    %v1831 = vunpack.c.h.b16 %v1629
    %v1832 = vunpack.c.l.b16 %v1630
    %v1833 = vunpack.c.h.b16 %v1630
    %v1834 = vunpack.c.l.b16 %v1631
    %v1835 = vunpack.c.h.b16 %v1631
    %v1836 = vunpack.c.l.b16 %v1632
    %v1837 = vunpack.c.h.b16 %v1632
    %v1838 = vunpack.c.l.b16 %v1633
    %v1839 = vunpack.c.h.b16 %v1633
    %v1840 = vunpack.c.l.b16 %v1634
    %v1841 = vunpack.c.h.b16 %v1634
    %v1842 = vunpack.c.l.b16 %v1635
    %v1843 = vunpack.c.h.b16 %v1635
    %v1844 = vunpack.c.l.b16 %v1636
    %v1845 = vunpack.c.h.b16 %v1636
    %v1846 = vunpack.c.l.b16 %v1637
    %v1847 = vunpack.c.h.b16 %v1637
    %v1848 = vunpack.c.l.b16 %v1638
    %v1849 = vunpack.c.h.b16 %v1638
    %v1850 = vunpack.c.l.b16 %v1639
    %v1851 = vunpack.c.h.b16 %v1639
    %v1852 = vunpack.c.l.b16 %v1640
    %v1853 = vunpack.c.h.b16 %v1640
    %v1854 = vunpack.c.l.b16 %v1641
    %v1855 = vunpack.c.h.b16 %v1641
    %v1856 = vpack.c.b16 %v1732, %v1728
    %v1857 = vpack.c.b16 %v1733, %v1729
    %v1858 = vpack.c.b16 %v1734, %v1730
    %v1859 = vpack.c.b16 %v1735, %v1731
    %v1860 = vpack.c.b16 %v1740, %v1736
    %v1861 = vpack.c.b16 %v1741, %v1737
    %v1862 = vpack.c.b16 %v1742, %v1738
    %v1863 = vpack.c.b16 %v1743, %v1739
    %v1864 = vpack.c.b16 %v1748, %v1744
    %v1865 = vpack.c.b16 %v1749, %v1745
    %v1866 = vpack.c.b16 %v1750, %v1746
    %v1867 = vpack.c.b16 %v1751, %v1747
    %v1868 = vpack.c.b16 %v1756, %v1752
    %v1869 = vpack.c.b16 %v1757, %v1753
    %v1870 = vpack.c.b16 %v1758, %v1754
    %v1871 = vpack.c.b16 %v1759, %v1755
    %v1872 = vpack.c.b16 %v1764, %v1760
    %v1873 = vpack.c.b16 %v1765, %v1761
    %v1874 = vpack.c.b16 %v1766, %v1762
    %v1875 = vpack.c.b16 %v1767, %v1763
    %v1876 = vpack.c.b16 %v1772, %v1768
    %v1877 = vpack.c.b16 %v1773, %v1769
    %v1878 = vpack.c.b16 %v1774, %v1770
    %v1879 = vpack.c.b16 %v1775, %v1771
    %v1880 = vpack.c.b16 %v1780, %v1776
    %v1881 = vpack.c.b16 %v1781, %v1777
    %v1882 = vpack.c.b16 %v1782, %v1778
    %v1883 = vpack.c.b16 %v1783, %v1779
    %v1884 = vpack.c.b16 %v1788, %v1784
    %v1885 = vpack.c.b16 %v1789, %v1785
    %v1886 = vpack.c.b16 %v1790, %v1786
    %v1887 = vpack.c.b16 %v1791, %v1787
    %v1888 = vpack.c.b16 %v1796, %v1792
    %v1889 = vpack.c.b16 %v1797, %v1793
    %v1890 = vpack.c.b16 %v1798, %v1794
    %v1891 = vpack.c.b16 %v1799, %v1795
    %v1892 = vpack.c.b16 %v1804, %v1800
    %v1893 = vpack.c.b16 %v1805, %v1801
    %v1894 = vpack.c.b16 %v1806, %v1802
    %v1895 = vpack.c.b16 %v1807, %v1803
    %v1896 = vpack.c.b16 %v1812, %v1808
    %v1897 = vpack.c.b16 %v1813, %v1809
    %v1898 = vpack.c.b16 %v1814, %v1810
    %v1899 = vpack.c.b16 %v1815, %v1811
    %v1900 = vpack.c.b16 %v1820, %v1816
    %v1901 = vpack.c.b16 %v1821, %v1817
    %v1902 = vpack.c.b16 %v1822, %v1818
    %v1903 = vpack.c.b16 %v1823, %v1819
    %v1904 = vpack.c.b16 %v1828, %v1824
    %v1905 = vpack.c.b16 %v1829, %v1825
    %v1906 = vpack.c.b16 %v1830, %v1826
    %v1907 = vpack.c.b16 %v1831, %v1827
    %v1908 = vpack.c.b16 %v1836, %v1832
    %v1909 = vpack.c.b16 %v1837, %v1833
    %v1910 = vpack.c.b16 %v1838, %v1834
    %v1911 = vpack.c.b16 %v1839, %v1835
    %v1912 = vpack.c.b16 %v1844, %v1840
    %v1913 = vpack.c.b16 %v1845, %v1841
    %v1914 = vpack.c.b16 %v1846, %v1842
    %v1915 = vpack.c.b16 %v1847, %v1843
    %v1916 = vpack.c.b16 %v1852, %v1848
    %v1917 = vpack.c.b16 %v1853, %v1849
    %v1918 = vpack.c.b16 %v1854, %v1850
    %v1919 = vpack.c.b16 %v1855, %v1851
    %1984 = vmatprep.subr.bf16.mxu0 %v1857
    %1985 = vmatpush1.bf16.msra.mxu0 %v1856
    %1986 = vmatprep.subr.bf16.mxu0 %v1861
    %1987 = vmatpush1.bf16.msra.mxu0 %v1860
    %1988 = vmatprep.subr.bf16.mxu0 %v1865
    %1989 = vmatpush1.bf16.msra.mxu0 %v1864
    %1990 = vmatprep.subr.bf16.mxu0 %v1869
    %1991 = vmatpush1.bf16.msra.mxu0 %v1868
    %1992 = vmatprep.subr.bf16.mxu0 %v1873
    %1993 = vmatpush1.bf16.msra.mxu0 %v1872
    %1994 = vmatprep.subr.bf16.mxu0 %v1877
    %1995 = vmatpush1.bf16.msra.mxu0 %v1876
    %1996 = vmatprep.subr.bf16.mxu0 %v1881
    %1997 = vmatpush1.bf16.msra.mxu0 %v1880
    %1998 = vmatprep.subr.bf16.mxu0 %v1885
    %1999 = vmatpush1.bf16.msra.mxu0 %v1884
    %2000 = vmatprep.subr.bf16.mxu0 %v1889
    %2001 = vmatpush1.bf16.msra.mxu0 %v1888
    %2002 = vmatprep.subr.bf16.mxu0 %v1893
    %2003 = vmatpush1.bf16.msra.mxu0 %v1892
    %2004 = vmatprep.subr.bf16.mxu0 %v1897
    %2005 = vmatpush1.bf16.msra.mxu0 %v1896
    %2006 = vmatprep.subr.bf16.mxu0 %v1901
    %2007 = vmatpush1.bf16.msra.mxu0 %v1900
    %2008 = vmatprep.subr.bf16.mxu0 %v1905
    %2009 = vmatpush1.bf16.msra.mxu0 %v1904
    %2010 = vmatprep.subr.bf16.mxu0 %v1909
    %2011 = vmatpush1.bf16.msra.mxu0 %v1908
    %2012 = vmatprep.subr.bf16.mxu0 %v1913
    %2013 = vmatpush1.bf16.msra.mxu0 %v1912
    %2014 = vmatprep.subr.bf16.mxu0 %v1917
    %2015 = vmatpush1.bf16.msra.mxu0 %v1916
    %2016 = vmatprep.mubr.bf16.mxu0 %v1547
    %2017 = vmatmul.mubr.bf16.gmra.mrb[0].mxu0 %v1546
    %v2018 = vpop.f32.mrb[0].mxu0
    %v2019 = vadd.f32 %v1647, %v2018
    %v2020 = vpop.f32.mrb[0].mxu0
    %v2021 = vadd.f32 %v1651, %v2020
    %v2022 = vpop.f32.mrb[0].mxu0
    %v2023 = vadd.f32 %v1647, %v2022
    %v2024 = vpop.f32.mrb[0].mxu0
    %v2025 = vadd.f32 %v1651, %v2024
    %2026 = vmatprep.mubr.bf16.mxu0 %v1549
    %2027 = vmatmul.mubr.bf16.gmra.mrb[0].mxu0 %v1548
    %v2028 = vpop.f32.mrb[0].mxu0
    %v2029 = vadd.f32 %v1647, %v2028
    %v2030 = vpop.f32.mrb[0].mxu0
    %v2031 = vadd.f32 %v1651, %v2030
    %v2032 = vpop.f32.mrb[0].mxu0
    %v2033 = vadd.f32 %v1647, %v2032
    %v2034 = vpop.f32.mrb[0].mxu0
    %v2035 = vadd.f32 %v1651, %v2034
    %2036 = vmatprep.mubr.bf16.mxu0 %v1551
    %2037 = vmatmul.mubr.bf16.gmra.mrb[0].mxu0 %v1550
    %v2038 = vpop.f32.mrb[0].mxu0
    %v2039 = vadd.f32 %v1647, %v2038
    %v2040 = vpop.f32.mrb[0].mxu0
    %v2041 = vadd.f32 %v1651, %v2040
    %v2042 = vpop.f32.mrb[0].mxu0
    %v2043 = vadd.f32 %v1647, %v2042
    %v2044 = vpop.f32.mrb[0].mxu0
    %v2045 = vadd.f32 %v1651, %v2044
    %2046 = vmatprep.mubr.bf16.mxu0 %v1553
    %2047 = vmatmul.mubr.bf16.gmra.mrb[0].mxu0 %v1552
    %v2048 = vpop.f32.mrb[0].mxu0
    %v2049 = vadd.f32 %v1647, %v2048
    %v2050 = vpop.f32.mrb[0].mxu0
    %v2051 = vadd.f32 %v1651, %v2050
    %v2052 = vpop.f32.mrb[0].mxu0
    %v2053 = vadd.f32 %v1647, %v2052
    %v2054 = vpop.f32.mrb[0].mxu0
    %v2055 = vadd.f32 %v1651, %v2054
    %2056 = vmatprep.mubr.bf16.mxu0 %v1555
    %2057 = vmatmul.mubr.bf16.gmra.mrb[0].mxu0 %v1554
    %v2058 = vpop.f32.mrb[0].mxu0
    %v2059 = vadd.f32 %v1647, %v2058
    %v2060 = vpop.f32.mrb[0].mxu0
    %v2061 = vadd.f32 %v1651, %v2060
    %v2062 = vpop.f32.mrb[0].mxu0
    %v2063 = vadd.f32 %v1647, %v2062
    %v2064 = vpop.f32.mrb[0].mxu0
    %v2065 = vadd.f32 %v1651, %v2064
    %2066 = vmatprep.mubr.bf16.mxu0 %v1557
    %2067 = vmatmul.mubr.bf16.gmra.mrb[0].mxu0 %v1556
    %v2068 = vpop.f32.mrb[0].mxu0
    %v2069 = vadd.f32 %v1647, %v2068
    %v2070 = vpop.f32.mrb[0].mxu0
    %v2071 = vadd.f32 %v1651, %v2070
    %v2072 = vpop.f32.mrb[0].mxu0
    %v2073 = vadd.f32 %v1647, %v2072
    %v2074 = vpop.f32.mrb[0].mxu0
    %v2075 = vadd.f32 %v1651, %v2074
    %2076 = vmatprep.mubr.bf16.mxu0 %v1559
    %2077 = vmatmul.mubr.bf16.gmra.mrb[0].mxu0 %v1558
    %v2078 = vpop.f32.mrb[0].mxu0
    %v2079 = vadd.f32 %v1647, %v2078
    %v2080 = vpop.f32.mrb[0].mxu0
    %v2081 = vadd.f32 %v1651, %v2080
    %v2082 = vpop.f32.mrb[0].mxu0
    %v2083 = vadd.f32 %v1647, %v2082
    %v2084 = vpop.f32.mrb[0].mxu0
    %v2085 = vadd.f32 %v1651, %v2084
    %2086 = vmatprep.mubr.bf16.mxu0 %v1561
    %2087 = vmatmul.mubr.bf16.gmra.mrb[0].mxu0 %v1560
    %v2088 = vpop.f32.mrb[0].mxu0
    %v2089 = vadd.f32 %v1647, %v2088
    %v2090 = vpop.f32.mrb[0].mxu0
    %v2091 = vadd.f32 %v1651, %v2090
    %v2092 = vpop.f32.mrb[0].mxu0
    %v2093 = vadd.f32 %v1647, %v2092
    %v2094 = vpop.f32.mrb[0].mxu0
    %v2095 = vadd.f32 %v1651, %v2094
    %2096 = vmatprep.mubr.bf16.mxu0 %v1563
    %2097 = vmatmul.mubr.bf16.gmra.mrb[0].mxu0 %v1562
    %v2098 = vpop.f32.mrb[0].mxu0
    %v2099 = vadd.f32 %v1647, %v2098
    %v2100 = vpop.f32.mrb[0].mxu0
    %v2101 = vadd.f32 %v1651, %v2100
    %v2102 = vpop.f32.mrb[0].mxu0
    %v2103 = vadd.f32 %v1647, %v2102
    %v2104 = vpop.f32.mrb[0].mxu0
    %v2105 = vadd.f32 %v1651, %v2104
    %2106 = vmatprep.mubr.bf16.mxu0 %v1565
    %2107 = vmatmul.mubr.bf16.gmra.mrb[0].mxu0 %v1564
    %v2108 = vpop.f32.mrb[0].mxu0
    %v2109 = vadd.f32 %v1647, %v2108
    %v2110 = vpop.f32.mrb[0].mxu0
    %v2111 = vadd.f32 %v1651, %v2110
    %v2112 = vpop.f32.mrb[0].mxu0
    %v2113 = vadd.f32 %v1647, %v2112
    %v2114 = vpop.f32.mrb[0].mxu0
    %v2115 = vadd.f32 %v1651, %v2114
    %2116 = vmatprep.mubr.bf16.mxu0 %v1567
    %2117 = vmatmul.mubr.bf16.gmra.mrb[0].mxu0 %v1566
    %v2118 = vpop.f32.mrb[0].mxu0
    %v2119 = vadd.f32 %v1647, %v2118
    %v2120 = vpop.f32.mrb[0].mxu0
    %v2121 = vadd.f32 %v1651, %v2120
    %v2122 = vpop.f32.mrb[0].mxu0
    %v2123 = vadd.f32 %v1647, %v2122
    %v2124 = vpop.f32.mrb[0].mxu0
    %v2125 = vadd.f32 %v1651, %v2124
    %2126 = vmatprep.mubr.bf16.mxu0 %v1569
    %2127 = vmatmul.mubr.bf16.gmra.mrb[0].mxu0 %v1568
    %v2128 = vpop.f32.mrb[0].mxu0
    %v2129 = vadd.f32 %v1647, %v2128
    %v2130 = vpop.f32.mrb[0].mxu0
    %v2131 = vadd.f32 %v1651, %v2130
    %v2132 = vpop.f32.mrb[0].mxu0
    %v2133 = vadd.f32 %v1647, %v2132
    %v2134 = vpop.f32.mrb[0].mxu0
    %v2135 = vadd.f32 %v1651, %v2134
    %2136 = vmatprep.mubr.bf16.mxu0 %v1571
    %2137 = vmatmul.mubr.bf16.gmra.mrb[0].mxu0 %v1570
    %v2138 = vpop.f32.mrb[0].mxu0
    %v2139 = vadd.f32 %v1647, %v2138
    %v2140 = vpop.f32.mrb[0].mxu0
    %v2141 = vadd.f32 %v1651, %v2140
    %v2142 = vpop.f32.mrb[0].mxu0
    %v2143 = vadd.f32 %v1647, %v2142
    %v2144 = vpop.f32.mrb[0].mxu0
    %v2145 = vadd.f32 %v1651, %v2144
    %2146 = vmatprep.mubr.bf16.mxu0 %v1573
    %2147 = vmatmul.mubr.bf16.gmra.mrb[0].mxu0 %v1572
    %v2148 = vpop.f32.mrb[0].mxu0
    %v2149 = vadd.f32 %v1647, %v2148
    %v2150 = vpop.f32.mrb[0].mxu0
    %v2151 = vadd.f32 %v1651, %v2150
    %v2152 = vpop.f32.mrb[0].mxu0
    %v2153 = vadd.f32 %v1647, %v2152
    %v2154 = vpop.f32.mrb[0].mxu0
    %v2155 = vadd.f32 %v1651, %v2154
    %2156 = vmatprep.mubr.bf16.mxu0 %v1575
    %2157 = vmatmul.mubr.bf16.gmra.mrb[0].mxu0 %v1574
    %v2158 = vpop.f32.mrb[0].mxu0
    %v2159 = vadd.f32 %v1647, %v2158
    %v2160 = vpop.f32.mrb[0].mxu0
    %v2161 = vadd.f32 %v1651, %v2160
    %v2162 = vpop.f32.mrb[0].mxu0
    %v2163 = vadd.f32 %v1647, %v2162
    %v2164 = vpop.f32.mrb[0].mxu0
    %v2165 = vadd.f32 %v1651, %v2164
    %2166 = vmatprep.mubr.bf16.mxu0 %v1577
    %2167 = vmatmul.mubr.bf16.gmra.mrb[0].mxu0 %v1576
    %v2168 = vpop.f32.mrb[0].mxu0
    %v2169 = vadd.f32 %v1647, %v2168
    %v2170 = vpop.f32.mrb[0].mxu0
    %v2171 = vadd.f32 %v1651, %v2170
    %v2172 = vpop.f32.mrb[0].mxu0
    %v2173 = vadd.f32 %v1647, %v2172
    %v2174 = vpop.f32.mrb[0].mxu0
    %v2175 = vadd.f32 %v1651, %v2174
    %2176 = vdwg.mxu0
    %2177 = vmatprep.subr.bf16.mxu0 %v1859
    %2178 = vmatpush1.bf16.msra.mxu0 %v1858
    %2179 = vmatprep.subr.bf16.mxu0 %v1863
    %2180 = vmatpush1.bf16.msra.mxu0 %v1862
    %2181 = vmatprep.subr.bf16.mxu0 %v1867
    %2182 = vmatpush1.bf16.msra.mxu0 %v1866
    %2183 = vmatprep.subr.bf16.mxu0 %v1871
    %2184 = vmatpush1.bf16.msra.mxu0 %v1870
    %2185 = vmatprep.subr.bf16.mxu0 %v1875
    %2186 = vmatpush1.bf16.msra.mxu0 %v1874
    %2187 = vmatprep.subr.bf16.mxu0 %v1879
    %2188 = vmatpush1.bf16.msra.mxu0 %v1878
    %2189 = vmatprep.subr.bf16.mxu0 %v1883
    %2190 = vmatpush1.bf16.msra.mxu0 %v1882
    %2191 = vmatprep.subr.bf16.mxu0 %v1887
    %2192 = vmatpush1.bf16.msra.mxu0 %v1886
    %2193 = vmatprep.subr.bf16.mxu0 %v1891
    %2194 = vmatpush1.bf16.msra.mxu0 %v1890
    %2195 = vmatprep.subr.bf16.mxu0 %v1895
    %2196 = vmatpush1.bf16.msra.mxu0 %v1894
    %2197 = vmatprep.subr.bf16.mxu0 %v1899
    %2198 = vmatpush1.bf16.msra.mxu0 %v1898
    %2199 = vmatprep.subr.bf16.mxu0 %v1903
    %2200 = vmatpush1.bf16.msra.mxu0 %v1902
    %2201 = vmatprep.subr.bf16.mxu0 %v1907
    %2202 = vmatpush1.bf16.msra.mxu0 %v1906
    %2203 = vmatprep.subr.bf16.mxu0 %v1911
    %2204 = vmatpush1.bf16.msra.mxu0 %v1910
    %2205 = vmatprep.subr.bf16.mxu0 %v1915
    %2206 = vmatpush1.bf16.msra.mxu0 %v1914
    %2207 = vmatprep.subr.bf16.mxu0 %v1919
    %2208 = vmatpush1.bf16.msra.mxu0 %v1918
    %2209 = vmatprep.mubr.bf16.mxu0 %v1547
    %2210 = vmatmul.mubr.bf16.gmra.mrb[0].mxu0 %v1546
    %v2211 = vpop.f32.mrb[0].mxu0
    %v2212 = vadd.f32 %v1655, %v2211
    %v2213 = vpop.f32.mrb[0].mxu0
    %v2214 = vadd.f32 %v1659, %v2213
    %v2215 = vpop.f32.mrb[0].mxu0
    %v2216 = vadd.f32 %v1655, %v2215
    %v2217 = vpop.f32.mrb[0].mxu0
    %v2218 = vadd.f32 %v1659, %v2217
    %2219 = vmatprep.mubr.bf16.mxu0 %v1549
    %2220 = vmatmul.mubr.bf16.gmra.mrb[0].mxu0 %v1548
    %v2221 = vpop.f32.mrb[0].mxu0
    %v2222 = vadd.f32 %v1655, %v2221
    %v2223 = vpop.f32.mrb[0].mxu0
    %v2224 = vadd.f32 %v1659, %v2223
    %v2225 = vpop.f32.mrb[0].mxu0
    %v2226 = vadd.f32 %v1655, %v2225
    %v2227 = vpop.f32.mrb[0].mxu0
    %v2228 = vadd.f32 %v1659, %v2227
    %2229 = vmatprep.mubr.bf16.mxu0 %v1551
    %2230 = vmatmul.mubr.bf16.gmra.mrb[0].mxu0 %v1550
    %v2231 = vpop.f32.mrb[0].mxu0
    %v2232 = vadd.f32 %v1655, %v2231
    %v2233 = vpop.f32.mrb[0].mxu0
    %v2234 = vadd.f32 %v1659, %v2233
    %v2235 = vpop.f32.mrb[0].mxu0
    %v2236 = vadd.f32 %v1655, %v2235
    %v2237 = vpop.f32.mrb[0].mxu0
    %v2238 = vadd.f32 %v1659, %v2237
    %2239 = vmatprep.mubr.bf16.mxu0 %v1553
    %2240 = vmatmul.mubr.bf16.gmra.mrb[0].mxu0 %v1552
    %v2241 = vpop.f32.mrb[0].mxu0
    %v2242 = vadd.f32 %v1655, %v2241
    %v2243 = vpop.f32.mrb[0].mxu0
    %v2244 = vadd.f32 %v1659, %v2243
    %v2245 = vpop.f32.mrb[0].mxu0
    %v2246 = vadd.f32 %v1655, %v2245
    %v2247 = vpop.f32.mrb[0].mxu0
    %v2248 = vadd.f32 %v1659, %v2247
    %2249 = vmatprep.mubr.bf16.mxu0 %v1555
    %2250 = vmatmul.mubr.bf16.gmra.mrb[0].mxu0 %v1554
    %v2251 = vpop.f32.mrb[0].mxu0
    %v2252 = vadd.f32 %v1655, %v2251
    %v2253 = vpop.f32.mrb[0].mxu0
    %v2254 = vadd.f32 %v1659, %v2253
    %v2255 = vpop.f32.mrb[0].mxu0
    %v2256 = vadd.f32 %v1655, %v2255
    %v2257 = vpop.f32.mrb[0].mxu0
    %v2258 = vadd.f32 %v1659, %v2257
    %2259 = vmatprep.mubr.bf16.mxu0 %v1557
    %2260 = vmatmul.mubr.bf16.gmra.mrb[0].mxu0 %v1556
    %v2261 = vpop.f32.mrb[0].mxu0
    %v2262 = vadd.f32 %v1655, %v2261
    %v2263 = vpop.f32.mrb[0].mxu0
    %v2264 = vadd.f32 %v1659, %v2263
    %v2265 = vpop.f32.mrb[0].mxu0
    %v2266 = vadd.f32 %v1655, %v2265
    %v2267 = vpop.f32.mrb[0].mxu0
    %v2268 = vadd.f32 %v1659, %v2267
    %2269 = vmatprep.mubr.bf16.mxu0 %v1559
    %2270 = vmatmul.mubr.bf16.gmra.mrb[0].mxu0 %v1558
    %v2271 = vpop.f32.mrb[0].mxu0
    %v2272 = vadd.f32 %v1655, %v2271
    %v2273 = vpop.f32.mrb[0].mxu0
    %v2274 = vadd.f32 %v1659, %v2273
    %v2275 = vpop.f32.mrb[0].mxu0
    %v2276 = vadd.f32 %v1655, %v2275
    %v2277 = vpop.f32.mrb[0].mxu0
    %v2278 = vadd.f32 %v1659, %v2277
    %2279 = vmatprep.mubr.bf16.mxu0 %v1561
    %2280 = vmatmul.mubr.bf16.gmra.mrb[0].mxu0 %v1560
    %v2281 = vpop.f32.mrb[0].mxu0
    %v2282 = vadd.f32 %v1655, %v2281
    %v2283 = vpop.f32.mrb[0].mxu0
    %v2284 = vadd.f32 %v1659, %v2283
    %v2285 = vpop.f32.mrb[0].mxu0
    %v2286 = vadd.f32 %v1655, %v2285
    %v2287 = vpop.f32.mrb[0].mxu0
    %v2288 = vadd.f32 %v1659, %v2287
    %2289 = vmatprep.mubr.bf16.mxu0 %v1563
    %2290 = vmatmul.mubr.bf16.gmra.mrb[0].mxu0 %v1562
    %v2291 = vpop.f32.mrb[0].mxu0
    %v2292 = vadd.f32 %v1655, %v2291
    %v2293 = vpop.f32.mrb[0].mxu0
    %v2294 = vadd.f32 %v1659, %v2293
    %v2295 = vpop.f32.mrb[0].mxu0
    %v2296 = vadd.f32 %v1655, %v2295
    %v2297 = vpop.f32.mrb[0].mxu0
    %v2298 = vadd.f32 %v1659, %v2297
    %2299 = vmatprep.mubr.bf16.mxu0 %v1565
    %2300 = vmatmul.mubr.bf16.gmra.mrb[0].mxu0 %v1564
    %v2301 = vpop.f32.mrb[0].mxu0
    %v2302 = vadd.f32 %v1655, %v2301
    %v2303 = vpop.f32.mrb[0].mxu0
    %v2304 = vadd.f32 %v1659, %v2303
    %v2305 = vpop.f32.mrb[0].mxu0
    %v2306 = vadd.f32 %v1655, %v2305
    %v2307 = vpop.f32.mrb[0].mxu0
    %v2308 = vadd.f32 %v1659, %v2307
    %2309 = vmatprep.mubr.bf16.mxu0 %v1567
    %2310 = vmatmul.mubr.bf16.gmra.mrb[0].mxu0 %v1566
    %v2311 = vpop.f32.mrb[0].mxu0
    %v2312 = vadd.f32 %v1655, %v2311
    %v2313 = vpop.f32.mrb[0].mxu0
    %v2314 = vadd.f32 %v1659, %v2313
    %v2315 = vpop.f32.mrb[0].mxu0
    %v2316 = vadd.f32 %v1655, %v2315
    %v2317 = vpop.f32.mrb[0].mxu0
    %v2318 = vadd.f32 %v1659, %v2317
    %2319 = vmatprep.mubr.bf16.mxu0 %v1569
    %2320 = vmatmul.mubr.bf16.gmra.mrb[0].mxu0 %v1568
    %v2321 = vpop.f32.mrb[0].mxu0
    %v2322 = vadd.f32 %v1655, %v2321
    %v2323 = vpop.f32.mrb[0].mxu0
    %v2324 = vadd.f32 %v1659, %v2323
    %v2325 = vpop.f32.mrb[0].mxu0
    %v2326 = vadd.f32 %v1655, %v2325
    %v2327 = vpop.f32.mrb[0].mxu0
    %v2328 = vadd.f32 %v1659, %v2327
    %2329 = vmatprep.mubr.bf16.mxu0 %v1571
    %2330 = vmatmul.mubr.bf16.gmra.mrb[0].mxu0 %v1570
    %v2331 = vpop.f32.mrb[0].mxu0
    %v2332 = vadd.f32 %v1655, %v2331
    %v2333 = vpop.f32.mrb[0].mxu0
    %v2334 = vadd.f32 %v1659, %v2333
    %v2335 = vpop.f32.mrb[0].mxu0
    %v2336 = vadd.f32 %v1655, %v2335
    %v2337 = vpop.f32.mrb[0].mxu0
    %v2338 = vadd.f32 %v1659, %v2337
    %2339 = vmatprep.mubr.bf16.mxu0 %v1573
    %2340 = vmatmul.mubr.bf16.gmra.mrb[0].mxu0 %v1572
    %v2341 = vpop.f32.mrb[0].mxu0
    %v2342 = vadd.f32 %v1655, %v2341
    %v2343 = vpop.f32.mrb[0].mxu0
    %v2344 = vadd.f32 %v1659, %v2343
    %v2345 = vpop.f32.mrb[0].mxu0
    %v2346 = vadd.f32 %v1655, %v2345
    %v2347 = vpop.f32.mrb[0].mxu0
    %v2348 = vadd.f32 %v1659, %v2347
    %2349 = vmatprep.mubr.bf16.mxu0 %v1575
    %2350 = vmatmul.mubr.bf16.gmra.mrb[0].mxu0 %v1574
    %v2351 = vpop.f32.mrb[0].mxu0
    %v2352 = vadd.f32 %v1655, %v2351
    %v2353 = vpop.f32.mrb[0].mxu0
    %v2354 = vadd.f32 %v1659, %v2353
    %v2355 = vpop.f32.mrb[0].mxu0
    %v2356 = vadd.f32 %v1655, %v2355
    %v2357 = vpop.f32.mrb[0].mxu0
    %v2358 = vadd.f32 %v1659, %v2357
    %2359 = vmatprep.mubr.bf16.mxu0 %v1577
    %2360 = vmatmul.mubr.bf16.gmra.mrb[0].mxu0 %v1576
    %v2361 = vpop.f32.mrb[0].mxu0
    %v2362 = vadd.f32 %v1655, %v2361
    %v2363 = vpop.f32.mrb[0].mxu0
    %v2364 = vadd.f32 %v1659, %v2363
    %v2365 = vpop.f32.mrb[0].mxu0
    %v2366 = vadd.f32 %v1655, %v2365
    %v2367 = vpop.f32.mrb[0].mxu0
    %v2368 = vadd.f32 %v1659, %v2367
    %2369 = vdwg.mxu0
    %v2370 = vmax.f32 %v2019, 0.0
    %v2371 = vmax.f32 %v2021, 0.0
    %v2372 = vmax.f32 %v2212, 0.0
    %v2373 = vmax.f32 %v2214, 0.0
    %v2374 = vmax.f32 %v2023, 0.0
    %v2375 = vmax.f32 %v2025, 0.0
    %v2376 = vmax.f32 %v2216, 0.0
    %v2377 = vmax.f32 %v2218, 0.0
    %v2378 = vmax.f32 %v2029, 0.0
    %v2379 = vmax.f32 %v2031, 0.0
    %v2380 = vmax.f32 %v2222, 0.0
    %v2381 = vmax.f32 %v2224, 0.0
    %v2382 = vmax.f32 %v2033, 0.0
    %v2383 = vmax.f32 %v2035, 0.0
    %v2384 = vmax.f32 %v2226, 0.0
    %v2385 = vmax.f32 %v2228, 0.0
    %v2386 = vmax.f32 %v2039, 0.0
    %v2387 = vmax.f32 %v2041, 0.0
    %v2388 = vmax.f32 %v2232, 0.0
    %v2389 = vmax.f32 %v2234, 0.0
    %v2390 = vmax.f32 %v2043, 0.0
    %v2391 = vmax.f32 %v2045, 0.0
    %v2392 = vmax.f32 %v2236, 0.0
    %v2393 = vmax.f32 %v2238, 0.0
    %v2394 = vmax.f32 %v2049, 0.0
    %v2395 = vmax.f32 %v2051, 0.0
    %v2396 = vmax.f32 %v2242, 0.0
    %v2397 = vmax.f32 %v2244, 0.0
    %v2398 = vmax.f32 %v2053, 0.0
    %v2399 = vmax.f32 %v2055, 0.0
    %v2400 = vmax.f32 %v2246, 0.0
    %v2401 = vmax.f32 %v2248, 0.0
    %v2402 = vmax.f32 %v2059, 0.0
    %v2403 = vmax.f32 %v2061, 0.0
    %v2404 = vmax.f32 %v2252, 0.0
    %v2405 = vmax.f32 %v2254, 0.0
    %v2406 = vmax.f32 %v2063, 0.0
    %v2407 = vmax.f32 %v2065, 0.0
    %v2408 = vmax.f32 %v2256, 0.0
    %v2409 = vmax.f32 %v2258, 0.0
    %v2410 = vmax.f32 %v2069, 0.0
    %v2411 = vmax.f32 %v2071, 0.0
    %v2412 = vmax.f32 %v2262, 0.0
    %v2413 = vmax.f32 %v2264, 0.0
    %v2414 = vmax.f32 %v2073, 0.0
    %v2415 = vmax.f32 %v2075, 0.0
    %v2416 = vmax.f32 %v2266, 0.0
    %v2417 = vmax.f32 %v2268, 0.0
    %v2418 = vmax.f32 %v2079, 0.0
    %v2419 = vmax.f32 %v2081, 0.0
    %v2420 = vmax.f32 %v2272, 0.0
    %v2421 = vmax.f32 %v2274, 0.0
    %v2422 = vmax.f32 %v2083, 0.0
    %v2423 = vmax.f32 %v2085, 0.0
    %v2424 = vmax.f32 %v2276, 0.0
    %v2425 = vmax.f32 %v2278, 0.0
    %v2426 = vmax.f32 %v2089, 0.0
    %v2427 = vmax.f32 %v2091, 0.0
    %v2428 = vmax.f32 %v2282, 0.0
    %v2429 = vmax.f32 %v2284, 0.0
    %v2430 = vmax.f32 %v2093, 0.0
    %v2431 = vmax.f32 %v2095, 0.0
    %v2432 = vmax.f32 %v2286, 0.0
    %v2433 = vmax.f32 %v2288, 0.0
    %v2434 = vmax.f32 %v2099, 0.0
    %v2435 = vmax.f32 %v2101, 0.0
    %v2436 = vmax.f32 %v2292, 0.0
    %v2437 = vmax.f32 %v2294, 0.0
    %v2438 = vmax.f32 %v2103, 0.0
    %v2439 = vmax.f32 %v2105, 0.0
    %v2440 = vmax.f32 %v2296, 0.0
    %v2441 = vmax.f32 %v2298, 0.0
    %v2442 = vmax.f32 %v2109, 0.0
    %v2443 = vmax.f32 %v2111, 0.0
    %v2444 = vmax.f32 %v2302, 0.0
    %v2445 = vmax.f32 %v2304, 0.0
    %v2446 = vmax.f32 %v2113, 0.0
    %v2447 = vmax.f32 %v2115, 0.0
    %v2448 = vmax.f32 %v2306, 0.0
    %v2449 = vmax.f32 %v2308, 0.0
    %v2450 = vmax.f32 %v2119, 0.0
    %v2451 = vmax.f32 %v2121, 0.0
    %v2452 = vmax.f32 %v2312, 0.0
    %v2453 = vmax.f32 %v2314, 0.0
    %v2454 = vmax.f32 %v2123, 0.0
    %v2455 = vmax.f32 %v2125, 0.0
    %v2456 = vmax.f32 %v2316, 0.0
    %v2457 = vmax.f32 %v2318, 0.0
    %v2458 = vmax.f32 %v2129, 0.0
    %v2459 = vmax.f32 %v2131, 0.0
    %v2460 = vmax.f32 %v2322, 0.0
    %v2461 = vmax.f32 %v2324, 0.0
    %v2462 = vmax.f32 %v2133, 0.0
    %v2463 = vmax.f32 %v2135, 0.0
    %v2464 = vmax.f32 %v2326, 0.0
    %v2465 = vmax.f32 %v2328, 0.0
    %v2466 = vmax.f32 %v2139, 0.0
    %v2467 = vmax.f32 %v2141, 0.0
    %v2468 = vmax.f32 %v2332, 0.0
    %v2469 = vmax.f32 %v2334, 0.0
    %v2470 = vmax.f32 %v2143, 0.0
    %v2471 = vmax.f32 %v2145, 0.0
    %v2472 = vmax.f32 %v2336, 0.0
    %v2473 = vmax.f32 %v2338, 0.0
    %v2474 = vmax.f32 %v2149, 0.0
    %v2475 = vmax.f32 %v2151, 0.0
    %v2476 = vmax.f32 %v2342, 0.0
    %v2477 = vmax.f32 %v2344, 0.0
    %v2478 = vmax.f32 %v2153, 0.0
    %v2479 = vmax.f32 %v2155, 0.0
    %v2480 = vmax.f32 %v2346, 0.0
    %v2481 = vmax.f32 %v2348, 0.0
    %v2482 = vmax.f32 %v2159, 0.0
    %v2483 = vmax.f32 %v2161, 0.0
    %v2484 = vmax.f32 %v2352, 0.0
    %v2485 = vmax.f32 %v2354, 0.0
    %v2486 = vmax.f32 %v2163, 0.0
    %v2487 = vmax.f32 %v2165, 0.0
    %v2488 = vmax.f32 %v2356, 0.0
    %v2489 = vmax.f32 %v2358, 0.0
    %v2490 = vmax.f32 %v2169, 0.0
    %v2491 = vmax.f32 %v2171, 0.0
    %v2492 = vmax.f32 %v2362, 0.0
    %v2493 = vmax.f32 %v2364, 0.0
    %v2494 = vmax.f32 %v2173, 0.0
    %v2495 = vmax.f32 %v2175, 0.0
    %v2496 = vmax.f32 %v2366, 0.0
    %v2497 = vmax.f32 %v2368, 0.0
    %v2498 = vpack.c.bf16 %v2374, %v2370
    %v2499 = vpack.c.bf16 %v2375, %v2371
    %v2500 = vpack.c.bf16 %v2376, %v2372
    %v2501 = vpack.c.bf16 %v2377, %v2373
    %v2502 = vpack.c.bf16 %v2382, %v2378
    %v2503 = vpack.c.bf16 %v2383, %v2379
    %v2504 = vpack.c.bf16 %v2384, %v2380
    %v2505 = vpack.c.bf16 %v2385, %v2381
    %v2506 = vpack.c.bf16 %v2390, %v2386
    %v2507 = vpack.c.bf16 %v2391, %v2387
    %v2508 = vpack.c.bf16 %v2392, %v2388
    %v2509 = vpack.c.bf16 %v2393, %v2389
    %v2510 = vpack.c.bf16 %v2398, %v2394
    %v2511 = vpack.c.bf16 %v2399, %v2395
    %v2512 = vpack.c.bf16 %v2400, %v2396
    %v2513 = vpack.c.bf16 %v2401, %v2397
    %v2514 = vpack.c.bf16 %v2406, %v2402
    %v2515 = vpack.c.bf16 %v2407, %v2403
    %v2516 = vpack.c.bf16 %v2408, %v2404
    %v2517 = vpack.c.bf16 %v2409, %v2405
    %v2518 = vpack.c.bf16 %v2414, %v2410
    %v2519 = vpack.c.bf16 %v2415, %v2411
    %v2520 = vpack.c.bf16 %v2416, %v2412
    %v2521 = vpack.c.bf16 %v2417, %v2413
    %v2522 = vpack.c.bf16 %v2422, %v2418
    %v2523 = vpack.c.bf16 %v2423, %v2419
    %v2524 = vpack.c.bf16 %v2424, %v2420
    %v2525 = vpack.c.bf16 %v2425, %v2421
    %v2526 = vpack.c.bf16 %v2430, %v2426
    %v2527 = vpack.c.bf16 %v2431, %v2427
    %v2528 = vpack.c.bf16 %v2432, %v2428
    %v2529 = vpack.c.bf16 %v2433, %v2429
    %v2530 = vpack.c.bf16 %v2438, %v2434
    %v2531 = vpack.c.bf16 %v2439, %v2435
    %v2532 = vpack.c.bf16 %v2440, %v2436
    %v2533 = vpack.c.bf16 %v2441, %v2437
    %v2534 = vpack.c.bf16 %v2446, %v2442
    %v2535 = vpack.c.bf16 %v2447, %v2443
    %v2536 = vpack.c.bf16 %v2448, %v2444
    %v2537 = vpack.c.bf16 %v2449, %v2445
    %v2538 = vpack.c.bf16 %v2454, %v2450
    %v2539 = vpack.c.bf16 %v2455, %v2451
    %v2540 = vpack.c.bf16 %v2456, %v2452
    %v2541 = vpack.c.bf16 %v2457, %v2453
    %v2542 = vpack.c.bf16 %v2462, %v2458
    %v2543 = vpack.c.bf16 %v2463, %v2459
    %v2544 = vpack.c.bf16 %v2464, %v2460
    %v2545 = vpack.c.bf16 %v2465, %v2461
    %v2546 = vpack.c.bf16 %v2470, %v2466
    %v2547 = vpack.c.bf16 %v2471, %v2467
    %v2548 = vpack.c.bf16 %v2472, %v2468
    %v2549 = vpack.c.bf16 %v2473, %v2469
    %v2550 = vpack.c.bf16 %v2478, %v2474
    %v2551 = vpack.c.bf16 %v2479, %v2475
    %v2552 = vpack.c.bf16 %v2480, %v2476
    %v2553 = vpack.c.bf16 %v2481, %v2477
    %v2554 = vpack.c.bf16 %v2486, %v2482
    %v2555 = vpack.c.bf16 %v2487, %v2483
    %v2556 = vpack.c.bf16 %v2488, %v2484
    %v2557 = vpack.c.bf16 %v2489, %v2485
    %v2558 = vpack.c.bf16 %v2494, %v2490
    %v2559 = vpack.c.bf16 %v2495, %v2491
    %v2560 = vpack.c.bf16 %v2496, %v2492
    %v2561 = vpack.c.bf16 %v2497, %v2493
    %v2562 = vld [vmem:[#allocation14] sm:$0xff]
    %v2563 = vld [vmem:[#allocation14 + $0x8] sm:$0xff]
    %v2564 = vld [vmem:[#allocation14 + $0x10] sm:$0xff]
    %v2565 = vld [vmem:[#allocation14 + $0x18] sm:$0xff]
    %v2566 = vld [vmem:[#allocation14 + $0x20] sm:$0xff]
    %v2567 = vld [vmem:[#allocation14 + $0x28] sm:$0xff]
    %v2568 = vld [vmem:[#allocation14 + $0x30] sm:$0xff]
    %v2569 = vld [vmem:[#allocation14 + $0x38] sm:$0xff]
    %v2570 = vld [vmem:[#allocation14 + $0x40] sm:$0xff]
    %v2571 = vld [vmem:[#allocation14 + $0x48] sm:$0xff]
    %v2572 = vld [vmem:[#allocation14 + $0x50] sm:$0xff]
    %v2573 = vld [vmem:[#allocation14 + $0x58] sm:$0xff]
    %v2574 = vld [vmem:[#allocation14 + $0x60] sm:$0xff]
    %v2575 = vld [vmem:[#allocation14 + $0x68] sm:$0xff]
    %v2576 = vld [vmem:[#allocation14 + $0x70] sm:$0xff]
    %v2577 = vld [vmem:[#allocation14 + $0x78] sm:$0xff]
    %v2578 = vld [vmem:[#allocation14 + $0x80] sm:$0xff]
    %v2579 = vld [vmem:[#allocation14 + $0x88] sm:$0xff]
    %v2580 = vld [vmem:[#allocation14 + $0x90] sm:$0xff]
    %v2581 = vld [vmem:[#allocation14 + $0x98] sm:$0xff]
    %v2582 = vld [vmem:[#allocation14 + $0xa0] sm:$0xff]
    %v2583 = vld [vmem:[#allocation14 + $0xa8] sm:$0xff]
    %v2584 = vld [vmem:[#allocation14 + $0xb0] sm:$0xff]
    %v2585 = vld [vmem:[#allocation14 + $0xb8] sm:$0xff]
    %v2586 = vld [vmem:[#allocation14 + $0xc0] sm:$0xff]
    %v2587 = vld [vmem:[#allocation14 + $0xc8] sm:$0xff]
    %v2588 = vld [vmem:[#allocation14 + $0xd0] sm:$0xff]
    %v2589 = vld [vmem:[#allocation14 + $0xd8] sm:$0xff]
    %v2590 = vld [vmem:[#allocation14 + $0xe0] sm:$0xff]
    %v2591 = vld [vmem:[#allocation14 + $0xe8] sm:$0xff]
    %v2592 = vld [vmem:[#allocation14 + $0xf0] sm:$0xff]
    %v2593 = vld [vmem:[#allocation14 + $0xf8] sm:$0xff]
    %v2594 = vld [vmem:[#allocation14 + $0x100] sm:$0xff]
    %v2595 = vld [vmem:[#allocation14 + $0x108] sm:$0xff]
    %v2596 = vld [vmem:[#allocation14 + $0x110] sm:$0xff]
    %v2597 = vld [vmem:[#allocation14 + $0x118] sm:$0xff]
    %v2598 = vld [vmem:[#allocation14 + $0x120] sm:$0xff]
    %v2599 = vld [vmem:[#allocation14 + $0x128] sm:$0xff]
    %v2600 = vld [vmem:[#allocation14 + $0x130] sm:$0xff]
    %v2601 = vld [vmem:[#allocation14 + $0x138] sm:$0xff]
    %v2602 = vld [vmem:[#allocation14 + $0x140] sm:$0xff]
    %v2603 = vld [vmem:[#allocation14 + $0x148] sm:$0xff]
    %v2604 = vld [vmem:[#allocation14 + $0x150] sm:$0xff]
    %v2605 = vld [vmem:[#allocation14 + $0x158] sm:$0xff]
    %v2606 = vld [vmem:[#allocation14 + $0x160] sm:$0xff]
    %v2607 = vld [vmem:[#allocation14 + $0x168] sm:$0xff]
    %v2608 = vld [vmem:[#allocation14 + $0x170] sm:$0xff]
    %v2609 = vld [vmem:[#allocation14 + $0x178] sm:$0xff]
    %v2610 = vld [vmem:[#allocation14 + $0x180] sm:$0xff]
    %v2611 = vld [vmem:[#allocation14 + $0x188] sm:$0xff]
    %v2612 = vld [vmem:[#allocation14 + $0x190] sm:$0xff]
    %v2613 = vld [vmem:[#allocation14 + $0x198] sm:$0xff]
    %v2614 = vld [vmem:[#allocation14 + $0x1a0] sm:$0xff]
    %v2615 = vld [vmem:[#allocation14 + $0x1a8] sm:$0xff]
    %v2616 = vld [vmem:[#allocation14 + $0x1b0] sm:$0xff]
    %v2617 = vld [vmem:[#allocation14 + $0x1b8] sm:$0xff]
    %v2618 = vld [vmem:[#allocation14 + $0x1c0] sm:$0xff]
    %v2619 = vld [vmem:[#allocation14 + $0x1c8] sm:$0xff]
    %v2620 = vld [vmem:[#allocation14 + $0x1d0] sm:$0xff]
    %v2621 = vld [vmem:[#allocation14 + $0x1d8] sm:$0xff]
    %v2622 = vld [vmem:[#allocation14 + $0x1e0] sm:$0xff]
    %v2623 = vld [vmem:[#allocation14 + $0x1e8] sm:$0xff]
    %v2624 = vld [vmem:[#allocation14 + $0x1f0] sm:$0xff]
    %v2625 = vld [vmem:[#allocation14 + $0x1f8] sm:$0xff]
    %v2626 = vld [vmem:[#allocation16] sm:$0x3]
    %v2628 = vlaneseq
    %v2629 = vshrl.u32 %v2628, 7
    %v2630 = vsub.s32 0, %v2629
    %v2631 = vrot.slane %v2626, %v2630
    %v2632 = vlaneseq
    %v2633 = vshrl.u32 %v2632, 7
    %v2634 = vsub.s32 1, %v2633
    %v2635 = vrot.slane %v2626, %v2634
    %v2702 = vunpack.c.l.b16 %v2562
    %v2703 = vunpack.c.h.b16 %v2562
    %v2704 = vunpack.c.l.b16 %v2563
    %v2705 = vunpack.c.h.b16 %v2563
    %v2706 = vunpack.c.l.b16 %v2564
    %v2707 = vunpack.c.h.b16 %v2564
    %v2708 = vunpack.c.l.b16 %v2565
    %v2709 = vunpack.c.h.b16 %v2565
    %v2710 = vunpack.c.l.b16 %v2566
    %v2711 = vunpack.c.h.b16 %v2566
    %v2712 = vunpack.c.l.b16 %v2567
    %v2713 = vunpack.c.h.b16 %v2567
    %v2714 = vunpack.c.l.b16 %v2568
    %v2715 = vunpack.c.h.b16 %v2568
    %v2716 = vunpack.c.l.b16 %v2569
    %v2717 = vunpack.c.h.b16 %v2569
    %v2718 = vunpack.c.l.b16 %v2570
    %v2719 = vunpack.c.h.b16 %v2570
    %v2720 = vunpack.c.l.b16 %v2571
    %v2721 = vunpack.c.h.b16 %v2571
    %v2722 = vunpack.c.l.b16 %v2572
    %v2723 = vunpack.c.h.b16 %v2572
    %v2724 = vunpack.c.l.b16 %v2573
    %v2725 = vunpack.c.h.b16 %v2573
    %v2726 = vunpack.c.l.b16 %v2574
    %v2727 = vunpack.c.h.b16 %v2574
    %v2728 = vunpack.c.l.b16 %v2575
    %v2729 = vunpack.c.h.b16 %v2575
    %v2730 = vunpack.c.l.b16 %v2576
    %v2731 = vunpack.c.h.b16 %v2576
    %v2732 = vunpack.c.l.b16 %v2577
    %v2733 = vunpack.c.h.b16 %v2577
    %v2734 = vunpack.c.l.b16 %v2578
    %v2735 = vunpack.c.h.b16 %v2578
    %v2736 = vunpack.c.l.b16 %v2579
    %v2737 = vunpack.c.h.b16 %v2579
    %v2738 = vunpack.c.l.b16 %v2580
    %v2739 = vunpack.c.h.b16 %v2580
    %v2740 = vunpack.c.l.b16 %v2581
    %v2741 = vunpack.c.h.b16 %v2581
    %v2742 = vunpack.c.l.b16 %v2582
    %v2743 = vunpack.c.h.b16 %v2582
    %v2744 = vunpack.c.l.b16 %v2583
    %v2745 = vunpack.c.h.b16 %v2583
    %v2746 = vunpack.c.l.b16 %v2584
    %v2747 = vunpack.c.h.b16 %v2584
    %v2748 = vunpack.c.l.b16 %v2585
    %v2749 = vunpack.c.h.b16 %v2585
    %v2750 = vunpack.c.l.b16 %v2586
    %v2751 = vunpack.c.h.b16 %v2586
    %v2752 = vunpack.c.l.b16 %v2587
    %v2753 = vunpack.c.h.b16 %v2587
    %v2754 = vunpack.c.l.b16 %v2588
    %v2755 = vunpack.c.h.b16 %v2588
    %v2756 = vunpack.c.l.b16 %v2589
    %v2757 = vunpack.c.h.b16 %v2589
    %v2758 = vunpack.c.l.b16 %v2590
    %v2759 = vunpack.c.h.b16 %v2590
    %v2760 = vunpack.c.l.b16 %v2591
    %v2761 = vunpack.c.h.b16 %v2591
    %v2762 = vunpack.c.l.b16 %v2592
    %v2763 = vunpack.c.h.b16 %v2592
    %v2764 = vunpack.c.l.b16 %v2593
    %v2765 = vunpack.c.h.b16 %v2593
    %v2766 = vunpack.c.l.b16 %v2594
    %v2767 = vunpack.c.h.b16 %v2594
    %v2768 = vunpack.c.l.b16 %v2595
    %v2769 = vunpack.c.h.b16 %v2595
    %v2770 = vunpack.c.l.b16 %v2596
    %v2771 = vunpack.c.h.b16 %v2596
    %v2772 = vunpack.c.l.b16 %v2597
    %v2773 = vunpack.c.h.b16 %v2597
    %v2774 = vunpack.c.l.b16 %v2598
    %v2775 = vunpack.c.h.b16 %v2598
    %v2776 = vunpack.c.l.b16 %v2599
    %v2777 = vunpack.c.h.b16 %v2599
    %v2778 = vunpack.c.l.b16 %v2600
    %v2779 = vunpack.c.h.b16 %v2600
    %v2780 = vunpack.c.l.b16 %v2601
    %v2781 = vunpack.c.h.b16 %v2601
    %v2782 = vunpack.c.l.b16 %v2602
    %v2783 = vunpack.c.h.b16 %v2602
    %v2784 = vunpack.c.l.b16 %v2603
    %v2785 = vunpack.c.h.b16 %v2603
    %v2786 = vunpack.c.l.b16 %v2604
    %v2787 = vunpack.c.h.b16 %v2604
    %v2788 = vunpack.c.l.b16 %v2605
    %v2789 = vunpack.c.h.b16 %v2605
    %v2790 = vunpack.c.l.b16 %v2606
    %v2791 = vunpack.c.h.b16 %v2606
    %v2792 = vunpack.c.l.b16 %v2607
    %v2793 = vunpack.c.h.b16 %v2607
    %v2794 = vunpack.c.l.b16 %v2608
    %v2795 = vunpack.c.h.b16 %v2608
    %v2796 = vunpack.c.l.b16 %v2609
    %v2797 = vunpack.c.h.b16 %v2609
    %v2798 = vunpack.c.l.b16 %v2610
    %v2799 = vunpack.c.h.b16 %v2610
    %v2800 = vunpack.c.l.b16 %v2611
    %v2801 = vunpack.c.h.b16 %v2611
    %v2802 = vunpack.c.l.b16 %v2612
    %v2803 = vunpack.c.h.b16 %v2612
    %v2804 = vunpack.c.l.b16 %v2613
    %v2805 = vunpack.c.h.b16 %v2613
    %v2806 = vunpack.c.l.b16 %v2614
    %v2807 = vunpack.c.h.b16 %v2614
    %v2808 = vunpack.c.l.b16 %v2615
    %v2809 = vunpack.c.h.b16 %v2615
    %v2810 = vunpack.c.l.b16 %v2616
    %v2811 = vunpack.c.h.b16 %v2616
    %v2812 = vunpack.c.l.b16 %v2617
    %v2813 = vunpack.c.h.b16 %v2617
    %v2814 = vunpack.c.l.b16 %v2618
    %v2815 = vunpack.c.h.b16 %v2618
    %v2816 = vunpack.c.l.b16 %v2619
    %v2817 = vunpack.c.h.b16 %v2619
    %v2818 = vunpack.c.l.b16 %v2620
    %v2819 = vunpack.c.h.b16 %v2620
    %v2820 = vunpack.c.l.b16 %v2621
    %v2821 = vunpack.c.h.b16 %v2621
    %v2822 = vunpack.c.l.b16 %v2622
    %v2823 = vunpack.c.h.b16 %v2622
    %v2824 = vunpack.c.l.b16 %v2623
    %v2825 = vunpack.c.h.b16 %v2623
    %v2826 = vunpack.c.l.b16 %v2624
    %v2827 = vunpack.c.h.b16 %v2624
    %v2828 = vunpack.c.l.b16 %v2625
    %v2829 = vunpack.c.h.b16 %v2625
    %v2830 = vpack.c.b16 %v2704, %v2702
    %v2831 = vpack.c.b16 %v2705, %v2703
    %v2832 = vpack.c.b16 %v2708, %v2706
    %v2833 = vpack.c.b16 %v2709, %v2707
    %v2834 = vpack.c.b16 %v2712, %v2710
    %v2835 = vpack.c.b16 %v2713, %v2711
    %v2836 = vpack.c.b16 %v2716, %v2714
    %v2837 = vpack.c.b16 %v2717, %v2715
    %v2838 = vpack.c.b16 %v2720, %v2718
    %v2839 = vpack.c.b16 %v2721, %v2719
    %v2840 = vpack.c.b16 %v2724, %v2722
    %v2841 = vpack.c.b16 %v2725, %v2723
    %v2842 = vpack.c.b16 %v2728, %v2726
    %v2843 = vpack.c.b16 %v2729, %v2727
    %v2844 = vpack.c.b16 %v2732, %v2730
    %v2845 = vpack.c.b16 %v2733, %v2731
    %v2846 = vpack.c.b16 %v2736, %v2734
    %v2847 = vpack.c.b16 %v2737, %v2735
    %v2848 = vpack.c.b16 %v2740, %v2738
    %v2849 = vpack.c.b16 %v2741, %v2739
    %v2850 = vpack.c.b16 %v2744, %v2742
    %v2851 = vpack.c.b16 %v2745, %v2743
    %v2852 = vpack.c.b16 %v2748, %v2746
    %v2853 = vpack.c.b16 %v2749, %v2747
    %v2854 = vpack.c.b16 %v2752, %v2750
    %v2855 = vpack.c.b16 %v2753, %v2751
    %v2856 = vpack.c.b16 %v2756, %v2754
    %v2857 = vpack.c.b16 %v2757, %v2755
    %v2858 = vpack.c.b16 %v2760, %v2758
    %v2859 = vpack.c.b16 %v2761, %v2759
    %v2860 = vpack.c.b16 %v2764, %v2762
    %v2861 = vpack.c.b16 %v2765, %v2763
    %v2862 = vpack.c.b16 %v2768, %v2766
    %v2863 = vpack.c.b16 %v2769, %v2767
    %v2864 = vpack.c.b16 %v2772, %v2770
    %v2865 = vpack.c.b16 %v2773, %v2771
    %v2866 = vpack.c.b16 %v2776, %v2774
    %v2867 = vpack.c.b16 %v2777, %v2775
    %v2868 = vpack.c.b16 %v2780, %v2778
    %v2869 = vpack.c.b16 %v2781, %v2779
    %v2870 = vpack.c.b16 %v2784, %v2782
    %v2871 = vpack.c.b16 %v2785, %v2783
    %v2872 = vpack.c.b16 %v2788, %v2786
    %v2873 = vpack.c.b16 %v2789, %v2787
    %v2874 = vpack.c.b16 %v2792, %v2790
    %v2875 = vpack.c.b16 %v2793, %v2791
    %v2876 = vpack.c.b16 %v2796, %v2794
    %v2877 = vpack.c.b16 %v2797, %v2795
    %v2878 = vpack.c.b16 %v2800, %v2798
    %v2879 = vpack.c.b16 %v2801, %v2799
    %v2880 = vpack.c.b16 %v2804, %v2802
    %v2881 = vpack.c.b16 %v2805, %v2803
    %v2882 = vpack.c.b16 %v2808, %v2806
    %v2883 = vpack.c.b16 %v2809, %v2807
    %v2884 = vpack.c.b16 %v2812, %v2810
    %v2885 = vpack.c.b16 %v2813, %v2811
    %v2886 = vpack.c.b16 %v2816, %v2814
    %v2887 = vpack.c.b16 %v2817, %v2815
    %v2888 = vpack.c.b16 %v2820, %v2818
    %v2889 = vpack.c.b16 %v2821, %v2819
    %v2890 = vpack.c.b16 %v2824, %v2822
    %v2891 = vpack.c.b16 %v2825, %v2823
    %v2892 = vpack.c.b16 %v2828, %v2826
    %v2893 = vpack.c.b16 %v2829, %v2827
    %2958 = vmatprep.subr.bf16.mxu0 %v2831
    %2959 = vmatpush1.bf16.msra.mxu0 %v2830
    %2960 = vmatprep.subr.bf16.mxu0 %v2833
    %2961 = vmatpush1.bf16.msra.mxu0 %v2832
    %2962 = vmatprep.subr.bf16.mxu0 %v2835
    %2963 = vmatpush1.bf16.msra.mxu0 %v2834
    %2964 = vmatprep.subr.bf16.mxu0 %v2837
    %2965 = vmatpush1.bf16.msra.mxu0 %v2836
    %2966 = vmatprep.subr.bf16.mxu0 %v2839
    %2967 = vmatpush1.bf16.msra.mxu0 %v2838
    %2968 = vmatprep.subr.bf16.mxu0 %v2841
    %2969 = vmatpush1.bf16.msra.mxu0 %v2840
    %2970 = vmatprep.subr.bf16.mxu0 %v2843
    %2971 = vmatpush1.bf16.msra.mxu0 %v2842
    %2972 = vmatprep.subr.bf16.mxu0 %v2845
    %2973 = vmatpush1.bf16.msra.mxu0 %v2844
    %2974 = vmatprep.subr.bf16.mxu0 %v2847
    %2975 = vmatpush1.bf16.msra.mxu0 %v2846
    %2976 = vmatprep.subr.bf16.mxu0 %v2849
    %2977 = vmatpush1.bf16.msra.mxu0 %v2848
    %2978 = vmatprep.subr.bf16.mxu0 %v2851
    %2979 = vmatpush1.bf16.msra.mxu0 %v2850
    %2980 = vmatprep.subr.bf16.mxu0 %v2853
    %2981 = vmatpush1.bf16.msra.mxu0 %v2852
    %2982 = vmatprep.subr.bf16.mxu0 %v2855
    %2983 = vmatpush1.bf16.msra.mxu0 %v2854
    %2984 = vmatprep.subr.bf16.mxu0 %v2857
    %2985 = vmatpush1.bf16.msra.mxu0 %v2856
    %2986 = vmatprep.subr.bf16.mxu0 %v2859
    %2987 = vmatpush1.bf16.msra.mxu0 %v2858
    %2988 = vmatprep.subr.bf16.mxu0 %v2861
    %2989 = vmatpush1.bf16.msra.mxu0 %v2860
    %2990 = vmatprep.mubr.bf16.mxu0 %v2499
    %2991 = vmatmul.mubr.bf16.gmra.mrb[0].mxu0 %v2498
    %v2992 = vpop.f32.mrb[0].mxu0
    %v2993 = vadd.f32 %v2631, %v2992
    %v2994 = vpop.f32.mrb[0].mxu0
    %v2995 = vadd.f32 %v2635, %v2994
    %v2996 = vpop.f32.mrb[0].mxu0
    %v2997 = vadd.f32 %v2631, %v2996
    %v2998 = vpop.f32.mrb[0].mxu0
    %v2999 = vadd.f32 %v2635, %v2998
    %3000 = vmatprep.mubr.bf16.mxu0 %v2503
    %3001 = vmatmul.mubr.bf16.gmra.mrb[0].mxu0 %v2502
    %v3002 = vpop.f32.mrb[0].mxu0
    %v3003 = vadd.f32 %v2631, %v3002
    %v3004 = vpop.f32.mrb[0].mxu0
    %v3005 = vadd.f32 %v2635, %v3004
    %v3006 = vpop.f32.mrb[0].mxu0
    %v3007 = vadd.f32 %v2631, %v3006
    %v3008 = vpop.f32.mrb[0].mxu0
    %v3009 = vadd.f32 %v2635, %v3008
    %3010 = vmatprep.mubr.bf16.mxu0 %v2507
    %3011 = vmatmul.mubr.bf16.gmra.mrb[0].mxu0 %v2506
    %v3012 = vpop.f32.mrb[0].mxu0
    %v3013 = vadd.f32 %v2631, %v3012
    %v3014 = vpop.f32.mrb[0].mxu0
    %v3015 = vadd.f32 %v2635, %v3014
    %v3016 = vpop.f32.mrb[0].mxu0
    %v3017 = vadd.f32 %v2631, %v3016
    %v3018 = vpop.f32.mrb[0].mxu0
    %v3019 = vadd.f32 %v2635, %v3018
    %3020 = vmatprep.mubr.bf16.mxu0 %v2511
    %3021 = vmatmul.mubr.bf16.gmra.mrb[0].mxu0 %v2510
    %v3022 = vpop.f32.mrb[0].mxu0
    %v3023 = vadd.f32 %v2631, %v3022
    %v3024 = vpop.f32.mrb[0].mxu0
    %v3025 = vadd.f32 %v2635, %v3024
    %v3026 = vpop.f32.mrb[0].mxu0
    %v3027 = vadd.f32 %v2631, %v3026
    %v3028 = vpop.f32.mrb[0].mxu0
    %v3029 = vadd.f32 %v2635, %v3028
    %3030 = vmatprep.mubr.bf16.mxu0 %v2515
    %3031 = vmatmul.mubr.bf16.gmra.mrb[0].mxu0 %v2514
    %v3032 = vpop.f32.mrb[0].mxu0
    %v3033 = vadd.f32 %v2631, %v3032
    %v3034 = vpop.f32.mrb[0].mxu0
    %v3035 = vadd.f32 %v2635, %v3034
    %v3036 = vpop.f32.mrb[0].mxu0
    %v3037 = vadd.f32 %v2631, %v3036
    %v3038 = vpop.f32.mrb[0].mxu0
    %v3039 = vadd.f32 %v2635, %v3038
    %3040 = vmatprep.mubr.bf16.mxu0 %v2519
    %3041 = vmatmul.mubr.bf16.gmra.mrb[0].mxu0 %v2518
    %v3042 = vpop.f32.mrb[0].mxu0
    %v3043 = vadd.f32 %v2631, %v3042
    %v3044 = vpop.f32.mrb[0].mxu0
    %v3045 = vadd.f32 %v2635, %v3044
    %v3046 = vpop.f32.mrb[0].mxu0
    %v3047 = vadd.f32 %v2631, %v3046
    %v3048 = vpop.f32.mrb[0].mxu0
    %v3049 = vadd.f32 %v2635, %v3048
    %3050 = vmatprep.mubr.bf16.mxu0 %v2523
    %3051 = vmatmul.mubr.bf16.gmra.mrb[0].mxu0 %v2522
    %v3052 = vpop.f32.mrb[0].mxu0
    %v3053 = vadd.f32 %v2631, %v3052
    %v3054 = vpop.f32.mrb[0].mxu0
    %v3055 = vadd.f32 %v2635, %v3054
    %v3056 = vpop.f32.mrb[0].mxu0
    %v3057 = vadd.f32 %v2631, %v3056
    %v3058 = vpop.f32.mrb[0].mxu0
    %v3059 = vadd.f32 %v2635, %v3058
    %3060 = vmatprep.mubr.bf16.mxu0 %v2527
    %3061 = vmatmul.mubr.bf16.gmra.mrb[0].mxu0 %v2526
    %v3062 = vpop.f32.mrb[0].mxu0
    %v3063 = vadd.f32 %v2631, %v3062
    %v3064 = vpop.f32.mrb[0].mxu0
    %v3065 = vadd.f32 %v2635, %v3064
    %v3066 = vpop.f32.mrb[0].mxu0
    %v3067 = vadd.f32 %v2631, %v3066
    %v3068 = vpop.f32.mrb[0].mxu0
    %v3069 = vadd.f32 %v2635, %v3068
    %3070 = vmatprep.mubr.bf16.mxu0 %v2531
    %3071 = vmatmul.mubr.bf16.gmra.mrb[0].mxu0 %v2530
    %v3072 = vpop.f32.mrb[0].mxu0
    %v3073 = vadd.f32 %v2631, %v3072
    %v3074 = vpop.f32.mrb[0].mxu0
    %v3075 = vadd.f32 %v2635, %v3074
    %v3076 = vpop.f32.mrb[0].mxu0
    %v3077 = vadd.f32 %v2631, %v3076
    %v3078 = vpop.f32.mrb[0].mxu0
    %v3079 = vadd.f32 %v2635, %v3078
    %3080 = vmatprep.mubr.bf16.mxu0 %v2535
    %3081 = vmatmul.mubr.bf16.gmra.mrb[0].mxu0 %v2534
    %v3082 = vpop.f32.mrb[0].mxu0
    %v3083 = vadd.f32 %v2631, %v3082
    %v3084 = vpop.f32.mrb[0].mxu0
    %v3085 = vadd.f32 %v2635, %v3084
    %v3086 = vpop.f32.mrb[0].mxu0
    %v3087 = vadd.f32 %v2631, %v3086
    %v3088 = vpop.f32.mrb[0].mxu0
    %v3089 = vadd.f32 %v2635, %v3088
    %3090 = vmatprep.mubr.bf16.mxu0 %v2539
    %3091 = vmatmul.mubr.bf16.gmra.mrb[0].mxu0 %v2538
    %v3092 = vpop.f32.mrb[0].mxu0
    %v3093 = vadd.f32 %v2631, %v3092
    %v3094 = vpop.f32.mrb[0].mxu0
    %v3095 = vadd.f32 %v2635, %v3094
    %v3096 = vpop.f32.mrb[0].mxu0
    %v3097 = vadd.f32 %v2631, %v3096
    %v3098 = vpop.f32.mrb[0].mxu0
    %v3099 = vadd.f32 %v2635, %v3098
    %3100 = vmatprep.mubr.bf16.mxu0 %v2543
    %3101 = vmatmul.mubr.bf16.gmra.mrb[0].mxu0 %v2542
    %v3102 = vpop.f32.mrb[0].mxu0
    %v3103 = vadd.f32 %v2631, %v3102
    %v3104 = vpop.f32.mrb[0].mxu0
    %v3105 = vadd.f32 %v2635, %v3104
    %v3106 = vpop.f32.mrb[0].mxu0
    %v3107 = vadd.f32 %v2631, %v3106
    %v3108 = vpop.f32.mrb[0].mxu0
    %v3109 = vadd.f32 %v2635, %v3108
    %3110 = vmatprep.mubr.bf16.mxu0 %v2547
    %3111 = vmatmul.mubr.bf16.gmra.mrb[0].mxu0 %v2546
    %v3112 = vpop.f32.mrb[0].mxu0
    %v3113 = vadd.f32 %v2631, %v3112
    %v3114 = vpop.f32.mrb[0].mxu0
    %v3115 = vadd.f32 %v2635, %v3114
    %v3116 = vpop.f32.mrb[0].mxu0
    %v3117 = vadd.f32 %v2631, %v3116
    %v3118 = vpop.f32.mrb[0].mxu0
    %v3119 = vadd.f32 %v2635, %v3118
    %3120 = vmatprep.mubr.bf16.mxu0 %v2551
    %3121 = vmatmul.mubr.bf16.gmra.mrb[0].mxu0 %v2550
    %v3122 = vpop.f32.mrb[0].mxu0
    %v3123 = vadd.f32 %v2631, %v3122
    %v3124 = vpop.f32.mrb[0].mxu0
    %v3125 = vadd.f32 %v2635, %v3124
    %v3126 = vpop.f32.mrb[0].mxu0
    %v3127 = vadd.f32 %v2631, %v3126
    %v3128 = vpop.f32.mrb[0].mxu0
    %v3129 = vadd.f32 %v2635, %v3128
    %3130 = vmatprep.mubr.bf16.mxu0 %v2555
    %3131 = vmatmul.mubr.bf16.gmra.mrb[0].mxu0 %v2554
    %v3132 = vpop.f32.mrb[0].mxu0
    %v3133 = vadd.f32 %v2631, %v3132
    %v3134 = vpop.f32.mrb[0].mxu0
    %v3135 = vadd.f32 %v2635, %v3134
    %v3136 = vpop.f32.mrb[0].mxu0
    %v3137 = vadd.f32 %v2631, %v3136
    %v3138 = vpop.f32.mrb[0].mxu0
    %v3139 = vadd.f32 %v2635, %v3138
    %3140 = vmatprep.mubr.bf16.mxu0 %v2559
    %3141 = vmatmul.mubr.bf16.gmra.mrb[0].mxu0 %v2558
    %v3142 = vpop.f32.mrb[0].mxu0
    %v3143 = vadd.f32 %v2631, %v3142
    %v3144 = vpop.f32.mrb[0].mxu0
    %v3145 = vadd.f32 %v2635, %v3144
    %v3146 = vpop.f32.mrb[0].mxu0
    %v3147 = vadd.f32 %v2631, %v3146
    %v3148 = vpop.f32.mrb[0].mxu0
    %v3149 = vadd.f32 %v2635, %v3148
    %3150 = vdwg.mxu0
    %3151 = vmatprep.subr.bf16.mxu0 %v2863
    %3152 = vmatpush1.bf16.msra.mxu0 %v2862
    %3153 = vmatprep.subr.bf16.mxu0 %v2865
    %3154 = vmatpush1.bf16.msra.mxu0 %v2864
    %3155 = vmatprep.subr.bf16.mxu0 %v2867
    %3156 = vmatpush1.bf16.msra.mxu0 %v2866
    %3157 = vmatprep.subr.bf16.mxu0 %v2869
    %3158 = vmatpush1.bf16.msra.mxu0 %v2868
    %3159 = vmatprep.subr.bf16.mxu0 %v2871
    %3160 = vmatpush1.bf16.msra.mxu0 %v2870
    %3161 = vmatprep.subr.bf16.mxu0 %v2873
    %3162 = vmatpush1.bf16.msra.mxu0 %v2872
    %3163 = vmatprep.subr.bf16.mxu0 %v2875
    %3164 = vmatpush1.bf16.msra.mxu0 %v2874
    %3165 = vmatprep.subr.bf16.mxu0 %v2877
    %3166 = vmatpush1.bf16.msra.mxu0 %v2876
    %3167 = vmatprep.subr.bf16.mxu0 %v2879
    %3168 = vmatpush1.bf16.msra.mxu0 %v2878
    %3169 = vmatprep.subr.bf16.mxu0 %v2881
    %3170 = vmatpush1.bf16.msra.mxu0 %v2880
    %3171 = vmatprep.subr.bf16.mxu0 %v2883
    %3172 = vmatpush1.bf16.msra.mxu0 %v2882
    %3173 = vmatprep.subr.bf16.mxu0 %v2885
    %3174 = vmatpush1.bf16.msra.mxu0 %v2884
    %3175 = vmatprep.subr.bf16.mxu0 %v2887
    %3176 = vmatpush1.bf16.msra.mxu0 %v2886
    %3177 = vmatprep.subr.bf16.mxu0 %v2889
    %3178 = vmatpush1.bf16.msra.mxu0 %v2888
    %3179 = vmatprep.subr.bf16.mxu0 %v2891
    %3180 = vmatpush1.bf16.msra.mxu0 %v2890
    %3181 = vmatprep.subr.bf16.mxu0 %v2893
    %3182 = vmatpush1.bf16.msra.mxu0 %v2892
    %3183 = vmatprep.mubr.bf16.mxu0 %v2501
    %3184 = vmatmul.mubr.bf16.gmra.mrb[0].mxu0 %v2500
    %v3185 = vpop.f32.mrb[0].mxu0
    %v3186 = vadd.f32 %v2993, %v3185
    %v3187 = vpop.f32.mrb[0].mxu0
    %v3188 = vadd.f32 %v2995, %v3187
    %v3189 = vpop.f32.mrb[0].mxu0
    %v3190 = vadd.f32 %v2997, %v3189
    %v3191 = vpop.f32.mrb[0].mxu0
    %v3192 = vadd.f32 %v2999, %v3191
    %3193 = vmatprep.mubr.bf16.mxu0 %v2505
    %3194 = vmatmul.mubr.bf16.gmra.mrb[0].mxu0 %v2504
    %v3195 = vpop.f32.mrb[0].mxu0
    %v3196 = vadd.f32 %v3003, %v3195
    %v3197 = vpop.f32.mrb[0].mxu0
    %v3198 = vadd.f32 %v3005, %v3197
    %v3199 = vpop.f32.mrb[0].mxu0
    %v3200 = vadd.f32 %v3007, %v3199
    %v3201 = vpop.f32.mrb[0].mxu0
    %v3202 = vadd.f32 %v3009, %v3201
    %3203 = vmatprep.mubr.bf16.mxu0 %v2509
    %3204 = vmatmul.mubr.bf16.gmra.mrb[0].mxu0 %v2508
    %v3205 = vpop.f32.mrb[0].mxu0
    %v3206 = vadd.f32 %v3013, %v3205
    %v3207 = vpop.f32.mrb[0].mxu0
    %v3208 = vadd.f32 %v3015, %v3207
    %v3209 = vpop.f32.mrb[0].mxu0
    %v3210 = vadd.f32 %v3017, %v3209
    %v3211 = vpop.f32.mrb[0].mxu0
    %v3212 = vadd.f32 %v3019, %v3211
    %3213 = vmatprep.mubr.bf16.mxu0 %v2513
    %3214 = vmatmul.mubr.bf16.gmra.mrb[0].mxu0 %v2512
    %v3215 = vpop.f32.mrb[0].mxu0
    %v3216 = vadd.f32 %v3023, %v3215
    %v3217 = vpop.f32.mrb[0].mxu0
    %v3218 = vadd.f32 %v3025, %v3217
    %v3219 = vpop.f32.mrb[0].mxu0
    %v3220 = vadd.f32 %v3027, %v3219
    %v3221 = vpop.f32.mrb[0].mxu0
    %v3222 = vadd.f32 %v3029, %v3221
    %3223 = vmatprep.mubr.bf16.mxu0 %v2517
    %3224 = vmatmul.mubr.bf16.gmra.mrb[0].mxu0 %v2516
    %v3225 = vpop.f32.mrb[0].mxu0
    %v3226 = vadd.f32 %v3033, %v3225
    %v3227 = vpop.f32.mrb[0].mxu0
    %v3228 = vadd.f32 %v3035, %v3227
    %v3229 = vpop.f32.mrb[0].mxu0
    %v3230 = vadd.f32 %v3037, %v3229
    %v3231 = vpop.f32.mrb[0].mxu0
    %v3232 = vadd.f32 %v3039, %v3231
    %3233 = vmatprep.mubr.bf16.mxu0 %v2521
    %3234 = vmatmul.mubr.bf16.gmra.mrb[0].mxu0 %v2520
    %v3235 = vpop.f32.mrb[0].mxu0
    %v3236 = vadd.f32 %v3043, %v3235
    %v3237 = vpop.f32.mrb[0].mxu0
    %v3238 = vadd.f32 %v3045, %v3237
    %v3239 = vpop.f32.mrb[0].mxu0
    %v3240 = vadd.f32 %v3047, %v3239
    %v3241 = vpop.f32.mrb[0].mxu0
    %v3242 = vadd.f32 %v3049, %v3241
    %3243 = vmatprep.mubr.bf16.mxu0 %v2525
    %3244 = vmatmul.mubr.bf16.gmra.mrb[0].mxu0 %v2524
    %v3245 = vpop.f32.mrb[0].mxu0
    %v3246 = vadd.f32 %v3053, %v3245
    %v3247 = vpop.f32.mrb[0].mxu0
    %v3248 = vadd.f32 %v3055, %v3247
    %v3249 = vpop.f32.mrb[0].mxu0
    %v3250 = vadd.f32 %v3057, %v3249
    %v3251 = vpop.f32.mrb[0].mxu0
    %v3252 = vadd.f32 %v3059, %v3251
    %3253 = vmatprep.mubr.bf16.mxu0 %v2529
    %3254 = vmatmul.mubr.bf16.gmra.mrb[0].mxu0 %v2528
    %v3255 = vpop.f32.mrb[0].mxu0
    %v3256 = vadd.f32 %v3063, %v3255
    %v3257 = vpop.f32.mrb[0].mxu0
    %v3258 = vadd.f32 %v3065, %v3257
    %v3259 = vpop.f32.mrb[0].mxu0
    %v3260 = vadd.f32 %v3067, %v3259
    %v3261 = vpop.f32.mrb[0].mxu0
    %v3262 = vadd.f32 %v3069, %v3261
    %3263 = vmatprep.mubr.bf16.mxu0 %v2533
    %3264 = vmatmul.mubr.bf16.gmra.mrb[0].mxu0 %v2532
    %v3265 = vpop.f32.mrb[0].mxu0
    %v3266 = vadd.f32 %v3073, %v3265
    %v3267 = vpop.f32.mrb[0].mxu0
    %v3268 = vadd.f32 %v3075, %v3267
    %v3269 = vpop.f32.mrb[0].mxu0
    %v3270 = vadd.f32 %v3077, %v3269
    %v3271 = vpop.f32.mrb[0].mxu0
    %v3272 = vadd.f32 %v3079, %v3271
    %3273 = vmatprep.mubr.bf16.mxu0 %v2537
    %3274 = vmatmul.mubr.bf16.gmra.mrb[0].mxu0 %v2536
    %v3275 = vpop.f32.mrb[0].mxu0
    %v3276 = vadd.f32 %v3083, %v3275
    %v3277 = vpop.f32.mrb[0].mxu0
    %v3278 = vadd.f32 %v3085, %v3277
    %v3279 = vpop.f32.mrb[0].mxu0
    %v3280 = vadd.f32 %v3087, %v3279
    %v3281 = vpop.f32.mrb[0].mxu0
    %v3282 = vadd.f32 %v3089, %v3281
    %3283 = vmatprep.mubr.bf16.mxu0 %v2541
    %3284 = vmatmul.mubr.bf16.gmra.mrb[0].mxu0 %v2540
    %v3285 = vpop.f32.mrb[0].mxu0
    %v3286 = vadd.f32 %v3093, %v3285
    %v3287 = vpop.f32.mrb[0].mxu0
    %v3288 = vadd.f32 %v3095, %v3287
    %v3289 = vpop.f32.mrb[0].mxu0
    %v3290 = vadd.f32 %v3097, %v3289
    %v3291 = vpop.f32.mrb[0].mxu0
    %v3292 = vadd.f32 %v3099, %v3291
    %3293 = vmatprep.mubr.bf16.mxu0 %v2545
    %3294 = vmatmul.mubr.bf16.gmra.mrb[0].mxu0 %v2544
    %v3295 = vpop.f32.mrb[0].mxu0
    %v3296 = vadd.f32 %v3103, %v3295
    %v3297 = vpop.f32.mrb[0].mxu0
    %v3298 = vadd.f32 %v3105, %v3297
    %v3299 = vpop.f32.mrb[0].mxu0
    %v3300 = vadd.f32 %v3107, %v3299
    %v3301 = vpop.f32.mrb[0].mxu0
    %v3302 = vadd.f32 %v3109, %v3301
    %3303 = vmatprep.mubr.bf16.mxu0 %v2549
    %3304 = vmatmul.mubr.bf16.gmra.mrb[0].mxu0 %v2548
    %v3305 = vpop.f32.mrb[0].mxu0
    %v3306 = vadd.f32 %v3113, %v3305
    %v3307 = vpop.f32.mrb[0].mxu0
    %v3308 = vadd.f32 %v3115, %v3307
    %v3309 = vpop.f32.mrb[0].mxu0
    %v3310 = vadd.f32 %v3117, %v3309
    %v3311 = vpop.f32.mrb[0].mxu0
    %v3312 = vadd.f32 %v3119, %v3311
    %3313 = vmatprep.mubr.bf16.mxu0 %v2553
    %3314 = vmatmul.mubr.bf16.gmra.mrb[0].mxu0 %v2552
    %v3315 = vpop.f32.mrb[0].mxu0
    %v3316 = vadd.f32 %v3123, %v3315
    %v3317 = vpop.f32.mrb[0].mxu0
    %v3318 = vadd.f32 %v3125, %v3317
    %v3319 = vpop.f32.mrb[0].mxu0
    %v3320 = vadd.f32 %v3127, %v3319
    %v3321 = vpop.f32.mrb[0].mxu0
    %v3322 = vadd.f32 %v3129, %v3321
    %3323 = vmatprep.mubr.bf16.mxu0 %v2557
    %3324 = vmatmul.mubr.bf16.gmra.mrb[0].mxu0 %v2556
    %v3325 = vpop.f32.mrb[0].mxu0
    %v3326 = vadd.f32 %v3133, %v3325
    %v3327 = vpop.f32.mrb[0].mxu0
    %v3328 = vadd.f32 %v3135, %v3327
    %v3329 = vpop.f32.mrb[0].mxu0
    %v3330 = vadd.f32 %v3137, %v3329
    %v3331 = vpop.f32.mrb[0].mxu0
    %v3332 = vadd.f32 %v3139, %v3331
    %3333 = vmatprep.mubr.bf16.mxu0 %v2561
    %3334 = vmatmul.mubr.bf16.gmra.mrb[0].mxu0 %v2560
    %v3335 = vpop.f32.mrb[0].mxu0
    %v3336 = vadd.f32 %v3143, %v3335
    %v3337 = vpop.f32.mrb[0].mxu0
    %v3338 = vadd.f32 %v3145, %v3337
    %v3339 = vpop.f32.mrb[0].mxu0
    %v3340 = vadd.f32 %v3147, %v3339
    %v3341 = vpop.f32.mrb[0].mxu0
    %v3342 = vadd.f32 %v3149, %v3341
    %3343 = vdwg.mxu0
    %v3344 = vadd.f32 %v1482, %v3186
    %v3345 = vadd.f32 %v1483, %v3188
    %v3346 = vadd.f32 %v1484, %v3190
    %v3347 = vadd.f32 %v1485, %v3192
    %v3348 = vadd.f32 %v1486, %v3196
    %v3349 = vadd.f32 %v1487, %v3198
    %v3350 = vadd.f32 %v1488, %v3200
    %v3351 = vadd.f32 %v1489, %v3202
    %v3352 = vadd.f32 %v1490, %v3206
    %v3353 = vadd.f32 %v1491, %v3208
    %v3354 = vadd.f32 %v1492, %v3210
    %v3355 = vadd.f32 %v1493, %v3212
    %v3356 = vadd.f32 %v1494, %v3216
    %v3357 = vadd.f32 %v1495, %v3218
    %v3358 = vadd.f32 %v1496, %v3220
    %v3359 = vadd.f32 %v1497, %v3222
    %v3360 = vadd.f32 %v1498, %v3226
    %v3361 = vadd.f32 %v1499, %v3228
    %v3362 = vadd.f32 %v1500, %v3230
    %v3363 = vadd.f32 %v1501, %v3232
    %v3364 = vadd.f32 %v1502, %v3236
    %v3365 = vadd.f32 %v1503, %v3238
    %v3366 = vadd.f32 %v1504, %v3240
    %v3367 = vadd.f32 %v1505, %v3242
    %v3368 = vadd.f32 %v1506, %v3246
    %v3369 = vadd.f32 %v1507, %v3248
    %v3370 = vadd.f32 %v1508, %v3250
    %v3371 = vadd.f32 %v1509, %v3252
    %v3372 = vadd.f32 %v1510, %v3256
    %v3373 = vadd.f32 %v1511, %v3258
    %v3374 = vadd.f32 %v1512, %v3260
    %v3375 = vadd.f32 %v1513, %v3262
    %v3376 = vadd.f32 %v1514, %v3266
    %v3377 = vadd.f32 %v1515, %v3268
    %v3378 = vadd.f32 %v1516, %v3270
    %v3379 = vadd.f32 %v1517, %v3272
    %v3380 = vadd.f32 %v1518, %v3276
    %v3381 = vadd.f32 %v1519, %v3278
    %v3382 = vadd.f32 %v1520, %v3280
    %v3383 = vadd.f32 %v1521, %v3282
    %v3384 = vadd.f32 %v1522, %v3286
    %v3385 = vadd.f32 %v1523, %v3288
    %v3386 = vadd.f32 %v1524, %v3290
    %v3387 = vadd.f32 %v1525, %v3292
    %v3388 = vadd.f32 %v1526, %v3296
    %v3389 = vadd.f32 %v1527, %v3298
    %v3390 = vadd.f32 %v1528, %v3300
    %v3391 = vadd.f32 %v1529, %v3302
    %v3392 = vadd.f32 %v1530, %v3306
    %v3393 = vadd.f32 %v1531, %v3308
    %v3394 = vadd.f32 %v1532, %v3310
    %v3395 = vadd.f32 %v1533, %v3312
    %v3396 = vadd.f32 %v1534, %v3316
    %v3397 = vadd.f32 %v1535, %v3318
    %v3398 = vadd.f32 %v1536, %v3320
    %v3399 = vadd.f32 %v1537, %v3322
    %v3400 = vadd.f32 %v1538, %v3326
    %v3401 = vadd.f32 %v1539, %v3328
    %v3402 = vadd.f32 %v1540, %v3330
    %v3403 = vadd.f32 %v1541, %v3332
    %v3404 = vadd.f32 %v1542, %v3336
    %v3405 = vadd.f32 %v1543, %v3338
    %v3406 = vadd.f32 %v1544, %v3340
    %v3407 = vadd.f32 %v1545, %v3342
    %v3408 = vadd.f32 %v3344, %v3345
    %3409 = vadd.xlane.f32.xlu0 %v3408
    %v3410 = vpop.xlane.xlu0 %3409
    %v3411 = vadd.f32 %v3346, %v3347
    %3412 = vadd.xlane.f32.xlu0 %v3411
    %v3413 = vpop.xlane.xlu0 %3412
    %v3414 = vadd.f32 %v3348, %v3349
    %3415 = vadd.xlane.f32.xlu0 %v3414
    %v3416 = vpop.xlane.xlu0 %3415
    %v3417 = vadd.f32 %v3350, %v3351
    %3418 = vadd.xlane.f32.xlu0 %v3417
    %v3419 = vpop.xlane.xlu0 %3418
    %v3420 = vadd.f32 %v3352, %v3353
    %3421 = vadd.xlane.f32.xlu0 %v3420
    %v3422 = vpop.xlane.xlu0 %3421
    %v3423 = vadd.f32 %v3354, %v3355
    %3424 = vadd.xlane.f32.xlu0 %v3423
    %v3425 = vpop.xlane.xlu0 %3424
    %v3426 = vadd.f32 %v3356, %v3357
    %3427 = vadd.xlane.f32.xlu0 %v3426
    %v3428 = vpop.xlane.xlu0 %3427
    %v3429 = vadd.f32 %v3358, %v3359
    %3430 = vadd.xlane.f32.xlu0 %v3429
    %v3431 = vpop.xlane.xlu0 %3430
    %v3432 = vadd.f32 %v3360, %v3361
    %3433 = vadd.xlane.f32.xlu0 %v3432
    %v3434 = vpop.xlane.xlu0 %3433
    %v3435 = vadd.f32 %v3362, %v3363
    %3436 = vadd.xlane.f32.xlu0 %v3435
    %v3437 = vpop.xlane.xlu0 %3436
    %v3438 = vadd.f32 %v3364, %v3365
    %3439 = vadd.xlane.f32.xlu0 %v3438
    %v3440 = vpop.xlane.xlu0 %3439
    %v3441 = vadd.f32 %v3366, %v3367
    %3442 = vadd.xlane.f32.xlu0 %v3441
    %v3443 = vpop.xlane.xlu0 %3442
    %v3444 = vadd.f32 %v3368, %v3369
    %3445 = vadd.xlane.f32.xlu0 %v3444
    %v3446 = vpop.xlane.xlu0 %3445
    %v3447 = vadd.f32 %v3370, %v3371
    %3448 = vadd.xlane.f32.xlu0 %v3447
    %v3449 = vpop.xlane.xlu0 %3448
    %v3450 = vadd.f32 %v3372, %v3373
    %3451 = vadd.xlane.f32.xlu0 %v3450
    %v3452 = vpop.xlane.xlu0 %3451
    %v3453 = vadd.f32 %v3374, %v3375
    %3454 = vadd.xlane.f32.xlu0 %v3453
    %v3455 = vpop.xlane.xlu0 %3454
    %v3456 = vadd.f32 %v3376, %v3377
    %3457 = vadd.xlane.f32.xlu0 %v3456
    %v3458 = vpop.xlane.xlu0 %3457
    %v3459 = vadd.f32 %v3378, %v3379
    %3460 = vadd.xlane.f32.xlu0 %v3459
    %v3461 = vpop.xlane.xlu0 %3460
    %v3462 = vadd.f32 %v3380, %v3381
    %3463 = vadd.xlane.f32.xlu0 %v3462
    %v3464 = vpop.xlane.xlu0 %3463
    %v3465 = vadd.f32 %v3382, %v3383
    %3466 = vadd.xlane.f32.xlu0 %v3465
    %v3467 = vpop.xlane.xlu0 %3466
    %v3468 = vadd.f32 %v3384, %v3385
    %3469 = vadd.xlane.f32.xlu0 %v3468
    %v3470 = vpop.xlane.xlu0 %3469
    %v3471 = vadd.f32 %v3386, %v3387
    %3472 = vadd.xlane.f32.xlu0 %v3471
    %v3473 = vpop.xlane.xlu0 %3472
    %v3474 = vadd.f32 %v3388, %v3389
    %3475 = vadd.xlane.f32.xlu0 %v3474
    %v3476 = vpop.xlane.xlu0 %3475
    %v3477 = vadd.f32 %v3390, %v3391
    %3478 = vadd.xlane.f32.xlu0 %v3477
    %v3479 = vpop.xlane.xlu0 %3478
    %v3480 = vadd.f32 %v3392, %v3393
    %3481 = vadd.xlane.f32.xlu0 %v3480
    %v3482 = vpop.xlane.xlu0 %3481
    %v3483 = vadd.f32 %v3394, %v3395
    %3484 = vadd.xlane.f32.xlu0 %v3483
    %v3485 = vpop.xlane.xlu0 %3484
    %v3486 = vadd.f32 %v3396, %v3397
    %3487 = vadd.xlane.f32.xlu0 %v3486
    %v3488 = vpop.xlane.xlu0 %3487
    %v3489 = vadd.f32 %v3398, %v3399
    %3490 = vadd.xlane.f32.xlu0 %v3489
    %v3491 = vpop.xlane.xlu0 %3490
    %v3492 = vadd.f32 %v3400, %v3401
    %3493 = vadd.xlane.f32.xlu0 %v3492
    %v3494 = vpop.xlane.xlu0 %3493
    %v3495 = vadd.f32 %v3402, %v3403
    %3496 = vadd.xlane.f32.xlu0 %v3495
    %v3497 = vpop.xlane.xlu0 %3496
    %v3498 = vadd.f32 %v3404, %v3405
    %3499 = vadd.xlane.f32.xlu0 %v3498
    %v3500 = vpop.xlane.xlu0 %3499
    %v3501 = vadd.f32 %v3406, %v3407
    %3502 = vadd.xlane.f32.xlu0 %v3501
    %v3503 = vpop.xlane.xlu0 %3502
    %v3504 = vmul.f32 %v3410, %v977
    %v3505 = vmul.f32 %v3413, %v977
    %v3506 = vmul.f32 %v3416, %v977
    %v3507 = vmul.f32 %v3419, %v977
    %v3508 = vmul.f32 %v3422, %v977
    %v3509 = vmul.f32 %v3425, %v977
    %v3510 = vmul.f32 %v3428, %v977
    %v3511 = vmul.f32 %v3431, %v977
    %v3512 = vmul.f32 %v3434, %v977
    %v3513 = vmul.f32 %v3437, %v977
    %v3514 = vmul.f32 %v3440, %v977
    %v3515 = vmul.f32 %v3443, %v977
    %v3516 = vmul.f32 %v3446, %v977
    %v3517 = vmul.f32 %v3449, %v977
    %v3518 = vmul.f32 %v3452, %v977
    %v3519 = vmul.f32 %v3455, %v977
    %v3520 = vmul.f32 %v3458, %v977
    %v3521 = vmul.f32 %v3461, %v977
    %v3522 = vmul.f32 %v3464, %v977
    %v3523 = vmul.f32 %v3467, %v977
    %v3524 = vmul.f32 %v3470, %v977
    %v3525 = vmul.f32 %v3473, %v977
    %v3526 = vmul.f32 %v3476, %v977
    %v3527 = vmul.f32 %v3479, %v977
    %v3528 = vmul.f32 %v3482, %v977
    %v3529 = vmul.f32 %v3485, %v977
    %v3530 = vmul.f32 %v3488, %v977
    %v3531 = vmul.f32 %v3491, %v977
    %v3532 = vmul.f32 %v3494, %v977
    %v3533 = vmul.f32 %v3497, %v977
    %v3534 = vmul.f32 %v3500, %v977
    %v3535 = vmul.f32 %v3503, %v977
    %v3536 = vsub.f32 %v3344, %v3504
    %v3537 = vsub.f32 %v3345, %v3504
    %v3538 = vsub.f32 %v3346, %v3505
    %v3539 = vsub.f32 %v3347, %v3505
    %v3540 = vsub.f32 %v3348, %v3506
    %v3541 = vsub.f32 %v3349, %v3506
    %v3542 = vsub.f32 %v3350, %v3507
    %v3543 = vsub.f32 %v3351, %v3507
    %v3544 = vsub.f32 %v3352, %v3508
    %v3545 = vsub.f32 %v3353, %v3508
    %v3546 = vsub.f32 %v3354, %v3509
    %v3547 = vsub.f32 %v3355, %v3509
    %v3548 = vsub.f32 %v3356, %v3510
    %v3549 = vsub.f32 %v3357, %v3510
    %v3550 = vsub.f32 %v3358, %v3511
    %v3551 = vsub.f32 %v3359, %v3511
    %v3552 = vsub.f32 %v3360, %v3512
    %v3553 = vsub.f32 %v3361, %v3512
    %v3554 = vsub.f32 %v3362, %v3513
    %v3555 = vsub.f32 %v3363, %v3513
    %v3556 = vsub.f32 %v3364, %v3514
    %v3557 = vsub.f32 %v3365, %v3514
    %v3558 = vsub.f32 %v3366, %v3515
    %v3559 = vsub.f32 %v3367, %v3515
    %v3560 = vsub.f32 %v3368, %v3516
    %v3561 = vsub.f32 %v3369, %v3516
    %v3562 = vsub.f32 %v3370, %v3517
    %v3563 = vsub.f32 %v3371, %v3517
    %v3564 = vsub.f32 %v3372, %v3518
    %v3565 = vsub.f32 %v3373, %v3518
    %v3566 = vsub.f32 %v3374, %v3519
    %v3567 = vsub.f32 %v3375, %v3519
    %v3568 = vsub.f32 %v3376, %v3520
    %v3569 = vsub.f32 %v3377, %v3520
    %v3570 = vsub.f32 %v3378, %v3521
    %v3571 = vsub.f32 %v3379, %v3521
    %v3572 = vsub.f32 %v3380, %v3522
    %v3573 = vsub.f32 %v3381, %v3522
    %v3574 = vsub.f32 %v3382, %v3523
    %v3575 = vsub.f32 %v3383, %v3523
    %v3576 = vsub.f32 %v3384, %v3524
    %v3577 = vsub.f32 %v3385, %v3524
    %v3578 = vsub.f32 %v3386, %v3525
    %v3579 = vsub.f32 %v3387, %v3525
    %v3580 = vsub.f32 %v3388, %v3526
    %v3581 = vsub.f32 %v3389, %v3526
    %v3582 = vsub.f32 %v3390, %v3527
    %v3583 = vsub.f32 %v3391, %v3527
    %v3584 = vsub.f32 %v3392, %v3528
    %v3585 = vsub.f32 %v3393, %v3528
    %v3586 = vsub.f32 %v3394, %v3529
    %v3587 = vsub.f32 %v3395, %v3529
    %v3588 = vsub.f32 %v3396, %v3530
    %v3589 = vsub.f32 %v3397, %v3530
    %v3590 = vsub.f32 %v3398, %v3531
    %v3591 = vsub.f32 %v3399, %v3531
    %v3592 = vsub.f32 %v3400, %v3532
    %v3593 = vsub.f32 %v3401, %v3532
    %v3594 = vsub.f32 %v3402, %v3533
    %v3595 = vsub.f32 %v3403, %v3533
    %v3596 = vsub.f32 %v3404, %v3534
    %v3597 = vsub.f32 %v3405, %v3534
    %v3598 = vsub.f32 %v3406, %v3535
    %v3599 = vsub.f32 %v3407, %v3535
    %v3600 = vmul.f32 %v3536, %v3536
    %v3601 = vmul.f32 %v3537, %v3537
    %v3602 = vmul.f32 %v3538, %v3538
    %v3603 = vmul.f32 %v3539, %v3539
    %v3604 = vmul.f32 %v3540, %v3540
    %v3605 = vmul.f32 %v3541, %v3541
    %v3606 = vmul.f32 %v3542, %v3542
    %v3607 = vmul.f32 %v3543, %v3543
    %v3608 = vmul.f32 %v3544, %v3544
    %v3609 = vmul.f32 %v3545, %v3545
    %v3610 = vmul.f32 %v3546, %v3546
    %v3611 = vmul.f32 %v3547, %v3547
    %v3612 = vmul.f32 %v3548, %v3548
    %v3613 = vmul.f32 %v3549, %v3549
    %v3614 = vmul.f32 %v3550, %v3550
    %v3615 = vmul.f32 %v3551, %v3551
    %v3616 = vmul.f32 %v3552, %v3552
    %v3617 = vmul.f32 %v3553, %v3553
    %v3618 = vmul.f32 %v3554, %v3554
    %v3619 = vmul.f32 %v3555, %v3555
    %v3620 = vmul.f32 %v3556, %v3556
    %v3621 = vmul.f32 %v3557, %v3557
    %v3622 = vmul.f32 %v3558, %v3558
    %v3623 = vmul.f32 %v3559, %v3559
    %v3624 = vmul.f32 %v3560, %v3560
    %v3625 = vmul.f32 %v3561, %v3561
    %v3626 = vmul.f32 %v3562, %v3562
    %v3627 = vmul.f32 %v3563, %v3563
    %v3628 = vmul.f32 %v3564, %v3564
    %v3629 = vmul.f32 %v3565, %v3565
    %v3630 = vmul.f32 %v3566, %v3566
    %v3631 = vmul.f32 %v3567, %v3567
    %v3632 = vmul.f32 %v3568, %v3568
    %v3633 = vmul.f32 %v3569, %v3569
    %v3634 = vmul.f32 %v3570, %v3570
    %v3635 = vmul.f32 %v3571, %v3571
    %v3636 = vmul.f32 %v3572, %v3572
    %v3637 = vmul.f32 %v3573, %v3573
    %v3638 = vmul.f32 %v3574, %v3574
    %v3639 = vmul.f32 %v3575, %v3575
    %v3640 = vmul.f32 %v3576, %v3576
    %v3641 = vmul.f32 %v3577, %v3577
    %v3642 = vmul.f32 %v3578, %v3578
    %v3643 = vmul.f32 %v3579, %v3579
    %v3644 = vmul.f32 %v3580, %v3580
    %v3645 = vmul.f32 %v3581, %v3581
    %v3646 = vmul.f32 %v3582, %v3582
    %v3647 = vmul.f32 %v3583, %v3583
    %v3648 = vmul.f32 %v3584, %v3584
    %v3649 = vmul.f32 %v3585, %v3585
    %v3650 = vmul.f32 %v3586, %v3586
    %v3651 = vmul.f32 %v3587, %v3587
    %v3652 = vmul.f32 %v3588, %v3588
    %v3653 = vmul.f32 %v3589, %v3589
    %v3654 = vmul.f32 %v3590, %v3590
    %v3655 = vmul.f32 %v3591, %v3591
    %v3656 = vmul.f32 %v3592, %v3592
    %v3657 = vmul.f32 %v3593, %v3593
    %v3658 = vmul.f32 %v3594, %v3594
    %v3659 = vmul.f32 %v3595, %v3595
    %v3660 = vmul.f32 %v3596, %v3596
    %v3661 = vmul.f32 %v3597, %v3597
    %v3662 = vmul.f32 %v3598, %v3598
    %v3663 = vmul.f32 %v3599, %v3599
    %v3664 = vadd.f32 %v3600, %v3601
    %3665 = vadd.xlane.f32.xlu0 %v3664
    %v3666 = vpop.xlane.xlu0 %3665
    %v3667 = vadd.f32 %v3602, %v3603
    %3668 = vadd.xlane.f32.xlu0 %v3667
    %v3669 = vpop.xlane.xlu0 %3668
    %v3670 = vadd.f32 %v3604, %v3605
    %3671 = vadd.xlane.f32.xlu0 %v3670
    %v3672 = vpop.xlane.xlu0 %3671
    %v3673 = vadd.f32 %v3606, %v3607
    %3674 = vadd.xlane.f32.xlu0 %v3673
    %v3675 = vpop.xlane.xlu0 %3674
    %v3676 = vadd.f32 %v3608, %v3609
    %3677 = vadd.xlane.f32.xlu0 %v3676
    %v3678 = vpop.xlane.xlu0 %3677
    %v3679 = vadd.f32 %v3610, %v3611
    %3680 = vadd.xlane.f32.xlu0 %v3679
    %v3681 = vpop.xlane.xlu0 %3680
    %v3682 = vadd.f32 %v3612, %v3613
    %3683 = vadd.xlane.f32.xlu0 %v3682
    %v3684 = vpop.xlane.xlu0 %3683
    %v3685 = vadd.f32 %v3614, %v3615
    %3686 = vadd.xlane.f32.xlu0 %v3685
    %v3687 = vpop.xlane.xlu0 %3686
    %v3688 = vadd.f32 %v3616, %v3617
    %3689 = vadd.xlane.f32.xlu0 %v3688
    %v3690 = vpop.xlane.xlu0 %3689
    %v3691 = vadd.f32 %v3618, %v3619
    %3692 = vadd.xlane.f32.xlu0 %v3691
    %v3693 = vpop.xlane.xlu0 %3692
    %v3694 = vadd.f32 %v3620, %v3621
    %3695 = vadd.xlane.f32.xlu0 %v3694
    %v3696 = vpop.xlane.xlu0 %3695
    %v3697 = vadd.f32 %v3622, %v3623
    %3698 = vadd.xlane.f32.xlu0 %v3697
    %v3699 = vpop.xlane.xlu0 %3698
    %v3700 = vadd.f32 %v3624, %v3625
    %3701 = vadd.xlane.f32.xlu0 %v3700
    %v3702 = vpop.xlane.xlu0 %3701
    %v3703 = vadd.f32 %v3626, %v3627
    %3704 = vadd.xlane.f32.xlu0 %v3703
    %v3705 = vpop.xlane.xlu0 %3704
    %v3706 = vadd.f32 %v3628, %v3629
    %3707 = vadd.xlane.f32.xlu0 %v3706
    %v3708 = vpop.xlane.xlu0 %3707
    %v3709 = vadd.f32 %v3630, %v3631
    %3710 = vadd.xlane.f32.xlu0 %v3709
    %v3711 = vpop.xlane.xlu0 %3710
    %v3712 = vadd.f32 %v3632, %v3633
    %3713 = vadd.xlane.f32.xlu0 %v3712
    %v3714 = vpop.xlane.xlu0 %3713
    %v3715 = vadd.f32 %v3634, %v3635
    %3716 = vadd.xlane.f32.xlu0 %v3715
    %v3717 = vpop.xlane.xlu0 %3716
    %v3718 = vadd.f32 %v3636, %v3637
    %3719 = vadd.xlane.f32.xlu0 %v3718
    %v3720 = vpop.xlane.xlu0 %3719
    %v3721 = vadd.f32 %v3638, %v3639
    %3722 = vadd.xlane.f32.xlu0 %v3721
    %v3723 = vpop.xlane.xlu0 %3722
    %v3724 = vadd.f32 %v3640, %v3641
    %3725 = vadd.xlane.f32.xlu0 %v3724
    %v3726 = vpop.xlane.xlu0 %3725
    %v3727 = vadd.f32 %v3642, %v3643
    %3728 = vadd.xlane.f32.xlu0 %v3727
    %v3729 = vpop.xlane.xlu0 %3728
    %v3730 = vadd.f32 %v3644, %v3645
    %3731 = vadd.xlane.f32.xlu0 %v3730
    %v3732 = vpop.xlane.xlu0 %3731
    %v3733 = vadd.f32 %v3646, %v3647
    %3734 = vadd.xlane.f32.xlu0 %v3733
    %v3735 = vpop.xlane.xlu0 %3734
    %v3736 = vadd.f32 %v3648, %v3649
    %3737 = vadd.xlane.f32.xlu0 %v3736
    %v3738 = vpop.xlane.xlu0 %3737
    %v3739 = vadd.f32 %v3650, %v3651
    %3740 = vadd.xlane.f32.xlu0 %v3739
    %v3741 = vpop.xlane.xlu0 %3740
    %v3742 = vadd.f32 %v3652, %v3653
    %3743 = vadd.xlane.f32.xlu0 %v3742
    %v3744 = vpop.xlane.xlu0 %3743
    %v3745 = vadd.f32 %v3654, %v3655
    %3746 = vadd.xlane.f32.xlu0 %v3745
    %v3747 = vpop.xlane.xlu0 %3746
    %v3748 = vadd.f32 %v3656, %v3657
    %3749 = vadd.xlane.f32.xlu0 %v3748
    %v3750 = vpop.xlane.xlu0 %3749
    %v3751 = vadd.f32 %v3658, %v3659
    %3752 = vadd.xlane.f32.xlu0 %v3751
    %v3753 = vpop.xlane.xlu0 %3752
    %v3754 = vadd.f32 %v3660, %v3661
    %3755 = vadd.xlane.f32.xlu0 %v3754
    %v3756 = vpop.xlane.xlu0 %3755
    %v3757 = vadd.f32 %v3662, %v3663
    %3758 = vadd.xlane.f32.xlu0 %v3757
    %v3759 = vpop.xlane.xlu0 %3758
    %v3760 = vmul.f32 %v3666, %v977
    %v3761 = vmul.f32 %v3669, %v977
    %v3762 = vmul.f32 %v3672, %v977
    %v3763 = vmul.f32 %v3675, %v977
    %v3764 = vmul.f32 %v3678, %v977
    %v3765 = vmul.f32 %v3681, %v977
    %v3766 = vmul.f32 %v3684, %v977
    %v3767 = vmul.f32 %v3687, %v977
    %v3768 = vmul.f32 %v3690, %v977
    %v3769 = vmul.f32 %v3693, %v977
    %v3770 = vmul.f32 %v3696, %v977
    %v3771 = vmul.f32 %v3699, %v977
    %v3772 = vmul.f32 %v3702, %v977
    %v3773 = vmul.f32 %v3705, %v977
    %v3774 = vmul.f32 %v3708, %v977
    %v3775 = vmul.f32 %v3711, %v977
    %v3776 = vmul.f32 %v3714, %v977
    %v3777 = vmul.f32 %v3717, %v977
    %v3778 = vmul.f32 %v3720, %v977
    %v3779 = vmul.f32 %v3723, %v977
    %v3780 = vmul.f32 %v3726, %v977
    %v3781 = vmul.f32 %v3729, %v977
    %v3782 = vmul.f32 %v3732, %v977
    %v3783 = vmul.f32 %v3735, %v977
    %v3784 = vmul.f32 %v3738, %v977
    %v3785 = vmul.f32 %v3741, %v977
    %v3786 = vmul.f32 %v3744, %v977
    %v3787 = vmul.f32 %v3747, %v977
    %v3788 = vmul.f32 %v3750, %v977
    %v3789 = vmul.f32 %v3753, %v977
    %v3790 = vmul.f32 %v3756, %v977
    %v3791 = vmul.f32 %v3759, %v977
    %v3792 = vadd.f32 %v3760, 1e-05
    %v3793 = vadd.f32 %v3761, 1e-05
    %v3794 = vadd.f32 %v3762, 1e-05
    %v3795 = vadd.f32 %v3763, 1e-05
    %v3796 = vadd.f32 %v3764, 1e-05
    %v3797 = vadd.f32 %v3765, 1e-05
    %v3798 = vadd.f32 %v3766, 1e-05
    %v3799 = vadd.f32 %v3767, 1e-05
    %v3800 = vadd.f32 %v3768, 1e-05
    %v3801 = vadd.f32 %v3769, 1e-05
    %v3802 = vadd.f32 %v3770, 1e-05
    %v3803 = vadd.f32 %v3771, 1e-05
    %v3804 = vadd.f32 %v3772, 1e-05
    %v3805 = vadd.f32 %v3773, 1e-05
    %v3806 = vadd.f32 %v3774, 1e-05
    %v3807 = vadd.f32 %v3775, 1e-05
    %v3808 = vadd.f32 %v3776, 1e-05
    %v3809 = vadd.f32 %v3777, 1e-05
    %v3810 = vadd.f32 %v3778, 1e-05
    %v3811 = vadd.f32 %v3779, 1e-05
    %v3812 = vadd.f32 %v3780, 1e-05
    %v3813 = vadd.f32 %v3781, 1e-05
    %v3814 = vadd.f32 %v3782, 1e-05
    %v3815 = vadd.f32 %v3783, 1e-05
    %v3816 = vadd.f32 %v3784, 1e-05
    %v3817 = vadd.f32 %v3785, 1e-05
    %v3818 = vadd.f32 %v3786, 1e-05
    %v3819 = vadd.f32 %v3787, 1e-05
    %v3820 = vadd.f32 %v3788, 1e-05
    %v3821 = vadd.f32 %v3789, 1e-05
    %v3822 = vadd.f32 %v3790, 1e-05
    %v3823 = vadd.f32 %v3791, 1e-05
    %v3824 = vrsqrt.pop %v3792
    %v3825 = vrsqrt.pop %v3793
    %v3826 = vrsqrt.pop %v3794
    %v3827 = vrsqrt.pop %v3795
    %v3828 = vrsqrt.pop %v3796
    %v3829 = vrsqrt.pop %v3797
    %v3830 = vrsqrt.pop %v3798
    %v3831 = vrsqrt.pop %v3799
    %v3832 = vrsqrt.pop %v3800
    %v3833 = vrsqrt.pop %v3801
    %v3834 = vrsqrt.pop %v3802
    %v3835 = vrsqrt.pop %v3803
    %v3836 = vrsqrt.pop %v3804
    %v3837 = vrsqrt.pop %v3805
    %v3838 = vrsqrt.pop %v3806
    %v3839 = vrsqrt.pop %v3807
    %v3840 = vrsqrt.pop %v3808
    %v3841 = vrsqrt.pop %v3809
    %v3842 = vrsqrt.pop %v3810
    %v3843 = vrsqrt.pop %v3811
    %v3844 = vrsqrt.pop %v3812
    %v3845 = vrsqrt.pop %v3813
    %v3846 = vrsqrt.pop %v3814
    %v3847 = vrsqrt.pop %v3815
    %v3848 = vrsqrt.pop %v3816
    %v3849 = vrsqrt.pop %v3817
    %v3850 = vrsqrt.pop %v3818
    %v3851 = vrsqrt.pop %v3819
    %v3852 = vrsqrt.pop %v3820
    %v3853 = vrsqrt.pop %v3821
    %v3854 = vrsqrt.pop %v3822
    %v3855 = vrsqrt.pop %v3823
    %v3856 = vmul.f32 %v3536, %v3824
    %v3857 = vmul.f32 %v3537, %v3824
    %v3858 = vmul.f32 %v3538, %v3825
    %v3859 = vmul.f32 %v3539, %v3825
    %v3860 = vmul.f32 %v3540, %v3826
    %v3861 = vmul.f32 %v3541, %v3826
    %v3862 = vmul.f32 %v3542, %v3827
    %v3863 = vmul.f32 %v3543, %v3827
    %v3864 = vmul.f32 %v3544, %v3828
    %v3865 = vmul.f32 %v3545, %v3828
    %v3866 = vmul.f32 %v3546, %v3829
    %v3867 = vmul.f32 %v3547, %v3829
    %v3868 = vmul.f32 %v3548, %v3830
    %v3869 = vmul.f32 %v3549, %v3830
    %v3870 = vmul.f32 %v3550, %v3831
    %v3871 = vmul.f32 %v3551, %v3831
    %v3872 = vmul.f32 %v3552, %v3832
    %v3873 = vmul.f32 %v3553, %v3832
    %v3874 = vmul.f32 %v3554, %v3833
    %v3875 = vmul.f32 %v3555, %v3833
    %v3876 = vmul.f32 %v3556, %v3834
    %v3877 = vmul.f32 %v3557, %v3834
    %v3878 = vmul.f32 %v3558, %v3835
    %v3879 = vmul.f32 %v3559, %v3835
    %v3880 = vmul.f32 %v3560, %v3836
    %v3881 = vmul.f32 %v3561, %v3836
    %v3882 = vmul.f32 %v3562, %v3837
    %v3883 = vmul.f32 %v3563, %v3837
    %v3884 = vmul.f32 %v3564, %v3838
    %v3885 = vmul.f32 %v3565, %v3838
    %v3886 = vmul.f32 %v3566, %v3839
    %v3887 = vmul.f32 %v3567, %v3839
    %v3888 = vmul.f32 %v3568, %v3840
    %v3889 = vmul.f32 %v3569, %v3840
    %v3890 = vmul.f32 %v3570, %v3841
    %v3891 = vmul.f32 %v3571, %v3841
    %v3892 = vmul.f32 %v3572, %v3842
    %v3893 = vmul.f32 %v3573, %v3842
    %v3894 = vmul.f32 %v3574, %v3843
    %v3895 = vmul.f32 %v3575, %v3843
    %v3896 = vmul.f32 %v3576, %v3844
    %v3897 = vmul.f32 %v3577, %v3844
    %v3898 = vmul.f32 %v3578, %v3845
    %v3899 = vmul.f32 %v3579, %v3845
    %v3900 = vmul.f32 %v3580, %v3846
    %v3901 = vmul.f32 %v3581, %v3846
    %v3902 = vmul.f32 %v3582, %v3847
    %v3903 = vmul.f32 %v3583, %v3847
    %v3904 = vmul.f32 %v3584, %v3848
    %v3905 = vmul.f32 %v3585, %v3848
    %v3906 = vmul.f32 %v3586, %v3849
    %v3907 = vmul.f32 %v3587, %v3849
    %v3908 = vmul.f32 %v3588, %v3850
    %v3909 = vmul.f32 %v3589, %v3850
    %v3910 = vmul.f32 %v3590, %v3851
    %v3911 = vmul.f32 %v3591, %v3851
    %v3912 = vmul.f32 %v3592, %v3852
    %v3913 = vmul.f32 %v3593, %v3852
    %v3914 = vmul.f32 %v3594, %v3853
    %v3915 = vmul.f32 %v3595, %v3853
    %v3916 = vmul.f32 %v3596, %v3854
    %v3917 = vmul.f32 %v3597, %v3854
    %v3918 = vmul.f32 %v3598, %v3855
    %v3919 = vmul.f32 %v3599, %v3855
    %v3920 = vld [vmem:[#allocation17] sm:$0x3]
    %v3922 = vlaneseq
    %v3923 = vshrl.u32 %v3922, 7
    %v3924 = vsub.s32 0, %v3923
    %v3925 = vrot.slane %v3920, %v3924
    %v3926 = vlaneseq
    %v3927 = vshrl.u32 %v3926, 7
    %v3928 = vsub.s32 1, %v3927
    %v3929 = vrot.slane %v3920, %v3928
    %v3932 = vmul.f32 %v3856, %v3925
    %v3933 = vmul.f32 %v3857, %v3929
    %v3934 = vmul.f32 %v3858, %v3925
    %v3935 = vmul.f32 %v3859, %v3929
    %v3936 = vmul.f32 %v3860, %v3925
    %v3937 = vmul.f32 %v3861, %v3929
    %v3938 = vmul.f32 %v3862, %v3925
    %v3939 = vmul.f32 %v3863, %v3929
    %v3940 = vmul.f32 %v3864, %v3925
    %v3941 = vmul.f32 %v3865, %v3929
    %v3942 = vmul.f32 %v3866, %v3925
    %v3943 = vmul.f32 %v3867, %v3929
    %v3944 = vmul.f32 %v3868, %v3925
    %v3945 = vmul.f32 %v3869, %v3929
    %v3946 = vmul.f32 %v3870, %v3925
    %v3947 = vmul.f32 %v3871, %v3929
    %v3948 = vmul.f32 %v3872, %v3925
    %v3949 = vmul.f32 %v3873, %v3929
    %v3950 = vmul.f32 %v3874, %v3925
    %v3951 = vmul.f32 %v3875, %v3929
    %v3952 = vmul.f32 %v3876, %v3925
    %v3953 = vmul.f32 %v3877, %v3929
    %v3954 = vmul.f32 %v3878, %v3925
    %v3955 = vmul.f32 %v3879, %v3929
    %v3956 = vmul.f32 %v3880, %v3925
    %v3957 = vmul.f32 %v3881, %v3929
    %v3958 = vmul.f32 %v3882, %v3925
    %v3959 = vmul.f32 %v3883, %v3929
    %v3960 = vmul.f32 %v3884, %v3925
    %v3961 = vmul.f32 %v3885, %v3929
    %v3962 = vmul.f32 %v3886, %v3925
    %v3963 = vmul.f32 %v3887, %v3929
    %v3964 = vmul.f32 %v3888, %v3925
    %v3965 = vmul.f32 %v3889, %v3929
    %v3966 = vmul.f32 %v3890, %v3925
    %v3967 = vmul.f32 %v3891, %v3929
    %v3968 = vmul.f32 %v3892, %v3925
    %v3969 = vmul.f32 %v3893, %v3929
    %v3970 = vmul.f32 %v3894, %v3925
    %v3971 = vmul.f32 %v3895, %v3929
    %v3972 = vmul.f32 %v3896, %v3925
    %v3973 = vmul.f32 %v3897, %v3929
    %v3974 = vmul.f32 %v3898, %v3925
    %v3975 = vmul.f32 %v3899, %v3929
    %v3976 = vmul.f32 %v3900, %v3925
    %v3977 = vmul.f32 %v3901, %v3929
    %v3978 = vmul.f32 %v3902, %v3925
    %v3979 = vmul.f32 %v3903, %v3929
    %v3980 = vmul.f32 %v3904, %v3925
    %v3981 = vmul.f32 %v3905, %v3929
    %v3982 = vmul.f32 %v3906, %v3925
    %v3983 = vmul.f32 %v3907, %v3929
    %v3984 = vmul.f32 %v3908, %v3925
    %v3985 = vmul.f32 %v3909, %v3929
    %v3986 = vmul.f32 %v3910, %v3925
    %v3987 = vmul.f32 %v3911, %v3929
    %v3988 = vmul.f32 %v3912, %v3925
    %v3989 = vmul.f32 %v3913, %v3929
    %v3990 = vmul.f32 %v3914, %v3925
    %v3991 = vmul.f32 %v3915, %v3929
    %v3992 = vmul.f32 %v3916, %v3925
    %v3993 = vmul.f32 %v3917, %v3929
    %v3994 = vmul.f32 %v3918, %v3925
    %v3995 = vmul.f32 %v3919, %v3929
    %v3996 = vld [vmem:[#allocation19] sm:$0x3]
    %v3998 = vlaneseq
    %v3999 = vshrl.u32 %v3998, 7
    %v4000 = vsub.s32 0, %v3999
    %v4001 = vrot.slane %v3996, %v4000
    %v4002 = vlaneseq
    %v4003 = vshrl.u32 %v4002, 7
    %v4004 = vsub.s32 1, %v4003
    %v4005 = vrot.slane %v3996, %v4004
    %v4008 = vadd.f32 %v3932, %v4001
    %v4009 = vadd.f32 %v3933, %v4005
    %v4010 = vadd.f32 %v3934, %v4001
    %v4011 = vadd.f32 %v3935, %v4005
    %v4012 = vadd.f32 %v3936, %v4001
    %v4013 = vadd.f32 %v3937, %v4005
    %v4014 = vadd.f32 %v3938, %v4001
    %v4015 = vadd.f32 %v3939, %v4005
    %v4016 = vadd.f32 %v3940, %v4001
    %v4017 = vadd.f32 %v3941, %v4005
    %v4018 = vadd.f32 %v3942, %v4001
    %v4019 = vadd.f32 %v3943, %v4005
    %v4020 = vadd.f32 %v3944, %v4001
    %v4021 = vadd.f32 %v3945, %v4005
    %v4022 = vadd.f32 %v3946, %v4001
    %v4023 = vadd.f32 %v3947, %v4005
    %v4024 = vadd.f32 %v3948, %v4001
    %v4025 = vadd.f32 %v3949, %v4005
    %v4026 = vadd.f32 %v3950, %v4001
    %v4027 = vadd.f32 %v3951, %v4005
    %v4028 = vadd.f32 %v3952, %v4001
    %v4029 = vadd.f32 %v3953, %v4005
    %v4030 = vadd.f32 %v3954, %v4001
    %v4031 = vadd.f32 %v3955, %v4005
    %v4032 = vadd.f32 %v3956, %v4001
    %v4033 = vadd.f32 %v3957, %v4005
    %v4034 = vadd.f32 %v3958, %v4001
    %v4035 = vadd.f32 %v3959, %v4005
    %v4036 = vadd.f32 %v3960, %v4001
    %v4037 = vadd.f32 %v3961, %v4005
    %v4038 = vadd.f32 %v3962, %v4001
    %v4039 = vadd.f32 %v3963, %v4005
    %v4040 = vadd.f32 %v3964, %v4001
    %v4041 = vadd.f32 %v3965, %v4005
    %v4042 = vadd.f32 %v3966, %v4001
    %v4043 = vadd.f32 %v3967, %v4005
    %v4044 = vadd.f32 %v3968, %v4001
    %v4045 = vadd.f32 %v3969, %v4005
    %v4046 = vadd.f32 %v3970, %v4001
    %v4047 = vadd.f32 %v3971, %v4005
    %v4048 = vadd.f32 %v3972, %v4001
    %v4049 = vadd.f32 %v3973, %v4005
    %v4050 = vadd.f32 %v3974, %v4001
    %v4051 = vadd.f32 %v3975, %v4005
    %v4052 = vadd.f32 %v3976, %v4001
    %v4053 = vadd.f32 %v3977, %v4005
    %v4054 = vadd.f32 %v3978, %v4001
    %v4055 = vadd.f32 %v3979, %v4005
    %v4056 = vadd.f32 %v3980, %v4001
    %v4057 = vadd.f32 %v3981, %v4005
    %v4058 = vadd.f32 %v3982, %v4001
    %v4059 = vadd.f32 %v3983, %v4005
    %v4060 = vadd.f32 %v3984, %v4001
    %v4061 = vadd.f32 %v3985, %v4005
    %v4062 = vadd.f32 %v3986, %v4001
    %v4063 = vadd.f32 %v3987, %v4005
    %v4064 = vadd.f32 %v3988, %v4001
    %v4065 = vadd.f32 %v3989, %v4005
    %v4066 = vadd.f32 %v3990, %v4001
    %v4067 = vadd.f32 %v3991, %v4005
    %v4068 = vadd.f32 %v3992, %v4001
    %v4069 = vadd.f32 %v3993, %v4005
    %v4070 = vadd.f32 %v3994, %v4001
    %v4071 = vadd.f32 %v3995, %v4005
    %4072 = vst [vmem:[#allocation20] sm:$0xff] %v4008
    %4073 = vst [vmem:[#allocation20 + $0x8] sm:$0xff] %v4009
    %4074 = vst [vmem:[#allocation20 + $0x10] sm:$0xff] %v4010
    %4075 = vst [vmem:[#allocation20 + $0x18] sm:$0xff] %v4011
    %4076 = vst [vmem:[#allocation20 + $0x20] sm:$0xff] %v4012
    %4077 = vst [vmem:[#allocation20 + $0x28] sm:$0xff] %v4013
    %4078 = vst [vmem:[#allocation20 + $0x30] sm:$0xff] %v4014
    %4079 = vst [vmem:[#allocation20 + $0x38] sm:$0xff] %v4015
    %4080 = vst [vmem:[#allocation20 + $0x40] sm:$0xff] %v4016
    %4081 = vst [vmem:[#allocation20 + $0x48] sm:$0xff] %v4017
    %4082 = vst [vmem:[#allocation20 + $0x50] sm:$0xff] %v4018
    %4083 = vst [vmem:[#allocation20 + $0x58] sm:$0xff] %v4019
    %4084 = vst [vmem:[#allocation20 + $0x60] sm:$0xff] %v4020
    %4085 = vst [vmem:[#allocation20 + $0x68] sm:$0xff] %v4021
    %4086 = vst [vmem:[#allocation20 + $0x70] sm:$0xff] %v4022
    %4087 = vst [vmem:[#allocation20 + $0x78] sm:$0xff] %v4023
    %4088 = vst [vmem:[#allocation20 + $0x80] sm:$0xff] %v4024
    %4089 = vst [vmem:[#allocation20 + $0x88] sm:$0xff] %v4025
    %4090 = vst [vmem:[#allocation20 + $0x90] sm:$0xff] %v4026
    %4091 = vst [vmem:[#allocation20 + $0x98] sm:$0xff] %v4027
    %4092 = vst [vmem:[#allocation20 + $0xa0] sm:$0xff] %v4028
    %4093 = vst [vmem:[#allocation20 + $0xa8] sm:$0xff] %v4029
    %4094 = vst [vmem:[#allocation20 + $0xb0] sm:$0xff] %v4030
    %4095 = vst [vmem:[#allocation20 + $0xb8] sm:$0xff] %v4031
    %4096 = vst [vmem:[#allocation20 + $0xc0] sm:$0xff] %v4032
    %4097 = vst [vmem:[#allocation20 + $0xc8] sm:$0xff] %v4033
    %4098 = vst [vmem:[#allocation20 + $0xd0] sm:$0xff] %v4034
    %4099 = vst [vmem:[#allocation20 + $0xd8] sm:$0xff] %v4035
    %4100 = vst [vmem:[#allocation20 + $0xe0] sm:$0xff] %v4036
    %4101 = vst [vmem:[#allocation20 + $0xe8] sm:$0xff] %v4037
    %4102 = vst [vmem:[#allocation20 + $0xf0] sm:$0xff] %v4038
    %4103 = vst [vmem:[#allocation20 + $0xf8] sm:$0xff] %v4039
    %4104 = vst [vmem:[#allocation20 + $0x100] sm:$0xff] %v4040
    %4105 = vst [vmem:[#allocation20 + $0x108] sm:$0xff] %v4041
    %4106 = vst [vmem:[#allocation20 + $0x110] sm:$0xff] %v4042
    %4107 = vst [vmem:[#allocation20 + $0x118] sm:$0xff] %v4043
    %4108 = vst [vmem:[#allocation20 + $0x120] sm:$0xff] %v4044
    %4109 = vst [vmem:[#allocation20 + $0x128] sm:$0xff] %v4045
    %4110 = vst [vmem:[#allocation20 + $0x130] sm:$0xff] %v4046
    %4111 = vst [vmem:[#allocation20 + $0x138] sm:$0xff] %v4047
    %4112 = vst [vmem:[#allocation20 + $0x140] sm:$0xff] %v4048
    %4113 = vst [vmem:[#allocation20 + $0x148] sm:$0xff] %v4049
    %4114 = vst [vmem:[#allocation20 + $0x150] sm:$0xff] %v4050
    %4115 = vst [vmem:[#allocation20 + $0x158] sm:$0xff] %v4051
    %4116 = vst [vmem:[#allocation20 + $0x160] sm:$0xff] %v4052
    %4117 = vst [vmem:[#allocation20 + $0x168] sm:$0xff] %v4053
    %4118 = vst [vmem:[#allocation20 + $0x170] sm:$0xff] %v4054
    %4119 = vst [vmem:[#allocation20 + $0x178] sm:$0xff] %v4055
    %4120 = vst [vmem:[#allocation20 + $0x180] sm:$0xff] %v4056
    %4121 = vst [vmem:[#allocation20 + $0x188] sm:$0xff] %v4057
    %4122 = vst [vmem:[#allocation20 + $0x190] sm:$0xff] %v4058
    %4123 = vst [vmem:[#allocation20 + $0x198] sm:$0xff] %v4059
    %4124 = vst [vmem:[#allocation20 + $0x1a0] sm:$0xff] %v4060
    %4125 = vst [vmem:[#allocation20 + $0x1a8] sm:$0xff] %v4061
    %4126 = vst [vmem:[#allocation20 + $0x1b0] sm:$0xff] %v4062
    %4127 = vst [vmem:[#allocation20 + $0x1b8] sm:$0xff] %v4063
    %4128 = vst [vmem:[#allocation20 + $0x1c0] sm:$0xff] %v4064
    %4129 = vst [vmem:[#allocation20 + $0x1c8] sm:$0xff] %v4065
    %4130 = vst [vmem:[#allocation20 + $0x1d0] sm:$0xff] %v4066
    %4131 = vst [vmem:[#allocation20 + $0x1d8] sm:$0xff] %v4067
    %4132 = vst [vmem:[#allocation20 + $0x1e0] sm:$0xff] %v4068
    %4133 = vst [vmem:[#allocation20 + $0x1e8] sm:$0xff] %v4069
    %4134 = vst [vmem:[#allocation20 + $0x1f0] sm:$0xff] %v4070
    %4135 = vst [vmem:[#allocation20 + $0x1f8] sm:$0xff] %v4071
    // Predicated region
    $region90: #{decoder_layer_forward.7} parent=1 // pred_check
      _
    $region91: #{decoder_layer_forward.7} parent=1 // pred_check_branch
      %4137 = sbr.rel (0) target = $region93
    $region92: #{decoder_layer_forward.7} parent=1 // pred_region
      %s4139 = ssub.s32 8192, 8192
      %4140 = vsyncadd [#allocation4], %s4139
      %s4141 = sshll.u32 [#allocation20], 4
      %s4142 = int_to_ptr.vmem [resolvable:$true] %s4141
      %4147 = dma.vmem_to_hbm [thread:$0]  %s4142, 8192, %s11, [#allocation4], 256, 256, 16
    $region93: #{decoder_layer_forward.7} parent=1 // pred_fallthru
      _
    // Predicated region
    $region94: #{decoder_layer_forward.7} parent=1 // pred_check
      _
    $region95: #{decoder_layer_forward.7} parent=1 // pred_check_branch
      %4149 = sbr.rel (0) target = $region97
    $region96: #{decoder_layer_forward.7} parent=1 // pred_region
      %4150 = dma.done [#allocation4], 8192
    $region97: #{decoder_layer_forward.7} parent=1 // pred_fallthru
      _
    %4151 = vsyncpa [#allocation3], 1
    %4152 = vsyncpa [#allocation6], 1
    %4153 = vsyncpa [#allocation9], 1
    %4154 = vsyncpa [#allocation12], 1
    %4155 = vsyncpa [#allocation15], 1
    %4156 = vsyncpa [#allocation18], 1
    %4157 = vsyncpa [#allocation4], 1

</llo_original>
